<compile_context>
chip_gen: v7x
topology: tpu7x:2x2x1
jax: 0.10.0
libtpu: 0.0.40
codegen_flags: <defaults>
</compile_context>

<pallas_src>
import functools

import jax
import jax.numpy as jnp
from jax.experimental import pallas as pl
from jax.experimental.pallas import tpu as pltpu

TM_MAX = 1024      # max im2col rows (lanes) per output block
NEG_SLOPE = 0.1


def _round_up(x, m):
    return ((x + m - 1) // m) * m


# ----------------------------- Pallas kernel ------------------------------ #
def _gemm_bias_act_kernel(w_ref, a_ref, t_ref, o_ref, *, neg_slope, apply_act):
    # w_ref: (1, Cp, Kp)  bf16  folded (BN-scale * W), transposed layout
    # a_ref: (1, Kp, TM)  bf16  transposed im2col block (M on lanes)
    # t_ref: (1, Cp, 1)   f32   per-channel shift (BN beta' / conv bias)
    # o_ref: (1, Cp, TM)  f32   lane-dense output block
    acc = jnp.dot(w_ref[0], a_ref[0], preferred_element_type=jnp.float32)
    y = acc + t_ref[0]                       # broadcast (Cp,1) over lanes
    if apply_act:
        y = jnp.where(y >= 0.0, y, neg_slope * y)   # LeakyReLU
    o_ref[0] = y.astype(o_ref.dtype)


def fused_gemm(w_b, a_b, shift_b, apply_act, neg_slope=NEG_SLOPE):
    """Batched transposed GEMM: out[p] = act(w[p] @ a[p] + shift[p]).

    w_b:     [P, Cout, Kdim] f32
    a_b:     [P, Kdim, M]    f32
    shift_b: [P, Cout]       f32
    returns  [P, Cout, M]    f32
    """
    P, Cout, Kdim = w_b.shape
    M = a_b.shape[-1]
    Cp = _round_up(Cout, 8)          # sublane-aligned output channels
    Kp = _round_up(Kdim, 16)         # bf16 sublane packing of contraction dim
    TM = min(TM_MAX, _round_up(M, 128))
    Mp = _round_up(M, TM)

    w_p = jnp.pad(w_b, ((0, 0), (0, Cp - Cout), (0, Kp - Kdim))).astype(jnp.bfloat16)
    a_p = jnp.pad(a_b, ((0, 0), (0, Kp - Kdim), (0, Mp - M))).astype(jnp.bfloat16)
    t_p = jnp.pad(shift_b, ((0, 0), (0, Cp - Cout)))[:, :, None].astype(jnp.float32)

    kern = functools.partial(_gemm_bias_act_kernel,
                             neg_slope=neg_slope, apply_act=apply_act)
    out = pl.pallas_call(
        kern,
        out_shape=jax.ShapeDtypeStruct((P, Cp, Mp), jnp.float32),
        grid_spec=pltpu.PrefetchScalarGridSpec(
            num_scalar_prefetch=0,
            grid=(P, Mp // TM),
            in_specs=[
                pl.BlockSpec((1, Cp, Kp), lambda p, i: (p, 0, 0)),
                pl.BlockSpec((1, Kp, TM), lambda p, i: (p, 0, i)),
                pl.BlockSpec((1, Cp, 1), lambda p, i: (p, 0, 0)),
            ],
            out_specs=pl.BlockSpec((1, Cp, TM), lambda p, i: (p, 0, i)),
        ),
        compiler_params=pltpu.CompilerParams(
            dimension_semantics=("parallel", "parallel")),
    )(w_p, a_p, t_p)
    return out[:, :Cout, :M]


# --------------------------- conv / deconv glue ---------------------------- #
def _conv_im2col_T(x_cf, K, stride, padding):
    """x_cf: [Cin, N, D, H, W] -> A^T [K^3*Cin, N*Do*Ho*Wo] (channels-first)."""
    Cin, N, D, H, W = x_cf.shape
    xp = jnp.pad(x_cf, ((0, 0), (0, 0), (padding, padding),
                        (padding, padding), (padding, padding)))
    Do = (D + 2 * padding - K) // stride + 1
    Ho = (H + 2 * padding - K) // stride + 1
    Wo = (W + 2 * padding - K) // stride + 1
    taps = []
    for kd in range(K):
        for kh in range(K):
            for kw in range(K):
                taps.append(xp[:, :,
                               kd:kd + stride * (Do - 1) + 1:stride,
                               kh:kh + stride * (Ho - 1) + 1:stride,
                               kw:kw + stride * (Wo - 1) + 1:stride])
    a_t = jnp.stack(taps, axis=0).reshape(K * K * K * Cin, N * Do * Ho * Wo)
    return a_t, (N, Do, Ho, Wo)


def conv3d_fused(x_cf, w, shift, stride, padding, apply_act, scale=None):
    """x_cf: [Cin,N,D,H,W]; w: [K,K,K,Cin,Cout] -> [Cout,N,Do,Ho,Wo]."""
    K = w.shape[0]
    Cout = w.shape[-1]
    a_t, (N, Do, Ho, Wo) = _conv_im2col_T(x_cf, K, stride, padding)
    w_mat = w.reshape(-1, Cout).T                 # [Cout, K^3*Cin]
    if scale is not None:                         # fold BN scale into weights
        w_mat = w_mat * scale[:, None]
    out = fused_gemm(w_mat[None], a_t[None], shift[None], apply_act)
    return out[0].reshape(Cout, N, Do, Ho, Wo)


def deconv3d_fused(x_cf, w_t, bias, neg_slope=NEG_SLOPE):
    """ConvTranspose3d(k=4, s=2, p=1) + LeakyReLU via exact polyphase decomposition.

    x_cf: [Cin, N, D, H, W]; w_t: PyTorch layout [Cin, Cout, 4, 4, 4].
    Output: [Cout, N, 2D, 2H, 2W].
    Each of the 8 output-parity phases is a stride-1 2x2x2 convolution over the
    pad-1 input; phases are batched as the leading grid axis of one GEMM call.
    """
    Cin, N, D, H, W = x_cf.shape
    Cout = w_t.shape[1]
    # equivalent forward-conv weight: flip spatial dims -> [kd, kh, kw, Cin, Cout]
    w_flip = jnp.flip(w_t, axis=(2, 3, 4)).transpose(2, 3, 4, 0, 1)
    xp = jnp.pad(x_cf, ((0, 0), (0, 0), (1, 1), (1, 1), (1, 1)))

    a_phases, w_phases = [], []
    for pd in range(2):
        for ph in range(2):
            for pw in range(2):
                taps = []
                for jd in range(2):
                    for jh in range(2):
                        for jw in range(2):
                            taps.append(xp[:, :,
                                           pd + jd:pd + jd + D,
                                           ph + jh:ph + jh + H,
                                           pw + jw:pw + jw + W])
                a_phases.append(
                    jnp.stack(taps, axis=0).reshape(8 * Cin, N * D * H * W))
                # phase weight: local tap (jd,jh,jw) <- w_flip[2jd+pd, 2jh+ph, 2jw+pw]
                wp = w_flip[pd::2, ph::2, pw::2]               # [2,2,2,Cin,Cout]
                w_phases.append(wp.reshape(8 * Cin, Cout).T)   # [Cout, 8*Cin]

    a_b = jnp.stack(a_phases, axis=0)               # [8, 8*Cin, M]
    w_b = jnp.stack(w_phases, axis=0)               # [8, Cout, 8*Cin]
    t_b = jnp.tile(bias[None, :], (8, 1))           # [8, Cout]
    out = fused_gemm(w_b, a_b, t_b, apply_act=True, neg_slope=neg_slope)

    # interleave the 8 phase outputs back onto the upsampled spatial grid
    out = out.reshape(2, 2, 2, Cout, N, D, H, W)    # (pd, ph, pw, co, n, d, h, w)
    out = out.transpose(3, 4, 5, 0, 6, 1, 7, 2)     # (co, n, d, pd, h, ph, w, pw)
    return out.reshape(Cout, N, 2 * D, 2 * H, 2 * W)


def bn_fold(gamma, beta, mean, var, eps=1e-5):
    s = gamma / jnp.sqrt(var + eps)
    return s, beta - mean * s


# ------------------------------ parameters -------------------------------- #
def init_params(key, C, K):
    keys = iter(jax.random.split(key, 48))

    def rnd(shape, scale=0.1):
        return scale * jax.random.normal(next(keys), shape, jnp.float32)

    def conv_block(cin, cout):
        return dict(
            w=rnd((K, K, K, cin, cout)),
            gamma=1.0 + rnd((cout,)),
            beta=rnd((cout,)),
            mean=rnd((cout,)),
            var=jnp.abs(1.0 + rnd((cout,))),
        )

    def deconv_block(cin, cout):
        return dict(w=rnd((cin, cout, 4, 4, 4)), b=rnd((cout,)))

    return dict(
        conv1=conv_block(C, C),
        conv2=conv_block(C, C),
        conv2_1=conv_block(C, C),
        conv3=conv_block(C, C),
        conv3_1=conv_block(C, C),
        deconv2=deconv_block(C, C),
        deconv1=deconv_block(2 * C, C),
        deconv0=deconv_block(2 * C, C),
        output=dict(w=rnd((K, K, K, 2 * C, C)), b=rnd((C,))),
    )


# ------------------------------ U_net forward ------------------------------ #
def unet_forward(params, x_cf, K):
    """x_cf: channels-first activation layout [C, N, D, H, W]."""
    pad = (K - 1) // 2

    def cbr(p, x, stride):  # Conv3d -> BatchNorm3d(eval) -> LeakyReLU -> Dropout(id)
        s, t = bn_fold(p['gamma'], p['beta'], p['mean'], p['var'])
        return conv3d_fused(x, p['w'], t, stride=stride, padding=pad,
                            apply_act=True, scale=s)

    x = x_cf
    out_conv1 = cbr(params['conv1'], x, 2)
    out_conv2 = cbr(params['conv2_1'], cbr(params['conv2'], out_conv1, 2), 1)
    out_conv3 = cbr(params['conv3_1'], cbr(params['conv3'], out_conv2, 2), 1)
    out_deconv2 = deconv3d_fused(out_conv3, params['deconv2']['w'], params['deconv2']['b'])
    concat2 = jnp.concatenate([out_conv2, out_deconv2], axis=0)      # channel axis
    out_deconv1 = deconv3d_fused(concat2, params['deconv1']['w'], params['deconv1']['b'])
    concat1 = jnp.concatenate([out_conv1, out_deconv1], axis=0)
    out_deconv0 = deconv3d_fused(concat1, params['deconv0']['w'], params['deconv0']['b'])
    concat0 = jnp.concatenate([x, out_deconv0], axis=0)
    # final Conv3d has a bias and no BN/activation: scale=None skips the multiply
    out = conv3d_fused(concat0, params['output']['w'], params['output']['b'],
                       stride=1, padding=pad, apply_act=False, scale=None)
    return out


# ---------------------------------- main ----------------------------------- #
if __name__ == "__main__":
    key = jax.random.PRNGKey(0)
    k_x, k_p = jax.random.split(key)

    N, C, D, H, W = 2, 4, 16, 16, 16   # input_channels = output_channels = 4
    K = 3                              # kernel_size

    # PyTorch-convention input NCDHW, permuted to the channels-first CNDHW layout.
    x_ncdhw = jax.random.normal(k_x, (N, C, D, H, W), jnp.float32)
    x_cf = jnp.transpose(x_ncdhw, (1, 0, 2, 3, 4))

    params = init_params(k_p, C, K)

    fwd = jax.jit(functools.partial(unet_forward, K=K))
    out_cf = fwd(params, x_cf)
    out_ncdhw = jnp.transpose(out_cf, (1, 0, 2, 3, 4))
    jax.block_until_ready(out_ncdhw)

    assert out_ncdhw.shape == (N, C, D, H, W), out_ncdhw.shape
    assert bool(jnp.all(jnp.isfinite(out_ncdhw)))
    print("KERNEL_OK")
</pallas_src>

<mosaic_0001>
module attributes {stable_mosaic.version = 11 : i64} {
  func.func @_gemm_bias_act_kernel(%arg0: i32, %arg1: i32, %arg2: memref<1x8x112xbf16, #tpu.memory_space<vmem>>, %arg3: memref<1x112x1024xbf16, #tpu.memory_space<vmem>>, %arg4: memref<1x8x1xf32, #tpu.memory_space<vmem>>, %arg5: memref<1x8x1024xf32, #tpu.memory_space<vmem>>) attributes {dimension_semantics = [#tpu.dimension_semantics<parallel>, #tpu.dimension_semantics<parallel>], iteration_bounds = array<i64: 1, 1>, scalar_prefetch = 0 : i64, scratch_operands = 0 : i64, tpu.core_type = #tpu.core_type<tc>, window_params = [{transform_indices = @transform_0, window_bounds = array<i64: 1, 8, 112>}, {transform_indices = @transform_1, window_bounds = array<i64: 1, 112, 1024>}, {transform_indices = @transform_2, window_bounds = array<i64: 1, 8, 1>}, {transform_indices = @transform_3, window_bounds = array<i64: 1, 8, 1024>}]} {
    %c0 = arith.constant 0 : index
    %c0_0 = arith.constant 0 : index
    %c0_1 = arith.constant 0 : index
    %0 = vector.load %arg2[%c0, %c0_0, %c0_1] : memref<1x8x112xbf16, #tpu.memory_space<vmem>>, vector<1x8x112xbf16>
    %1 = vector.shape_cast %0 : vector<1x8x112xbf16> to vector<8x112xbf16>
    %c0_2 = arith.constant 0 : index
    %c0_3 = arith.constant 0 : index
    %c0_4 = arith.constant 0 : index
    %2 = vector.load %arg3[%c0_2, %c0_3, %c0_4] : memref<1x112x1024xbf16, #tpu.memory_space<vmem>>, vector<1x112x1024xbf16>
    %3 = vector.shape_cast %2 : vector<1x112x1024xbf16> to vector<112x1024xbf16>
    %cst = arith.constant dense<0.000000e+00> : vector<8x1024xf32>
    %4 = tpu.matmul %1, %3, %cst {dimension_numbers = #tpu.dot_dimension_numbers<[1], [0], [0], [1], [0, 0, 1, 1], [], []>} : vector<8x112xbf16>, vector<112x1024xbf16>, vector<8x1024xf32> -> vector<8x1024xf32>
    %c0_5 = arith.constant 0 : index
    %c0_6 = arith.constant 0 : index
    %c0_7 = arith.constant 0 : index
    %5 = vector.load %arg4[%c0_5, %c0_6, %c0_7] : memref<1x8x1xf32, #tpu.memory_space<vmem>>, vector<1x8x1xf32>
    %6 = vector.shape_cast %5 : vector<1x8x1xf32> to vector<8x1xf32>
    %7 = vector.broadcast %6 : vector<8x1xf32> to vector<8x1024xf32>
    %8 = arith.addf %4, %7 : vector<8x1024xf32>
    %cst_8 = arith.constant 0.000000e+00 : f32
    %9 = vector.broadcast %cst_8 : f32 to vector<8x1024xf32>
    %10 = arith.cmpf oge, %8, %9 : vector<8x1024xf32>
    %cst_9 = arith.constant 1.000000e-01 : f32
    %11 = vector.broadcast %cst_9 : f32 to vector<8x1024xf32>
    %12 = arith.mulf %11, %8 : vector<8x1024xf32>
    %13 = arith.select %10, %8, %12 : vector<8x1024xi1>, vector<8x1024xf32>
    %c0_10 = arith.constant 0 : index
    %c0_11 = arith.constant 0 : index
    %c0_12 = arith.constant 0 : index
    %14 = vector.load %arg5[%c0_10, %c0_11, %c0_12] : memref<1x8x1024xf32, #tpu.memory_space<vmem>>, vector<1x8x1024xf32>
    %15 = vector.shape_cast %14 : vector<1x8x1024xf32> to vector<8x1024xf32>
    %16 = vector.shape_cast %13 : vector<8x1024xf32> to vector<1x8x1024xf32>
    tpu.vector_store %arg5[%c0_10, %c0_11, %c0_12], %16 {strides = array<i32>} : memref<1x8x1024xf32, #tpu.memory_space<vmem>>, vector<1x8x1024xf32>,
    return
  }
  func.func @transform_0(%arg0: i32, %arg1: i32) -> (i32, i32, i32) {
    %c0_i32 = arith.constant 0 : i32
    %c0_i32_0 = arith.constant 0 : i32
    %c0_i32_1 = arith.constant 0 : i32
    return %arg0, %c0_i32, %c0_i32_0 : i32, i32, i32
  }
  func.func @transform_1(%arg0: i32, %arg1: i32) -> (i32, i32, i32) {
    %c0_i32 = arith.constant 0 : i32
    %c0_i32_0 = arith.constant 0 : i32
    return %arg0, %c0_i32, %arg1 : i32, i32, i32
  }
  func.func @transform_2(%arg0: i32, %arg1: i32) -> (i32, i32, i32) {
    %c0_i32 = arith.constant 0 : i32
    %c0_i32_0 = arith.constant 0 : i32
    %c0_i32_1 = arith.constant 0 : i32
    return %arg0, %c0_i32, %c0_i32_0 : i32, i32, i32
  }
  func.func @transform_3(%arg0: i32, %arg1: i32) -> (i32, i32, i32) {
    %c0_i32 = arith.constant 0 : i32
    %c0_i32_0 = arith.constant 0 : i32
    return %arg0, %c0_i32, %arg1 : i32, i32, i32
  }
}

module attributes {stable_mosaic.version = 11 : i64} {
  func.func @_gemm_bias_act_kernel(%arg0: i32, %arg1: i32, %arg2: memref<1x8x112xbf16, #tpu.memory_space<vmem>>, %arg3: memref<1x112x128xbf16, #tpu.memory_space<vmem>>, %arg4: memref<1x8x1xf32, #tpu.memory_space<vmem>>, %arg5: memref<1x8x128xf32, #tpu.memory_space<vmem>>) attributes {dimension_semantics = [#tpu.dimension_semantics<parallel>, #tpu.dimension_semantics<parallel>], iteration_bounds = array<i64: 1, 1>, scalar_prefetch = 0 : i64, scratch_operands = 0 : i64, tpu.core_type = #tpu.core_type<tc>, window_params = [{transform_indices = @transform_0, window_bounds = array<i64: 1, 8, 112>}, {transform_indices = @transform_1, window_bounds = array<i64: 1, 112, 128>}, {transform_indices = @transform_2, window_bounds = array<i64: 1, 8, 1>}, {transform_indices = @transform_3, window_bounds = array<i64: 1, 8, 128>}]} {
    %c0 = arith.constant 0 : index
    %c0_0 = arith.constant 0 : index
    %c0_1 = arith.constant 0 : index
    %0 = vector.load %arg2[%c0, %c0_0, %c0_1] : memref<1x8x112xbf16, #tpu.memory_space<vmem>>, vector<1x8x112xbf16>
    %1 = vector.shape_cast %0 : vector<1x8x112xbf16> to vector<8x112xbf16>
    %c0_2 = arith.constant 0 : index
    %c0_3 = arith.constant 0 : index
    %c0_4 = arith.constant 0 : index
    %2 = vector.load %arg3[%c0_2, %c0_3, %c0_4] : memref<1x112x128xbf16, #tpu.memory_space<vmem>>, vector<1x112x128xbf16>
    %3 = vector.shape_cast %2 : vector<1x112x128xbf16> to vector<112x128xbf16>
    %cst = arith.constant dense<0.000000e+00> : vector<8x128xf32>
    %4 = tpu.matmul %1, %3, %cst {dimension_numbers = #tpu.dot_dimension_numbers<[1], [0], [0], [1], [0, 0, 1, 1], [], []>} : vector<8x112xbf16>, vector<112x128xbf16>, vector<8x128xf32> -> vector<8x128xf32>
    %c0_5 = arith.constant 0 : index
    %c0_6 = arith.constant 0 : index
    %c0_7 = arith.constant 0 : index
    %5 = vector.load %arg4[%c0_5, %c0_6, %c0_7] : memref<1x8x1xf32, #tpu.memory_space<vmem>>, vector<1x8x1xf32>
    %6 = vector.shape_cast %5 : vector<1x8x1xf32> to vector<8x1xf32>
    %7 = vector.broadcast %6 : vector<8x1xf32> to vector<8x128xf32>
    %8 = arith.addf %4, %7 : vector<8x128xf32>
    %cst_8 = arith.constant 0.000000e+00 : f32
    %9 = vector.broadcast %cst_8 : f32 to vector<8x128xf32>
    %10 = arith.cmpf oge, %8, %9 : vector<8x128xf32>
    %cst_9 = arith.constant 1.000000e-01 : f32
    %11 = vector.broadcast %cst_9 : f32 to vector<8x128xf32>
    %12 = arith.mulf %11, %8 : vector<8x128xf32>
    %13 = arith.select %10, %8, %12 : vector<8x128xi1>, vector<8x128xf32>
    %c0_10 = arith.constant 0 : index
    %c0_11 = arith.constant 0 : index
    %c0_12 = arith.constant 0 : index
    %14 = vector.load %arg5[%c0_10, %c0_11, %c0_12] : memref<1x8x128xf32, #tpu.memory_space<vmem>>, vector<1x8x128xf32>
    %15 = vector.shape_cast %14 : vector<1x8x128xf32> to vector<8x128xf32>
    %16 = vector.shape_cast %13 : vector<8x128xf32> to vector<1x8x128xf32>
    tpu.vector_store %arg5[%c0_10, %c0_11, %c0_12], %16 {strides = array<i32>} : memref<1x8x128xf32, #tpu.memory_space<vmem>>, vector<1x8x128xf32>,
    return
  }
  func.func @transform_0(%arg0: i32, %arg1: i32) -> (i32, i32, i32) {
    %c0_i32 = arith.constant 0 : i32
    %c0_i32_0 = arith.constant 0 : i32
    %c0_i32_1 = arith.constant 0 : i32
    return %arg0, %c0_i32, %c0_i32_0 : i32, i32, i32
  }
  func.func @transform_1(%arg0: i32, %arg1: i32) -> (i32, i32, i32) {
    %c0_i32 = arith.constant 0 : i32
    %c0_i32_0 = arith.constant 0 : i32
    return %arg0, %c0_i32, %arg1 : i32, i32, i32
  }
  func.func @transform_2(%arg0: i32, %arg1: i32) -> (i32, i32, i32) {
    %c0_i32 = arith.constant 0 : i32
    %c0_i32_0 = arith.constant 0 : i32
    %c0_i32_1 = arith.constant 0 : i32
    return %arg0, %c0_i32, %c0_i32_0 : i32, i32, i32
  }
  func.func @transform_3(%arg0: i32, %arg1: i32) -> (i32, i32, i32) {
    %c0_i32 = arith.constant 0 : i32
    %c0_i32_0 = arith.constant 0 : i32
    return %arg0, %c0_i32, %arg1 : i32, i32, i32
  }
}

module attributes {stable_mosaic.version = 11 : i64} {
  func.func @_gemm_bias_act_kernel(%arg0: i32, %arg1: i32, %arg2: memref<1x8x32xbf16, #tpu.memory_space<vmem>>, %arg3: memref<1x32x128xbf16, #tpu.memory_space<vmem>>, %arg4: memref<1x8x1xf32, #tpu.memory_space<vmem>>, %arg5: memref<1x8x128xf32, #tpu.memory_space<vmem>>) attributes {dimension_semantics = [#tpu.dimension_semantics<parallel>, #tpu.dimension_semantics<parallel>], iteration_bounds = array<i64: 8, 1>, scalar_prefetch = 0 : i64, scratch_operands = 0 : i64, tpu.core_type = #tpu.core_type<tc>, window_params = [{transform_indices = @transform_0, window_bounds = array<i64: 1, 8, 32>}, {transform_indices = @transform_1, window_bounds = array<i64: 1, 32, 128>}, {transform_indices = @transform_2, window_bounds = array<i64: 1, 8, 1>}, {transform_indices = @transform_3, window_bounds = array<i64: 1, 8, 128>}]} {
    %c0 = arith.constant 0 : index
    %c0_0 = arith.constant 0 : index
    %c0_1 = arith.constant 0 : index
    %0 = vector.load %arg2[%c0, %c0_0, %c0_1] : memref<1x8x32xbf16, #tpu.memory_space<vmem>>, vector<1x8x32xbf16>
    %1 = vector.shape_cast %0 : vector<1x8x32xbf16> to vector<8x32xbf16>
    %c0_2 = arith.constant 0 : index
    %c0_3 = arith.constant 0 : index
    %c0_4 = arith.constant 0 : index
    %2 = vector.load %arg3[%c0_2, %c0_3, %c0_4] : memref<1x32x128xbf16, #tpu.memory_space<vmem>>, vector<1x32x128xbf16>
    %3 = vector.shape_cast %2 : vector<1x32x128xbf16> to vector<32x128xbf16>
    %cst = arith.constant dense<0.000000e+00> : vector<8x128xf32>
    %4 = tpu.matmul %1, %3, %cst {dimension_numbers = #tpu.dot_dimension_numbers<[1], [0], [0], [1], [0, 0, 1, 1], [], []>} : vector<8x32xbf16>, vector<32x128xbf16>, vector<8x128xf32> -> vector<8x128xf32>
    %c0_5 = arith.constant 0 : index
    %c0_6 = arith.constant 0 : index
    %c0_7 = arith.constant 0 : index
    %5 = vector.load %arg4[%c0_5, %c0_6, %c0_7] : memref<1x8x1xf32, #tpu.memory_space<vmem>>, vector<1x8x1xf32>
    %6 = vector.shape_cast %5 : vector<1x8x1xf32> to vector<8x1xf32>
    %7 = vector.broadcast %6 : vector<8x1xf32> to vector<8x128xf32>
    %8 = arith.addf %4, %7 : vector<8x128xf32>
    %cst_8 = arith.constant 0.000000e+00 : f32
    %9 = vector.broadcast %cst_8 : f32 to vector<8x128xf32>
    %10 = arith.cmpf oge, %8, %9 : vector<8x128xf32>
    %cst_9 = arith.constant 1.000000e-01 : f32
    %11 = vector.broadcast %cst_9 : f32 to vector<8x128xf32>
    %12 = arith.mulf %11, %8 : vector<8x128xf32>
    %13 = arith.select %10, %8, %12 : vector<8x128xi1>, vector<8x128xf32>
    %c0_10 = arith.constant 0 : index
    %c0_11 = arith.constant 0 : index
    %c0_12 = arith.constant 0 : index
    %14 = vector.load %arg5[%c0_10, %c0_11, %c0_12] : memref<1x8x128xf32, #tpu.memory_space<vmem>>, vector<1x8x128xf32>
    %15 = vector.shape_cast %14 : vector<1x8x128xf32> to vector<8x128xf32>
    %16 = vector.shape_cast %13 : vector<8x128xf32> to vector<1x8x128xf32>
    tpu.vector_store %arg5[%c0_10, %c0_11, %c0_12], %16 {strides = array<i32>} : memref<1x8x128xf32, #tpu.memory_space<vmem>>, vector<1x8x128xf32>,
    return
  }
  func.func @transform_0(%arg0: i32, %arg1: i32) -> (i32, i32, i32) {
    %c0_i32 = arith.constant 0 : i32
    %c0_i32_0 = arith.constant 0 : i32
    %c0_i32_1 = arith.constant 0 : i32
    return %arg0, %c0_i32, %c0_i32_0 : i32, i32, i32
  }
  func.func @transform_1(%arg0: i32, %arg1: i32) -> (i32, i32, i32) {
    %c0_i32 = arith.constant 0 : i32
    %c0_i32_0 = arith.constant 0 : i32
    return %arg0, %c0_i32, %arg1 : i32, i32, i32
  }
  func.func @transform_2(%arg0: i32, %arg1: i32) -> (i32, i32, i32) {
    %c0_i32 = arith.constant 0 : i32
    %c0_i32_0 = arith.constant 0 : i32
    %c0_i32_1 = arith.constant 0 : i32
    return %arg0, %c0_i32, %c0_i32_0 : i32, i32, i32
  }
  func.func @transform_3(%arg0: i32, %arg1: i32) -> (i32, i32, i32) {
    %c0_i32 = arith.constant 0 : i32
    %c0_i32_0 = arith.constant 0 : i32
    return %arg0, %c0_i32, %arg1 : i32, i32, i32
  }
}

module attributes {stable_mosaic.version = 11 : i64} {
  func.func @_gemm_bias_act_kernel(%arg0: i32, %arg1: i32, %arg2: memref<1x8x64xbf16, #tpu.memory_space<vmem>>, %arg3: memref<1x64x128xbf16, #tpu.memory_space<vmem>>, %arg4: memref<1x8x1xf32, #tpu.memory_space<vmem>>, %arg5: memref<1x8x128xf32, #tpu.memory_space<vmem>>) attributes {dimension_semantics = [#tpu.dimension_semantics<parallel>, #tpu.dimension_semantics<parallel>], iteration_bounds = array<i64: 8, 1>, scalar_prefetch = 0 : i64, scratch_operands = 0 : i64, tpu.core_type = #tpu.core_type<tc>, window_params = [{transform_indices = @transform_0, window_bounds = array<i64: 1, 8, 64>}, {transform_indices = @transform_1, window_bounds = array<i64: 1, 64, 128>}, {transform_indices = @transform_2, window_bounds = array<i64: 1, 8, 1>}, {transform_indices = @transform_3, window_bounds = array<i64: 1, 8, 128>}]} {
    %c0 = arith.constant 0 : index
    %c0_0 = arith.constant 0 : index
    %c0_1 = arith.constant 0 : index
    %0 = vector.load %arg2[%c0, %c0_0, %c0_1] : memref<1x8x64xbf16, #tpu.memory_space<vmem>>, vector<1x8x64xbf16>
    %1 = vector.shape_cast %0 : vector<1x8x64xbf16> to vector<8x64xbf16>
    %c0_2 = arith.constant 0 : index
    %c0_3 = arith.constant 0 : index
    %c0_4 = arith.constant 0 : index
    %2 = vector.load %arg3[%c0_2, %c0_3, %c0_4] : memref<1x64x128xbf16, #tpu.memory_space<vmem>>, vector<1x64x128xbf16>
    %3 = vector.shape_cast %2 : vector<1x64x128xbf16> to vector<64x128xbf16>
    %cst = arith.constant dense<0.000000e+00> : vector<8x128xf32>
    %4 = tpu.matmul %1, %3, %cst {dimension_numbers = #tpu.dot_dimension_numbers<[1], [0], [0], [1], [0, 0, 1, 1], [], []>} : vector<8x64xbf16>, vector<64x128xbf16>, vector<8x128xf32> -> vector<8x128xf32>
    %c0_5 = arith.constant 0 : index
    %c0_6 = arith.constant 0 : index
    %c0_7 = arith.constant 0 : index
    %5 = vector.load %arg4[%c0_5, %c0_6, %c0_7] : memref<1x8x1xf32, #tpu.memory_space<vmem>>, vector<1x8x1xf32>
    %6 = vector.shape_cast %5 : vector<1x8x1xf32> to vector<8x1xf32>
    %7 = vector.broadcast %6 : vector<8x1xf32> to vector<8x128xf32>
    %8 = arith.addf %4, %7 : vector<8x128xf32>
    %cst_8 = arith.constant 0.000000e+00 : f32
    %9 = vector.broadcast %cst_8 : f32 to vector<8x128xf32>
    %10 = arith.cmpf oge, %8, %9 : vector<8x128xf32>
    %cst_9 = arith.constant 1.000000e-01 : f32
    %11 = vector.broadcast %cst_9 : f32 to vector<8x128xf32>
    %12 = arith.mulf %11, %8 : vector<8x128xf32>
    %13 = arith.select %10, %8, %12 : vector<8x128xi1>, vector<8x128xf32>
    %c0_10 = arith.constant 0 : index
    %c0_11 = arith.constant 0 : index
    %c0_12 = arith.constant 0 : index
    %14 = vector.load %arg5[%c0_10, %c0_11, %c0_12] : memref<1x8x128xf32, #tpu.memory_space<vmem>>, vector<1x8x128xf32>
    %15 = vector.shape_cast %14 : vector<1x8x128xf32> to vector<8x128xf32>
    %16 = vector.shape_cast %13 : vector<8x128xf32> to vector<1x8x128xf32>
    tpu.vector_store %arg5[%c0_10, %c0_11, %c0_12], %16 {strides = array<i32>} : memref<1x8x128xf32, #tpu.memory_space<vmem>>, vector<1x8x128xf32>,
    return
  }
  func.func @transform_0(%arg0: i32, %arg1: i32) -> (i32, i32, i32) {
    %c0_i32 = arith.constant 0 : i32
    %c0_i32_0 = arith.constant 0 : i32
    %c0_i32_1 = arith.constant 0 : i32
    return %arg0, %c0_i32, %c0_i32_0 : i32, i32, i32
  }
  func.func @transform_1(%arg0: i32, %arg1: i32) -> (i32, i32, i32) {
    %c0_i32 = arith.constant 0 : i32
    %c0_i32_0 = arith.constant 0 : i32
    return %arg0, %c0_i32, %arg1 : i32, i32, i32
  }
  func.func @transform_2(%arg0: i32, %arg1: i32) -> (i32, i32, i32) {
    %c0_i32 = arith.constant 0 : i32
    %c0_i32_0 = arith.constant 0 : i32
    %c0_i32_1 = arith.constant 0 : i32
    return %arg0, %c0_i32, %c0_i32_0 : i32, i32, i32
  }
  func.func @transform_3(%arg0: i32, %arg1: i32) -> (i32, i32, i32) {
    %c0_i32 = arith.constant 0 : i32
    %c0_i32_0 = arith.constant 0 : i32
    return %arg0, %c0_i32, %arg1 : i32, i32, i32
  }
}

module attributes {stable_mosaic.version = 11 : i64} {
  func.func @_gemm_bias_act_kernel(%arg0: i32, %arg1: i32, %arg2: memref<1x8x64xbf16, #tpu.memory_space<vmem>>, %arg3: memref<1x64x1024xbf16, #tpu.memory_space<vmem>>, %arg4: memref<1x8x1xf32, #tpu.memory_space<vmem>>, %arg5: memref<1x8x1024xf32, #tpu.memory_space<vmem>>) attributes {dimension_semantics = [#tpu.dimension_semantics<parallel>, #tpu.dimension_semantics<parallel>], iteration_bounds = array<i64: 8, 1>, scalar_prefetch = 0 : i64, scratch_operands = 0 : i64, tpu.core_type = #tpu.core_type<tc>, window_params = [{transform_indices = @transform_0, window_bounds = array<i64: 1, 8, 64>}, {transform_indices = @transform_1, window_bounds = array<i64: 1, 64, 1024>}, {transform_indices = @transform_2, window_bounds = array<i64: 1, 8, 1>}, {transform_indices = @transform_3, window_bounds = array<i64: 1, 8, 1024>}]} {
    %c0 = arith.constant 0 : index
    %c0_0 = arith.constant 0 : index
    %c0_1 = arith.constant 0 : index
    %0 = vector.load %arg2[%c0, %c0_0, %c0_1] : memref<1x8x64xbf16, #tpu.memory_space<vmem>>, vector<1x8x64xbf16>
    %1 = vector.shape_cast %0 : vector<1x8x64xbf16> to vector<8x64xbf16>
    %c0_2 = arith.constant 0 : index
    %c0_3 = arith.constant 0 : index
    %c0_4 = arith.constant 0 : index
    %2 = vector.load %arg3[%c0_2, %c0_3, %c0_4] : memref<1x64x1024xbf16, #tpu.memory_space<vmem>>, vector<1x64x1024xbf16>
    %3 = vector.shape_cast %2 : vector<1x64x1024xbf16> to vector<64x1024xbf16>
    %cst = arith.constant dense<0.000000e+00> : vector<8x1024xf32>
    %4 = tpu.matmul %1, %3, %cst {dimension_numbers = #tpu.dot_dimension_numbers<[1], [0], [0], [1], [0, 0, 1, 1], [], []>} : vector<8x64xbf16>, vector<64x1024xbf16>, vector<8x1024xf32> -> vector<8x1024xf32>
    %c0_5 = arith.constant 0 : index
    %c0_6 = arith.constant 0 : index
    %c0_7 = arith.constant 0 : index
    %5 = vector.load %arg4[%c0_5, %c0_6, %c0_7] : memref<1x8x1xf32, #tpu.memory_space<vmem>>, vector<1x8x1xf32>
    %6 = vector.shape_cast %5 : vector<1x8x1xf32> to vector<8x1xf32>
    %7 = vector.broadcast %6 : vector<8x1xf32> to vector<8x1024xf32>
    %8 = arith.addf %4, %7 : vector<8x1024xf32>
    %cst_8 = arith.constant 0.000000e+00 : f32
    %9 = vector.broadcast %cst_8 : f32 to vector<8x1024xf32>
    %10 = arith.cmpf oge, %8, %9 : vector<8x1024xf32>
    %cst_9 = arith.constant 1.000000e-01 : f32
    %11 = vector.broadcast %cst_9 : f32 to vector<8x1024xf32>
    %12 = arith.mulf %11, %8 : vector<8x1024xf32>
    %13 = arith.select %10, %8, %12 : vector<8x1024xi1>, vector<8x1024xf32>
    %c0_10 = arith.constant 0 : index
    %c0_11 = arith.constant 0 : index
    %c0_12 = arith.constant 0 : index
    %14 = vector.load %arg5[%c0_10, %c0_11, %c0_12] : memref<1x8x1024xf32, #tpu.memory_space<vmem>>, vector<1x8x1024xf32>
    %15 = vector.shape_cast %14 : vector<1x8x1024xf32> to vector<8x1024xf32>
    %16 = vector.shape_cast %13 : vector<8x1024xf32> to vector<1x8x1024xf32>
    tpu.vector_store %arg5[%c0_10, %c0_11, %c0_12], %16 {strides = array<i32>} : memref<1x8x1024xf32, #tpu.memory_space<vmem>>, vector<1x8x1024xf32>,
    return
  }
  func.func @transform_0(%arg0: i32, %arg1: i32) -> (i32, i32, i32) {
    %c0_i32 = arith.constant 0 : i32
    %c0_i32_0 = arith.constant 0 : i32
    %c0_i32_1 = arith.constant 0 : i32
    return %arg0, %c0_i32, %c0_i32_0 : i32, i32, i32
  }
  func.func @transform_1(%arg0: i32, %arg1: i32) -> (i32, i32, i32) {
    %c0_i32 = arith.constant 0 : i32
    %c0_i32_0 = arith.constant 0 : i32
    return %arg0, %c0_i32, %arg1 : i32, i32, i32
  }
  func.func @transform_2(%arg0: i32, %arg1: i32) -> (i32, i32, i32) {
    %c0_i32 = arith.constant 0 : i32
    %c0_i32_0 = arith.constant 0 : i32
    %c0_i32_1 = arith.constant 0 : i32
    return %arg0, %c0_i32, %c0_i32_0 : i32, i32, i32
  }
  func.func @transform_3(%arg0: i32, %arg1: i32) -> (i32, i32, i32) {
    %c0_i32 = arith.constant 0 : i32
    %c0_i32_0 = arith.constant 0 : i32
    return %arg0, %c0_i32, %arg1 : i32, i32, i32
  }
}

module attributes {stable_mosaic.version = 11 : i64} {
  func.func @_gemm_bias_act_kernel(%arg0: i32, %arg1: i32, %arg2: memref<1x8x224xbf16, #tpu.memory_space<vmem>>, %arg3: memref<1x224x1024xbf16, #tpu.memory_space<vmem>>, %arg4: memref<1x8x1xf32, #tpu.memory_space<vmem>>, %arg5: memref<1x8x1024xf32, #tpu.memory_space<vmem>>) attributes {dimension_semantics = [#tpu.dimension_semantics<parallel>, #tpu.dimension_semantics<parallel>], iteration_bounds = array<i64: 1, 8>, scalar_prefetch = 0 : i64, scratch_operands = 0 : i64, tpu.core_type = #tpu.core_type<tc>, window_params = [{transform_indices = @transform_0, window_bounds = array<i64: 1, 8, 224>}, {transform_indices = @transform_1, window_bounds = array<i64: 1, 224, 1024>}, {transform_indices = @transform_2, window_bounds = array<i64: 1, 8, 1>}, {transform_indices = @transform_3, window_bounds = array<i64: 1, 8, 1024>}]} {
    %c0 = arith.constant 0 : index
    %c0_0 = arith.constant 0 : index
    %c0_1 = arith.constant 0 : index
    %0 = vector.load %arg2[%c0, %c0_0, %c0_1] : memref<1x8x224xbf16, #tpu.memory_space<vmem>>, vector<1x8x224xbf16>
    %1 = vector.shape_cast %0 : vector<1x8x224xbf16> to vector<8x224xbf16>
    %c0_2 = arith.constant 0 : index
    %c0_3 = arith.constant 0 : index
    %c0_4 = arith.constant 0 : index
    %2 = vector.load %arg3[%c0_2, %c0_3, %c0_4] : memref<1x224x1024xbf16, #tpu.memory_space<vmem>>, vector<1x224x1024xbf16>
    %3 = vector.shape_cast %2 : vector<1x224x1024xbf16> to vector<224x1024xbf16>
    %cst = arith.constant dense<0.000000e+00> : vector<8x1024xf32>
    %4 = tpu.matmul %1, %3, %cst {dimension_numbers = #tpu.dot_dimension_numbers<[1], [0], [0], [1], [0, 0, 1, 1], [], []>} : vector<8x224xbf16>, vector<224x1024xbf16>, vector<8x1024xf32> -> vector<8x1024xf32>
    %c0_5 = arith.constant 0 : index
    %c0_6 = arith.constant 0 : index
    %c0_7 = arith.constant 0 : index
    %5 = vector.load %arg4[%c0_5, %c0_6, %c0_7] : memref<1x8x1xf32, #tpu.memory_space<vmem>>, vector<1x8x1xf32>
    %6 = vector.shape_cast %5 : vector<1x8x1xf32> to vector<8x1xf32>
    %7 = vector.broadcast %6 : vector<8x1xf32> to vector<8x1024xf32>
    %8 = arith.addf %4, %7 : vector<8x1024xf32>
    %c0_8 = arith.constant 0 : index
    %c0_9 = arith.constant 0 : index
    %c0_10 = arith.constant 0 : index
    %9 = vector.load %arg5[%c0_8, %c0_9, %c0_10] : memref<1x8x1024xf32, #tpu.memory_space<vmem>>, vector<1x8x1024xf32>
    %10 = vector.shape_cast %9 : vector<1x8x1024xf32> to vector<8x1024xf32>
    %11 = vector.shape_cast %8 : vector<8x1024xf32> to vector<1x8x1024xf32>
    tpu.vector_store %arg5[%c0_8, %c0_9, %c0_10], %11 {strides = array<i32>} : memref<1x8x1024xf32, #tpu.memory_space<vmem>>, vector<1x8x1024xf32>,
    return
  }
  func.func @transform_0(%arg0: i32, %arg1: i32) -> (i32, i32, i32) {
    %c0_i32 = arith.constant 0 : i32
    %c0_i32_0 = arith.constant 0 : i32
    %c0_i32_1 = arith.constant 0 : i32
    return %arg0, %c0_i32, %c0_i32_0 : i32, i32, i32
  }
  func.func @transform_1(%arg0: i32, %arg1: i32) -> (i32, i32, i32) {
    %c0_i32 = arith.constant 0 : i32
    %c0_i32_0 = arith.constant 0 : i32
    return %arg0, %c0_i32, %arg1 : i32, i32, i32
  }
  func.func @transform_2(%arg0: i32, %arg1: i32) -> (i32, i32, i32) {
    %c0_i32 = arith.constant 0 : i32
    %c0_i32_0 = arith.constant 0 : i32
    %c0_i32_1 = arith.constant 0 : i32
    return %arg0, %c0_i32, %c0_i32_0 : i32, i32, i32
  }
  func.func @transform_3(%arg0: i32, %arg1: i32) -> (i32, i32, i32) {
    %c0_i32 = arith.constant 0 : i32
    %c0_i32_0 = arith.constant 0 : i32
    return %arg0, %c0_i32, %arg1 : i32, i32, i32
  }
}

</mosaic_0001>

<llo_original>
// kernel: squeeze.6
$region0: #{squeeze.6}
  %s0 = inlined_call_operand.vmem [shape: bf16[1,4,1024], index: 0, kind: input, shape index: {}]
  %s1 = inlined_call_operand.vmem [shape: bf16[4,2,8,8,8], index: 1, kind: output, shape index: {}]
  $region1: #{squeeze.6} parent=0
    #allocation0 [shape = 'u8[262144]{0}', space=vmem, size = 0x40000, scoped, tag = 'scoped mem for output reshape']
    #allocation1 [shape = 'u8[32768]{0}', space=vmem, size = 0x8000, scoped, tag = 'scoped mem for input reshape']
    %s3 = smul.u32 2, 2
    %s4 = sshllo.u32 0, %s3
    %s5 = smul.addr 2, 7
    %s6 = scalar_lea.vmem %s0, %s5
    %s7 = sshrl.u32 %s4, 1
    %s8 = sor.u32 %s4, %s7
    %s9 = sand.u32 %s8, 85
    %s10 = sshrl.u32 %s9, 1
    %s11 = sor.u32 %s9, %s10
    %s12 = sand.u32 51, %s11
    %s13 = sshrl.u32 %s12, 2
    %s14 = sor.u32 %s12, %s13
    %s15 = sand.u32 15, %s14
    %v16 = vld [vmem:[%s6] sm:%s15]
    %v17 = vunpack.c.l.bf16 %v16
    %v18 = vunpack.c.h.bf16 %v16
    %s19 = scalar_lea.vmem [#allocation1], 56
    %20 = vst [vmem:[%s19] sm:%s4] %v17
    %s21 = smul.addr 2, 6
    %s22 = scalar_lea.vmem %s0, %s21
    %s23 = sshrl.u32 %s4, 1
    %s24 = sor.u32 %s4, %s23
    %s25 = sand.u32 %s24, 85
    %s26 = sshrl.u32 %s25, 1
    %s27 = sor.u32 %s25, %s26
    %s28 = sand.u32 51, %s27
    %s29 = sshrl.u32 %s28, 2
    %s30 = sor.u32 %s28, %s29
    %s31 = sand.u32 15, %s30
    %v32 = vld [vmem:[%s22] sm:%s31]
    %v33 = vunpack.c.l.bf16 %v32
    %v34 = vunpack.c.h.bf16 %v32
    %s35 = scalar_lea.vmem [#allocation1], 48
    %36 = vst [vmem:[%s35] sm:%s4] %v33
    %s37 = smul.addr 2, 5
    %s38 = scalar_lea.vmem %s0, %s37
    %s39 = sshrl.u32 %s4, 1
    %s40 = sor.u32 %s4, %s39
    %s41 = sand.u32 %s40, 85
    %s42 = sshrl.u32 %s41, 1
    %s43 = sor.u32 %s41, %s42
    %s44 = sand.u32 51, %s43
    %s45 = sshrl.u32 %s44, 2
    %s46 = sor.u32 %s44, %s45
    %s47 = sand.u32 15, %s46
    %v48 = vld [vmem:[%s38] sm:%s47]
    %v49 = vunpack.c.l.bf16 %v48
    %v50 = vunpack.c.h.bf16 %v48
    %s51 = scalar_lea.vmem [#allocation1], 40
    %52 = vst [vmem:[%s51] sm:%s4] %v49
    %s53 = smul.addr 2, 4
    %s54 = scalar_lea.vmem %s0, %s53
    %s55 = sshrl.u32 %s4, 1
    %s56 = sor.u32 %s4, %s55
    %s57 = sand.u32 %s56, 85
    %s58 = sshrl.u32 %s57, 1
    %s59 = sor.u32 %s57, %s58
    %s60 = sand.u32 51, %s59
    %s61 = sshrl.u32 %s60, 2
    %s62 = sor.u32 %s60, %s61
    %s63 = sand.u32 15, %s62
    %v64 = vld [vmem:[%s54] sm:%s63]
    %v65 = vunpack.c.l.bf16 %v64
    %v66 = vunpack.c.h.bf16 %v64
    %s67 = scalar_lea.vmem [#allocation1], 32
    %68 = vst [vmem:[%s67] sm:%s4] %v65
    %s69 = smul.addr 2, 3
    %s70 = scalar_lea.vmem %s0, %s69
    %s71 = sshrl.u32 %s4, 1
    %s72 = sor.u32 %s4, %s71
    %s73 = sand.u32 %s72, 85
    %s74 = sshrl.u32 %s73, 1
    %s75 = sor.u32 %s73, %s74
    %s76 = sand.u32 51, %s75
    %s77 = sshrl.u32 %s76, 2
    %s78 = sor.u32 %s76, %s77
    %s79 = sand.u32 15, %s78
    %v80 = vld [vmem:[%s70] sm:%s79]
    %v81 = vunpack.c.l.bf16 %v80
    %v82 = vunpack.c.h.bf16 %v80
    %s83 = scalar_lea.vmem [#allocation1], 24
    %84 = vst [vmem:[%s83] sm:%s4] %v81
    %s85 = smul.addr 2, 2
    %s86 = scalar_lea.vmem %s0, %s85
    %s87 = sshrl.u32 %s4, 1
    %s88 = sor.u32 %s4, %s87
    %s89 = sand.u32 %s88, 85
    %s90 = sshrl.u32 %s89, 1
    %s91 = sor.u32 %s89, %s90
    %s92 = sand.u32 51, %s91
    %s93 = sshrl.u32 %s92, 2
    %s94 = sor.u32 %s92, %s93
    %s95 = sand.u32 15, %s94
    %v96 = vld [vmem:[%s86] sm:%s95]
    %v97 = vunpack.c.l.bf16 %v96
    %v98 = vunpack.c.h.bf16 %v96
    %s99 = scalar_lea.vmem [#allocation1], 16
    %100 = vst [vmem:[%s99] sm:%s4] %v97
    %s101 = scalar_lea.vmem %s0, 2
    %s102 = sshrl.u32 %s4, 1
    %s103 = sor.u32 %s4, %s102
    %s104 = sand.u32 %s103, 85
    %s105 = sshrl.u32 %s104, 1
    %s106 = sor.u32 %s104, %s105
    %s107 = sand.u32 51, %s106
    %s108 = sshrl.u32 %s107, 2
    %s109 = sor.u32 %s107, %s108
    %s110 = sand.u32 15, %s109
    %v111 = vld [vmem:[%s101] sm:%s110]
    %v112 = vunpack.c.l.bf16 %v111
    %v113 = vunpack.c.h.bf16 %v111
    %s114 = scalar_lea.vmem [#allocation1], 8
    %115 = vst [vmem:[%s114] sm:%s4] %v112
    %s116 = sshrl.u32 %s4, 1
    %s117 = sor.u32 %s4, %s116
    %s118 = sand.u32 %s117, 85
    %s119 = sshrl.u32 %s118, 1
    %s120 = sor.u32 %s118, %s119
    %s121 = sand.u32 51, %s120
    %s122 = sshrl.u32 %s121, 2
    %s123 = sor.u32 %s121, %s122
    %s124 = sand.u32 15, %s123
    %v125 = vld [vmem:[%s0] sm:%s124]
    %v126 = vunpack.c.l.bf16 %v125
    %v127 = vunpack.c.h.bf16 %v125
    %128 = vst [vmem:[#allocation1] sm:%s4] %v126
    %v129 = vld [vmem:[#allocation1] sm:$0xf]
    %vm130 = vcmask 64512
    %131 = vst.msk [vmem:[#allocation0] sm:$0x1] %vm130, %v129
    %s132 = scalar_lea.vmem [#allocation0], 127
    %133 = vst.msk [vmem:[%s132] sm:$0x2] %vm130, %v129
    %s134 = scalar_lea.vmem [#allocation0], 254
    %135 = vst.msk [vmem:[%s134] sm:$0x4] %vm130, %v129
    %s136 = scalar_lea.vmem [#allocation0], 381
    %137 = vst.msk [vmem:[%s136] sm:$0x8] %vm130, %v129
    %s138 = scalar_lea.vmem [#allocation1], 8
    %v139 = vld [vmem:[%s138] sm:$0xf]
    %vm140 = vcmask 64512
    %s141 = scalar_lea.vmem [#allocation0], 16
    %142 = vst.msk [vmem:[%s141] sm:$0x1] %vm140, %v139
    %s143 = scalar_lea.vmem [#allocation0], 143
    %144 = vst.msk [vmem:[%s143] sm:$0x2] %vm140, %v139
    %s145 = scalar_lea.vmem [#allocation0], 270
    %146 = vst.msk [vmem:[%s145] sm:$0x4] %vm140, %v139
    %s147 = scalar_lea.vmem [#allocation0], 397
    %148 = vst.msk [vmem:[%s147] sm:$0x8] %vm140, %v139
    %s149 = scalar_lea.vmem [#allocation1], 16
    %v150 = vld [vmem:[%s149] sm:$0xf]
    %vm151 = vcmask 64512
    %s152 = scalar_lea.vmem [#allocation0], 32
    %153 = vst.msk [vmem:[%s152] sm:$0x1] %vm151, %v150
    %s154 = scalar_lea.vmem [#allocation0], 159
    %155 = vst.msk [vmem:[%s154] sm:$0x2] %vm151, %v150
    %s156 = scalar_lea.vmem [#allocation0], 286
    %157 = vst.msk [vmem:[%s156] sm:$0x4] %vm151, %v150
    %s158 = scalar_lea.vmem [#allocation0], 413
    %159 = vst.msk [vmem:[%s158] sm:$0x8] %vm151, %v150
    %s160 = scalar_lea.vmem [#allocation1], 24
    %v161 = vld [vmem:[%s160] sm:$0xf]
    %vm162 = vcmask 64512
    %s163 = scalar_lea.vmem [#allocation0], 48
    %164 = vst.msk [vmem:[%s163] sm:$0x1] %vm162, %v161
    %s165 = scalar_lea.vmem [#allocation0], 175
    %166 = vst.msk [vmem:[%s165] sm:$0x2] %vm162, %v161
    %s167 = scalar_lea.vmem [#allocation0], 302
    %168 = vst.msk [vmem:[%s167] sm:$0x4] %vm162, %v161
    %s169 = scalar_lea.vmem [#allocation0], 429
    %170 = vst.msk [vmem:[%s169] sm:$0x8] %vm162, %v161
    %s171 = scalar_lea.vmem [#allocation1], 32
    %v172 = vld [vmem:[%s171] sm:$0xf]
    %vm173 = vcmask 64512
    %s174 = scalar_lea.vmem [#allocation0], 64
    %175 = vst.msk [vmem:[%s174] sm:$0x1] %vm173, %v172
    %s176 = scalar_lea.vmem [#allocation0], 191
    %177 = vst.msk [vmem:[%s176] sm:$0x2] %vm173, %v172
    %s178 = scalar_lea.vmem [#allocation0], 318
    %179 = vst.msk [vmem:[%s178] sm:$0x4] %vm173, %v172
    %s180 = scalar_lea.vmem [#allocation0], 445
    %181 = vst.msk [vmem:[%s180] sm:$0x8] %vm173, %v172
    %s182 = scalar_lea.vmem [#allocation1], 40
    %v183 = vld [vmem:[%s182] sm:$0xf]
    %vm184 = vcmask 64512
    %s185 = scalar_lea.vmem [#allocation0], 80
    %186 = vst.msk [vmem:[%s185] sm:$0x1] %vm184, %v183
    %s187 = scalar_lea.vmem [#allocation0], 207
    %188 = vst.msk [vmem:[%s187] sm:$0x2] %vm184, %v183
    %s189 = scalar_lea.vmem [#allocation0], 334
    %190 = vst.msk [vmem:[%s189] sm:$0x4] %vm184, %v183
    %s191 = scalar_lea.vmem [#allocation0], 461
    %192 = vst.msk [vmem:[%s191] sm:$0x8] %vm184, %v183
    %s193 = scalar_lea.vmem [#allocation1], 48
    %v194 = vld [vmem:[%s193] sm:$0xf]
    %vm195 = vcmask 64512
    %s196 = scalar_lea.vmem [#allocation0], 96
    %197 = vst.msk [vmem:[%s196] sm:$0x1] %vm195, %v194
    %s198 = scalar_lea.vmem [#allocation0], 223
    %199 = vst.msk [vmem:[%s198] sm:$0x2] %vm195, %v194
    %s200 = scalar_lea.vmem [#allocation0], 350
    %201 = vst.msk [vmem:[%s200] sm:$0x4] %vm195, %v194
    %s202 = scalar_lea.vmem [#allocation0], 477
    %203 = vst.msk [vmem:[%s202] sm:$0x8] %vm195, %v194
    %s204 = scalar_lea.vmem [#allocation1], 56
    %v205 = vld [vmem:[%s204] sm:$0xf]
    %vm206 = vcmask 64512
    %s207 = scalar_lea.vmem [#allocation0], 112
    %208 = vst.msk [vmem:[%s207] sm:$0x1] %vm206, %v205
    %s209 = scalar_lea.vmem [#allocation0], 239
    %210 = vst.msk [vmem:[%s209] sm:$0x2] %vm206, %v205
    %s211 = scalar_lea.vmem [#allocation0], 366
    %212 = vst.msk [vmem:[%s211] sm:$0x4] %vm206, %v205
    %s213 = scalar_lea.vmem [#allocation0], 493
    %214 = vst.msk [vmem:[%s213] sm:$0x8] %vm206, %v205
    %v215 = vld.sshfl [vmem:[#allocation1] sm:$0xff pattern:$0xb3a29180]
    %216 = vrot.lane.b32.xlu0 %v215, 120
    %v217 = vpop.permute.xlu0 %216
    %vm218 = vcmask 64512
    %s219 = scalar_lea.vmem [#allocation0], 1
    %220 = vst.msk [vmem:[%s219] ss:$16 sm:$0x3] %vm218, %v217
    %s221 = scalar_lea.vmem [#allocation0], 97
    %222 = vst.msk [vmem:[%s221] ss:$16 sm:$0xc] %vm218, %v217
    %s223 = scalar_lea.vmem [#allocation0], 193
    %224 = vst.msk [vmem:[%s223] ss:$16 sm:$0x30] %vm218, %v217
    %s225 = scalar_lea.vmem [#allocation0], 289
    %226 = vst.msk [vmem:[%s225] ss:$16 sm:$0xc0] %vm218, %v217
    %s227 = scalar_lea.vmem [#allocation1], 16
    %v228 = vld.sshfl [vmem:[%s227] sm:$0xff pattern:$0xb3a29180]
    %229 = vrot.lane.b32.xlu0 %v228, 120
    %v230 = vpop.permute.xlu0 %229
    %vm231 = vcmask 64512
    %s232 = scalar_lea.vmem [#allocation0], 33
    %233 = vst.msk [vmem:[%s232] ss:$16 sm:$0x3] %vm231, %v230
    %s234 = scalar_lea.vmem [#allocation0], 129
    %235 = vst.msk [vmem:[%s234] ss:$16 sm:$0xc] %vm231, %v230
    %s236 = scalar_lea.vmem [#allocation0], 225
    %237 = vst.msk [vmem:[%s236] ss:$16 sm:$0x30] %vm231, %v230
    %s238 = scalar_lea.vmem [#allocation0], 321
    %239 = vst.msk [vmem:[%s238] ss:$16 sm:$0xc0] %vm231, %v230
    %s240 = scalar_lea.vmem [#allocation1], 32
    %v241 = vld.sshfl [vmem:[%s240] sm:$0xff pattern:$0xb3a29180]
    %242 = vrot.lane.b32.xlu0 %v241, 120
    %v243 = vpop.permute.xlu0 %242
    %vm244 = vcmask 64512
    %s245 = scalar_lea.vmem [#allocation0], 65
    %246 = vst.msk [vmem:[%s245] ss:$16 sm:$0x3] %vm244, %v243
    %s247 = scalar_lea.vmem [#allocation0], 161
    %248 = vst.msk [vmem:[%s247] ss:$16 sm:$0xc] %vm244, %v243
    %s249 = scalar_lea.vmem [#allocation0], 257
    %250 = vst.msk [vmem:[%s249] ss:$16 sm:$0x30] %vm244, %v243
    %s251 = scalar_lea.vmem [#allocation0], 353
    %252 = vst.msk [vmem:[%s251] ss:$16 sm:$0xc0] %vm244, %v243
    %s253 = scalar_lea.vmem [#allocation1], 48
    %v254 = vld.sshfl [vmem:[%s253] sm:$0xff pattern:$0xb3a29180]
    %255 = vrot.lane.b32.xlu0 %v254, 120
    %v256 = vpop.permute.xlu0 %255
    %vm257 = vcmask 64512
    %s258 = scalar_lea.vmem [#allocation0], 97
    %259 = vst.msk [vmem:[%s258] ss:$16 sm:$0x3] %vm257, %v256
    %s260 = scalar_lea.vmem [#allocation0], 193
    %261 = vst.msk [vmem:[%s260] ss:$16 sm:$0xc] %vm257, %v256
    %s262 = scalar_lea.vmem [#allocation0], 289
    %263 = vst.msk [vmem:[%s262] ss:$16 sm:$0x30] %vm257, %v256
    %s264 = scalar_lea.vmem [#allocation0], 385
    %265 = vst.msk [vmem:[%s264] ss:$16 sm:$0xc0] %vm257, %v256
    %v266 = vld.sshfl [vmem:[#allocation1] sm:$0xff pattern:$0xb3a29180]
    %267 = vrot.lane.b32.xlu0 %v266, 112
    %v268 = vpop.permute.xlu0 %267
    %vm269 = vcmask 64512
    %s270 = scalar_lea.vmem [#allocation0], 2
    %271 = vst.msk [vmem:[%s270] ss:$16 sm:$0x3] %vm269, %v268
    %s272 = scalar_lea.vmem [#allocation0], 98
    %273 = vst.msk [vmem:[%s272] ss:$16 sm:$0xc] %vm269, %v268
    %s274 = scalar_lea.vmem [#allocation0], 194
    %275 = vst.msk [vmem:[%s274] ss:$16 sm:$0x30] %vm269, %v268
    %s276 = scalar_lea.vmem [#allocation0], 290
    %277 = vst.msk [vmem:[%s276] ss:$16 sm:$0xc0] %vm269, %v268
    %s278 = scalar_lea.vmem [#allocation1], 16
    %v279 = vld.sshfl [vmem:[%s278] sm:$0xff pattern:$0xb3a29180]
    %280 = vrot.lane.b32.xlu0 %v279, 112
    %v281 = vpop.permute.xlu0 %280
    %vm282 = vcmask 64512
    %s283 = scalar_lea.vmem [#allocation0], 34
    %284 = vst.msk [vmem:[%s283] ss:$16 sm:$0x3] %vm282, %v281
    %s285 = scalar_lea.vmem [#allocation0], 130
    %286 = vst.msk [vmem:[%s285] ss:$16 sm:$0xc] %vm282, %v281
    %s287 = scalar_lea.vmem [#allocation0], 226
    %288 = vst.msk [vmem:[%s287] ss:$16 sm:$0x30] %vm282, %v281
    %s289 = scalar_lea.vmem [#allocation0], 322
    %290 = vst.msk [vmem:[%s289] ss:$16 sm:$0xc0] %vm282, %v281
    %s291 = scalar_lea.vmem [#allocation1], 32
    %v292 = vld.sshfl [vmem:[%s291] sm:$0xff pattern:$0xb3a29180]
    %293 = vrot.lane.b32.xlu0 %v292, 112
    %v294 = vpop.permute.xlu0 %293
    %vm295 = vcmask 64512
    %s296 = scalar_lea.vmem [#allocation0], 66
    %297 = vst.msk [vmem:[%s296] ss:$16 sm:$0x3] %vm295, %v294
    %s298 = scalar_lea.vmem [#allocation0], 162
    %299 = vst.msk [vmem:[%s298] ss:$16 sm:$0xc] %vm295, %v294
    %s300 = scalar_lea.vmem [#allocation0], 258
    %301 = vst.msk [vmem:[%s300] ss:$16 sm:$0x30] %vm295, %v294
    %s302 = scalar_lea.vmem [#allocation0], 354
    %303 = vst.msk [vmem:[%s302] ss:$16 sm:$0xc0] %vm295, %v294
    %s304 = scalar_lea.vmem [#allocation1], 48
    %v305 = vld.sshfl [vmem:[%s304] sm:$0xff pattern:$0xb3a29180]
    %306 = vrot.lane.b32.xlu0 %v305, 112
    %v307 = vpop.permute.xlu0 %306
    %vm308 = vcmask 64512
    %s309 = scalar_lea.vmem [#allocation0], 98
    %310 = vst.msk [vmem:[%s309] ss:$16 sm:$0x3] %vm308, %v307
    %s311 = scalar_lea.vmem [#allocation0], 194
    %312 = vst.msk [vmem:[%s311] ss:$16 sm:$0xc] %vm308, %v307
    %s313 = scalar_lea.vmem [#allocation0], 290
    %314 = vst.msk [vmem:[%s313] ss:$16 sm:$0x30] %vm308, %v307
    %s315 = scalar_lea.vmem [#allocation0], 386
    %316 = vst.msk [vmem:[%s315] ss:$16 sm:$0xc0] %vm308, %v307
    %v317 = vld.sshfl [vmem:[#allocation1] sm:$0xff pattern:$0xb3a29180]
    %318 = vrot.lane.b32.xlu0 %v317, 104
    %v319 = vpop.permute.xlu0 %318
    %vm320 = vcmask 64512
    %s321 = scalar_lea.vmem [#allocation0], 3
    %322 = vst.msk [vmem:[%s321] ss:$16 sm:$0x3] %vm320, %v319
    %s323 = scalar_lea.vmem [#allocation0], 99
    %324 = vst.msk [vmem:[%s323] ss:$16 sm:$0xc] %vm320, %v319
    %s325 = scalar_lea.vmem [#allocation0], 195
    %326 = vst.msk [vmem:[%s325] ss:$16 sm:$0x30] %vm320, %v319
    %s327 = scalar_lea.vmem [#allocation0], 291
    %328 = vst.msk [vmem:[%s327] ss:$16 sm:$0xc0] %vm320, %v319
    %s329 = scalar_lea.vmem [#allocation1], 16
    %v330 = vld.sshfl [vmem:[%s329] sm:$0xff pattern:$0xb3a29180]
    %331 = vrot.lane.b32.xlu0 %v330, 104
    %v332 = vpop.permute.xlu0 %331
    %vm333 = vcmask 64512
    %s334 = scalar_lea.vmem [#allocation0], 35
    %335 = vst.msk [vmem:[%s334] ss:$16 sm:$0x3] %vm333, %v332
    %s336 = scalar_lea.vmem [#allocation0], 131
    %337 = vst.msk [vmem:[%s336] ss:$16 sm:$0xc] %vm333, %v332
    %s338 = scalar_lea.vmem [#allocation0], 227
    %339 = vst.msk [vmem:[%s338] ss:$16 sm:$0x30] %vm333, %v332
    %s340 = scalar_lea.vmem [#allocation0], 323
    %341 = vst.msk [vmem:[%s340] ss:$16 sm:$0xc0] %vm333, %v332
    %s342 = scalar_lea.vmem [#allocation1], 32
    %v343 = vld.sshfl [vmem:[%s342] sm:$0xff pattern:$0xb3a29180]
    %344 = vrot.lane.b32.xlu0 %v343, 104
    %v345 = vpop.permute.xlu0 %344
    %vm346 = vcmask 64512
    %s347 = scalar_lea.vmem [#allocation0], 67
    %348 = vst.msk [vmem:[%s347] ss:$16 sm:$0x3] %vm346, %v345
    %s349 = scalar_lea.vmem [#allocation0], 163
    %350 = vst.msk [vmem:[%s349] ss:$16 sm:$0xc] %vm346, %v345
    %s351 = scalar_lea.vmem [#allocation0], 259
    %352 = vst.msk [vmem:[%s351] ss:$16 sm:$0x30] %vm346, %v345
    %s353 = scalar_lea.vmem [#allocation0], 355
    %354 = vst.msk [vmem:[%s353] ss:$16 sm:$0xc0] %vm346, %v345
    %s355 = scalar_lea.vmem [#allocation1], 48
    %v356 = vld.sshfl [vmem:[%s355] sm:$0xff pattern:$0xb3a29180]
    %357 = vrot.lane.b32.xlu0 %v356, 104
    %v358 = vpop.permute.xlu0 %357
    %vm359 = vcmask 64512
    %s360 = scalar_lea.vmem [#allocation0], 99
    %361 = vst.msk [vmem:[%s360] ss:$16 sm:$0x3] %vm359, %v358
    %s362 = scalar_lea.vmem [#allocation0], 195
    %363 = vst.msk [vmem:[%s362] ss:$16 sm:$0xc] %vm359, %v358
    %s364 = scalar_lea.vmem [#allocation0], 291
    %365 = vst.msk [vmem:[%s364] ss:$16 sm:$0x30] %vm359, %v358
    %s366 = scalar_lea.vmem [#allocation0], 387
    %367 = vst.msk [vmem:[%s366] ss:$16 sm:$0xc0] %vm359, %v358
    %v368 = vld.sshfl [vmem:[#allocation1] sm:$0xff pattern:$0xb3a29180]
    %369 = vrot.lane.b32.xlu0 %v368, 96
    %v370 = vpop.permute.xlu0 %369
    %vm371 = vcmask 64512
    %s372 = scalar_lea.vmem [#allocation0], 4
    %373 = vst.msk [vmem:[%s372] ss:$16 sm:$0x3] %vm371, %v370
    %s374 = scalar_lea.vmem [#allocation0], 100
    %375 = vst.msk [vmem:[%s374] ss:$16 sm:$0xc] %vm371, %v370
    %s376 = scalar_lea.vmem [#allocation0], 196
    %377 = vst.msk [vmem:[%s376] ss:$16 sm:$0x30] %vm371, %v370
    %s378 = scalar_lea.vmem [#allocation0], 292
    %379 = vst.msk [vmem:[%s378] ss:$16 sm:$0xc0] %vm371, %v370
    %s380 = scalar_lea.vmem [#allocation1], 16
    %v381 = vld.sshfl [vmem:[%s380] sm:$0xff pattern:$0xb3a29180]
    %382 = vrot.lane.b32.xlu0 %v381, 96
    %v383 = vpop.permute.xlu0 %382
    %vm384 = vcmask 64512
    %s385 = scalar_lea.vmem [#allocation0], 36
    %386 = vst.msk [vmem:[%s385] ss:$16 sm:$0x3] %vm384, %v383
    %s387 = scalar_lea.vmem [#allocation0], 132
    %388 = vst.msk [vmem:[%s387] ss:$16 sm:$0xc] %vm384, %v383
    %s389 = scalar_lea.vmem [#allocation0], 228
    %390 = vst.msk [vmem:[%s389] ss:$16 sm:$0x30] %vm384, %v383
    %s391 = scalar_lea.vmem [#allocation0], 324
    %392 = vst.msk [vmem:[%s391] ss:$16 sm:$0xc0] %vm384, %v383
    %s393 = scalar_lea.vmem [#allocation1], 32
    %v394 = vld.sshfl [vmem:[%s393] sm:$0xff pattern:$0xb3a29180]
    %395 = vrot.lane.b32.xlu0 %v394, 96
    %v396 = vpop.permute.xlu0 %395
    %vm397 = vcmask 64512
    %s398 = scalar_lea.vmem [#allocation0], 68
    %399 = vst.msk [vmem:[%s398] ss:$16 sm:$0x3] %vm397, %v396
    %s400 = scalar_lea.vmem [#allocation0], 164
    %401 = vst.msk [vmem:[%s400] ss:$16 sm:$0xc] %vm397, %v396
    %s402 = scalar_lea.vmem [#allocation0], 260
    %403 = vst.msk [vmem:[%s402] ss:$16 sm:$0x30] %vm397, %v396
    %s404 = scalar_lea.vmem [#allocation0], 356
    %405 = vst.msk [vmem:[%s404] ss:$16 sm:$0xc0] %vm397, %v396
    %s406 = scalar_lea.vmem [#allocation1], 48
    %v407 = vld.sshfl [vmem:[%s406] sm:$0xff pattern:$0xb3a29180]
    %408 = vrot.lane.b32.xlu0 %v407, 96
    %v409 = vpop.permute.xlu0 %408
    %vm410 = vcmask 64512
    %s411 = scalar_lea.vmem [#allocation0], 100
    %412 = vst.msk [vmem:[%s411] ss:$16 sm:$0x3] %vm410, %v409
    %s413 = scalar_lea.vmem [#allocation0], 196
    %414 = vst.msk [vmem:[%s413] ss:$16 sm:$0xc] %vm410, %v409
    %s415 = scalar_lea.vmem [#allocation0], 292
    %416 = vst.msk [vmem:[%s415] ss:$16 sm:$0x30] %vm410, %v409
    %s417 = scalar_lea.vmem [#allocation0], 388
    %418 = vst.msk [vmem:[%s417] ss:$16 sm:$0xc0] %vm410, %v409
    %v419 = vld.sshfl [vmem:[#allocation1] sm:$0xff pattern:$0xb3a29180]
    %420 = vrot.lane.b32.xlu0 %v419, 88
    %v421 = vpop.permute.xlu0 %420
    %vm422 = vcmask 64512
    %s423 = scalar_lea.vmem [#allocation0], 5
    %424 = vst.msk [vmem:[%s423] ss:$16 sm:$0x3] %vm422, %v421
    %s425 = scalar_lea.vmem [#allocation0], 101
    %426 = vst.msk [vmem:[%s425] ss:$16 sm:$0xc] %vm422, %v421
    %s427 = scalar_lea.vmem [#allocation0], 197
    %428 = vst.msk [vmem:[%s427] ss:$16 sm:$0x30] %vm422, %v421
    %s429 = scalar_lea.vmem [#allocation0], 293
    %430 = vst.msk [vmem:[%s429] ss:$16 sm:$0xc0] %vm422, %v421
    %s431 = scalar_lea.vmem [#allocation1], 16
    %v432 = vld.sshfl [vmem:[%s431] sm:$0xff pattern:$0xb3a29180]
    %433 = vrot.lane.b32.xlu0 %v432, 88
    %v434 = vpop.permute.xlu0 %433
    %vm435 = vcmask 64512
    %s436 = scalar_lea.vmem [#allocation0], 37
    %437 = vst.msk [vmem:[%s436] ss:$16 sm:$0x3] %vm435, %v434
    %s438 = scalar_lea.vmem [#allocation0], 133
    %439 = vst.msk [vmem:[%s438] ss:$16 sm:$0xc] %vm435, %v434
    %s440 = scalar_lea.vmem [#allocation0], 229
    %441 = vst.msk [vmem:[%s440] ss:$16 sm:$0x30] %vm435, %v434
    %s442 = scalar_lea.vmem [#allocation0], 325
    %443 = vst.msk [vmem:[%s442] ss:$16 sm:$0xc0] %vm435, %v434
    %s444 = scalar_lea.vmem [#allocation1], 32
    %v445 = vld.sshfl [vmem:[%s444] sm:$0xff pattern:$0xb3a29180]
    %446 = vrot.lane.b32.xlu0 %v445, 88
    %v447 = vpop.permute.xlu0 %446
    %vm448 = vcmask 64512
    %s449 = scalar_lea.vmem [#allocation0], 69
    %450 = vst.msk [vmem:[%s449] ss:$16 sm:$0x3] %vm448, %v447
    %s451 = scalar_lea.vmem [#allocation0], 165
    %452 = vst.msk [vmem:[%s451] ss:$16 sm:$0xc] %vm448, %v447
    %s453 = scalar_lea.vmem [#allocation0], 261
    %454 = vst.msk [vmem:[%s453] ss:$16 sm:$0x30] %vm448, %v447
    %s455 = scalar_lea.vmem [#allocation0], 357
    %456 = vst.msk [vmem:[%s455] ss:$16 sm:$0xc0] %vm448, %v447
    %s457 = scalar_lea.vmem [#allocation1], 48
    %v458 = vld.sshfl [vmem:[%s457] sm:$0xff pattern:$0xb3a29180]
    %459 = vrot.lane.b32.xlu0 %v458, 88
    %v460 = vpop.permute.xlu0 %459
    %vm461 = vcmask 64512
    %s462 = scalar_lea.vmem [#allocation0], 101
    %463 = vst.msk [vmem:[%s462] ss:$16 sm:$0x3] %vm461, %v460
    %s464 = scalar_lea.vmem [#allocation0], 197
    %465 = vst.msk [vmem:[%s464] ss:$16 sm:$0xc] %vm461, %v460
    %s466 = scalar_lea.vmem [#allocation0], 293
    %467 = vst.msk [vmem:[%s466] ss:$16 sm:$0x30] %vm461, %v460
    %s468 = scalar_lea.vmem [#allocation0], 389
    %469 = vst.msk [vmem:[%s468] ss:$16 sm:$0xc0] %vm461, %v460
    %v470 = vld.sshfl [vmem:[#allocation1] sm:$0xff pattern:$0xb3a29180]
    %471 = vrot.lane.b32.xlu0 %v470, 80
    %v472 = vpop.permute.xlu0 %471
    %vm473 = vcmask 64512
    %s474 = scalar_lea.vmem [#allocation0], 6
    %475 = vst.msk [vmem:[%s474] ss:$16 sm:$0x3] %vm473, %v472
    %s476 = scalar_lea.vmem [#allocation0], 102
    %477 = vst.msk [vmem:[%s476] ss:$16 sm:$0xc] %vm473, %v472
    %s478 = scalar_lea.vmem [#allocation0], 198
    %479 = vst.msk [vmem:[%s478] ss:$16 sm:$0x30] %vm473, %v472
    %s480 = scalar_lea.vmem [#allocation0], 294
    %481 = vst.msk [vmem:[%s480] ss:$16 sm:$0xc0] %vm473, %v472
    %s482 = scalar_lea.vmem [#allocation1], 16
    %v483 = vld.sshfl [vmem:[%s482] sm:$0xff pattern:$0xb3a29180]
    %484 = vrot.lane.b32.xlu0 %v483, 80
    %v485 = vpop.permute.xlu0 %484
    %vm486 = vcmask 64512
    %s487 = scalar_lea.vmem [#allocation0], 38
    %488 = vst.msk [vmem:[%s487] ss:$16 sm:$0x3] %vm486, %v485
    %s489 = scalar_lea.vmem [#allocation0], 134
    %490 = vst.msk [vmem:[%s489] ss:$16 sm:$0xc] %vm486, %v485
    %s491 = scalar_lea.vmem [#allocation0], 230
    %492 = vst.msk [vmem:[%s491] ss:$16 sm:$0x30] %vm486, %v485
    %s493 = scalar_lea.vmem [#allocation0], 326
    %494 = vst.msk [vmem:[%s493] ss:$16 sm:$0xc0] %vm486, %v485
    %s495 = scalar_lea.vmem [#allocation1], 32
    %v496 = vld.sshfl [vmem:[%s495] sm:$0xff pattern:$0xb3a29180]
    %497 = vrot.lane.b32.xlu0 %v496, 80
    %v498 = vpop.permute.xlu0 %497
    %vm499 = vcmask 64512
    %s500 = scalar_lea.vmem [#allocation0], 70
    %501 = vst.msk [vmem:[%s500] ss:$16 sm:$0x3] %vm499, %v498
    %s502 = scalar_lea.vmem [#allocation0], 166
    %503 = vst.msk [vmem:[%s502] ss:$16 sm:$0xc] %vm499, %v498
    %s504 = scalar_lea.vmem [#allocation0], 262
    %505 = vst.msk [vmem:[%s504] ss:$16 sm:$0x30] %vm499, %v498
    %s506 = scalar_lea.vmem [#allocation0], 358
    %507 = vst.msk [vmem:[%s506] ss:$16 sm:$0xc0] %vm499, %v498
    %s508 = scalar_lea.vmem [#allocation1], 48
    %v509 = vld.sshfl [vmem:[%s508] sm:$0xff pattern:$0xb3a29180]
    %510 = vrot.lane.b32.xlu0 %v509, 80
    %v511 = vpop.permute.xlu0 %510
    %vm512 = vcmask 64512
    %s513 = scalar_lea.vmem [#allocation0], 102
    %514 = vst.msk [vmem:[%s513] ss:$16 sm:$0x3] %vm512, %v511
    %s515 = scalar_lea.vmem [#allocation0], 198
    %516 = vst.msk [vmem:[%s515] ss:$16 sm:$0xc] %vm512, %v511
    %s517 = scalar_lea.vmem [#allocation0], 294
    %518 = vst.msk [vmem:[%s517] ss:$16 sm:$0x30] %vm512, %v511
    %s519 = scalar_lea.vmem [#allocation0], 390
    %520 = vst.msk [vmem:[%s519] ss:$16 sm:$0xc0] %vm512, %v511
    %v521 = vld.sshfl [vmem:[#allocation1] sm:$0xff pattern:$0xb3a29180]
    %522 = vrot.lane.b32.xlu0 %v521, 72
    %v523 = vpop.permute.xlu0 %522
    %vm524 = vcmask 64512
    %s525 = scalar_lea.vmem [#allocation0], 7
    %526 = vst.msk [vmem:[%s525] ss:$16 sm:$0x3] %vm524, %v523
    %s527 = scalar_lea.vmem [#allocation0], 103
    %528 = vst.msk [vmem:[%s527] ss:$16 sm:$0xc] %vm524, %v523
    %s529 = scalar_lea.vmem [#allocation0], 199
    %530 = vst.msk [vmem:[%s529] ss:$16 sm:$0x30] %vm524, %v523
    %s531 = scalar_lea.vmem [#allocation0], 295
    %532 = vst.msk [vmem:[%s531] ss:$16 sm:$0xc0] %vm524, %v523
    %s533 = scalar_lea.vmem [#allocation1], 16
    %v534 = vld.sshfl [vmem:[%s533] sm:$0xff pattern:$0xb3a29180]
    %535 = vrot.lane.b32.xlu0 %v534, 72
    %v536 = vpop.permute.xlu0 %535
    %vm537 = vcmask 64512
    %s538 = scalar_lea.vmem [#allocation0], 39
    %539 = vst.msk [vmem:[%s538] ss:$16 sm:$0x3] %vm537, %v536
    %s540 = scalar_lea.vmem [#allocation0], 135
    %541 = vst.msk [vmem:[%s540] ss:$16 sm:$0xc] %vm537, %v536
    %s542 = scalar_lea.vmem [#allocation0], 231
    %543 = vst.msk [vmem:[%s542] ss:$16 sm:$0x30] %vm537, %v536
    %s544 = scalar_lea.vmem [#allocation0], 327
    %545 = vst.msk [vmem:[%s544] ss:$16 sm:$0xc0] %vm537, %v536
    %s546 = scalar_lea.vmem [#allocation1], 32
    %v547 = vld.sshfl [vmem:[%s546] sm:$0xff pattern:$0xb3a29180]
    %548 = vrot.lane.b32.xlu0 %v547, 72
    %v549 = vpop.permute.xlu0 %548
    %vm550 = vcmask 64512
    %s551 = scalar_lea.vmem [#allocation0], 71
    %552 = vst.msk [vmem:[%s551] ss:$16 sm:$0x3] %vm550, %v549
    %s553 = scalar_lea.vmem [#allocation0], 167
    %554 = vst.msk [vmem:[%s553] ss:$16 sm:$0xc] %vm550, %v549
    %s555 = scalar_lea.vmem [#allocation0], 263
    %556 = vst.msk [vmem:[%s555] ss:$16 sm:$0x30] %vm550, %v549
    %s557 = scalar_lea.vmem [#allocation0], 359
    %558 = vst.msk [vmem:[%s557] ss:$16 sm:$0xc0] %vm550, %v549
    %s559 = scalar_lea.vmem [#allocation1], 48
    %v560 = vld.sshfl [vmem:[%s559] sm:$0xff pattern:$0xb3a29180]
    %561 = vrot.lane.b32.xlu0 %v560, 72
    %v562 = vpop.permute.xlu0 %561
    %vm563 = vcmask 64512
    %s564 = scalar_lea.vmem [#allocation0], 103
    %565 = vst.msk [vmem:[%s564] ss:$16 sm:$0x3] %vm563, %v562
    %s566 = scalar_lea.vmem [#allocation0], 199
    %567 = vst.msk [vmem:[%s566] ss:$16 sm:$0xc] %vm563, %v562
    %s568 = scalar_lea.vmem [#allocation0], 295
    %569 = vst.msk [vmem:[%s568] ss:$16 sm:$0x30] %vm563, %v562
    %s570 = scalar_lea.vmem [#allocation0], 391
    %571 = vst.msk [vmem:[%s570] ss:$16 sm:$0xc0] %vm563, %v562
    %v572 = vld.sshfl [vmem:[#allocation1] sm:$0xff pattern:$0xb3a29180]
    %573 = vrot.lane.b32.xlu0 %v572, 64
    %v574 = vpop.permute.xlu0 %573
    %vm575 = vcmask 64512
    %s576 = scalar_lea.vmem [#allocation0], 8
    %577 = vst.msk [vmem:[%s576] ss:$16 sm:$0x3] %vm575, %v574
    %s578 = scalar_lea.vmem [#allocation0], 104
    %579 = vst.msk [vmem:[%s578] ss:$16 sm:$0xc] %vm575, %v574
    %s580 = scalar_lea.vmem [#allocation0], 200
    %581 = vst.msk [vmem:[%s580] ss:$16 sm:$0x30] %vm575, %v574
    %s582 = scalar_lea.vmem [#allocation0], 296
    %583 = vst.msk [vmem:[%s582] ss:$16 sm:$0xc0] %vm575, %v574
    %s584 = scalar_lea.vmem [#allocation1], 16
    %v585 = vld.sshfl [vmem:[%s584] sm:$0xff pattern:$0xb3a29180]
    %586 = vrot.lane.b32.xlu0 %v585, 64
    %v587 = vpop.permute.xlu0 %586
    %vm588 = vcmask 64512
    %s589 = scalar_lea.vmem [#allocation0], 40
    %590 = vst.msk [vmem:[%s589] ss:$16 sm:$0x3] %vm588, %v587
    %s591 = scalar_lea.vmem [#allocation0], 136
    %592 = vst.msk [vmem:[%s591] ss:$16 sm:$0xc] %vm588, %v587
    %s593 = scalar_lea.vmem [#allocation0], 232
    %594 = vst.msk [vmem:[%s593] ss:$16 sm:$0x30] %vm588, %v587
    %s595 = scalar_lea.vmem [#allocation0], 328
    %596 = vst.msk [vmem:[%s595] ss:$16 sm:$0xc0] %vm588, %v587
    %s597 = scalar_lea.vmem [#allocation1], 32
    %v598 = vld.sshfl [vmem:[%s597] sm:$0xff pattern:$0xb3a29180]
    %599 = vrot.lane.b32.xlu0 %v598, 64
    %v600 = vpop.permute.xlu0 %599
    %vm601 = vcmask 64512
    %s602 = scalar_lea.vmem [#allocation0], 72
    %603 = vst.msk [vmem:[%s602] ss:$16 sm:$0x3] %vm601, %v600
    %s604 = scalar_lea.vmem [#allocation0], 168
    %605 = vst.msk [vmem:[%s604] ss:$16 sm:$0xc] %vm601, %v600
    %s606 = scalar_lea.vmem [#allocation0], 264
    %607 = vst.msk [vmem:[%s606] ss:$16 sm:$0x30] %vm601, %v600
    %s608 = scalar_lea.vmem [#allocation0], 360
    %609 = vst.msk [vmem:[%s608] ss:$16 sm:$0xc0] %vm601, %v600
    %s610 = scalar_lea.vmem [#allocation1], 48
    %v611 = vld.sshfl [vmem:[%s610] sm:$0xff pattern:$0xb3a29180]
    %612 = vrot.lane.b32.xlu0 %v611, 64
    %v613 = vpop.permute.xlu0 %612
    %vm614 = vcmask 64512
    %s615 = scalar_lea.vmem [#allocation0], 104
    %616 = vst.msk [vmem:[%s615] ss:$16 sm:$0x3] %vm614, %v613
    %s617 = scalar_lea.vmem [#allocation0], 200
    %618 = vst.msk [vmem:[%s617] ss:$16 sm:$0xc] %vm614, %v613
    %s619 = scalar_lea.vmem [#allocation0], 296
    %620 = vst.msk [vmem:[%s619] ss:$16 sm:$0x30] %vm614, %v613
    %s621 = scalar_lea.vmem [#allocation0], 392
    %622 = vst.msk [vmem:[%s621] ss:$16 sm:$0xc0] %vm614, %v613
    %v623 = vld.sshfl [vmem:[#allocation1] sm:$0xff pattern:$0xb3a29180]
    %624 = vrot.lane.b32.xlu0 %v623, 56
    %v625 = vpop.permute.xlu0 %624
    %vm626 = vcmask 64512
    %s627 = scalar_lea.vmem [#allocation0], 9
    %628 = vst.msk [vmem:[%s627] ss:$16 sm:$0x3] %vm626, %v625
    %s629 = scalar_lea.vmem [#allocation0], 105
    %630 = vst.msk [vmem:[%s629] ss:$16 sm:$0xc] %vm626, %v625
    %s631 = scalar_lea.vmem [#allocation0], 201
    %632 = vst.msk [vmem:[%s631] ss:$16 sm:$0x30] %vm626, %v625
    %s633 = scalar_lea.vmem [#allocation0], 297
    %634 = vst.msk [vmem:[%s633] ss:$16 sm:$0xc0] %vm626, %v625
    %s635 = scalar_lea.vmem [#allocation1], 16
    %v636 = vld.sshfl [vmem:[%s635] sm:$0xff pattern:$0xb3a29180]
    %637 = vrot.lane.b32.xlu0 %v636, 56
    %v638 = vpop.permute.xlu0 %637
    %vm639 = vcmask 64512
    %s640 = scalar_lea.vmem [#allocation0], 41
    %641 = vst.msk [vmem:[%s640] ss:$16 sm:$0x3] %vm639, %v638
    %s642 = scalar_lea.vmem [#allocation0], 137
    %643 = vst.msk [vmem:[%s642] ss:$16 sm:$0xc] %vm639, %v638
    %s644 = scalar_lea.vmem [#allocation0], 233
    %645 = vst.msk [vmem:[%s644] ss:$16 sm:$0x30] %vm639, %v638
    %s646 = scalar_lea.vmem [#allocation0], 329
    %647 = vst.msk [vmem:[%s646] ss:$16 sm:$0xc0] %vm639, %v638
    %s648 = scalar_lea.vmem [#allocation1], 32
    %v649 = vld.sshfl [vmem:[%s648] sm:$0xff pattern:$0xb3a29180]
    %650 = vrot.lane.b32.xlu0 %v649, 56
    %v651 = vpop.permute.xlu0 %650
    %vm652 = vcmask 64512
    %s653 = scalar_lea.vmem [#allocation0], 73
    %654 = vst.msk [vmem:[%s653] ss:$16 sm:$0x3] %vm652, %v651
    %s655 = scalar_lea.vmem [#allocation0], 169
    %656 = vst.msk [vmem:[%s655] ss:$16 sm:$0xc] %vm652, %v651
    %s657 = scalar_lea.vmem [#allocation0], 265
    %658 = vst.msk [vmem:[%s657] ss:$16 sm:$0x30] %vm652, %v651
    %s659 = scalar_lea.vmem [#allocation0], 361
    %660 = vst.msk [vmem:[%s659] ss:$16 sm:$0xc0] %vm652, %v651
    %s661 = scalar_lea.vmem [#allocation1], 48
    %v662 = vld.sshfl [vmem:[%s661] sm:$0xff pattern:$0xb3a29180]
    %663 = vrot.lane.b32.xlu0 %v662, 56
    %v664 = vpop.permute.xlu0 %663
    %vm665 = vcmask 64512
    %s666 = scalar_lea.vmem [#allocation0], 105
    %667 = vst.msk [vmem:[%s666] ss:$16 sm:$0x3] %vm665, %v664
    %s668 = scalar_lea.vmem [#allocation0], 201
    %669 = vst.msk [vmem:[%s668] ss:$16 sm:$0xc] %vm665, %v664
    %s670 = scalar_lea.vmem [#allocation0], 297
    %671 = vst.msk [vmem:[%s670] ss:$16 sm:$0x30] %vm665, %v664
    %s672 = scalar_lea.vmem [#allocation0], 393
    %673 = vst.msk [vmem:[%s672] ss:$16 sm:$0xc0] %vm665, %v664
    %v674 = vld.sshfl [vmem:[#allocation1] sm:$0xff pattern:$0xb3a29180]
    %675 = vrot.lane.b32.xlu0 %v674, 48
    %v676 = vpop.permute.xlu0 %675
    %vm677 = vcmask 64512
    %s678 = scalar_lea.vmem [#allocation0], 10
    %679 = vst.msk [vmem:[%s678] ss:$16 sm:$0x3] %vm677, %v676
    %s680 = scalar_lea.vmem [#allocation0], 106
    %681 = vst.msk [vmem:[%s680] ss:$16 sm:$0xc] %vm677, %v676
    %s682 = scalar_lea.vmem [#allocation0], 202
    %683 = vst.msk [vmem:[%s682] ss:$16 sm:$0x30] %vm677, %v676
    %s684 = scalar_lea.vmem [#allocation0], 298
    %685 = vst.msk [vmem:[%s684] ss:$16 sm:$0xc0] %vm677, %v676
    %s686 = scalar_lea.vmem [#allocation1], 16
    %v687 = vld.sshfl [vmem:[%s686] sm:$0xff pattern:$0xb3a29180]
    %688 = vrot.lane.b32.xlu0 %v687, 48
    %v689 = vpop.permute.xlu0 %688
    %vm690 = vcmask 64512
    %s691 = scalar_lea.vmem [#allocation0], 42
    %692 = vst.msk [vmem:[%s691] ss:$16 sm:$0x3] %vm690, %v689
    %s693 = scalar_lea.vmem [#allocation0], 138
    %694 = vst.msk [vmem:[%s693] ss:$16 sm:$0xc] %vm690, %v689
    %s695 = scalar_lea.vmem [#allocation0], 234
    %696 = vst.msk [vmem:[%s695] ss:$16 sm:$0x30] %vm690, %v689
    %s697 = scalar_lea.vmem [#allocation0], 330
    %698 = vst.msk [vmem:[%s697] ss:$16 sm:$0xc0] %vm690, %v689
    %s699 = scalar_lea.vmem [#allocation1], 32
    %v700 = vld.sshfl [vmem:[%s699] sm:$0xff pattern:$0xb3a29180]
    %701 = vrot.lane.b32.xlu0 %v700, 48
    %v702 = vpop.permute.xlu0 %701
    %vm703 = vcmask 64512
    %s704 = scalar_lea.vmem [#allocation0], 74
    %705 = vst.msk [vmem:[%s704] ss:$16 sm:$0x3] %vm703, %v702
    %s706 = scalar_lea.vmem [#allocation0], 170
    %707 = vst.msk [vmem:[%s706] ss:$16 sm:$0xc] %vm703, %v702
    %s708 = scalar_lea.vmem [#allocation0], 266
    %709 = vst.msk [vmem:[%s708] ss:$16 sm:$0x30] %vm703, %v702
    %s710 = scalar_lea.vmem [#allocation0], 362
    %711 = vst.msk [vmem:[%s710] ss:$16 sm:$0xc0] %vm703, %v702
    %s712 = scalar_lea.vmem [#allocation1], 48
    %v713 = vld.sshfl [vmem:[%s712] sm:$0xff pattern:$0xb3a29180]
    %714 = vrot.lane.b32.xlu0 %v713, 48
    %v715 = vpop.permute.xlu0 %714
    %vm716 = vcmask 64512
    %s717 = scalar_lea.vmem [#allocation0], 106
    %718 = vst.msk [vmem:[%s717] ss:$16 sm:$0x3] %vm716, %v715
    %s719 = scalar_lea.vmem [#allocation0], 202
    %720 = vst.msk [vmem:[%s719] ss:$16 sm:$0xc] %vm716, %v715
    %s721 = scalar_lea.vmem [#allocation0], 298
    %722 = vst.msk [vmem:[%s721] ss:$16 sm:$0x30] %vm716, %v715
    %s723 = scalar_lea.vmem [#allocation0], 394
    %724 = vst.msk [vmem:[%s723] ss:$16 sm:$0xc0] %vm716, %v715
    %v725 = vld.sshfl [vmem:[#allocation1] sm:$0xff pattern:$0xb3a29180]
    %726 = vrot.lane.b32.xlu0 %v725, 40
    %v727 = vpop.permute.xlu0 %726
    %vm728 = vcmask 64512
    %s729 = scalar_lea.vmem [#allocation0], 11
    %730 = vst.msk [vmem:[%s729] ss:$16 sm:$0x3] %vm728, %v727
    %s731 = scalar_lea.vmem [#allocation0], 107
    %732 = vst.msk [vmem:[%s731] ss:$16 sm:$0xc] %vm728, %v727
    %s733 = scalar_lea.vmem [#allocation0], 203
    %734 = vst.msk [vmem:[%s733] ss:$16 sm:$0x30] %vm728, %v727
    %s735 = scalar_lea.vmem [#allocation0], 299
    %736 = vst.msk [vmem:[%s735] ss:$16 sm:$0xc0] %vm728, %v727
    %s737 = scalar_lea.vmem [#allocation1], 16
    %v738 = vld.sshfl [vmem:[%s737] sm:$0xff pattern:$0xb3a29180]
    %739 = vrot.lane.b32.xlu0 %v738, 40
    %v740 = vpop.permute.xlu0 %739
    %vm741 = vcmask 64512
    %s742 = scalar_lea.vmem [#allocation0], 43
    %743 = vst.msk [vmem:[%s742] ss:$16 sm:$0x3] %vm741, %v740
    %s744 = scalar_lea.vmem [#allocation0], 139
    %745 = vst.msk [vmem:[%s744] ss:$16 sm:$0xc] %vm741, %v740
    %s746 = scalar_lea.vmem [#allocation0], 235
    %747 = vst.msk [vmem:[%s746] ss:$16 sm:$0x30] %vm741, %v740
    %s748 = scalar_lea.vmem [#allocation0], 331
    %749 = vst.msk [vmem:[%s748] ss:$16 sm:$0xc0] %vm741, %v740
    %s750 = scalar_lea.vmem [#allocation1], 32
    %v751 = vld.sshfl [vmem:[%s750] sm:$0xff pattern:$0xb3a29180]
    %752 = vrot.lane.b32.xlu0 %v751, 40
    %v753 = vpop.permute.xlu0 %752
    %vm754 = vcmask 64512
    %s755 = scalar_lea.vmem [#allocation0], 75
    %756 = vst.msk [vmem:[%s755] ss:$16 sm:$0x3] %vm754, %v753
    %s757 = scalar_lea.vmem [#allocation0], 171
    %758 = vst.msk [vmem:[%s757] ss:$16 sm:$0xc] %vm754, %v753
    %s759 = scalar_lea.vmem [#allocation0], 267
    %760 = vst.msk [vmem:[%s759] ss:$16 sm:$0x30] %vm754, %v753
    %s761 = scalar_lea.vmem [#allocation0], 363
    %762 = vst.msk [vmem:[%s761] ss:$16 sm:$0xc0] %vm754, %v753
    %s763 = scalar_lea.vmem [#allocation1], 48
    %v764 = vld.sshfl [vmem:[%s763] sm:$0xff pattern:$0xb3a29180]
    %765 = vrot.lane.b32.xlu0 %v764, 40
    %v766 = vpop.permute.xlu0 %765
    %vm767 = vcmask 64512
    %s768 = scalar_lea.vmem [#allocation0], 107
    %769 = vst.msk [vmem:[%s768] ss:$16 sm:$0x3] %vm767, %v766
    %s770 = scalar_lea.vmem [#allocation0], 203
    %771 = vst.msk [vmem:[%s770] ss:$16 sm:$0xc] %vm767, %v766
    %s772 = scalar_lea.vmem [#allocation0], 299
    %773 = vst.msk [vmem:[%s772] ss:$16 sm:$0x30] %vm767, %v766
    %s774 = scalar_lea.vmem [#allocation0], 395
    %775 = vst.msk [vmem:[%s774] ss:$16 sm:$0xc0] %vm767, %v766
    %v776 = vld.sshfl [vmem:[#allocation1] sm:$0xff pattern:$0xb3a29180]
    %777 = vrot.lane.b32.xlu0 %v776, 32
    %v778 = vpop.permute.xlu0 %777
    %vm779 = vcmask 64512
    %s780 = scalar_lea.vmem [#allocation0], 12
    %781 = vst.msk [vmem:[%s780] ss:$16 sm:$0x3] %vm779, %v778
    %s782 = scalar_lea.vmem [#allocation0], 108
    %783 = vst.msk [vmem:[%s782] ss:$16 sm:$0xc] %vm779, %v778
    %s784 = scalar_lea.vmem [#allocation0], 204
    %785 = vst.msk [vmem:[%s784] ss:$16 sm:$0x30] %vm779, %v778
    %s786 = scalar_lea.vmem [#allocation0], 300
    %787 = vst.msk [vmem:[%s786] ss:$16 sm:$0xc0] %vm779, %v778
    %s788 = scalar_lea.vmem [#allocation1], 16
    %v789 = vld.sshfl [vmem:[%s788] sm:$0xff pattern:$0xb3a29180]
    %790 = vrot.lane.b32.xlu0 %v789, 32
    %v791 = vpop.permute.xlu0 %790
    %vm792 = vcmask 64512
    %s793 = scalar_lea.vmem [#allocation0], 44
    %794 = vst.msk [vmem:[%s793] ss:$16 sm:$0x3] %vm792, %v791
    %s795 = scalar_lea.vmem [#allocation0], 140
    %796 = vst.msk [vmem:[%s795] ss:$16 sm:$0xc] %vm792, %v791
    %s797 = scalar_lea.vmem [#allocation0], 236
    %798 = vst.msk [vmem:[%s797] ss:$16 sm:$0x30] %vm792, %v791
    %s799 = scalar_lea.vmem [#allocation0], 332
    %800 = vst.msk [vmem:[%s799] ss:$16 sm:$0xc0] %vm792, %v791
    %s801 = scalar_lea.vmem [#allocation1], 32
    %v802 = vld.sshfl [vmem:[%s801] sm:$0xff pattern:$0xb3a29180]
    %803 = vrot.lane.b32.xlu0 %v802, 32
    %v804 = vpop.permute.xlu0 %803
    %vm805 = vcmask 64512
    %s806 = scalar_lea.vmem [#allocation0], 76
    %807 = vst.msk [vmem:[%s806] ss:$16 sm:$0x3] %vm805, %v804
    %s808 = scalar_lea.vmem [#allocation0], 172
    %809 = vst.msk [vmem:[%s808] ss:$16 sm:$0xc] %vm805, %v804
    %s810 = scalar_lea.vmem [#allocation0], 268
    %811 = vst.msk [vmem:[%s810] ss:$16 sm:$0x30] %vm805, %v804
    %s812 = scalar_lea.vmem [#allocation0], 364
    %813 = vst.msk [vmem:[%s812] ss:$16 sm:$0xc0] %vm805, %v804
    %s814 = scalar_lea.vmem [#allocation1], 48
    %v815 = vld.sshfl [vmem:[%s814] sm:$0xff pattern:$0xb3a29180]
    %816 = vrot.lane.b32.xlu0 %v815, 32
    %v817 = vpop.permute.xlu0 %816
    %vm818 = vcmask 64512
    %s819 = scalar_lea.vmem [#allocation0], 108
    %820 = vst.msk [vmem:[%s819] ss:$16 sm:$0x3] %vm818, %v817
    %s821 = scalar_lea.vmem [#allocation0], 204
    %822 = vst.msk [vmem:[%s821] ss:$16 sm:$0xc] %vm818, %v817
    %s823 = scalar_lea.vmem [#allocation0], 300
    %824 = vst.msk [vmem:[%s823] ss:$16 sm:$0x30] %vm818, %v817
    %s825 = scalar_lea.vmem [#allocation0], 396
    %826 = vst.msk [vmem:[%s825] ss:$16 sm:$0xc0] %vm818, %v817
    %v827 = vld.sshfl [vmem:[#allocation1] sm:$0xff pattern:$0xb3a29180]
    %828 = vrot.lane.b32.xlu0 %v827, 24
    %v829 = vpop.permute.xlu0 %828
    %vm830 = vcmask 64512
    %s831 = scalar_lea.vmem [#allocation0], 13
    %832 = vst.msk [vmem:[%s831] ss:$16 sm:$0x3] %vm830, %v829
    %s833 = scalar_lea.vmem [#allocation0], 109
    %834 = vst.msk [vmem:[%s833] ss:$16 sm:$0xc] %vm830, %v829
    %s835 = scalar_lea.vmem [#allocation0], 205
    %836 = vst.msk [vmem:[%s835] ss:$16 sm:$0x30] %vm830, %v829
    %s837 = scalar_lea.vmem [#allocation0], 301
    %838 = vst.msk [vmem:[%s837] ss:$16 sm:$0xc0] %vm830, %v829
    %s839 = scalar_lea.vmem [#allocation1], 16
    %v840 = vld.sshfl [vmem:[%s839] sm:$0xff pattern:$0xb3a29180]
    %841 = vrot.lane.b32.xlu0 %v840, 24
    %v842 = vpop.permute.xlu0 %841
    %vm843 = vcmask 64512
    %s844 = scalar_lea.vmem [#allocation0], 45
    %845 = vst.msk [vmem:[%s844] ss:$16 sm:$0x3] %vm843, %v842
    %s846 = scalar_lea.vmem [#allocation0], 141
    %847 = vst.msk [vmem:[%s846] ss:$16 sm:$0xc] %vm843, %v842
    %s848 = scalar_lea.vmem [#allocation0], 237
    %849 = vst.msk [vmem:[%s848] ss:$16 sm:$0x30] %vm843, %v842
    %s850 = scalar_lea.vmem [#allocation0], 333
    %851 = vst.msk [vmem:[%s850] ss:$16 sm:$0xc0] %vm843, %v842
    %s852 = scalar_lea.vmem [#allocation1], 32
    %v853 = vld.sshfl [vmem:[%s852] sm:$0xff pattern:$0xb3a29180]
    %854 = vrot.lane.b32.xlu0 %v853, 24
    %v855 = vpop.permute.xlu0 %854
    %vm856 = vcmask 64512
    %s857 = scalar_lea.vmem [#allocation0], 77
    %858 = vst.msk [vmem:[%s857] ss:$16 sm:$0x3] %vm856, %v855
    %s859 = scalar_lea.vmem [#allocation0], 173
    %860 = vst.msk [vmem:[%s859] ss:$16 sm:$0xc] %vm856, %v855
    %s861 = scalar_lea.vmem [#allocation0], 269
    %862 = vst.msk [vmem:[%s861] ss:$16 sm:$0x30] %vm856, %v855
    %s863 = scalar_lea.vmem [#allocation0], 365
    %864 = vst.msk [vmem:[%s863] ss:$16 sm:$0xc0] %vm856, %v855
    %s865 = scalar_lea.vmem [#allocation1], 48
    %v866 = vld.sshfl [vmem:[%s865] sm:$0xff pattern:$0xb3a29180]
    %867 = vrot.lane.b32.xlu0 %v866, 24
    %v868 = vpop.permute.xlu0 %867
    %vm869 = vcmask 64512
    %s870 = scalar_lea.vmem [#allocation0], 109
    %871 = vst.msk [vmem:[%s870] ss:$16 sm:$0x3] %vm869, %v868
    %s872 = scalar_lea.vmem [#allocation0], 205
    %873 = vst.msk [vmem:[%s872] ss:$16 sm:$0xc] %vm869, %v868
    %s874 = scalar_lea.vmem [#allocation0], 301
    %875 = vst.msk [vmem:[%s874] ss:$16 sm:$0x30] %vm869, %v868
    %s876 = scalar_lea.vmem [#allocation0], 397
    %877 = vst.msk [vmem:[%s876] ss:$16 sm:$0xc0] %vm869, %v868
    %v878 = vld.sshfl [vmem:[#allocation1] sm:$0xff pattern:$0xb3a29180]
    %879 = vrot.lane.b32.xlu0 %v878, 16
    %v880 = vpop.permute.xlu0 %879
    %vm881 = vcmask 64512
    %s882 = scalar_lea.vmem [#allocation0], 14
    %883 = vst.msk [vmem:[%s882] ss:$16 sm:$0x3] %vm881, %v880
    %s884 = scalar_lea.vmem [#allocation0], 110
    %885 = vst.msk [vmem:[%s884] ss:$16 sm:$0xc] %vm881, %v880
    %s886 = scalar_lea.vmem [#allocation0], 206
    %887 = vst.msk [vmem:[%s886] ss:$16 sm:$0x30] %vm881, %v880
    %s888 = scalar_lea.vmem [#allocation0], 302
    %889 = vst.msk [vmem:[%s888] ss:$16 sm:$0xc0] %vm881, %v880
    %s890 = scalar_lea.vmem [#allocation1], 16
    %v891 = vld.sshfl [vmem:[%s890] sm:$0xff pattern:$0xb3a29180]
    %892 = vrot.lane.b32.xlu0 %v891, 16
    %v893 = vpop.permute.xlu0 %892
    %vm894 = vcmask 64512
    %s895 = scalar_lea.vmem [#allocation0], 46
    %896 = vst.msk [vmem:[%s895] ss:$16 sm:$0x3] %vm894, %v893
    %s897 = scalar_lea.vmem [#allocation0], 142
    %898 = vst.msk [vmem:[%s897] ss:$16 sm:$0xc] %vm894, %v893
    %s899 = scalar_lea.vmem [#allocation0], 238
    %900 = vst.msk [vmem:[%s899] ss:$16 sm:$0x30] %vm894, %v893
    %s901 = scalar_lea.vmem [#allocation0], 334
    %902 = vst.msk [vmem:[%s901] ss:$16 sm:$0xc0] %vm894, %v893
    %s903 = scalar_lea.vmem [#allocation1], 32
    %v904 = vld.sshfl [vmem:[%s903] sm:$0xff pattern:$0xb3a29180]
    %905 = vrot.lane.b32.xlu0 %v904, 16
    %v906 = vpop.permute.xlu0 %905
    %vm907 = vcmask 64512
    %s908 = scalar_lea.vmem [#allocation0], 78
    %909 = vst.msk [vmem:[%s908] ss:$16 sm:$0x3] %vm907, %v906
    %s910 = scalar_lea.vmem [#allocation0], 174
    %911 = vst.msk [vmem:[%s910] ss:$16 sm:$0xc] %vm907, %v906
    %s912 = scalar_lea.vmem [#allocation0], 270
    %913 = vst.msk [vmem:[%s912] ss:$16 sm:$0x30] %vm907, %v906
    %s914 = scalar_lea.vmem [#allocation0], 366
    %915 = vst.msk [vmem:[%s914] ss:$16 sm:$0xc0] %vm907, %v906
    %s916 = scalar_lea.vmem [#allocation1], 48
    %v917 = vld.sshfl [vmem:[%s916] sm:$0xff pattern:$0xb3a29180]
    %918 = vrot.lane.b32.xlu0 %v917, 16
    %v919 = vpop.permute.xlu0 %918
    %vm920 = vcmask 64512
    %s921 = scalar_lea.vmem [#allocation0], 110
    %922 = vst.msk [vmem:[%s921] ss:$16 sm:$0x3] %vm920, %v919
    %s923 = scalar_lea.vmem [#allocation0], 206
    %924 = vst.msk [vmem:[%s923] ss:$16 sm:$0xc] %vm920, %v919
    %s925 = scalar_lea.vmem [#allocation0], 302
    %926 = vst.msk [vmem:[%s925] ss:$16 sm:$0x30] %vm920, %v919
    %s927 = scalar_lea.vmem [#allocation0], 398
    %928 = vst.msk [vmem:[%s927] ss:$16 sm:$0xc0] %vm920, %v919
    %v929 = vld.sshfl [vmem:[#allocation1] sm:$0xff pattern:$0xb3a29180]
    %930 = vrot.lane.b32.xlu0 %v929, 8
    %v931 = vpop.permute.xlu0 %930
    %vm932 = vcmask 64512
    %s933 = scalar_lea.vmem [#allocation0], 15
    %934 = vst.msk [vmem:[%s933] ss:$16 sm:$0x3] %vm932, %v931
    %s935 = scalar_lea.vmem [#allocation0], 111
    %936 = vst.msk [vmem:[%s935] ss:$16 sm:$0xc] %vm932, %v931
    %s937 = scalar_lea.vmem [#allocation0], 207
    %938 = vst.msk [vmem:[%s937] ss:$16 sm:$0x30] %vm932, %v931
    %s939 = scalar_lea.vmem [#allocation0], 303
    %940 = vst.msk [vmem:[%s939] ss:$16 sm:$0xc0] %vm932, %v931
    %s941 = scalar_lea.vmem [#allocation1], 16
    %v942 = vld.sshfl [vmem:[%s941] sm:$0xff pattern:$0xb3a29180]
    %943 = vrot.lane.b32.xlu0 %v942, 8
    %v944 = vpop.permute.xlu0 %943
    %vm945 = vcmask 64512
    %s946 = scalar_lea.vmem [#allocation0], 47
    %947 = vst.msk [vmem:[%s946] ss:$16 sm:$0x3] %vm945, %v944
    %s948 = scalar_lea.vmem [#allocation0], 143
    %949 = vst.msk [vmem:[%s948] ss:$16 sm:$0xc] %vm945, %v944
    %s950 = scalar_lea.vmem [#allocation0], 239
    %951 = vst.msk [vmem:[%s950] ss:$16 sm:$0x30] %vm945, %v944
    %s952 = scalar_lea.vmem [#allocation0], 335
    %953 = vst.msk [vmem:[%s952] ss:$16 sm:$0xc0] %vm945, %v944
    %s954 = scalar_lea.vmem [#allocation1], 32
    %v955 = vld.sshfl [vmem:[%s954] sm:$0xff pattern:$0xb3a29180]
    %956 = vrot.lane.b32.xlu0 %v955, 8
    %v957 = vpop.permute.xlu0 %956
    %vm958 = vcmask 64512
    %s959 = scalar_lea.vmem [#allocation0], 79
    %960 = vst.msk [vmem:[%s959] ss:$16 sm:$0x3] %vm958, %v957
    %s961 = scalar_lea.vmem [#allocation0], 175
    %962 = vst.msk [vmem:[%s961] ss:$16 sm:$0xc] %vm958, %v957
    %s963 = scalar_lea.vmem [#allocation0], 271
    %964 = vst.msk [vmem:[%s963] ss:$16 sm:$0x30] %vm958, %v957
    %s965 = scalar_lea.vmem [#allocation0], 367
    %966 = vst.msk [vmem:[%s965] ss:$16 sm:$0xc0] %vm958, %v957
    %s967 = scalar_lea.vmem [#allocation1], 48
    %v968 = vld.sshfl [vmem:[%s967] sm:$0xff pattern:$0xb3a29180]
    %969 = vrot.lane.b32.xlu0 %v968, 8
    %v970 = vpop.permute.xlu0 %969
    %vm971 = vcmask 64512
    %s972 = scalar_lea.vmem [#allocation0], 111
    %973 = vst.msk [vmem:[%s972] ss:$16 sm:$0x3] %vm971, %v970
    %s974 = scalar_lea.vmem [#allocation0], 207
    %975 = vst.msk [vmem:[%s974] ss:$16 sm:$0xc] %vm971, %v970
    %s976 = scalar_lea.vmem [#allocation0], 303
    %977 = vst.msk [vmem:[%s976] ss:$16 sm:$0x30] %vm971, %v970
    %s978 = scalar_lea.vmem [#allocation0], 399
    %979 = vst.msk [vmem:[%s978] ss:$16 sm:$0xc0] %vm971, %v970
    %s981 = smul.u32 4, 2
    %s982 = sshllo.u32 0, %s981
    %s983 = sshrl.u32 %s981, 1
    %v984 = vld [vmem:[#allocation0] sm:%s982]
    %v985 = vpack.c.bf16 0.0, %v984
    %s986 = sshllo.u32 0, %s983
    %987 = vst [vmem:[%s1] sm:%s986] %v985
    %s988 = scalar_lea.vmem [#allocation0], 8
    %v989 = vld [vmem:[%s988] sm:%s982]
    %v990 = vpack.c.bf16 0.0, %v989
    %s991 = sshllo.u32 0, %s983
    %s992 = scalar_lea.vmem %s1, 4
    %993 = vst [vmem:[%s992] sm:%s991] %v990
    %s994 = scalar_lea.vmem [#allocation0], 16
    %v995 = vld [vmem:[%s994] sm:%s982]
    %v996 = vpack.c.bf16 0.0, %v995
    %s997 = sshllo.u32 0, %s983
    %s998 = smul.addr 4, 2
    %s999 = scalar_lea.vmem %s1, %s998
    %1000 = vst [vmem:[%s999] sm:%s997] %v996
    %s1001 = scalar_lea.vmem [#allocation0], 24
    %v1002 = vld [vmem:[%s1001] sm:%s982]
    %v1003 = vpack.c.bf16 0.0, %v1002
    %s1004 = sshllo.u32 0, %s983
    %s1005 = smul.addr 4, 3
    %s1006 = scalar_lea.vmem %s1, %s1005
    %1007 = vst [vmem:[%s1006] sm:%s1004] %v1003
    %s1008 = scalar_lea.vmem [#allocation0], 32
    %v1009 = vld [vmem:[%s1008] sm:%s982]
    %v1010 = vpack.c.bf16 0.0, %v1009
    %s1011 = sshllo.u32 0, %s983
    %s1012 = smul.addr 4, 4
    %s1013 = scalar_lea.vmem %s1, %s1012
    %1014 = vst [vmem:[%s1013] sm:%s1011] %v1010
    %s1015 = scalar_lea.vmem [#allocation0], 40
    %v1016 = vld [vmem:[%s1015] sm:%s982]
    %v1017 = vpack.c.bf16 0.0, %v1016
    %s1018 = sshllo.u32 0, %s983
    %s1019 = smul.addr 4, 5
    %s1020 = scalar_lea.vmem %s1, %s1019
    %1021 = vst [vmem:[%s1020] sm:%s1018] %v1017
    %s1022 = scalar_lea.vmem [#allocation0], 48
    %v1023 = vld [vmem:[%s1022] sm:%s982]
    %v1024 = vpack.c.bf16 0.0, %v1023
    %s1025 = sshllo.u32 0, %s983
    %s1026 = smul.addr 4, 6
    %s1027 = scalar_lea.vmem %s1, %s1026
    %1028 = vst [vmem:[%s1027] sm:%s1025] %v1024
    %s1029 = scalar_lea.vmem [#allocation0], 56
    %v1030 = vld [vmem:[%s1029] sm:%s982]
    %v1031 = vpack.c.bf16 0.0, %v1030
    %s1032 = sshllo.u32 0, %s983
    %s1033 = smul.addr 4, 7
    %s1034 = scalar_lea.vmem %s1, %s1033
    %1035 = vst [vmem:[%s1034] sm:%s1032] %v1031
    %s1036 = scalar_lea.vmem [#allocation0], 64
    %v1037 = vld [vmem:[%s1036] sm:%s982]
    %v1038 = vpack.c.bf16 0.0, %v1037
    %s1039 = sshllo.u32 0, %s983
    %s1040 = smul.addr 4, 8
    %s1041 = scalar_lea.vmem %s1, %s1040
    %1042 = vst [vmem:[%s1041] sm:%s1039] %v1038
    %s1043 = scalar_lea.vmem [#allocation0], 72
    %v1044 = vld [vmem:[%s1043] sm:%s982]
    %v1045 = vpack.c.bf16 0.0, %v1044
    %s1046 = sshllo.u32 0, %s983
    %s1047 = smul.addr 4, 9
    %s1048 = scalar_lea.vmem %s1, %s1047
    %1049 = vst [vmem:[%s1048] sm:%s1046] %v1045
    %s1050 = scalar_lea.vmem [#allocation0], 80
    %v1051 = vld [vmem:[%s1050] sm:%s982]
    %v1052 = vpack.c.bf16 0.0, %v1051
    %s1053 = sshllo.u32 0, %s983
    %s1054 = smul.addr 4, 10
    %s1055 = scalar_lea.vmem %s1, %s1054
    %1056 = vst [vmem:[%s1055] sm:%s1053] %v1052
    %s1057 = scalar_lea.vmem [#allocation0], 88
    %v1058 = vld [vmem:[%s1057] sm:%s982]
    %v1059 = vpack.c.bf16 0.0, %v1058
    %s1060 = sshllo.u32 0, %s983
    %s1061 = smul.addr 4, 11
    %s1062 = scalar_lea.vmem %s1, %s1061
    %1063 = vst [vmem:[%s1062] sm:%s1060] %v1059
    %s1064 = scalar_lea.vmem [#allocation0], 96
    %v1065 = vld [vmem:[%s1064] sm:%s982]
    %v1066 = vpack.c.bf16 0.0, %v1065
    %s1067 = sshllo.u32 0, %s983
    %s1068 = smul.addr 4, 12
    %s1069 = scalar_lea.vmem %s1, %s1068
    %1070 = vst [vmem:[%s1069] sm:%s1067] %v1066
    %s1071 = scalar_lea.vmem [#allocation0], 104
    %v1072 = vld [vmem:[%s1071] sm:%s982]
    %v1073 = vpack.c.bf16 0.0, %v1072
    %s1074 = sshllo.u32 0, %s983
    %s1075 = smul.addr 4, 13
    %s1076 = scalar_lea.vmem %s1, %s1075
    %1077 = vst [vmem:[%s1076] sm:%s1074] %v1073
    %s1078 = scalar_lea.vmem [#allocation0], 112
    %v1079 = vld [vmem:[%s1078] sm:%s982]
    %v1080 = vpack.c.bf16 0.0, %v1079
    %s1081 = sshllo.u32 0, %s983
    %s1082 = smul.addr 4, 14
    %s1083 = scalar_lea.vmem %s1, %s1082
    %1084 = vst [vmem:[%s1083] sm:%s1081] %v1080
    %s1085 = scalar_lea.vmem [#allocation0], 120
    %v1086 = vld [vmem:[%s1085] sm:%s982]
    %v1087 = vpack.c.bf16 0.0, %v1086
    %s1088 = sshllo.u32 0, %s983
    %s1089 = smul.addr 4, 15
    %s1090 = scalar_lea.vmem %s1, %s1089
    %1091 = vst [vmem:[%s1090] sm:%s1088] %v1087
    %s1092 = scalar_lea.vmem [#allocation0], 128
    %v1093 = vld [vmem:[%s1092] sm:%s982]
    %v1094 = vpack.c.bf16 0.0, %v1093
    %s1095 = sshllo.u32 0, %s983
    %s1096 = smul.addr 4, 16
    %s1097 = scalar_lea.vmem %s1, %s1096
    %1098 = vst [vmem:[%s1097] sm:%s1095] %v1094
    %s1099 = scalar_lea.vmem [#allocation0], 136
    %v1100 = vld [vmem:[%s1099] sm:%s982]
    %v1101 = vpack.c.bf16 0.0, %v1100
    %s1102 = sshllo.u32 0, %s983
    %s1103 = smul.addr 4, 17
    %s1104 = scalar_lea.vmem %s1, %s1103
    %1105 = vst [vmem:[%s1104] sm:%s1102] %v1101
    %s1106 = scalar_lea.vmem [#allocation0], 144
    %v1107 = vld [vmem:[%s1106] sm:%s982]
    %v1108 = vpack.c.bf16 0.0, %v1107
    %s1109 = sshllo.u32 0, %s983
    %s1110 = smul.addr 4, 18
    %s1111 = scalar_lea.vmem %s1, %s1110
    %1112 = vst [vmem:[%s1111] sm:%s1109] %v1108
    %s1113 = scalar_lea.vmem [#allocation0], 152
    %v1114 = vld [vmem:[%s1113] sm:%s982]
    %v1115 = vpack.c.bf16 0.0, %v1114
    %s1116 = sshllo.u32 0, %s983
    %s1117 = smul.addr 4, 19
    %s1118 = scalar_lea.vmem %s1, %s1117
    %1119 = vst [vmem:[%s1118] sm:%s1116] %v1115
    %s1120 = scalar_lea.vmem [#allocation0], 160
    %v1121 = vld [vmem:[%s1120] sm:%s982]
    %v1122 = vpack.c.bf16 0.0, %v1121
    %s1123 = sshllo.u32 0, %s983
    %s1124 = smul.addr 4, 20
    %s1125 = scalar_lea.vmem %s1, %s1124
    %1126 = vst [vmem:[%s1125] sm:%s1123] %v1122
    %s1127 = scalar_lea.vmem [#allocation0], 168
    %v1128 = vld [vmem:[%s1127] sm:%s982]
    %v1129 = vpack.c.bf16 0.0, %v1128
    %s1130 = sshllo.u32 0, %s983
    %s1131 = smul.addr 4, 21
    %s1132 = scalar_lea.vmem %s1, %s1131
    %1133 = vst [vmem:[%s1132] sm:%s1130] %v1129
    %s1134 = scalar_lea.vmem [#allocation0], 176
    %v1135 = vld [vmem:[%s1134] sm:%s982]
    %v1136 = vpack.c.bf16 0.0, %v1135
    %s1137 = sshllo.u32 0, %s983
    %s1138 = smul.addr 4, 22
    %s1139 = scalar_lea.vmem %s1, %s1138
    %1140 = vst [vmem:[%s1139] sm:%s1137] %v1136
    %s1141 = scalar_lea.vmem [#allocation0], 184
    %v1142 = vld [vmem:[%s1141] sm:%s982]
    %v1143 = vpack.c.bf16 0.0, %v1142
    %s1144 = sshllo.u32 0, %s983
    %s1145 = smul.addr 4, 23
    %s1146 = scalar_lea.vmem %s1, %s1145
    %1147 = vst [vmem:[%s1146] sm:%s1144] %v1143
    %s1148 = scalar_lea.vmem [#allocation0], 192
    %v1149 = vld [vmem:[%s1148] sm:%s982]
    %v1150 = vpack.c.bf16 0.0, %v1149
    %s1151 = sshllo.u32 0, %s983
    %s1152 = smul.addr 4, 24
    %s1153 = scalar_lea.vmem %s1, %s1152
    %1154 = vst [vmem:[%s1153] sm:%s1151] %v1150
    %s1155 = scalar_lea.vmem [#allocation0], 200
    %v1156 = vld [vmem:[%s1155] sm:%s982]
    %v1157 = vpack.c.bf16 0.0, %v1156
    %s1158 = sshllo.u32 0, %s983
    %s1159 = smul.addr 4, 25
    %s1160 = scalar_lea.vmem %s1, %s1159
    %1161 = vst [vmem:[%s1160] sm:%s1158] %v1157
    %s1162 = scalar_lea.vmem [#allocation0], 208
    %v1163 = vld [vmem:[%s1162] sm:%s982]
    %v1164 = vpack.c.bf16 0.0, %v1163
    %s1165 = sshllo.u32 0, %s983
    %s1166 = smul.addr 4, 26
    %s1167 = scalar_lea.vmem %s1, %s1166
    %1168 = vst [vmem:[%s1167] sm:%s1165] %v1164
    %s1169 = scalar_lea.vmem [#allocation0], 216
    %v1170 = vld [vmem:[%s1169] sm:%s982]
    %v1171 = vpack.c.bf16 0.0, %v1170
    %s1172 = sshllo.u32 0, %s983
    %s1173 = smul.addr 4, 27
    %s1174 = scalar_lea.vmem %s1, %s1173
    %1175 = vst [vmem:[%s1174] sm:%s1172] %v1171
    %s1176 = scalar_lea.vmem [#allocation0], 224
    %v1177 = vld [vmem:[%s1176] sm:%s982]
    %v1178 = vpack.c.bf16 0.0, %v1177
    %s1179 = sshllo.u32 0, %s983
    %s1180 = smul.addr 4, 28
    %s1181 = scalar_lea.vmem %s1, %s1180
    %1182 = vst [vmem:[%s1181] sm:%s1179] %v1178
    %s1183 = scalar_lea.vmem [#allocation0], 232
    %v1184 = vld [vmem:[%s1183] sm:%s982]
    %v1185 = vpack.c.bf16 0.0, %v1184
    %s1186 = sshllo.u32 0, %s983
    %s1187 = smul.addr 4, 29
    %s1188 = scalar_lea.vmem %s1, %s1187
    %1189 = vst [vmem:[%s1188] sm:%s1186] %v1185
    %s1190 = scalar_lea.vmem [#allocation0], 240
    %v1191 = vld [vmem:[%s1190] sm:%s982]
    %v1192 = vpack.c.bf16 0.0, %v1191
    %s1193 = sshllo.u32 0, %s983
    %s1194 = smul.addr 4, 30
    %s1195 = scalar_lea.vmem %s1, %s1194
    %1196 = vst [vmem:[%s1195] sm:%s1193] %v1192
    %s1197 = scalar_lea.vmem [#allocation0], 248
    %v1198 = vld [vmem:[%s1197] sm:%s982]
    %v1199 = vpack.c.bf16 0.0, %v1198
    %s1200 = sshllo.u32 0, %s983
    %s1201 = smul.addr 4, 31
    %s1202 = scalar_lea.vmem %s1, %s1201
    %1203 = vst [vmem:[%s1202] sm:%s1200] %v1199
    %s1204 = scalar_lea.vmem [#allocation0], 256
    %v1205 = vld [vmem:[%s1204] sm:%s982]
    %v1206 = vpack.c.bf16 0.0, %v1205
    %s1207 = sshllo.u32 0, %s983
    %s1208 = smul.addr 4, 32
    %s1209 = scalar_lea.vmem %s1, %s1208
    %1210 = vst [vmem:[%s1209] sm:%s1207] %v1206
    %s1211 = scalar_lea.vmem [#allocation0], 264
    %v1212 = vld [vmem:[%s1211] sm:%s982]
    %v1213 = vpack.c.bf16 0.0, %v1212
    %s1214 = sshllo.u32 0, %s983
    %s1215 = smul.addr 4, 33
    %s1216 = scalar_lea.vmem %s1, %s1215
    %1217 = vst [vmem:[%s1216] sm:%s1214] %v1213
    %s1218 = scalar_lea.vmem [#allocation0], 272
    %v1219 = vld [vmem:[%s1218] sm:%s982]
    %v1220 = vpack.c.bf16 0.0, %v1219
    %s1221 = sshllo.u32 0, %s983
    %s1222 = smul.addr 4, 34
    %s1223 = scalar_lea.vmem %s1, %s1222
    %1224 = vst [vmem:[%s1223] sm:%s1221] %v1220
    %s1225 = scalar_lea.vmem [#allocation0], 280
    %v1226 = vld [vmem:[%s1225] sm:%s982]
    %v1227 = vpack.c.bf16 0.0, %v1226
    %s1228 = sshllo.u32 0, %s983
    %s1229 = smul.addr 4, 35
    %s1230 = scalar_lea.vmem %s1, %s1229
    %1231 = vst [vmem:[%s1230] sm:%s1228] %v1227
    %s1232 = scalar_lea.vmem [#allocation0], 288
    %v1233 = vld [vmem:[%s1232] sm:%s982]
    %v1234 = vpack.c.bf16 0.0, %v1233
    %s1235 = sshllo.u32 0, %s983
    %s1236 = smul.addr 4, 36
    %s1237 = scalar_lea.vmem %s1, %s1236
    %1238 = vst [vmem:[%s1237] sm:%s1235] %v1234
    %s1239 = scalar_lea.vmem [#allocation0], 296
    %v1240 = vld [vmem:[%s1239] sm:%s982]
    %v1241 = vpack.c.bf16 0.0, %v1240
    %s1242 = sshllo.u32 0, %s983
    %s1243 = smul.addr 4, 37
    %s1244 = scalar_lea.vmem %s1, %s1243
    %1245 = vst [vmem:[%s1244] sm:%s1242] %v1241
    %s1246 = scalar_lea.vmem [#allocation0], 304
    %v1247 = vld [vmem:[%s1246] sm:%s982]
    %v1248 = vpack.c.bf16 0.0, %v1247
    %s1249 = sshllo.u32 0, %s983
    %s1250 = smul.addr 4, 38
    %s1251 = scalar_lea.vmem %s1, %s1250
    %1252 = vst [vmem:[%s1251] sm:%s1249] %v1248
    %s1253 = scalar_lea.vmem [#allocation0], 312
    %v1254 = vld [vmem:[%s1253] sm:%s982]
    %v1255 = vpack.c.bf16 0.0, %v1254
    %s1256 = sshllo.u32 0, %s983
    %s1257 = smul.addr 4, 39
    %s1258 = scalar_lea.vmem %s1, %s1257
    %1259 = vst [vmem:[%s1258] sm:%s1256] %v1255
    %s1260 = scalar_lea.vmem [#allocation0], 320
    %v1261 = vld [vmem:[%s1260] sm:%s982]
    %v1262 = vpack.c.bf16 0.0, %v1261
    %s1263 = sshllo.u32 0, %s983
    %s1264 = smul.addr 4, 40
    %s1265 = scalar_lea.vmem %s1, %s1264
    %1266 = vst [vmem:[%s1265] sm:%s1263] %v1262
    %s1267 = scalar_lea.vmem [#allocation0], 328
    %v1268 = vld [vmem:[%s1267] sm:%s982]
    %v1269 = vpack.c.bf16 0.0, %v1268
    %s1270 = sshllo.u32 0, %s983
    %s1271 = smul.addr 4, 41
    %s1272 = scalar_lea.vmem %s1, %s1271
    %1273 = vst [vmem:[%s1272] sm:%s1270] %v1269
    %s1274 = scalar_lea.vmem [#allocation0], 336
    %v1275 = vld [vmem:[%s1274] sm:%s982]
    %v1276 = vpack.c.bf16 0.0, %v1275
    %s1277 = sshllo.u32 0, %s983
    %s1278 = smul.addr 4, 42
    %s1279 = scalar_lea.vmem %s1, %s1278
    %1280 = vst [vmem:[%s1279] sm:%s1277] %v1276
    %s1281 = scalar_lea.vmem [#allocation0], 344
    %v1282 = vld [vmem:[%s1281] sm:%s982]
    %v1283 = vpack.c.bf16 0.0, %v1282
    %s1284 = sshllo.u32 0, %s983
    %s1285 = smul.addr 4, 43
    %s1286 = scalar_lea.vmem %s1, %s1285
    %1287 = vst [vmem:[%s1286] sm:%s1284] %v1283
    %s1288 = scalar_lea.vmem [#allocation0], 352
    %v1289 = vld [vmem:[%s1288] sm:%s982]
    %v1290 = vpack.c.bf16 0.0, %v1289
    %s1291 = sshllo.u32 0, %s983
    %s1292 = smul.addr 4, 44
    %s1293 = scalar_lea.vmem %s1, %s1292
    %1294 = vst [vmem:[%s1293] sm:%s1291] %v1290
    %s1295 = scalar_lea.vmem [#allocation0], 360
    %v1296 = vld [vmem:[%s1295] sm:%s982]
    %v1297 = vpack.c.bf16 0.0, %v1296
    %s1298 = sshllo.u32 0, %s983
    %s1299 = smul.addr 4, 45
    %s1300 = scalar_lea.vmem %s1, %s1299
    %1301 = vst [vmem:[%s1300] sm:%s1298] %v1297
    %s1302 = scalar_lea.vmem [#allocation0], 368
    %v1303 = vld [vmem:[%s1302] sm:%s982]
    %v1304 = vpack.c.bf16 0.0, %v1303
    %s1305 = sshllo.u32 0, %s983
    %s1306 = smul.addr 4, 46
    %s1307 = scalar_lea.vmem %s1, %s1306
    %1308 = vst [vmem:[%s1307] sm:%s1305] %v1304
    %s1309 = scalar_lea.vmem [#allocation0], 376
    %v1310 = vld [vmem:[%s1309] sm:%s982]
    %v1311 = vpack.c.bf16 0.0, %v1310
    %s1312 = sshllo.u32 0, %s983
    %s1313 = smul.addr 4, 47
    %s1314 = scalar_lea.vmem %s1, %s1313
    %1315 = vst [vmem:[%s1314] sm:%s1312] %v1311
    %s1316 = scalar_lea.vmem [#allocation0], 384
    %v1317 = vld [vmem:[%s1316] sm:%s982]
    %v1318 = vpack.c.bf16 0.0, %v1317
    %s1319 = sshllo.u32 0, %s983
    %s1320 = smul.addr 4, 48
    %s1321 = scalar_lea.vmem %s1, %s1320
    %1322 = vst [vmem:[%s1321] sm:%s1319] %v1318
    %s1323 = scalar_lea.vmem [#allocation0], 392
    %v1324 = vld [vmem:[%s1323] sm:%s982]
    %v1325 = vpack.c.bf16 0.0, %v1324
    %s1326 = sshllo.u32 0, %s983
    %s1327 = smul.addr 4, 49
    %s1328 = scalar_lea.vmem %s1, %s1327
    %1329 = vst [vmem:[%s1328] sm:%s1326] %v1325
    %s1330 = scalar_lea.vmem [#allocation0], 400
    %v1331 = vld [vmem:[%s1330] sm:%s982]
    %v1332 = vpack.c.bf16 0.0, %v1331
    %s1333 = sshllo.u32 0, %s983
    %s1334 = smul.addr 4, 50
    %s1335 = scalar_lea.vmem %s1, %s1334
    %1336 = vst [vmem:[%s1335] sm:%s1333] %v1332
    %s1337 = scalar_lea.vmem [#allocation0], 408
    %v1338 = vld [vmem:[%s1337] sm:%s982]
    %v1339 = vpack.c.bf16 0.0, %v1338
    %s1340 = sshllo.u32 0, %s983
    %s1341 = smul.addr 4, 51
    %s1342 = scalar_lea.vmem %s1, %s1341
    %1343 = vst [vmem:[%s1342] sm:%s1340] %v1339
    %s1344 = scalar_lea.vmem [#allocation0], 416
    %v1345 = vld [vmem:[%s1344] sm:%s982]
    %v1346 = vpack.c.bf16 0.0, %v1345
    %s1347 = sshllo.u32 0, %s983
    %s1348 = smul.addr 4, 52
    %s1349 = scalar_lea.vmem %s1, %s1348
    %1350 = vst [vmem:[%s1349] sm:%s1347] %v1346
    %s1351 = scalar_lea.vmem [#allocation0], 424
    %v1352 = vld [vmem:[%s1351] sm:%s982]
    %v1353 = vpack.c.bf16 0.0, %v1352
    %s1354 = sshllo.u32 0, %s983
    %s1355 = smul.addr 4, 53
    %s1356 = scalar_lea.vmem %s1, %s1355
    %1357 = vst [vmem:[%s1356] sm:%s1354] %v1353
    %s1358 = scalar_lea.vmem [#allocation0], 432
    %v1359 = vld [vmem:[%s1358] sm:%s982]
    %v1360 = vpack.c.bf16 0.0, %v1359
    %s1361 = sshllo.u32 0, %s983
    %s1362 = smul.addr 4, 54
    %s1363 = scalar_lea.vmem %s1, %s1362
    %1364 = vst [vmem:[%s1363] sm:%s1361] %v1360
    %s1365 = scalar_lea.vmem [#allocation0], 440
    %v1366 = vld [vmem:[%s1365] sm:%s982]
    %v1367 = vpack.c.bf16 0.0, %v1366
    %s1368 = sshllo.u32 0, %s983
    %s1369 = smul.addr 4, 55
    %s1370 = scalar_lea.vmem %s1, %s1369
    %1371 = vst [vmem:[%s1370] sm:%s1368] %v1367
    %s1372 = scalar_lea.vmem [#allocation0], 448
    %v1373 = vld [vmem:[%s1372] sm:%s982]
    %v1374 = vpack.c.bf16 0.0, %v1373
    %s1375 = sshllo.u32 0, %s983
    %s1376 = smul.addr 4, 56
    %s1377 = scalar_lea.vmem %s1, %s1376
    %1378 = vst [vmem:[%s1377] sm:%s1375] %v1374
    %s1379 = scalar_lea.vmem [#allocation0], 456
    %v1380 = vld [vmem:[%s1379] sm:%s982]
    %v1381 = vpack.c.bf16 0.0, %v1380
    %s1382 = sshllo.u32 0, %s983
    %s1383 = smul.addr 4, 57
    %s1384 = scalar_lea.vmem %s1, %s1383
    %1385 = vst [vmem:[%s1384] sm:%s1382] %v1381
    %s1386 = scalar_lea.vmem [#allocation0], 464
    %v1387 = vld [vmem:[%s1386] sm:%s982]
    %v1388 = vpack.c.bf16 0.0, %v1387
    %s1389 = sshllo.u32 0, %s983
    %s1390 = smul.addr 4, 58
    %s1391 = scalar_lea.vmem %s1, %s1390
    %1392 = vst [vmem:[%s1391] sm:%s1389] %v1388
    %s1393 = scalar_lea.vmem [#allocation0], 472
    %v1394 = vld [vmem:[%s1393] sm:%s982]
    %v1395 = vpack.c.bf16 0.0, %v1394
    %s1396 = sshllo.u32 0, %s983
    %s1397 = smul.addr 4, 59
    %s1398 = scalar_lea.vmem %s1, %s1397
    %1399 = vst [vmem:[%s1398] sm:%s1396] %v1395
    %s1400 = scalar_lea.vmem [#allocation0], 480
    %v1401 = vld [vmem:[%s1400] sm:%s982]
    %v1402 = vpack.c.bf16 0.0, %v1401
    %s1403 = sshllo.u32 0, %s983
    %s1404 = smul.addr 4, 60
    %s1405 = scalar_lea.vmem %s1, %s1404
    %1406 = vst [vmem:[%s1405] sm:%s1403] %v1402
    %s1407 = scalar_lea.vmem [#allocation0], 488
    %v1408 = vld [vmem:[%s1407] sm:%s982]
    %v1409 = vpack.c.bf16 0.0, %v1408
    %s1410 = sshllo.u32 0, %s983
    %s1411 = smul.addr 4, 61
    %s1412 = scalar_lea.vmem %s1, %s1411
    %1413 = vst [vmem:[%s1412] sm:%s1410] %v1409
    %s1414 = scalar_lea.vmem [#allocation0], 496
    %v1415 = vld [vmem:[%s1414] sm:%s982]
    %v1416 = vpack.c.bf16 0.0, %v1415
    %s1417 = sshllo.u32 0, %s983
    %s1418 = smul.addr 4, 62
    %s1419 = scalar_lea.vmem %s1, %s1418
    %1420 = vst [vmem:[%s1419] sm:%s1417] %v1416
    %s1421 = scalar_lea.vmem [#allocation0], 504
    %v1422 = vld [vmem:[%s1421] sm:%s982]
    %v1423 = vpack.c.bf16 0.0, %v1422
    %s1424 = sshllo.u32 0, %s983
    %s1425 = smul.addr 4, 63
    %s1426 = scalar_lea.vmem %s1, %s1425
    %1427 = vst [vmem:[%s1426] sm:%s1424] %v1423

// kernel: unet_forward.9
$region0: #{unet_forward.9}
  #allocation0 [shape = 'u32[]', space=smem, size = 0x4, offset = 0x4, fixed_abs, tag = 'smem constant byte address 0x4 - core index']
  #allocation1 [shape = 'u32[144,128]{1,0:T(1,128)}', space=vmem, size = 0x12000, scoped, tag = 'internal scratch']
  %s0 = inlined_call_operand.vmem [shape: bf16[1,8,112], index: 0, kind: input, shape index: {}]
  %s1 = inlined_call_operand.vmem [shape: bf16[1,112,1024], index: 1, kind: input, shape index: {}]
  %s2 = inlined_call_operand.vmem [shape: f32[1,8,1], index: 2, kind: input, shape index: {}]
  %s3 = inlined_call_operand.vmem [shape: f32[1,8,1024], index: 3, kind: output, shape index: {}]
  %s4 = sld [smem:[#allocation0]]
  $region22: #{unet_forward.9} parent=0
    _
  %s6 = ssub.s32 1, %s4
  %s7 = scalar_select 0, %s6, %s4
  // Predicated region
  $region2: #{unet_forward.9} parent=0 // pred_check
    _
  $region3: #{unet_forward.9} parent=0 // pred_check_branch
    %9 = sbr.rel (0) target = $region5
  $region4: #{unet_forward.9} parent=0 // pred_region
    _
  $region5: #{unet_forward.9} parent=0 // pred_fallthru
    _
  // Predicated region
  $region6: #{unet_forward.9} parent=0 // pred_check
    _
  $region7: #{unet_forward.9} parent=0 // pred_check_branch
    %11 = sbr.rel (0) target = $region9
  $region8: #{unet_forward.9} parent=0 // pred_region
    _
  $region9: #{unet_forward.9} parent=0 // pred_fallthru
    _
  // Predicated region
  $region10: #{unet_forward.9} parent=0 // pred_check
    _
  $region11: #{unet_forward.9} parent=0 // pred_check_branch
    %13 = sbr.rel (0) target = $region13
  $region12: #{unet_forward.9} parent=0 // pred_region
    _
  $region13: #{unet_forward.9} parent=0 // pred_fallthru
    _
  %v15 = vld [vmem:[%s0] sm:$0xf]
  %v16 = vld [vmem:[%s1] sm:$0xff]
  %v17 = vld [vmem:[%s1 + $0x8] sm:$0xff]
  %v18 = vld [vmem:[%s1 + $0x10] sm:$0xff]
  %v19 = vld [vmem:[%s1 + $0x18] sm:$0xff]
  %v20 = vld [vmem:[%s1 + $0x20] sm:$0xff]
  %v21 = vld [vmem:[%s1 + $0x28] sm:$0xff]
  %v22 = vld [vmem:[%s1 + $0x30] sm:$0xff]
  %v23 = vld [vmem:[%s1 + $0x38] sm:$0xff]
  %v24 = vld [vmem:[%s1 + $0x40] sm:$0xff]
  %v25 = vld [vmem:[%s1 + $0x48] sm:$0xff]
  %v26 = vld [vmem:[%s1 + $0x50] sm:$0xff]
  %v27 = vld [vmem:[%s1 + $0x58] sm:$0xff]
  %v28 = vld [vmem:[%s1 + $0x60] sm:$0xff]
  %v29 = vld [vmem:[%s1 + $0x68] sm:$0xff]
  %v30 = vld [vmem:[%s1 + $0x70] sm:$0xff]
  %v31 = vld [vmem:[%s1 + $0x78] sm:$0xff]
  %v32 = vld [vmem:[%s1 + $0x80] sm:$0xff]
  %v33 = vld [vmem:[%s1 + $0x88] sm:$0xff]
  %v34 = vld [vmem:[%s1 + $0x90] sm:$0xff]
  %v35 = vld [vmem:[%s1 + $0x98] sm:$0xff]
  %v36 = vld [vmem:[%s1 + $0xa0] sm:$0xff]
  %v37 = vld [vmem:[%s1 + $0xa8] sm:$0xff]
  %v38 = vld [vmem:[%s1 + $0xb0] sm:$0xff]
  %v39 = vld [vmem:[%s1 + $0xb8] sm:$0xff]
  %v40 = vld [vmem:[%s1 + $0xc0] sm:$0xff]
  %v41 = vld [vmem:[%s1 + $0xc8] sm:$0xff]
  %v42 = vld [vmem:[%s1 + $0xd0] sm:$0xff]
  %v43 = vld [vmem:[%s1 + $0xd8] sm:$0xff]
  %v44 = vld [vmem:[%s1 + $0xe0] sm:$0xff]
  %v45 = vld [vmem:[%s1 + $0xe8] sm:$0xff]
  %v46 = vld [vmem:[%s1 + $0xf0] sm:$0xff]
  %v47 = vld [vmem:[%s1 + $0xf8] sm:$0xff]
  %v48 = vld [vmem:[%s1 + $0x100] sm:$0xff]
  %v49 = vld [vmem:[%s1 + $0x108] sm:$0xff]
  %v50 = vld [vmem:[%s1 + $0x110] sm:$0xff]
  %v51 = vld [vmem:[%s1 + $0x118] sm:$0xff]
  %v52 = vld [vmem:[%s1 + $0x120] sm:$0xff]
  %v53 = vld [vmem:[%s1 + $0x128] sm:$0xff]
  %v54 = vld [vmem:[%s1 + $0x130] sm:$0xff]
  %v55 = vld [vmem:[%s1 + $0x138] sm:$0xff]
  %v56 = vld [vmem:[%s1 + $0x140] sm:$0xff]
  %v57 = vld [vmem:[%s1 + $0x148] sm:$0xff]
  %v58 = vld [vmem:[%s1 + $0x150] sm:$0xff]
  %v59 = vld [vmem:[%s1 + $0x158] sm:$0xff]
  %v60 = vld [vmem:[%s1 + $0x160] sm:$0xff]
  %v61 = vld [vmem:[%s1 + $0x168] sm:$0xff]
  %v62 = vld [vmem:[%s1 + $0x170] sm:$0xff]
  %v63 = vld [vmem:[%s1 + $0x178] sm:$0xff]
  %v64 = vld [vmem:[%s1 + $0x180] sm:$0xff]
  %v65 = vld [vmem:[%s1 + $0x188] sm:$0xff]
  %v66 = vld [vmem:[%s1 + $0x190] sm:$0xff]
  %v67 = vld [vmem:[%s1 + $0x198] sm:$0xff]
  %v68 = vld [vmem:[%s1 + $0x1a0] sm:$0xff]
  %v69 = vld [vmem:[%s1 + $0x1a8] sm:$0xff]
  %v70 = vld [vmem:[%s1 + $0x1b0] sm:$0xff]
  %v71 = vld [vmem:[%s1 + $0x1b8] sm:$0xff]
  %v72 = vld [vmem:[%s2] sm:$0xff]
  %74 = vset.pattern.permute.xlu0 0
  %75 = vperm.xlu0 %74, %v72
  %v76 = vpop.permute.xlu0 %75
  %v134 = vunpack.c.l.b16 %v16
  %v135 = vunpack.c.h.b16 %v16
  %v136 = vunpack.c.l.b16 %v17
  %v137 = vunpack.c.h.b16 %v17
  %v138 = vunpack.c.l.b16 %v18
  %v139 = vunpack.c.h.b16 %v18
  %v140 = vunpack.c.l.b16 %v19
  %v141 = vunpack.c.h.b16 %v19
  %v142 = vunpack.c.l.b16 %v20
  %v143 = vunpack.c.h.b16 %v20
  %v144 = vunpack.c.l.b16 %v21
  %v145 = vunpack.c.h.b16 %v21
  %v146 = vunpack.c.l.b16 %v22
  %v147 = vunpack.c.h.b16 %v22
  %v148 = vunpack.c.l.b16 %v23
  %v149 = vunpack.c.h.b16 %v23
  %v150 = vunpack.c.l.b16 %v24
  %v151 = vunpack.c.h.b16 %v24
  %v152 = vunpack.c.l.b16 %v25
  %v153 = vunpack.c.h.b16 %v25
  %v154 = vunpack.c.l.b16 %v26
  %v155 = vunpack.c.h.b16 %v26
  %v156 = vunpack.c.l.b16 %v27
  %v157 = vunpack.c.h.b16 %v27
  %v158 = vunpack.c.l.b16 %v28
  %v159 = vunpack.c.h.b16 %v28
  %v160 = vunpack.c.l.b16 %v29
  %v161 = vunpack.c.h.b16 %v29
  %v162 = vunpack.c.l.b16 %v30
  %v163 = vunpack.c.h.b16 %v30
  %v164 = vunpack.c.l.b16 %v31
  %v165 = vunpack.c.h.b16 %v31
  %v166 = vunpack.c.l.b16 %v32
  %v167 = vunpack.c.h.b16 %v32
  %v168 = vunpack.c.l.b16 %v33
  %v169 = vunpack.c.h.b16 %v33
  %v170 = vunpack.c.l.b16 %v34
  %v171 = vunpack.c.h.b16 %v34
  %v172 = vunpack.c.l.b16 %v35
  %v173 = vunpack.c.h.b16 %v35
  %v174 = vunpack.c.l.b16 %v36
  %v175 = vunpack.c.h.b16 %v36
  %v176 = vunpack.c.l.b16 %v37
  %v177 = vunpack.c.h.b16 %v37
  %v178 = vunpack.c.l.b16 %v38
  %v179 = vunpack.c.h.b16 %v38
  %v180 = vunpack.c.l.b16 %v39
  %v181 = vunpack.c.h.b16 %v39
  %v182 = vunpack.c.l.b16 %v40
  %v183 = vunpack.c.h.b16 %v40
  %v184 = vunpack.c.l.b16 %v41
  %v185 = vunpack.c.h.b16 %v41
  %v186 = vunpack.c.l.b16 %v42
  %v187 = vunpack.c.h.b16 %v42
  %v188 = vunpack.c.l.b16 %v43
  %v189 = vunpack.c.h.b16 %v43
  %v190 = vunpack.c.l.b16 %v44
  %v191 = vunpack.c.h.b16 %v44
  %v192 = vunpack.c.l.b16 %v45
  %v193 = vunpack.c.h.b16 %v45
  %v194 = vunpack.c.l.b16 %v46
  %v195 = vunpack.c.h.b16 %v46
  %v196 = vunpack.c.l.b16 %v47
  %v197 = vunpack.c.h.b16 %v47
  %v198 = vunpack.c.l.b16 %v48
  %v199 = vunpack.c.h.b16 %v48
  %v200 = vunpack.c.l.b16 %v49
  %v201 = vunpack.c.h.b16 %v49
  %v202 = vunpack.c.l.b16 %v50
  %v203 = vunpack.c.h.b16 %v50
  %v204 = vunpack.c.l.b16 %v51
  %v205 = vunpack.c.h.b16 %v51
  %v206 = vunpack.c.l.b16 %v52
  %v207 = vunpack.c.h.b16 %v52
  %v208 = vunpack.c.l.b16 %v53
  %v209 = vunpack.c.h.b16 %v53
  %v210 = vunpack.c.l.b16 %v54
  %v211 = vunpack.c.h.b16 %v54
  %v212 = vunpack.c.l.b16 %v55
  %v213 = vunpack.c.h.b16 %v55
  %v214 = vunpack.c.l.b16 %v56
  %v215 = vunpack.c.h.b16 %v56
  %v216 = vunpack.c.l.b16 %v57
  %v217 = vunpack.c.h.b16 %v57
  %v218 = vunpack.c.l.b16 %v58
  %v219 = vunpack.c.h.b16 %v58
  %v220 = vunpack.c.l.b16 %v59
  %v221 = vunpack.c.h.b16 %v59
  %v222 = vunpack.c.l.b16 %v60
  %v223 = vunpack.c.h.b16 %v60
  %v224 = vunpack.c.l.b16 %v61
  %v225 = vunpack.c.h.b16 %v61
  %v226 = vunpack.c.l.b16 %v62
  %v227 = vunpack.c.h.b16 %v62
  %v228 = vunpack.c.l.b16 %v63
  %v229 = vunpack.c.h.b16 %v63
  %v230 = vunpack.c.l.b16 %v64
  %v231 = vunpack.c.h.b16 %v64
  %v232 = vunpack.c.l.b16 %v65
  %v233 = vunpack.c.h.b16 %v65
  %v234 = vunpack.c.l.b16 %v66
  %v235 = vunpack.c.h.b16 %v66
  %v236 = vunpack.c.l.b16 %v67
  %v237 = vunpack.c.h.b16 %v67
  %v238 = vunpack.c.l.b16 %v68
  %v239 = vunpack.c.h.b16 %v68
  %v240 = vunpack.c.l.b16 %v69
  %v241 = vunpack.c.h.b16 %v69
  %v242 = vunpack.c.l.b16 %v70
  %v243 = vunpack.c.h.b16 %v70
  %v244 = vunpack.c.l.b16 %v71
  %v245 = vunpack.c.h.b16 %v71
  %v246 = vpack.c.b16 %v142, %v134
  %v247 = vpack.c.b16 %v143, %v135
  %v248 = vpack.c.b16 %v144, %v136
  %v249 = vpack.c.b16 %v145, %v137
  %v250 = vpack.c.b16 %v146, %v138
  %v251 = vpack.c.b16 %v147, %v139
  %v252 = vpack.c.b16 %v148, %v140
  %v253 = vpack.c.b16 %v149, %v141
  %v254 = vpack.c.b16 %v158, %v150
  %v255 = vpack.c.b16 %v159, %v151
  %v256 = vpack.c.b16 %v160, %v152
  %v257 = vpack.c.b16 %v161, %v153
  %v258 = vpack.c.b16 %v162, %v154
  %v259 = vpack.c.b16 %v163, %v155
  %v260 = vpack.c.b16 %v164, %v156
  %v261 = vpack.c.b16 %v165, %v157
  %v262 = vpack.c.b16 %v174, %v166
  %v263 = vpack.c.b16 %v175, %v167
  %v264 = vpack.c.b16 %v176, %v168
  %v265 = vpack.c.b16 %v177, %v169
  %v266 = vpack.c.b16 %v178, %v170
  %v267 = vpack.c.b16 %v179, %v171
  %v268 = vpack.c.b16 %v180, %v172
  %v269 = vpack.c.b16 %v181, %v173
  %v270 = vpack.c.b16 %v190, %v182
  %v271 = vpack.c.b16 %v191, %v183
  %v272 = vpack.c.b16 %v192, %v184
  %v273 = vpack.c.b16 %v193, %v185
  %v274 = vpack.c.b16 %v194, %v186
  %v275 = vpack.c.b16 %v195, %v187
  %v276 = vpack.c.b16 %v196, %v188
  %v277 = vpack.c.b16 %v197, %v189
  %v278 = vpack.c.b16 %v206, %v198
  %v279 = vpack.c.b16 %v207, %v199
  %v280 = vpack.c.b16 %v208, %v200
  %v281 = vpack.c.b16 %v209, %v201
  %v282 = vpack.c.b16 %v210, %v202
  %v283 = vpack.c.b16 %v211, %v203
  %v284 = vpack.c.b16 %v212, %v204
  %v285 = vpack.c.b16 %v213, %v205
  %v286 = vpack.c.b16 %v222, %v214
  %v287 = vpack.c.b16 %v223, %v215
  %v288 = vpack.c.b16 %v224, %v216
  %v289 = vpack.c.b16 %v225, %v217
  %v290 = vpack.c.b16 %v226, %v218
  %v291 = vpack.c.b16 %v227, %v219
  %v292 = vpack.c.b16 %v228, %v220
  %v293 = vpack.c.b16 %v229, %v221
  %v294 = vpack.c.b16 %v238, %v230
  %v295 = vpack.c.b16 %v239, %v231
  %v296 = vpack.c.b16 %v240, %v232
  %v297 = vpack.c.b16 %v241, %v233
  %v298 = vpack.c.b16 %v242, %v234
  %v299 = vpack.c.b16 %v243, %v235
  %v300 = vpack.c.b16 %v244, %v236
  %v301 = vpack.c.b16 %v245, %v237
  %vm358 = vcmask 916480
  %v360 = vsel %vm358, %v15, 0
  %362 = vmatprep.subr.bf16.mxu0 %v247
  %363 = vmatpush1.bf16.msra.mxu0 %v246
  %364 = vmatprep.subr.bf16.mxu0 %v255
  %365 = vmatpush1.bf16.msra.mxu0 %v254
  %366 = vmatprep.subr.bf16.mxu0 %v263
  %367 = vmatpush1.bf16.msra.mxu0 %v262
  %368 = vmatprep.subr.bf16.mxu0 %v271
  %369 = vmatpush1.bf16.msra.mxu0 %v270
  %370 = vmatprep.subr.bf16.mxu0 %v279
  %371 = vmatpush1.bf16.msra.mxu0 %v278
  %372 = vmatprep.subr.bf16.mxu0 %v287
  %373 = vmatpush1.bf16.msra.mxu0 %v286
  %374 = vmatprep.subr.bf16.mxu0 %v295
  %375 = vmatpush1.bf16.msra.mxu0 %v294
  %376 = vmatprep.subr.bf16.mxu0 0
  %377 = vmatpush1.bf16.msra.mxu0 0
  %378 = vmatprep.subr.bf16.mxu0 0
  %379 = vmatpush1.bf16.msra.mxu0 0
  %380 = vmatprep.subr.bf16.mxu0 0
  %381 = vmatpush1.bf16.msra.mxu0 0
  %382 = vmatprep.subr.bf16.mxu0 0
  %383 = vmatpush1.bf16.msra.mxu0 0
  %384 = vmatprep.subr.bf16.mxu0 0
  %385 = vmatpush1.bf16.msra.mxu0 0
  %386 = vmatprep.subr.bf16.mxu0 0
  %387 = vmatpush1.bf16.msra.mxu0 0
  %388 = vmatprep.subr.bf16.mxu0 0
  %389 = vmatpush1.bf16.msra.mxu0 0
  %390 = vmatprep.subr.bf16.mxu0 0
  %391 = vmatpush1.bf16.msra.mxu0 0
  %392 = vmatprep.subr.bf16.mxu0 0
  %393 = vmatpush1.bf16.msra.mxu0 0
  %394 = vmatprep.mubr.bf16.mxu0 0
  %395 = vmatmul.mubr.bf16.gmra.mrb[0].mxu0 %v360
  %v396 = vpop.f32.mrb[0].mxu0
  %v397 = vadd.f32 %v76, %v396
  %v398 = vpop.f32.mrb[0].mxu0
  %v399 = vadd.f32 %v76, %v398
  %v400 = vpop.f32.mrb[0].mxu0
  %v401 = vpop.f32.mrb[0].mxu0
  %402 = vdwg.mxu0
  %403 = vmatprep.subr.bf16.mxu0 %v249
  %404 = vmatpush1.bf16.msra.mxu0 %v248
  %405 = vmatprep.subr.bf16.mxu0 %v257
  %406 = vmatpush1.bf16.msra.mxu0 %v256
  %407 = vmatprep.subr.bf16.mxu0 %v265
  %408 = vmatpush1.bf16.msra.mxu0 %v264
  %409 = vmatprep.subr.bf16.mxu0 %v273
  %410 = vmatpush1.bf16.msra.mxu0 %v272
  %411 = vmatprep.subr.bf16.mxu0 %v281
  %412 = vmatpush1.bf16.msra.mxu0 %v280
  %413 = vmatprep.subr.bf16.mxu0 %v289
  %414 = vmatpush1.bf16.msra.mxu0 %v288
  %415 = vmatprep.subr.bf16.mxu0 %v297
  %416 = vmatpush1.bf16.msra.mxu0 %v296
  %417 = vmatprep.subr.bf16.mxu0 0
  %418 = vmatpush1.bf16.msra.mxu0 0
  %419 = vmatprep.subr.bf16.mxu0 0
  %420 = vmatpush1.bf16.msra.mxu0 0
  %421 = vmatprep.subr.bf16.mxu0 0
  %422 = vmatpush1.bf16.msra.mxu0 0
  %423 = vmatprep.subr.bf16.mxu0 0
  %424 = vmatpush1.bf16.msra.mxu0 0
  %425 = vmatprep.subr.bf16.mxu0 0
  %426 = vmatpush1.bf16.msra.mxu0 0
  %427 = vmatprep.subr.bf16.mxu0 0
  %428 = vmatpush1.bf16.msra.mxu0 0
  %429 = vmatprep.subr.bf16.mxu0 0
  %430 = vmatpush1.bf16.msra.mxu0 0
  %431 = vmatprep.subr.bf16.mxu0 0
  %432 = vmatpush1.bf16.msra.mxu0 0
  %433 = vmatprep.subr.bf16.mxu0 0
  %434 = vmatpush1.bf16.msra.mxu0 0
  %435 = vmatprep.mubr.bf16.mxu0 0
  %436 = vmatmul.mubr.bf16.gmra.mrb[0].mxu0 %v360
  %v437 = vpop.f32.mrb[0].mxu0
  %v438 = vadd.f32 %v76, %v437
  %v439 = vpop.f32.mrb[0].mxu0
  %v440 = vadd.f32 %v76, %v439
  %v441 = vpop.f32.mrb[0].mxu0
  %v442 = vpop.f32.mrb[0].mxu0
  %443 = vdwg.mxu0
  %444 = vmatprep.subr.bf16.mxu0 %v251
  %445 = vmatpush1.bf16.msra.mxu0 %v250
  %446 = vmatprep.subr.bf16.mxu0 %v259
  %447 = vmatpush1.bf16.msra.mxu0 %v258
  %448 = vmatprep.subr.bf16.mxu0 %v267
  %449 = vmatpush1.bf16.msra.mxu0 %v266
  %450 = vmatprep.subr.bf16.mxu0 %v275
  %451 = vmatpush1.bf16.msra.mxu0 %v274
  %452 = vmatprep.subr.bf16.mxu0 %v283
  %453 = vmatpush1.bf16.msra.mxu0 %v282
  %454 = vmatprep.subr.bf16.mxu0 %v291
  %455 = vmatpush1.bf16.msra.mxu0 %v290
  %456 = vmatprep.subr.bf16.mxu0 %v299
  %457 = vmatpush1.bf16.msra.mxu0 %v298
  %458 = vmatprep.subr.bf16.mxu0 0
  %459 = vmatpush1.bf16.msra.mxu0 0
  %460 = vmatprep.subr.bf16.mxu0 0
  %461 = vmatpush1.bf16.msra.mxu0 0
  %462 = vmatprep.subr.bf16.mxu0 0
  %463 = vmatpush1.bf16.msra.mxu0 0
  %464 = vmatprep.subr.bf16.mxu0 0
  %465 = vmatpush1.bf16.msra.mxu0 0
  %466 = vmatprep.subr.bf16.mxu0 0
  %467 = vmatpush1.bf16.msra.mxu0 0
  %468 = vmatprep.subr.bf16.mxu0 0
  %469 = vmatpush1.bf16.msra.mxu0 0
  %470 = vmatprep.subr.bf16.mxu0 0
  %471 = vmatpush1.bf16.msra.mxu0 0
  %472 = vmatprep.subr.bf16.mxu0 0
  %473 = vmatpush1.bf16.msra.mxu0 0
  %474 = vmatprep.subr.bf16.mxu0 0
  %475 = vmatpush1.bf16.msra.mxu0 0
  %476 = vmatprep.mubr.bf16.mxu0 0
  %477 = vmatmul.mubr.bf16.gmra.mrb[0].mxu0 %v360
  %v478 = vpop.f32.mrb[0].mxu0
  %v479 = vadd.f32 %v76, %v478
  %v480 = vpop.f32.mrb[0].mxu0
  %v481 = vadd.f32 %v76, %v480
  %v482 = vpop.f32.mrb[0].mxu0
  %v483 = vpop.f32.mrb[0].mxu0
  %484 = vdwg.mxu0
  %485 = vmatprep.subr.bf16.mxu0 %v253
  %486 = vmatpush1.bf16.msra.mxu0 %v252
  %487 = vmatprep.subr.bf16.mxu0 %v261
  %488 = vmatpush1.bf16.msra.mxu0 %v260
  %489 = vmatprep.subr.bf16.mxu0 %v269
  %490 = vmatpush1.bf16.msra.mxu0 %v268
  %491 = vmatprep.subr.bf16.mxu0 %v277
  %492 = vmatpush1.bf16.msra.mxu0 %v276
  %493 = vmatprep.subr.bf16.mxu0 %v285
  %494 = vmatpush1.bf16.msra.mxu0 %v284
  %495 = vmatprep.subr.bf16.mxu0 %v293
  %496 = vmatpush1.bf16.msra.mxu0 %v292
  %497 = vmatprep.subr.bf16.mxu0 %v301
  %498 = vmatpush1.bf16.msra.mxu0 %v300
  %499 = vmatprep.subr.bf16.mxu0 0
  %500 = vmatpush1.bf16.msra.mxu0 0
  %501 = vmatprep.subr.bf16.mxu0 0
  %502 = vmatpush1.bf16.msra.mxu0 0
  %503 = vmatprep.subr.bf16.mxu0 0
  %504 = vmatpush1.bf16.msra.mxu0 0
  %505 = vmatprep.subr.bf16.mxu0 0
  %506 = vmatpush1.bf16.msra.mxu0 0
  %507 = vmatprep.subr.bf16.mxu0 0
  %508 = vmatpush1.bf16.msra.mxu0 0
  %509 = vmatprep.subr.bf16.mxu0 0
  %510 = vmatpush1.bf16.msra.mxu0 0
  %511 = vmatprep.subr.bf16.mxu0 0
  %512 = vmatpush1.bf16.msra.mxu0 0
  %513 = vmatprep.subr.bf16.mxu0 0
  %514 = vmatpush1.bf16.msra.mxu0 0
  %515 = vmatprep.subr.bf16.mxu0 0
  %516 = vmatpush1.bf16.msra.mxu0 0
  %517 = vmatprep.mubr.bf16.mxu0 0
  %518 = vmatmul.mubr.bf16.gmra.mrb[0].mxu0 %v360
  %v519 = vpop.f32.mrb[0].mxu0
  %v520 = vadd.f32 %v76, %v519
  %v521 = vpop.f32.mrb[0].mxu0
  %v522 = vadd.f32 %v76, %v521
  %v523 = vpop.f32.mrb[0].mxu0
  %v524 = vpop.f32.mrb[0].mxu0
  %525 = vdwg.mxu0
  %vm526 = vcmp.ge.f32.partialorder %v397, 0.0
  %vm527 = vcmp.ge.f32.partialorder %v399, 0.0
  %vm528 = vcmp.ge.f32.partialorder %v438, 0.0
  %vm529 = vcmp.ge.f32.partialorder %v440, 0.0
  %vm530 = vcmp.ge.f32.partialorder %v479, 0.0
  %vm531 = vcmp.ge.f32.partialorder %v481, 0.0
  %vm532 = vcmp.ge.f32.partialorder %v520, 0.0
  %vm533 = vcmp.ge.f32.partialorder %v522, 0.0
  %v534 = vmul.f32 %v397, 0.1
  %v535 = vmul.f32 %v399, 0.1
  %v536 = vmul.f32 %v438, 0.1
  %v537 = vmul.f32 %v440, 0.1
  %v538 = vmul.f32 %v479, 0.1
  %v539 = vmul.f32 %v481, 0.1
  %v540 = vmul.f32 %v520, 0.1
  %v541 = vmul.f32 %v522, 0.1
  %v542 = vsel %vm526, %v397, %v534
  %v543 = vsel %vm527, %v399, %v535
  %v544 = vsel %vm528, %v438, %v536
  %v545 = vsel %vm529, %v440, %v537
  %v546 = vsel %vm530, %v479, %v538
  %v547 = vsel %vm531, %v481, %v539
  %v548 = vsel %vm532, %v520, %v540
  %v549 = vsel %vm533, %v522, %v541
  %550 = vst [vmem:[%s3] sm:$0xff] %v542
  %551 = vst [vmem:[%s3 + $0x8] sm:$0xff] %v543
  %552 = vst [vmem:[%s3 + $0x10] sm:$0xff] %v544
  %553 = vst [vmem:[%s3 + $0x18] sm:$0xff] %v545
  %554 = vst [vmem:[%s3 + $0x20] sm:$0xff] %v546
  %555 = vst [vmem:[%s3 + $0x28] sm:$0xff] %v547
  %556 = vst [vmem:[%s3 + $0x30] sm:$0xff] %v548
  %557 = vst [vmem:[%s3 + $0x38] sm:$0xff] %v549
  // Predicated region
  $region14: #{unet_forward.9} parent=0 // pred_check
    _
  $region15: #{unet_forward.9} parent=0 // pred_check_branch
    %559 = sbr.rel (0) target = $region17
  $region16: #{unet_forward.9} parent=0 // pred_region
    _
  $region17: #{unet_forward.9} parent=0 // pred_fallthru
    _
  // Predicated region
  $region18: #{unet_forward.9} parent=0 // pred_check
    _
  $region19: #{unet_forward.9} parent=0 // pred_check_branch
    %561 = sbr.rel (0) target = $region21
  $region20: #{unet_forward.9} parent=0 // pred_region
    _
  $region21: #{unet_forward.9} parent=0 // pred_fallthru
    _

// kernel: squeeze.7
$region0: #{squeeze.7}
  %s0 = inlined_call_operand.vmem [shape: bf16[1,4,128], index: 0, kind: input, shape index: {}]
  %s1 = inlined_call_operand.vmem [shape: bf16[4,2,4,4,4], index: 1, kind: output, shape index: {}]
  $region1: #{squeeze.7} parent=0
    #allocation0 [shape = 'u8[131072]{0}', space=vmem, size = 0x20000, scoped, tag = 'scoped mem for output reshape']
    #allocation1 [shape = 'u8[4096]{0}', space=vmem, size = 0x1000, scoped, tag = 'scoped mem for input reshape']
    %s3 = smul.u32 2, 2
    %s4 = sshllo.u32 0, %s3
    %s5 = sshrl.u32 %s4, 1
    %s6 = sor.u32 %s4, %s5
    %s7 = sand.u32 %s6, 85
    %s8 = sshrl.u32 %s7, 1
    %s9 = sor.u32 %s7, %s8
    %s10 = sand.u32 51, %s9
    %s11 = sshrl.u32 %s10, 2
    %s12 = sor.u32 %s10, %s11
    %s13 = sand.u32 15, %s12
    %v14 = vld [vmem:[%s0] sm:%s13]
    %v15 = vunpack.c.l.bf16 %v14
    %v16 = vunpack.c.h.bf16 %v14
    %17 = vst [vmem:[#allocation1] sm:%s4] %v15
    %v18 = vld [vmem:[#allocation1] sm:$0xf]
    %vm19 = vcmask 31744
    %20 = vst.msk [vmem:[#allocation0] sm:$0x1] %vm19, %v18
    %s21 = scalar_lea.vmem [#allocation0], 63
    %22 = vst.msk [vmem:[%s21] sm:$0x2] %vm19, %v18
    %s23 = scalar_lea.vmem [#allocation0], 126
    %24 = vst.msk [vmem:[%s23] sm:$0x4] %vm19, %v18
    %s25 = scalar_lea.vmem [#allocation0], 189
    %26 = vst.msk [vmem:[%s25] sm:$0x8] %vm19, %v18
    %v27 = vld [vmem:[#allocation1] sm:$0xf]
    %28 = vrot.lane.b32.xlu0 %v27, 124
    %v29 = vpop.permute.xlu0 %28
    %vm30 = vcmask 31744
    %s31 = scalar_lea.vmem [#allocation0], 1
    %32 = vst.msk [vmem:[%s31] sm:$0x1] %vm30, %v29
    %s33 = scalar_lea.vmem [#allocation0], 64
    %34 = vst.msk [vmem:[%s33] sm:$0x2] %vm30, %v29
    %s35 = scalar_lea.vmem [#allocation0], 127
    %36 = vst.msk [vmem:[%s35] sm:$0x4] %vm30, %v29
    %s37 = scalar_lea.vmem [#allocation0], 190
    %38 = vst.msk [vmem:[%s37] sm:$0x8] %vm30, %v29
    %v39 = vld [vmem:[#allocation1] sm:$0xf]
    %40 = vrot.lane.b32.xlu0 %v39, 120
    %v41 = vpop.permute.xlu0 %40
    %vm42 = vcmask 31744
    %s43 = scalar_lea.vmem [#allocation0], 2
    %44 = vst.msk [vmem:[%s43] sm:$0x1] %vm42, %v41
    %s45 = scalar_lea.vmem [#allocation0], 65
    %46 = vst.msk [vmem:[%s45] sm:$0x2] %vm42, %v41
    %s47 = scalar_lea.vmem [#allocation0], 128
    %48 = vst.msk [vmem:[%s47] sm:$0x4] %vm42, %v41
    %s49 = scalar_lea.vmem [#allocation0], 191
    %50 = vst.msk [vmem:[%s49] sm:$0x8] %vm42, %v41
    %v51 = vld [vmem:[#allocation1] sm:$0xf]
    %52 = vrot.lane.b32.xlu0 %v51, 116
    %v53 = vpop.permute.xlu0 %52
    %vm54 = vcmask 31744
    %s55 = scalar_lea.vmem [#allocation0], 3
    %56 = vst.msk [vmem:[%s55] sm:$0x1] %vm54, %v53
    %s57 = scalar_lea.vmem [#allocation0], 66
    %58 = vst.msk [vmem:[%s57] sm:$0x2] %vm54, %v53
    %s59 = scalar_lea.vmem [#allocation0], 129
    %60 = vst.msk [vmem:[%s59] sm:$0x4] %vm54, %v53
    %s61 = scalar_lea.vmem [#allocation0], 192
    %62 = vst.msk [vmem:[%s61] sm:$0x8] %vm54, %v53
    %v63 = vld [vmem:[#allocation1] sm:$0xf]
    %64 = vrot.lane.b32.xlu0 %v63, 112
    %v65 = vpop.permute.xlu0 %64
    %vm66 = vcmask 31744
    %s67 = scalar_lea.vmem [#allocation0], 8
    %68 = vst.msk [vmem:[%s67] sm:$0x1] %vm66, %v65
    %s69 = scalar_lea.vmem [#allocation0], 71
    %70 = vst.msk [vmem:[%s69] sm:$0x2] %vm66, %v65
    %s71 = scalar_lea.vmem [#allocation0], 134
    %72 = vst.msk [vmem:[%s71] sm:$0x4] %vm66, %v65
    %s73 = scalar_lea.vmem [#allocation0], 197
    %74 = vst.msk [vmem:[%s73] sm:$0x8] %vm66, %v65
    %v75 = vld [vmem:[#allocation1] sm:$0xf]
    %76 = vrot.lane.b32.xlu0 %v75, 108
    %v77 = vpop.permute.xlu0 %76
    %vm78 = vcmask 31744
    %s79 = scalar_lea.vmem [#allocation0], 9
    %80 = vst.msk [vmem:[%s79] sm:$0x1] %vm78, %v77
    %s81 = scalar_lea.vmem [#allocation0], 72
    %82 = vst.msk [vmem:[%s81] sm:$0x2] %vm78, %v77
    %s83 = scalar_lea.vmem [#allocation0], 135
    %84 = vst.msk [vmem:[%s83] sm:$0x4] %vm78, %v77
    %s85 = scalar_lea.vmem [#allocation0], 198
    %86 = vst.msk [vmem:[%s85] sm:$0x8] %vm78, %v77
    %v87 = vld [vmem:[#allocation1] sm:$0xf]
    %88 = vrot.lane.b32.xlu0 %v87, 104
    %v89 = vpop.permute.xlu0 %88
    %vm90 = vcmask 31744
    %s91 = scalar_lea.vmem [#allocation0], 10
    %92 = vst.msk [vmem:[%s91] sm:$0x1] %vm90, %v89
    %s93 = scalar_lea.vmem [#allocation0], 73
    %94 = vst.msk [vmem:[%s93] sm:$0x2] %vm90, %v89
    %s95 = scalar_lea.vmem [#allocation0], 136
    %96 = vst.msk [vmem:[%s95] sm:$0x4] %vm90, %v89
    %s97 = scalar_lea.vmem [#allocation0], 199
    %98 = vst.msk [vmem:[%s97] sm:$0x8] %vm90, %v89
    %v99 = vld [vmem:[#allocation1] sm:$0xf]
    %100 = vrot.lane.b32.xlu0 %v99, 100
    %v101 = vpop.permute.xlu0 %100
    %vm102 = vcmask 31744
    %s103 = scalar_lea.vmem [#allocation0], 11
    %104 = vst.msk [vmem:[%s103] sm:$0x1] %vm102, %v101
    %s105 = scalar_lea.vmem [#allocation0], 74
    %106 = vst.msk [vmem:[%s105] sm:$0x2] %vm102, %v101
    %s107 = scalar_lea.vmem [#allocation0], 137
    %108 = vst.msk [vmem:[%s107] sm:$0x4] %vm102, %v101
    %s109 = scalar_lea.vmem [#allocation0], 200
    %110 = vst.msk [vmem:[%s109] sm:$0x8] %vm102, %v101
    %v111 = vld [vmem:[#allocation1] sm:$0xf]
    %112 = vrot.lane.b32.xlu0 %v111, 96
    %v113 = vpop.permute.xlu0 %112
    %vm114 = vcmask 31744
    %s115 = scalar_lea.vmem [#allocation0], 16
    %116 = vst.msk [vmem:[%s115] sm:$0x1] %vm114, %v113
    %s117 = scalar_lea.vmem [#allocation0], 79
    %118 = vst.msk [vmem:[%s117] sm:$0x2] %vm114, %v113
    %s119 = scalar_lea.vmem [#allocation0], 142
    %120 = vst.msk [vmem:[%s119] sm:$0x4] %vm114, %v113
    %s121 = scalar_lea.vmem [#allocation0], 205
    %122 = vst.msk [vmem:[%s121] sm:$0x8] %vm114, %v113
    %v123 = vld [vmem:[#allocation1] sm:$0xf]
    %124 = vrot.lane.b32.xlu0 %v123, 92
    %v125 = vpop.permute.xlu0 %124
    %vm126 = vcmask 31744
    %s127 = scalar_lea.vmem [#allocation0], 17
    %128 = vst.msk [vmem:[%s127] sm:$0x1] %vm126, %v125
    %s129 = scalar_lea.vmem [#allocation0], 80
    %130 = vst.msk [vmem:[%s129] sm:$0x2] %vm126, %v125
    %s131 = scalar_lea.vmem [#allocation0], 143
    %132 = vst.msk [vmem:[%s131] sm:$0x4] %vm126, %v125
    %s133 = scalar_lea.vmem [#allocation0], 206
    %134 = vst.msk [vmem:[%s133] sm:$0x8] %vm126, %v125
    %v135 = vld [vmem:[#allocation1] sm:$0xf]
    %136 = vrot.lane.b32.xlu0 %v135, 88
    %v137 = vpop.permute.xlu0 %136
    %vm138 = vcmask 31744
    %s139 = scalar_lea.vmem [#allocation0], 18
    %140 = vst.msk [vmem:[%s139] sm:$0x1] %vm138, %v137
    %s141 = scalar_lea.vmem [#allocation0], 81
    %142 = vst.msk [vmem:[%s141] sm:$0x2] %vm138, %v137
    %s143 = scalar_lea.vmem [#allocation0], 144
    %144 = vst.msk [vmem:[%s143] sm:$0x4] %vm138, %v137
    %s145 = scalar_lea.vmem [#allocation0], 207
    %146 = vst.msk [vmem:[%s145] sm:$0x8] %vm138, %v137
    %v147 = vld [vmem:[#allocation1] sm:$0xf]
    %148 = vrot.lane.b32.xlu0 %v147, 84
    %v149 = vpop.permute.xlu0 %148
    %vm150 = vcmask 31744
    %s151 = scalar_lea.vmem [#allocation0], 19
    %152 = vst.msk [vmem:[%s151] sm:$0x1] %vm150, %v149
    %s153 = scalar_lea.vmem [#allocation0], 82
    %154 = vst.msk [vmem:[%s153] sm:$0x2] %vm150, %v149
    %s155 = scalar_lea.vmem [#allocation0], 145
    %156 = vst.msk [vmem:[%s155] sm:$0x4] %vm150, %v149
    %s157 = scalar_lea.vmem [#allocation0], 208
    %158 = vst.msk [vmem:[%s157] sm:$0x8] %vm150, %v149
    %v159 = vld [vmem:[#allocation1] sm:$0xf]
    %160 = vrot.lane.b32.xlu0 %v159, 80
    %v161 = vpop.permute.xlu0 %160
    %vm162 = vcmask 31744
    %s163 = scalar_lea.vmem [#allocation0], 24
    %164 = vst.msk [vmem:[%s163] sm:$0x1] %vm162, %v161
    %s165 = scalar_lea.vmem [#allocation0], 87
    %166 = vst.msk [vmem:[%s165] sm:$0x2] %vm162, %v161
    %s167 = scalar_lea.vmem [#allocation0], 150
    %168 = vst.msk [vmem:[%s167] sm:$0x4] %vm162, %v161
    %s169 = scalar_lea.vmem [#allocation0], 213
    %170 = vst.msk [vmem:[%s169] sm:$0x8] %vm162, %v161
    %v171 = vld [vmem:[#allocation1] sm:$0xf]
    %172 = vrot.lane.b32.xlu0 %v171, 76
    %v173 = vpop.permute.xlu0 %172
    %vm174 = vcmask 31744
    %s175 = scalar_lea.vmem [#allocation0], 25
    %176 = vst.msk [vmem:[%s175] sm:$0x1] %vm174, %v173
    %s177 = scalar_lea.vmem [#allocation0], 88
    %178 = vst.msk [vmem:[%s177] sm:$0x2] %vm174, %v173
    %s179 = scalar_lea.vmem [#allocation0], 151
    %180 = vst.msk [vmem:[%s179] sm:$0x4] %vm174, %v173
    %s181 = scalar_lea.vmem [#allocation0], 214
    %182 = vst.msk [vmem:[%s181] sm:$0x8] %vm174, %v173
    %v183 = vld [vmem:[#allocation1] sm:$0xf]
    %184 = vrot.lane.b32.xlu0 %v183, 72
    %v185 = vpop.permute.xlu0 %184
    %vm186 = vcmask 31744
    %s187 = scalar_lea.vmem [#allocation0], 26
    %188 = vst.msk [vmem:[%s187] sm:$0x1] %vm186, %v185
    %s189 = scalar_lea.vmem [#allocation0], 89
    %190 = vst.msk [vmem:[%s189] sm:$0x2] %vm186, %v185
    %s191 = scalar_lea.vmem [#allocation0], 152
    %192 = vst.msk [vmem:[%s191] sm:$0x4] %vm186, %v185
    %s193 = scalar_lea.vmem [#allocation0], 215
    %194 = vst.msk [vmem:[%s193] sm:$0x8] %vm186, %v185
    %v195 = vld [vmem:[#allocation1] sm:$0xf]
    %196 = vrot.lane.b32.xlu0 %v195, 68
    %v197 = vpop.permute.xlu0 %196
    %vm198 = vcmask 31744
    %s199 = scalar_lea.vmem [#allocation0], 27
    %200 = vst.msk [vmem:[%s199] sm:$0x1] %vm198, %v197
    %s201 = scalar_lea.vmem [#allocation0], 90
    %202 = vst.msk [vmem:[%s201] sm:$0x2] %vm198, %v197
    %s203 = scalar_lea.vmem [#allocation0], 153
    %204 = vst.msk [vmem:[%s203] sm:$0x4] %vm198, %v197
    %s205 = scalar_lea.vmem [#allocation0], 216
    %206 = vst.msk [vmem:[%s205] sm:$0x8] %vm198, %v197
    %v207 = vld [vmem:[#allocation1] sm:$0xf]
    %208 = vrot.lane.b32.xlu0 %v207, 64
    %v209 = vpop.permute.xlu0 %208
    %vm210 = vcmask 31744
    %s211 = scalar_lea.vmem [#allocation0], 32
    %212 = vst.msk [vmem:[%s211] sm:$0x1] %vm210, %v209
    %s213 = scalar_lea.vmem [#allocation0], 95
    %214 = vst.msk [vmem:[%s213] sm:$0x2] %vm210, %v209
    %s215 = scalar_lea.vmem [#allocation0], 158
    %216 = vst.msk [vmem:[%s215] sm:$0x4] %vm210, %v209
    %s217 = scalar_lea.vmem [#allocation0], 221
    %218 = vst.msk [vmem:[%s217] sm:$0x8] %vm210, %v209
    %v219 = vld [vmem:[#allocation1] sm:$0xf]
    %220 = vrot.lane.b32.xlu0 %v219, 60
    %v221 = vpop.permute.xlu0 %220
    %vm222 = vcmask 31744
    %s223 = scalar_lea.vmem [#allocation0], 33
    %224 = vst.msk [vmem:[%s223] sm:$0x1] %vm222, %v221
    %s225 = scalar_lea.vmem [#allocation0], 96
    %226 = vst.msk [vmem:[%s225] sm:$0x2] %vm222, %v221
    %s227 = scalar_lea.vmem [#allocation0], 159
    %228 = vst.msk [vmem:[%s227] sm:$0x4] %vm222, %v221
    %s229 = scalar_lea.vmem [#allocation0], 222
    %230 = vst.msk [vmem:[%s229] sm:$0x8] %vm222, %v221
    %v231 = vld [vmem:[#allocation1] sm:$0xf]
    %232 = vrot.lane.b32.xlu0 %v231, 56
    %v233 = vpop.permute.xlu0 %232
    %vm234 = vcmask 31744
    %s235 = scalar_lea.vmem [#allocation0], 34
    %236 = vst.msk [vmem:[%s235] sm:$0x1] %vm234, %v233
    %s237 = scalar_lea.vmem [#allocation0], 97
    %238 = vst.msk [vmem:[%s237] sm:$0x2] %vm234, %v233
    %s239 = scalar_lea.vmem [#allocation0], 160
    %240 = vst.msk [vmem:[%s239] sm:$0x4] %vm234, %v233
    %s241 = scalar_lea.vmem [#allocation0], 223
    %242 = vst.msk [vmem:[%s241] sm:$0x8] %vm234, %v233
    %v243 = vld [vmem:[#allocation1] sm:$0xf]
    %244 = vrot.lane.b32.xlu0 %v243, 52
    %v245 = vpop.permute.xlu0 %244
    %vm246 = vcmask 31744
    %s247 = scalar_lea.vmem [#allocation0], 35
    %248 = vst.msk [vmem:[%s247] sm:$0x1] %vm246, %v245
    %s249 = scalar_lea.vmem [#allocation0], 98
    %250 = vst.msk [vmem:[%s249] sm:$0x2] %vm246, %v245
    %s251 = scalar_lea.vmem [#allocation0], 161
    %252 = vst.msk [vmem:[%s251] sm:$0x4] %vm246, %v245
    %s253 = scalar_lea.vmem [#allocation0], 224
    %254 = vst.msk [vmem:[%s253] sm:$0x8] %vm246, %v245
    %v255 = vld [vmem:[#allocation1] sm:$0xf]
    %256 = vrot.lane.b32.xlu0 %v255, 48
    %v257 = vpop.permute.xlu0 %256
    %vm258 = vcmask 31744
    %s259 = scalar_lea.vmem [#allocation0], 40
    %260 = vst.msk [vmem:[%s259] sm:$0x1] %vm258, %v257
    %s261 = scalar_lea.vmem [#allocation0], 103
    %262 = vst.msk [vmem:[%s261] sm:$0x2] %vm258, %v257
    %s263 = scalar_lea.vmem [#allocation0], 166
    %264 = vst.msk [vmem:[%s263] sm:$0x4] %vm258, %v257
    %s265 = scalar_lea.vmem [#allocation0], 229
    %266 = vst.msk [vmem:[%s265] sm:$0x8] %vm258, %v257
    %v267 = vld [vmem:[#allocation1] sm:$0xf]
    %268 = vrot.lane.b32.xlu0 %v267, 44
    %v269 = vpop.permute.xlu0 %268
    %vm270 = vcmask 31744
    %s271 = scalar_lea.vmem [#allocation0], 41
    %272 = vst.msk [vmem:[%s271] sm:$0x1] %vm270, %v269
    %s273 = scalar_lea.vmem [#allocation0], 104
    %274 = vst.msk [vmem:[%s273] sm:$0x2] %vm270, %v269
    %s275 = scalar_lea.vmem [#allocation0], 167
    %276 = vst.msk [vmem:[%s275] sm:$0x4] %vm270, %v269
    %s277 = scalar_lea.vmem [#allocation0], 230
    %278 = vst.msk [vmem:[%s277] sm:$0x8] %vm270, %v269
    %v279 = vld [vmem:[#allocation1] sm:$0xf]
    %280 = vrot.lane.b32.xlu0 %v279, 40
    %v281 = vpop.permute.xlu0 %280
    %vm282 = vcmask 31744
    %s283 = scalar_lea.vmem [#allocation0], 42
    %284 = vst.msk [vmem:[%s283] sm:$0x1] %vm282, %v281
    %s285 = scalar_lea.vmem [#allocation0], 105
    %286 = vst.msk [vmem:[%s285] sm:$0x2] %vm282, %v281
    %s287 = scalar_lea.vmem [#allocation0], 168
    %288 = vst.msk [vmem:[%s287] sm:$0x4] %vm282, %v281
    %s289 = scalar_lea.vmem [#allocation0], 231
    %290 = vst.msk [vmem:[%s289] sm:$0x8] %vm282, %v281
    %v291 = vld [vmem:[#allocation1] sm:$0xf]
    %292 = vrot.lane.b32.xlu0 %v291, 36
    %v293 = vpop.permute.xlu0 %292
    %vm294 = vcmask 31744
    %s295 = scalar_lea.vmem [#allocation0], 43
    %296 = vst.msk [vmem:[%s295] sm:$0x1] %vm294, %v293
    %s297 = scalar_lea.vmem [#allocation0], 106
    %298 = vst.msk [vmem:[%s297] sm:$0x2] %vm294, %v293
    %s299 = scalar_lea.vmem [#allocation0], 169
    %300 = vst.msk [vmem:[%s299] sm:$0x4] %vm294, %v293
    %s301 = scalar_lea.vmem [#allocation0], 232
    %302 = vst.msk [vmem:[%s301] sm:$0x8] %vm294, %v293
    %v303 = vld [vmem:[#allocation1] sm:$0xf]
    %304 = vrot.lane.b32.xlu0 %v303, 32
    %v305 = vpop.permute.xlu0 %304
    %vm306 = vcmask 31744
    %s307 = scalar_lea.vmem [#allocation0], 48
    %308 = vst.msk [vmem:[%s307] sm:$0x1] %vm306, %v305
    %s309 = scalar_lea.vmem [#allocation0], 111
    %310 = vst.msk [vmem:[%s309] sm:$0x2] %vm306, %v305
    %s311 = scalar_lea.vmem [#allocation0], 174
    %312 = vst.msk [vmem:[%s311] sm:$0x4] %vm306, %v305
    %s313 = scalar_lea.vmem [#allocation0], 237
    %314 = vst.msk [vmem:[%s313] sm:$0x8] %vm306, %v305
    %v315 = vld [vmem:[#allocation1] sm:$0xf]
    %316 = vrot.lane.b32.xlu0 %v315, 28
    %v317 = vpop.permute.xlu0 %316
    %vm318 = vcmask 31744
    %s319 = scalar_lea.vmem [#allocation0], 49
    %320 = vst.msk [vmem:[%s319] sm:$0x1] %vm318, %v317
    %s321 = scalar_lea.vmem [#allocation0], 112
    %322 = vst.msk [vmem:[%s321] sm:$0x2] %vm318, %v317
    %s323 = scalar_lea.vmem [#allocation0], 175
    %324 = vst.msk [vmem:[%s323] sm:$0x4] %vm318, %v317
    %s325 = scalar_lea.vmem [#allocation0], 238
    %326 = vst.msk [vmem:[%s325] sm:$0x8] %vm318, %v317
    %v327 = vld [vmem:[#allocation1] sm:$0xf]
    %328 = vrot.lane.b32.xlu0 %v327, 24
    %v329 = vpop.permute.xlu0 %328
    %vm330 = vcmask 31744
    %s331 = scalar_lea.vmem [#allocation0], 50
    %332 = vst.msk [vmem:[%s331] sm:$0x1] %vm330, %v329
    %s333 = scalar_lea.vmem [#allocation0], 113
    %334 = vst.msk [vmem:[%s333] sm:$0x2] %vm330, %v329
    %s335 = scalar_lea.vmem [#allocation0], 176
    %336 = vst.msk [vmem:[%s335] sm:$0x4] %vm330, %v329
    %s337 = scalar_lea.vmem [#allocation0], 239
    %338 = vst.msk [vmem:[%s337] sm:$0x8] %vm330, %v329
    %v339 = vld [vmem:[#allocation1] sm:$0xf]
    %340 = vrot.lane.b32.xlu0 %v339, 20
    %v341 = vpop.permute.xlu0 %340
    %vm342 = vcmask 31744
    %s343 = scalar_lea.vmem [#allocation0], 51
    %344 = vst.msk [vmem:[%s343] sm:$0x1] %vm342, %v341
    %s345 = scalar_lea.vmem [#allocation0], 114
    %346 = vst.msk [vmem:[%s345] sm:$0x2] %vm342, %v341
    %s347 = scalar_lea.vmem [#allocation0], 177
    %348 = vst.msk [vmem:[%s347] sm:$0x4] %vm342, %v341
    %s349 = scalar_lea.vmem [#allocation0], 240
    %350 = vst.msk [vmem:[%s349] sm:$0x8] %vm342, %v341
    %v351 = vld [vmem:[#allocation1] sm:$0xf]
    %352 = vrot.lane.b32.xlu0 %v351, 16
    %v353 = vpop.permute.xlu0 %352
    %vm354 = vcmask 31744
    %s355 = scalar_lea.vmem [#allocation0], 56
    %356 = vst.msk [vmem:[%s355] sm:$0x1] %vm354, %v353
    %s357 = scalar_lea.vmem [#allocation0], 119
    %358 = vst.msk [vmem:[%s357] sm:$0x2] %vm354, %v353
    %s359 = scalar_lea.vmem [#allocation0], 182
    %360 = vst.msk [vmem:[%s359] sm:$0x4] %vm354, %v353
    %s361 = scalar_lea.vmem [#allocation0], 245
    %362 = vst.msk [vmem:[%s361] sm:$0x8] %vm354, %v353
    %v363 = vld [vmem:[#allocation1] sm:$0xf]
    %364 = vrot.lane.b32.xlu0 %v363, 12
    %v365 = vpop.permute.xlu0 %364
    %vm366 = vcmask 31744
    %s367 = scalar_lea.vmem [#allocation0], 57
    %368 = vst.msk [vmem:[%s367] sm:$0x1] %vm366, %v365
    %s369 = scalar_lea.vmem [#allocation0], 120
    %370 = vst.msk [vmem:[%s369] sm:$0x2] %vm366, %v365
    %s371 = scalar_lea.vmem [#allocation0], 183
    %372 = vst.msk [vmem:[%s371] sm:$0x4] %vm366, %v365
    %s373 = scalar_lea.vmem [#allocation0], 246
    %374 = vst.msk [vmem:[%s373] sm:$0x8] %vm366, %v365
    %v375 = vld [vmem:[#allocation1] sm:$0xf]
    %376 = vrot.lane.b32.xlu0 %v375, 8
    %v377 = vpop.permute.xlu0 %376
    %vm378 = vcmask 31744
    %s379 = scalar_lea.vmem [#allocation0], 58
    %380 = vst.msk [vmem:[%s379] sm:$0x1] %vm378, %v377
    %s381 = scalar_lea.vmem [#allocation0], 121
    %382 = vst.msk [vmem:[%s381] sm:$0x2] %vm378, %v377
    %s383 = scalar_lea.vmem [#allocation0], 184
    %384 = vst.msk [vmem:[%s383] sm:$0x4] %vm378, %v377
    %s385 = scalar_lea.vmem [#allocation0], 247
    %386 = vst.msk [vmem:[%s385] sm:$0x8] %vm378, %v377
    %v387 = vld [vmem:[#allocation1] sm:$0xf]
    %388 = vrot.lane.b32.xlu0 %v387, 4
    %v389 = vpop.permute.xlu0 %388
    %vm390 = vcmask 31744
    %s391 = scalar_lea.vmem [#allocation0], 59
    %392 = vst.msk [vmem:[%s391] sm:$0x1] %vm390, %v389
    %s393 = scalar_lea.vmem [#allocation0], 122
    %394 = vst.msk [vmem:[%s393] sm:$0x2] %vm390, %v389
    %s395 = scalar_lea.vmem [#allocation0], 185
    %396 = vst.msk [vmem:[%s395] sm:$0x4] %vm390, %v389
    %s397 = scalar_lea.vmem [#allocation0], 248
    %398 = vst.msk [vmem:[%s397] sm:$0x8] %vm390, %v389
    %s400 = smul.u32 2, 2
    %s401 = sshllo.u32 0, %s400
    %s402 = sshrl.u32 %s400, 1
    %v403 = vld [vmem:[#allocation0] sm:%s401]
    %v404 = vpack.c.bf16 0.0, %v403
    %s405 = sshllo.u32 0, %s402
    %406 = vst [vmem:[%s1] sm:%s405] %v404
    %s407 = scalar_lea.vmem [#allocation0], 8
    %v408 = vld [vmem:[%s407] sm:%s401]
    %v409 = vpack.c.bf16 0.0, %v408
    %s410 = sshllo.u32 0, %s402
    %s411 = scalar_lea.vmem %s1, 2
    %412 = vst [vmem:[%s411] sm:%s410] %v409
    %s413 = scalar_lea.vmem [#allocation0], 16
    %v414 = vld [vmem:[%s413] sm:%s401]
    %v415 = vpack.c.bf16 0.0, %v414
    %s416 = sshllo.u32 0, %s402
    %s417 = smul.addr 2, 2
    %s418 = scalar_lea.vmem %s1, %s417
    %419 = vst [vmem:[%s418] sm:%s416] %v415
    %s420 = scalar_lea.vmem [#allocation0], 24
    %v421 = vld [vmem:[%s420] sm:%s401]
    %v422 = vpack.c.bf16 0.0, %v421
    %s423 = sshllo.u32 0, %s402
    %s424 = smul.addr 2, 3
    %s425 = scalar_lea.vmem %s1, %s424
    %426 = vst [vmem:[%s425] sm:%s423] %v422
    %s427 = scalar_lea.vmem [#allocation0], 32
    %v428 = vld [vmem:[%s427] sm:%s401]
    %v429 = vpack.c.bf16 0.0, %v428
    %s430 = sshllo.u32 0, %s402
    %s431 = smul.addr 2, 4
    %s432 = scalar_lea.vmem %s1, %s431
    %433 = vst [vmem:[%s432] sm:%s430] %v429
    %s434 = scalar_lea.vmem [#allocation0], 40
    %v435 = vld [vmem:[%s434] sm:%s401]
    %v436 = vpack.c.bf16 0.0, %v435
    %s437 = sshllo.u32 0, %s402
    %s438 = smul.addr 2, 5
    %s439 = scalar_lea.vmem %s1, %s438
    %440 = vst [vmem:[%s439] sm:%s437] %v436
    %s441 = scalar_lea.vmem [#allocation0], 48
    %v442 = vld [vmem:[%s441] sm:%s401]
    %v443 = vpack.c.bf16 0.0, %v442
    %s444 = sshllo.u32 0, %s402
    %s445 = smul.addr 2, 6
    %s446 = scalar_lea.vmem %s1, %s445
    %447 = vst [vmem:[%s446] sm:%s444] %v443
    %s448 = scalar_lea.vmem [#allocation0], 56
    %v449 = vld [vmem:[%s448] sm:%s401]
    %v450 = vpack.c.bf16 0.0, %v449
    %s451 = sshllo.u32 0, %s402
    %s452 = smul.addr 2, 7
    %s453 = scalar_lea.vmem %s1, %s452
    %454 = vst [vmem:[%s453] sm:%s451] %v450
    %s455 = scalar_lea.vmem [#allocation0], 64
    %v456 = vld [vmem:[%s455] sm:%s401]
    %v457 = vpack.c.bf16 0.0, %v456
    %s458 = sshllo.u32 0, %s402
    %s459 = smul.addr 2, 8
    %s460 = scalar_lea.vmem %s1, %s459
    %461 = vst [vmem:[%s460] sm:%s458] %v457
    %s462 = scalar_lea.vmem [#allocation0], 72
    %v463 = vld [vmem:[%s462] sm:%s401]
    %v464 = vpack.c.bf16 0.0, %v463
    %s465 = sshllo.u32 0, %s402
    %s466 = smul.addr 2, 9
    %s467 = scalar_lea.vmem %s1, %s466
    %468 = vst [vmem:[%s467] sm:%s465] %v464
    %s469 = scalar_lea.vmem [#allocation0], 80
    %v470 = vld [vmem:[%s469] sm:%s401]
    %v471 = vpack.c.bf16 0.0, %v470
    %s472 = sshllo.u32 0, %s402
    %s473 = smul.addr 2, 10
    %s474 = scalar_lea.vmem %s1, %s473
    %475 = vst [vmem:[%s474] sm:%s472] %v471
    %s476 = scalar_lea.vmem [#allocation0], 88
    %v477 = vld [vmem:[%s476] sm:%s401]
    %v478 = vpack.c.bf16 0.0, %v477
    %s479 = sshllo.u32 0, %s402
    %s480 = smul.addr 2, 11
    %s481 = scalar_lea.vmem %s1, %s480
    %482 = vst [vmem:[%s481] sm:%s479] %v478
    %s483 = scalar_lea.vmem [#allocation0], 96
    %v484 = vld [vmem:[%s483] sm:%s401]
    %v485 = vpack.c.bf16 0.0, %v484
    %s486 = sshllo.u32 0, %s402
    %s487 = smul.addr 2, 12
    %s488 = scalar_lea.vmem %s1, %s487
    %489 = vst [vmem:[%s488] sm:%s486] %v485
    %s490 = scalar_lea.vmem [#allocation0], 104
    %v491 = vld [vmem:[%s490] sm:%s401]
    %v492 = vpack.c.bf16 0.0, %v491
    %s493 = sshllo.u32 0, %s402
    %s494 = smul.addr 2, 13
    %s495 = scalar_lea.vmem %s1, %s494
    %496 = vst [vmem:[%s495] sm:%s493] %v492
    %s497 = scalar_lea.vmem [#allocation0], 112
    %v498 = vld [vmem:[%s497] sm:%s401]
    %v499 = vpack.c.bf16 0.0, %v498
    %s500 = sshllo.u32 0, %s402
    %s501 = smul.addr 2, 14
    %s502 = scalar_lea.vmem %s1, %s501
    %503 = vst [vmem:[%s502] sm:%s500] %v499
    %s504 = scalar_lea.vmem [#allocation0], 120
    %v505 = vld [vmem:[%s504] sm:%s401]
    %v506 = vpack.c.bf16 0.0, %v505
    %s507 = sshllo.u32 0, %s402
    %s508 = smul.addr 2, 15
    %s509 = scalar_lea.vmem %s1, %s508
    %510 = vst [vmem:[%s509] sm:%s507] %v506
    %s511 = scalar_lea.vmem [#allocation0], 128
    %v512 = vld [vmem:[%s511] sm:%s401]
    %v513 = vpack.c.bf16 0.0, %v512
    %s514 = sshllo.u32 0, %s402
    %s515 = smul.addr 2, 16
    %s516 = scalar_lea.vmem %s1, %s515
    %517 = vst [vmem:[%s516] sm:%s514] %v513
    %s518 = scalar_lea.vmem [#allocation0], 136
    %v519 = vld [vmem:[%s518] sm:%s401]
    %v520 = vpack.c.bf16 0.0, %v519
    %s521 = sshllo.u32 0, %s402
    %s522 = smul.addr 2, 17
    %s523 = scalar_lea.vmem %s1, %s522
    %524 = vst [vmem:[%s523] sm:%s521] %v520
    %s525 = scalar_lea.vmem [#allocation0], 144
    %v526 = vld [vmem:[%s525] sm:%s401]
    %v527 = vpack.c.bf16 0.0, %v526
    %s528 = sshllo.u32 0, %s402
    %s529 = smul.addr 2, 18
    %s530 = scalar_lea.vmem %s1, %s529
    %531 = vst [vmem:[%s530] sm:%s528] %v527
    %s532 = scalar_lea.vmem [#allocation0], 152
    %v533 = vld [vmem:[%s532] sm:%s401]
    %v534 = vpack.c.bf16 0.0, %v533
    %s535 = sshllo.u32 0, %s402
    %s536 = smul.addr 2, 19
    %s537 = scalar_lea.vmem %s1, %s536
    %538 = vst [vmem:[%s537] sm:%s535] %v534
    %s539 = scalar_lea.vmem [#allocation0], 160
    %v540 = vld [vmem:[%s539] sm:%s401]
    %v541 = vpack.c.bf16 0.0, %v540
    %s542 = sshllo.u32 0, %s402
    %s543 = smul.addr 2, 20
    %s544 = scalar_lea.vmem %s1, %s543
    %545 = vst [vmem:[%s544] sm:%s542] %v541
    %s546 = scalar_lea.vmem [#allocation0], 168
    %v547 = vld [vmem:[%s546] sm:%s401]
    %v548 = vpack.c.bf16 0.0, %v547
    %s549 = sshllo.u32 0, %s402
    %s550 = smul.addr 2, 21
    %s551 = scalar_lea.vmem %s1, %s550
    %552 = vst [vmem:[%s551] sm:%s549] %v548
    %s553 = scalar_lea.vmem [#allocation0], 176
    %v554 = vld [vmem:[%s553] sm:%s401]
    %v555 = vpack.c.bf16 0.0, %v554
    %s556 = sshllo.u32 0, %s402
    %s557 = smul.addr 2, 22
    %s558 = scalar_lea.vmem %s1, %s557
    %559 = vst [vmem:[%s558] sm:%s556] %v555
    %s560 = scalar_lea.vmem [#allocation0], 184
    %v561 = vld [vmem:[%s560] sm:%s401]
    %v562 = vpack.c.bf16 0.0, %v561
    %s563 = sshllo.u32 0, %s402
    %s564 = smul.addr 2, 23
    %s565 = scalar_lea.vmem %s1, %s564
    %566 = vst [vmem:[%s565] sm:%s563] %v562
    %s567 = scalar_lea.vmem [#allocation0], 192
    %v568 = vld [vmem:[%s567] sm:%s401]
    %v569 = vpack.c.bf16 0.0, %v568
    %s570 = sshllo.u32 0, %s402
    %s571 = smul.addr 2, 24
    %s572 = scalar_lea.vmem %s1, %s571
    %573 = vst [vmem:[%s572] sm:%s570] %v569
    %s574 = scalar_lea.vmem [#allocation0], 200
    %v575 = vld [vmem:[%s574] sm:%s401]
    %v576 = vpack.c.bf16 0.0, %v575
    %s577 = sshllo.u32 0, %s402
    %s578 = smul.addr 2, 25
    %s579 = scalar_lea.vmem %s1, %s578
    %580 = vst [vmem:[%s579] sm:%s577] %v576
    %s581 = scalar_lea.vmem [#allocation0], 208
    %v582 = vld [vmem:[%s581] sm:%s401]
    %v583 = vpack.c.bf16 0.0, %v582
    %s584 = sshllo.u32 0, %s402
    %s585 = smul.addr 2, 26
    %s586 = scalar_lea.vmem %s1, %s585
    %587 = vst [vmem:[%s586] sm:%s584] %v583
    %s588 = scalar_lea.vmem [#allocation0], 216
    %v589 = vld [vmem:[%s588] sm:%s401]
    %v590 = vpack.c.bf16 0.0, %v589
    %s591 = sshllo.u32 0, %s402
    %s592 = smul.addr 2, 27
    %s593 = scalar_lea.vmem %s1, %s592
    %594 = vst [vmem:[%s593] sm:%s591] %v590
    %s595 = scalar_lea.vmem [#allocation0], 224
    %v596 = vld [vmem:[%s595] sm:%s401]
    %v597 = vpack.c.bf16 0.0, %v596
    %s598 = sshllo.u32 0, %s402
    %s599 = smul.addr 2, 28
    %s600 = scalar_lea.vmem %s1, %s599
    %601 = vst [vmem:[%s600] sm:%s598] %v597
    %s602 = scalar_lea.vmem [#allocation0], 232
    %v603 = vld [vmem:[%s602] sm:%s401]
    %v604 = vpack.c.bf16 0.0, %v603
    %s605 = sshllo.u32 0, %s402
    %s606 = smul.addr 2, 29
    %s607 = scalar_lea.vmem %s1, %s606
    %608 = vst [vmem:[%s607] sm:%s605] %v604
    %s609 = scalar_lea.vmem [#allocation0], 240
    %v610 = vld [vmem:[%s609] sm:%s401]
    %v611 = vpack.c.bf16 0.0, %v610
    %s612 = sshllo.u32 0, %s402
    %s613 = smul.addr 2, 30
    %s614 = scalar_lea.vmem %s1, %s613
    %615 = vst [vmem:[%s614] sm:%s612] %v611
    %s616 = scalar_lea.vmem [#allocation0], 248
    %v617 = vld [vmem:[%s616] sm:%s401]
    %v618 = vpack.c.bf16 0.0, %v617
    %s619 = sshllo.u32 0, %s402
    %s620 = smul.addr 2, 31
    %s621 = scalar_lea.vmem %s1, %s620
    %622 = vst [vmem:[%s621] sm:%s619] %v618

// kernel: unet_forward.10
$region0: #{unet_forward.10}
  #allocation0 [shape = 'u32[]', space=smem, size = 0x4, offset = 0x4, fixed_abs, tag = 'smem constant byte address 0x4 - core index']
  #allocation1 [shape = 'u32[144,128]{1,0:T(1,128)}', space=vmem, size = 0x12000, scoped, tag = 'internal scratch']
  %s0 = inlined_call_operand.vmem [shape: bf16[1,8,112], index: 0, kind: input, shape index: {}]
  %s1 = inlined_call_operand.vmem [shape: bf16[1,112,128], index: 1, kind: input, shape index: {}]
  %s2 = inlined_call_operand.vmem [shape: f32[1,8,1], index: 2, kind: input, shape index: {}]
  %s3 = inlined_call_operand.vmem [shape: f32[1,8,128], index: 3, kind: output, shape index: {}]
  %s4 = sld [smem:[#allocation0]]
  $region22: #{unet_forward.10} parent=0
    _
  %s6 = ssub.s32 1, %s4
  %s7 = scalar_select 0, %s6, %s4
  // Predicated region
  $region2: #{unet_forward.10} parent=0 // pred_check
    _
  $region3: #{unet_forward.10} parent=0 // pred_check_branch
    %9 = sbr.rel (0) target = $region5
  $region4: #{unet_forward.10} parent=0 // pred_region
    _
  $region5: #{unet_forward.10} parent=0 // pred_fallthru
    _
  // Predicated region
  $region6: #{unet_forward.10} parent=0 // pred_check
    _
  $region7: #{unet_forward.10} parent=0 // pred_check_branch
    %11 = sbr.rel (0) target = $region9
  $region8: #{unet_forward.10} parent=0 // pred_region
    _
  $region9: #{unet_forward.10} parent=0 // pred_fallthru
    _
  // Predicated region
  $region10: #{unet_forward.10} parent=0 // pred_check
    _
  $region11: #{unet_forward.10} parent=0 // pred_check_branch
    %13 = sbr.rel (0) target = $region13
  $region12: #{unet_forward.10} parent=0 // pred_region
    _
  $region13: #{unet_forward.10} parent=0 // pred_fallthru
    _
  %v15 = vld [vmem:[%s0] sm:$0xf]
  %v16 = vld [vmem:[%s1] sm:$0xf]
  %v17 = vld [vmem:[%s1 + $0x4] sm:$0xf]
  %v18 = vld [vmem:[%s1 + $0x8] sm:$0xf]
  %v19 = vld [vmem:[%s1 + $0xc] sm:$0xf]
  %v20 = vld [vmem:[%s1 + $0x10] sm:$0xf]
  %v21 = vld [vmem:[%s1 + $0x14] sm:$0xf]
  %v22 = vld [vmem:[%s1 + $0x18] sm:$0xf]
  %v23 = vld [vmem:[%s1 + $0x1c] sm:$0xf]
  %v24 = vld [vmem:[%s1 + $0x20] sm:$0xf]
  %v25 = vld [vmem:[%s1 + $0x24] sm:$0xf]
  %v26 = vld [vmem:[%s1 + $0x28] sm:$0xf]
  %v27 = vld [vmem:[%s1 + $0x2c] sm:$0xf]
  %v28 = vld [vmem:[%s1 + $0x30] sm:$0xf]
  %v29 = vld [vmem:[%s1 + $0x34] sm:$0xf]
  %v30 = vld [vmem:[%s2] sm:$0xff]
  %32 = vset.pattern.permute.xlu0 0
  %33 = vperm.xlu0 %32, %v30
  %v34 = vpop.permute.xlu0 %33
  %v50 = vunpack.c.l.b16 %v16
  %v51 = vunpack.c.l.b16 %v17
  %v52 = vunpack.c.l.b16 %v18
  %v53 = vunpack.c.l.b16 %v19
  %v54 = vunpack.c.l.b16 %v20
  %v55 = vunpack.c.l.b16 %v21
  %v56 = vunpack.c.l.b16 %v22
  %v57 = vunpack.c.l.b16 %v23
  %v58 = vunpack.c.l.b16 %v24
  %v59 = vunpack.c.l.b16 %v25
  %v60 = vunpack.c.l.b16 %v26
  %v61 = vunpack.c.l.b16 %v27
  %v62 = vunpack.c.l.b16 %v28
  %v63 = vunpack.c.l.b16 %v29
  %v64 = vpack.c.b16 %v51, %v50
  %v65 = vpack.c.b16 %v53, %v52
  %v66 = vpack.c.b16 %v55, %v54
  %v67 = vpack.c.b16 %v57, %v56
  %v68 = vpack.c.b16 %v59, %v58
  %v69 = vpack.c.b16 %v61, %v60
  %v70 = vpack.c.b16 %v63, %v62
  %vm78 = vcmask 916480
  %v80 = vsel %vm78, %v15, 0
  %82 = vmatprep.subr.bf16.mxu0 0
  %83 = vmatpush1.bf16.msra.mxu0 %v64
  %84 = vmatprep.subr.bf16.mxu0 0
  %85 = vmatpush1.bf16.msra.mxu0 %v65
  %86 = vmatprep.subr.bf16.mxu0 0
  %87 = vmatpush1.bf16.msra.mxu0 %v66
  %88 = vmatprep.subr.bf16.mxu0 0
  %89 = vmatpush1.bf16.msra.mxu0 %v67
  %90 = vmatprep.subr.bf16.mxu0 0
  %91 = vmatpush1.bf16.msra.mxu0 %v68
  %92 = vmatprep.subr.bf16.mxu0 0
  %93 = vmatpush1.bf16.msra.mxu0 %v69
  %94 = vmatprep.subr.bf16.mxu0 0
  %95 = vmatpush1.bf16.msra.mxu0 %v70
  %96 = vmatprep.subr.bf16.mxu0 0
  %97 = vmatpush1.bf16.msra.mxu0 0
  %98 = vmatprep.subr.bf16.mxu0 0
  %99 = vmatpush1.bf16.msra.mxu0 0
  %100 = vmatprep.subr.bf16.mxu0 0
  %101 = vmatpush1.bf16.msra.mxu0 0
  %102 = vmatprep.subr.bf16.mxu0 0
  %103 = vmatpush1.bf16.msra.mxu0 0
  %104 = vmatprep.subr.bf16.mxu0 0
  %105 = vmatpush1.bf16.msra.mxu0 0
  %106 = vmatprep.subr.bf16.mxu0 0
  %107 = vmatpush1.bf16.msra.mxu0 0
  %108 = vmatprep.subr.bf16.mxu0 0
  %109 = vmatpush1.bf16.msra.mxu0 0
  %110 = vmatprep.subr.bf16.mxu0 0
  %111 = vmatpush1.bf16.msra.mxu0 0
  %112 = vmatprep.subr.bf16.mxu0 0
  %113 = vmatpush1.bf16.msra.mxu0 0
  %114 = vmatprep.mubr.bf16.mxu0 0
  %115 = vmatmul.mubr.bf16.gmra.mrb[0].mxu0 %v80
  %v116 = vpop.f32.mrb[0].mxu0
  %v117 = vadd.f32 %v34, %v116
  %v118 = vpop.f32.mrb[0].mxu0
  %v119 = vpop.f32.mrb[0].mxu0
  %v120 = vpop.f32.mrb[0].mxu0
  %121 = vdwg.mxu0
  %vm122 = vcmp.ge.f32.partialorder %v117, 0.0
  %v123 = vmul.f32 %v117, 0.1
  %v124 = vsel %vm122, %v117, %v123
  %125 = vst [vmem:[%s3] sm:$0xff] %v124
  // Predicated region
  $region14: #{unet_forward.10} parent=0 // pred_check
    _
  $region15: #{unet_forward.10} parent=0 // pred_check_branch
    %127 = sbr.rel (0) target = $region17
  $region16: #{unet_forward.10} parent=0 // pred_region
    _
  $region17: #{unet_forward.10} parent=0 // pred_fallthru
    _
  // Predicated region
  $region18: #{unet_forward.10} parent=0 // pred_check
    _
  $region19: #{unet_forward.10} parent=0 // pred_check_branch
    %129 = sbr.rel (0) target = $region21
  $region20: #{unet_forward.10} parent=0 // pred_region
    _
  $region21: #{unet_forward.10} parent=0 // pred_fallthru
    _

// kernel: unet_forward.14
$region0: #{unet_forward.14}
  #allocation0 [shape = 'u32[]', space=smem, size = 0x4, offset = 0x4, fixed_abs, tag = 'smem constant byte address 0x4 - core index']
  #allocation1 [shape = 'u32[144,128]{1,0:T(1,128)}', space=vmem, size = 0x12000, scoped, tag = 'internal scratch']
  %s0 = inlined_call_operand.vmem [shape: bf16[8,8,32], index: 0, kind: input, shape index: {}]
  %s1 = inlined_call_operand.vmem [shape: bf16[8,32,128], index: 1, kind: input, shape index: {}]
  %s2 = inlined_call_operand.vmem [shape: f32[8,8,1], index: 2, kind: input, shape index: {}]
  %s3 = inlined_call_operand.vmem [shape: f32[8,8,128], index: 3, kind: output, shape index: {}]
  %s4 = sld [smem:[#allocation0]]
  $region45: #{unet_forward.14} parent=0
    _
  %s6 = ssub.s32 1, %s4
  %s7 = scalar_select 0, %s6, %s4
  loop: start=0, step=1, limit=10
  $region2: #{unet_forward.14} parent=0 // loop_pre_header
    _
  $region3: #{unet_forward.14} parent=0 // loop_header
    %s9 = sphi 0, %s13
    %p10 = scmp.ge.s32.totalorder %s9, 10
    %s16 = sphi 0, %s28
    %s17 = sphi 0, %s24
    %s18 = sphi 0, %s16
    %s19 = sphi 0, %s17
    %s20 = sphi 0, %s18
    %s21 = sphi 0, %s19
    %s31 = sphi 0, %s33
    %s34 = sphi 0, %s31
    %s35 = sphi 0, %s34
    %s51 = sphi 0, %s35
    %s59 = sphi 0, %s61
    %s62 = sphi 0, %s59
    %s63 = sphi 0, %s62
    %s79 = sphi 0, %s63
    %s85 = sphi 0, %s87
    %s88 = sphi 0, %s85
    %s89 = sphi 0, %s88
    %s105 = sphi 0, %s89
    %s113 = sphi 0, %s115
    %s116 = sphi 0, %s113
    %s117 = sphi 0, %s116
    %s133 = sphi 0, %s117
  $region4: #{unet_forward.14} parent=0 // loop_header_branch
    %12 = sbr.rel (%p10) target = $region8
  $region5: #{unet_forward.14} parent=0 // loop_body
    %s14 = ssub.s32 %s9, 1
    %s15 = ssub.s32 %s9, 2
    %s22 = sadd.s32 1, %s17
    %p23 = scmp.ge.s32.totalorder %s22, 1
    %s24 = scalar_select %p23, 0, %s22
    %s25 = sadd.s32 1, %s16
    %s26 = scalar_select %p23, %s25, %s16
    %p27 = scmp.ge.s32.totalorder %s26, 8
    %s28 = scalar_select %p27, 0, %s26
    %s29 = ssub.s32 %s16, %s28
    %p30 = scmp.eq.s32.totalorder %s29, 0
    %s32 = sadd.s32 %s31, 1
    %s33 = scalar_select %p30, %s31, %s32
    %p36 = pneg %p30
    %p37 = scmp.eq.s32.totalorder %s9, 7
    %p38 = por %p36, %p37
    %p39 = scmp.ne.s32.totalorder %s31, %s34
    %p40 = scmp.eq.s32.totalorder %s9, 0
    %p41 = por %p39, %p40
    %p42 = scmp.ne.s32.totalorder %s31, %s34
    %p43 = scmp.eq.s32.totalorder %s14, 7
    %p44 = por %p42, %p43
    %p45 = scmp.ne.s32.totalorder %s34, %s35
    %p46 = scmp.eq.s32.totalorder %s14, 0
    %p47 = por %p45, %p46
    %p48 = scmp.ne.s32.totalorder %s34, %s35
    %p49 = scmp.eq.s32.totalorder %s15, 7
    %p50 = por %p48, %p49
    %p52 = scmp.ne.s32.totalorder %s35, %s51
    %p53 = scmp.eq.s32.totalorder %s15, 0
    %p54 = por %p52, %p53
    %s55 = ssub.s32 %s16, %s28
    %s56 = ssub.s32 %s17, %s24
    %s57 = sor.u32 %s55, %s56
    %p58 = scmp.eq.s32.totalorder %s57, 0
    %s60 = sadd.s32 %s59, 1
    %s61 = scalar_select %p58, %s59, %s60
    %p64 = pneg %p58
    %p65 = scmp.eq.s32.totalorder %s9, 7
    %p66 = por %p64, %p65
    %p67 = scmp.ne.s32.totalorder %s59, %s62
    %p68 = scmp.eq.s32.totalorder %s9, 0
    %p69 = por %p67, %p68
    %p70 = scmp.ne.s32.totalorder %s59, %s62
    %p71 = scmp.eq.s32.totalorder %s14, 7
    %p72 = por %p70, %p71
    %p73 = scmp.ne.s32.totalorder %s62, %s63
    %p74 = scmp.eq.s32.totalorder %s14, 0
    %p75 = por %p73, %p74
    %p76 = scmp.ne.s32.totalorder %s62, %s63
    %p77 = scmp.eq.s32.totalorder %s15, 7
    %p78 = por %p76, %p77
    %p80 = scmp.ne.s32.totalorder %s63, %s79
    %p81 = scmp.eq.s32.totalorder %s15, 0
    %p82 = por %p80, %p81
    %s83 = ssub.s32 %s16, %s28
    %p84 = scmp.eq.s32.totalorder %s83, 0
    %s86 = sadd.s32 %s85, 1
    %s87 = scalar_select %p84, %s85, %s86
    %p90 = pneg %p84
    %p91 = scmp.eq.s32.totalorder %s9, 7
    %p92 = por %p90, %p91
    %p93 = scmp.ne.s32.totalorder %s85, %s88
    %p94 = scmp.eq.s32.totalorder %s9, 0
    %p95 = por %p93, %p94
    %p96 = scmp.ne.s32.totalorder %s85, %s88
    %p97 = scmp.eq.s32.totalorder %s14, 7
    %p98 = por %p96, %p97
    %p99 = scmp.ne.s32.totalorder %s88, %s89
    %p100 = scmp.eq.s32.totalorder %s14, 0
    %p101 = por %p99, %p100
    %p102 = scmp.ne.s32.totalorder %s88, %s89
    %p103 = scmp.eq.s32.totalorder %s15, 7
    %p104 = por %p102, %p103
    %p106 = scmp.ne.s32.totalorder %s89, %s105
    %p107 = scmp.eq.s32.totalorder %s15, 0
    %p108 = por %p106, %p107
    %s109 = ssub.s32 %s16, %s28
    %s110 = ssub.s32 %s17, %s24
    %s111 = sor.u32 %s109, %s110
    %p112 = scmp.eq.s32.totalorder %s111, 0
    %s114 = sadd.s32 %s113, 1
    %s115 = scalar_select %p112, %s113, %s114
    %p118 = pneg %p112
    %p119 = scmp.eq.s32.totalorder %s9, 7
    %p120 = por %p118, %p119
    %p121 = scmp.ne.s32.totalorder %s113, %s116
    %p122 = scmp.eq.s32.totalorder %s9, 0
    %p123 = por %p121, %p122
    %p124 = scmp.ne.s32.totalorder %s113, %s116
    %p125 = scmp.eq.s32.totalorder %s14, 7
    %p126 = por %p124, %p125
    %p127 = scmp.ne.s32.totalorder %s116, %s117
    %p128 = scmp.eq.s32.totalorder %s14, 0
    %p129 = por %p127, %p128
    %p130 = scmp.ne.s32.totalorder %s116, %s117
    %p131 = scmp.eq.s32.totalorder %s15, 7
    %p132 = por %p130, %p131
    %p134 = scmp.ne.s32.totalorder %s117, %s133
    %p135 = scmp.eq.s32.totalorder %s15, 0
    %p136 = por %p134, %p135
    %p137 = scmp.le.s32.totalorder 1, %s9
    %p138 = scmp.lt.s32.totalorder %s9, 9
    %p139 = pnand %p137, %p138
    %p140 = pneg %p139
    // Predicated region
    $region9: #{unet_forward.14} parent=5 // pred_check
      _
    $region10: #{unet_forward.14} parent=5 // pred_check_branch
      %142 = sbr.rel (%p139) target = $region12
    $region11: #{unet_forward.14} parent=5 // pred_region
      %s143 = ssub.s32 %s9, 1
    $region12: #{unet_forward.14} parent=5 // pred_fallthru
      _
    %p144 = scmp.lt.s32.totalorder %s9, 8
    // Predicated region
    $region13: #{unet_forward.14} parent=5 // pred_check
      %p145 = pneg %p144
    $region14: #{unet_forward.14} parent=5 // pred_check_branch
      %147 = sbr.rel (%p145) target = $region16
    $region15: #{unet_forward.14} parent=5 // pred_region
      // Predicated region
      $region17: #{unet_forward.14} parent=15 // pred_check
        %p148 = pneg %p41
      $region18: #{unet_forward.14} parent=15 // pred_check_branch
        %150 = sbr.rel (%p148) target = $region20
      $region19: #{unet_forward.14} parent=15 // pred_region
        %p151 = scmp.lt.s32.totalorder %s16, 7
        %s152 = scalar_select %p151, %s16, 7
        %s153 = smul.addr %s152, 4
        %s154 = scalar_lea.vmem %s0, %s153
      $region20: #{unet_forward.14} parent=15 // pred_fallthru
        _
      // Predicated region
      $region21: #{unet_forward.14} parent=15 // pred_check
        %p155 = pneg %p69
      $region22: #{unet_forward.14} parent=15 // pred_check_branch
        %157 = sbr.rel (%p155) target = $region24
      $region23: #{unet_forward.14} parent=15 // pred_region
        %p158 = scmp.lt.s32.totalorder %s16, 7
        %s159 = scalar_select %p158, %s16, 7
        %p160 = scmp.lt.s32.totalorder %s17, 0
        %s161 = scalar_select %p160, %s17, 0
        %s162 = smul.addr %s159, 4
        %s163 = sadd.s32 %s161, %s162
        %s164 = smul.addr %s163, 4
        %s165 = scalar_lea.vmem %s1, %s164
      $region24: #{unet_forward.14} parent=15 // pred_fallthru
        _
      // Predicated region
      $region25: #{unet_forward.14} parent=15 // pred_check
        %p166 = pneg %p95
      $region26: #{unet_forward.14} parent=15 // pred_check_branch
        %168 = sbr.rel (%p166) target = $region28
      $region27: #{unet_forward.14} parent=15 // pred_region
        %p169 = scmp.lt.s32.totalorder %s16, 7
        %s170 = scalar_select %p169, %s16, 7
        %s171 = smul.addr %s170, 8
        %s172 = scalar_lea.vmem %s2, %s171
      $region28: #{unet_forward.14} parent=15 // pred_fallthru
        _
    $region16: #{unet_forward.14} parent=5 // pred_fallthru
      _
    %p173 = scmp.le.s32.totalorder 1, %s9
    %p174 = scmp.lt.s32.totalorder %s9, 9
    %p175 = pnand %p173, %p174
    %p176 = pneg %p175
    // Predicated region
    $region29: #{unet_forward.14} parent=5 // pred_check
      _
    $region30: #{unet_forward.14} parent=5 // pred_check_branch
      %178 = sbr.rel (%p175) target = $region32
    $region31: #{unet_forward.14} parent=5 // pred_region
      %s179 = ssub.s32 %s9, 1
      %p180 = scmp.lt.s32.totalorder %s18, 7
      %s181 = scalar_select %p180, %s18, 7
      %s182 = smul.addr %s181, 4
      %s183 = scalar_lea.vmem %s0, %s182
      %p184 = pneg %p47
      %p185 = pneg %p44
      %p186 = scmp.lt.s32.totalorder %s18, 7
      %s187 = scalar_select %p186, %s18, 7
      %p188 = scmp.lt.s32.totalorder %s19, 0
      %s189 = scalar_select %p188, %s19, 0
      %s190 = smul.addr %s187, 4
      %s191 = sadd.s32 %s189, %s190
      %s192 = smul.addr %s191, 4
      %s193 = scalar_lea.vmem %s1, %s192
      %p194 = pneg %p75
      %p195 = pneg %p72
      %p196 = scmp.lt.s32.totalorder %s18, 7
      %s197 = scalar_select %p196, %s18, 7
      %s198 = smul.addr %s197, 8
      %s199 = scalar_lea.vmem %s2, %s198
      %p200 = pneg %p101
      %p201 = pneg %p98
      %p202 = pneg %p129
      %p203 = pneg %p126
      %p204 = scmp.lt.s32.totalorder %s18, 7
      %s205 = scalar_select %p204, %s18, 7
      %p206 = scmp.lt.s32.totalorder %s19, 0
      %s207 = scalar_select %p206, %s19, 0
      %s208 = sadd.s32 %s207, %s205
      %s209 = smul.addr %s208, 8
      %s210 = scalar_lea.vmem %s3, %s209
      %p211 = scmp.lt.s32.totalorder %s18, 7
      %s212 = scalar_select %p211, %s18, 7
      %s213 = smul.addr %s212, 4
      %s214 = scalar_lea.vmem %s0, %s213
      %p215 = scmp.lt.s32.totalorder %s18, 7
      %s216 = scalar_select %p215, %s18, 7
      %p217 = scmp.lt.s32.totalorder %s19, 0
      %s218 = scalar_select %p217, %s19, 0
      %s219 = smul.addr %s216, 4
      %s220 = sadd.s32 %s218, %s219
      %s221 = smul.addr %s220, 4
      %s222 = scalar_lea.vmem %s1, %s221
      %p223 = scmp.lt.s32.totalorder %s18, 7
      %s224 = scalar_select %p223, %s18, 7
      %s225 = smul.addr %s224, 8
      %s226 = scalar_lea.vmem %s2, %s225
      %p227 = scmp.lt.s32.totalorder %s18, 7
      %s228 = scalar_select %p227, %s18, 7
      %p229 = scmp.lt.s32.totalorder %s19, 0
      %s230 = scalar_select %p229, %s19, 0
      %s231 = sadd.s32 %s230, %s228
      %s232 = smul.addr %s231, 8
      %s233 = scalar_lea.vmem %s3, %s232
      %v235 = vld [vmem:[%s214] sm:$0xf]
      %v236 = vld [vmem:[%s222] sm:$0xf]
      %v237 = vld [vmem:[%s222 + $0x4] sm:$0xf]
      %v238 = vld [vmem:[%s222 + $0x8] sm:$0xf]
      %v239 = vld [vmem:[%s222 + $0xc] sm:$0xf]
      %v240 = vld [vmem:[%s226] sm:$0xff]
      %242 = vset.pattern.permute.xlu0 0
      %243 = vperm.xlu0 %242, %v240
      %v244 = vpop.permute.xlu0 %243
      %v250 = vunpack.c.l.b16 %v236
      %v251 = vunpack.c.l.b16 %v237
      %v252 = vunpack.c.l.b16 %v238
      %v253 = vunpack.c.l.b16 %v239
      %v254 = vpack.c.b16 %v251, %v250
      %v255 = vpack.c.b16 %v253, %v252
      %vm258 = vcmask 261120
      %v260 = vsel %vm258, %v235, 0
      %262 = vmatprep.subr.bf16.mxu0 0
      %263 = vmatpush1.bf16.msra.mxu0 %v254
      %264 = vmatprep.subr.bf16.mxu0 0
      %265 = vmatpush1.bf16.msra.mxu0 %v255
      %266 = vmatprep.subr.bf16.mxu0 0
      %267 = vmatpush1.bf16.msra.mxu0 0
      %268 = vmatprep.subr.bf16.mxu0 0
      %269 = vmatpush1.bf16.msra.mxu0 0
      %270 = vmatprep.subr.bf16.mxu0 0
      %271 = vmatpush1.bf16.msra.mxu0 0
      %272 = vmatprep.subr.bf16.mxu0 0
      %273 = vmatpush1.bf16.msra.mxu0 0
      %274 = vmatprep.subr.bf16.mxu0 0
      %275 = vmatpush1.bf16.msra.mxu0 0
      %276 = vmatprep.subr.bf16.mxu0 0
      %277 = vmatpush1.bf16.msra.mxu0 0
      %278 = vmatprep.subr.bf16.mxu0 0
      %279 = vmatpush1.bf16.msra.mxu0 0
      %280 = vmatprep.subr.bf16.mxu0 0
      %281 = vmatpush1.bf16.msra.mxu0 0
      %282 = vmatprep.subr.bf16.mxu0 0
      %283 = vmatpush1.bf16.msra.mxu0 0
      %284 = vmatprep.subr.bf16.mxu0 0
      %285 = vmatpush1.bf16.msra.mxu0 0
      %286 = vmatprep.subr.bf16.mxu0 0
      %287 = vmatpush1.bf16.msra.mxu0 0
      %288 = vmatprep.subr.bf16.mxu0 0
      %289 = vmatpush1.bf16.msra.mxu0 0
      %290 = vmatprep.subr.bf16.mxu0 0
      %291 = vmatpush1.bf16.msra.mxu0 0
      %292 = vmatprep.subr.bf16.mxu0 0
      %293 = vmatpush1.bf16.msra.mxu0 0
      %294 = vmatprep.mubr.bf16.mxu0 0
      %295 = vmatmul.mubr.bf16.gmra.mrb[0].mxu0 %v260
      %v296 = vpop.f32.mrb[0].mxu0
      %v297 = vadd.f32 %v244, %v296
      %v298 = vpop.f32.mrb[0].mxu0
      %v299 = vpop.f32.mrb[0].mxu0
      %v300 = vpop.f32.mrb[0].mxu0
      %301 = vdwg.mxu0
      %vm302 = vcmp.ge.f32.partialorder %v297, 0.0
      %v303 = vmul.f32 %v297, 0.1
      %v304 = vsel %vm302, %v297, %v303
      %305 = vst [vmem:[%s233] sm:$0xff] %v304
      %p306 = scmp.lt.s32.totalorder %s18, 7
      %s307 = scalar_select %p306, %s18, 7
      %p308 = scmp.lt.s32.totalorder %s19, 0
      %s309 = scalar_select %p308, %s19, 0
      %s310 = sadd.s32 %s309, %s307
      %s311 = smul.addr %s310, 8
      %s312 = scalar_lea.vmem %s3, %s311
      // Predicated region
      $region33: #{unet_forward.14} parent=31 // pred_check
        %p313 = pneg %p126
      $region34: #{unet_forward.14} parent=31 // pred_check_branch
        %315 = sbr.rel (%p313) target = $region36
      $region35: #{unet_forward.14} parent=31 // pred_region
        _
      $region36: #{unet_forward.14} parent=31 // pred_fallthru
        _
    $region32: #{unet_forward.14} parent=5 // pred_fallthru
      _
    %p316 = scmp.le.s32.totalorder 2, %s9
    // Predicated region
    $region37: #{unet_forward.14} parent=5 // pred_check
      %p317 = pneg %p316
    $region38: #{unet_forward.14} parent=5 // pred_check_branch
      %319 = sbr.rel (%p317) target = $region40
    $region39: #{unet_forward.14} parent=5 // pred_region
      %s320 = ssub.s32 %s9, 2
      // Predicated region
      $region41: #{unet_forward.14} parent=39 // pred_check
        %p321 = pneg %p132
      $region42: #{unet_forward.14} parent=39 // pred_check_branch
        %323 = sbr.rel (%p321) target = $region44
      $region43: #{unet_forward.14} parent=39 // pred_region
        %p324 = scmp.lt.s32.totalorder %s20, 7
        %s325 = scalar_select %p324, %s20, 7
        %p326 = scmp.lt.s32.totalorder %s21, 0
        %s327 = scalar_select %p326, %s21, 0
        %s328 = sadd.s32 %s327, %s325
        %s329 = smul.addr %s328, 8
        %s330 = scalar_lea.vmem %s3, %s329
      $region44: #{unet_forward.14} parent=39 // pred_fallthru
        _
    $region40: #{unet_forward.14} parent=5 // pred_fallthru
      _
  $region6: #{unet_forward.14} parent=0 // loop_footer
    %s13 = sadd.s32 1, %s9
  $region7: #{unet_forward.14} parent=0 // loop_footer_branch
    %8 = sbr.rel target = $region3
  $region8: #{unet_forward.14} parent=0 // loop_exit
    _

// kernel: unet_forward.15
$region0: #{unet_forward.15}
  #allocation0 [shape = 'u32[]', space=smem, size = 0x4, offset = 0x4, fixed_abs, tag = 'smem constant byte address 0x4 - core index']
  #allocation1 [shape = 'u32[144,128]{1,0:T(1,128)}', space=vmem, size = 0x12000, scoped, tag = 'internal scratch']
  %s0 = inlined_call_operand.vmem [shape: bf16[8,8,64], index: 0, kind: input, shape index: {}]
  %s1 = inlined_call_operand.vmem [shape: bf16[8,64,128], index: 1, kind: input, shape index: {}]
  %s2 = inlined_call_operand.vmem [shape: f32[8,8,1], index: 2, kind: input, shape index: {}]
  %s3 = inlined_call_operand.vmem [shape: f32[8,8,128], index: 3, kind: output, shape index: {}]
  %s4 = sld [smem:[#allocation0]]
  $region45: #{unet_forward.15} parent=0
    _
  %s6 = ssub.s32 1, %s4
  %s7 = scalar_select 0, %s6, %s4
  loop: start=0, step=1, limit=10
  $region2: #{unet_forward.15} parent=0 // loop_pre_header
    _
  $region3: #{unet_forward.15} parent=0 // loop_header
    %s9 = sphi 0, %s13
    %p10 = scmp.ge.s32.totalorder %s9, 10
    %s16 = sphi 0, %s28
    %s17 = sphi 0, %s24
    %s18 = sphi 0, %s16
    %s19 = sphi 0, %s17
    %s20 = sphi 0, %s18
    %s21 = sphi 0, %s19
    %s31 = sphi 0, %s33
    %s34 = sphi 0, %s31
    %s35 = sphi 0, %s34
    %s51 = sphi 0, %s35
    %s59 = sphi 0, %s61
    %s62 = sphi 0, %s59
    %s63 = sphi 0, %s62
    %s79 = sphi 0, %s63
    %s85 = sphi 0, %s87
    %s88 = sphi 0, %s85
    %s89 = sphi 0, %s88
    %s105 = sphi 0, %s89
    %s113 = sphi 0, %s115
    %s116 = sphi 0, %s113
    %s117 = sphi 0, %s116
    %s133 = sphi 0, %s117
  $region4: #{unet_forward.15} parent=0 // loop_header_branch
    %12 = sbr.rel (%p10) target = $region8
  $region5: #{unet_forward.15} parent=0 // loop_body
    %s14 = ssub.s32 %s9, 1
    %s15 = ssub.s32 %s9, 2
    %s22 = sadd.s32 1, %s17
    %p23 = scmp.ge.s32.totalorder %s22, 1
    %s24 = scalar_select %p23, 0, %s22
    %s25 = sadd.s32 1, %s16
    %s26 = scalar_select %p23, %s25, %s16
    %p27 = scmp.ge.s32.totalorder %s26, 8
    %s28 = scalar_select %p27, 0, %s26
    %s29 = ssub.s32 %s16, %s28
    %p30 = scmp.eq.s32.totalorder %s29, 0
    %s32 = sadd.s32 %s31, 1
    %s33 = scalar_select %p30, %s31, %s32
    %p36 = pneg %p30
    %p37 = scmp.eq.s32.totalorder %s9, 7
    %p38 = por %p36, %p37
    %p39 = scmp.ne.s32.totalorder %s31, %s34
    %p40 = scmp.eq.s32.totalorder %s9, 0
    %p41 = por %p39, %p40
    %p42 = scmp.ne.s32.totalorder %s31, %s34
    %p43 = scmp.eq.s32.totalorder %s14, 7
    %p44 = por %p42, %p43
    %p45 = scmp.ne.s32.totalorder %s34, %s35
    %p46 = scmp.eq.s32.totalorder %s14, 0
    %p47 = por %p45, %p46
    %p48 = scmp.ne.s32.totalorder %s34, %s35
    %p49 = scmp.eq.s32.totalorder %s15, 7
    %p50 = por %p48, %p49
    %p52 = scmp.ne.s32.totalorder %s35, %s51
    %p53 = scmp.eq.s32.totalorder %s15, 0
    %p54 = por %p52, %p53
    %s55 = ssub.s32 %s16, %s28
    %s56 = ssub.s32 %s17, %s24
    %s57 = sor.u32 %s55, %s56
    %p58 = scmp.eq.s32.totalorder %s57, 0
    %s60 = sadd.s32 %s59, 1
    %s61 = scalar_select %p58, %s59, %s60
    %p64 = pneg %p58
    %p65 = scmp.eq.s32.totalorder %s9, 7
    %p66 = por %p64, %p65
    %p67 = scmp.ne.s32.totalorder %s59, %s62
    %p68 = scmp.eq.s32.totalorder %s9, 0
    %p69 = por %p67, %p68
    %p70 = scmp.ne.s32.totalorder %s59, %s62
    %p71 = scmp.eq.s32.totalorder %s14, 7
    %p72 = por %p70, %p71
    %p73 = scmp.ne.s32.totalorder %s62, %s63
    %p74 = scmp.eq.s32.totalorder %s14, 0
    %p75 = por %p73, %p74
    %p76 = scmp.ne.s32.totalorder %s62, %s63
    %p77 = scmp.eq.s32.totalorder %s15, 7
    %p78 = por %p76, %p77
    %p80 = scmp.ne.s32.totalorder %s63, %s79
    %p81 = scmp.eq.s32.totalorder %s15, 0
    %p82 = por %p80, %p81
    %s83 = ssub.s32 %s16, %s28
    %p84 = scmp.eq.s32.totalorder %s83, 0
    %s86 = sadd.s32 %s85, 1
    %s87 = scalar_select %p84, %s85, %s86
    %p90 = pneg %p84
    %p91 = scmp.eq.s32.totalorder %s9, 7
    %p92 = por %p90, %p91
    %p93 = scmp.ne.s32.totalorder %s85, %s88
    %p94 = scmp.eq.s32.totalorder %s9, 0
    %p95 = por %p93, %p94
    %p96 = scmp.ne.s32.totalorder %s85, %s88
    %p97 = scmp.eq.s32.totalorder %s14, 7
    %p98 = por %p96, %p97
    %p99 = scmp.ne.s32.totalorder %s88, %s89
    %p100 = scmp.eq.s32.totalorder %s14, 0
    %p101 = por %p99, %p100
    %p102 = scmp.ne.s32.totalorder %s88, %s89
    %p103 = scmp.eq.s32.totalorder %s15, 7
    %p104 = por %p102, %p103
    %p106 = scmp.ne.s32.totalorder %s89, %s105
    %p107 = scmp.eq.s32.totalorder %s15, 0
    %p108 = por %p106, %p107
    %s109 = ssub.s32 %s16, %s28
    %s110 = ssub.s32 %s17, %s24
    %s111 = sor.u32 %s109, %s110
    %p112 = scmp.eq.s32.totalorder %s111, 0
    %s114 = sadd.s32 %s113, 1
    %s115 = scalar_select %p112, %s113, %s114
    %p118 = pneg %p112
    %p119 = scmp.eq.s32.totalorder %s9, 7
    %p120 = por %p118, %p119
    %p121 = scmp.ne.s32.totalorder %s113, %s116
    %p122 = scmp.eq.s32.totalorder %s9, 0
    %p123 = por %p121, %p122
    %p124 = scmp.ne.s32.totalorder %s113, %s116
    %p125 = scmp.eq.s32.totalorder %s14, 7
    %p126 = por %p124, %p125
    %p127 = scmp.ne.s32.totalorder %s116, %s117
    %p128 = scmp.eq.s32.totalorder %s14, 0
    %p129 = por %p127, %p128
    %p130 = scmp.ne.s32.totalorder %s116, %s117
    %p131 = scmp.eq.s32.totalorder %s15, 7
    %p132 = por %p130, %p131
    %p134 = scmp.ne.s32.totalorder %s117, %s133
    %p135 = scmp.eq.s32.totalorder %s15, 0
    %p136 = por %p134, %p135
    %p137 = scmp.le.s32.totalorder 1, %s9
    %p138 = scmp.lt.s32.totalorder %s9, 9
    %p139 = pnand %p137, %p138
    %p140 = pneg %p139
    // Predicated region
    $region9: #{unet_forward.15} parent=5 // pred_check
      _
    $region10: #{unet_forward.15} parent=5 // pred_check_branch
      %142 = sbr.rel (%p139) target = $region12
    $region11: #{unet_forward.15} parent=5 // pred_region
      %s143 = ssub.s32 %s9, 1
    $region12: #{unet_forward.15} parent=5 // pred_fallthru
      _
    %p144 = scmp.lt.s32.totalorder %s9, 8
    // Predicated region
    $region13: #{unet_forward.15} parent=5 // pred_check
      %p145 = pneg %p144
    $region14: #{unet_forward.15} parent=5 // pred_check_branch
      %147 = sbr.rel (%p145) target = $region16
    $region15: #{unet_forward.15} parent=5 // pred_region
      // Predicated region
      $region17: #{unet_forward.15} parent=15 // pred_check
        %p148 = pneg %p41
      $region18: #{unet_forward.15} parent=15 // pred_check_branch
        %150 = sbr.rel (%p148) target = $region20
      $region19: #{unet_forward.15} parent=15 // pred_region
        %p151 = scmp.lt.s32.totalorder %s16, 7
        %s152 = scalar_select %p151, %s16, 7
        %s153 = smul.addr %s152, 4
        %s154 = scalar_lea.vmem %s0, %s153
      $region20: #{unet_forward.15} parent=15 // pred_fallthru
        _
      // Predicated region
      $region21: #{unet_forward.15} parent=15 // pred_check
        %p155 = pneg %p69
      $region22: #{unet_forward.15} parent=15 // pred_check_branch
        %157 = sbr.rel (%p155) target = $region24
      $region23: #{unet_forward.15} parent=15 // pred_region
        %p158 = scmp.lt.s32.totalorder %s16, 7
        %s159 = scalar_select %p158, %s16, 7
        %p160 = scmp.lt.s32.totalorder %s17, 0
        %s161 = scalar_select %p160, %s17, 0
        %s162 = smul.addr %s159, 8
        %s163 = sadd.s32 %s161, %s162
        %s164 = smul.addr %s163, 4
        %s165 = scalar_lea.vmem %s1, %s164
      $region24: #{unet_forward.15} parent=15 // pred_fallthru
        _
      // Predicated region
      $region25: #{unet_forward.15} parent=15 // pred_check
        %p166 = pneg %p95
      $region26: #{unet_forward.15} parent=15 // pred_check_branch
        %168 = sbr.rel (%p166) target = $region28
      $region27: #{unet_forward.15} parent=15 // pred_region
        %p169 = scmp.lt.s32.totalorder %s16, 7
        %s170 = scalar_select %p169, %s16, 7
        %s171 = smul.addr %s170, 8
        %s172 = scalar_lea.vmem %s2, %s171
      $region28: #{unet_forward.15} parent=15 // pred_fallthru
        _
    $region16: #{unet_forward.15} parent=5 // pred_fallthru
      _
    %p173 = scmp.le.s32.totalorder 1, %s9
    %p174 = scmp.lt.s32.totalorder %s9, 9
    %p175 = pnand %p173, %p174
    %p176 = pneg %p175
    // Predicated region
    $region29: #{unet_forward.15} parent=5 // pred_check
      _
    $region30: #{unet_forward.15} parent=5 // pred_check_branch
      %178 = sbr.rel (%p175) target = $region32
    $region31: #{unet_forward.15} parent=5 // pred_region
      %s179 = ssub.s32 %s9, 1
      %p180 = scmp.lt.s32.totalorder %s18, 7
      %s181 = scalar_select %p180, %s18, 7
      %s182 = smul.addr %s181, 4
      %s183 = scalar_lea.vmem %s0, %s182
      %p184 = pneg %p47
      %p185 = pneg %p44
      %p186 = scmp.lt.s32.totalorder %s18, 7
      %s187 = scalar_select %p186, %s18, 7
      %p188 = scmp.lt.s32.totalorder %s19, 0
      %s189 = scalar_select %p188, %s19, 0
      %s190 = smul.addr %s187, 8
      %s191 = sadd.s32 %s189, %s190
      %s192 = smul.addr %s191, 4
      %s193 = scalar_lea.vmem %s1, %s192
      %p194 = pneg %p75
      %p195 = pneg %p72
      %p196 = scmp.lt.s32.totalorder %s18, 7
      %s197 = scalar_select %p196, %s18, 7
      %s198 = smul.addr %s197, 8
      %s199 = scalar_lea.vmem %s2, %s198
      %p200 = pneg %p101
      %p201 = pneg %p98
      %p202 = pneg %p129
      %p203 = pneg %p126
      %p204 = scmp.lt.s32.totalorder %s18, 7
      %s205 = scalar_select %p204, %s18, 7
      %p206 = scmp.lt.s32.totalorder %s19, 0
      %s207 = scalar_select %p206, %s19, 0
      %s208 = sadd.s32 %s207, %s205
      %s209 = smul.addr %s208, 8
      %s210 = scalar_lea.vmem %s3, %s209
      %p211 = scmp.lt.s32.totalorder %s18, 7
      %s212 = scalar_select %p211, %s18, 7
      %s213 = smul.addr %s212, 4
      %s214 = scalar_lea.vmem %s0, %s213
      %p215 = scmp.lt.s32.totalorder %s18, 7
      %s216 = scalar_select %p215, %s18, 7
      %p217 = scmp.lt.s32.totalorder %s19, 0
      %s218 = scalar_select %p217, %s19, 0
      %s219 = smul.addr %s216, 8
      %s220 = sadd.s32 %s218, %s219
      %s221 = smul.addr %s220, 4
      %s222 = scalar_lea.vmem %s1, %s221
      %p223 = scmp.lt.s32.totalorder %s18, 7
      %s224 = scalar_select %p223, %s18, 7
      %s225 = smul.addr %s224, 8
      %s226 = scalar_lea.vmem %s2, %s225
      %p227 = scmp.lt.s32.totalorder %s18, 7
      %s228 = scalar_select %p227, %s18, 7
      %p229 = scmp.lt.s32.totalorder %s19, 0
      %s230 = scalar_select %p229, %s19, 0
      %s231 = sadd.s32 %s230, %s228
      %s232 = smul.addr %s231, 8
      %s233 = scalar_lea.vmem %s3, %s232
      %v235 = vld [vmem:[%s214] sm:$0xf]
      %v236 = vld [vmem:[%s222] sm:$0xf]
      %v237 = vld [vmem:[%s222 + $0x4] sm:$0xf]
      %v238 = vld [vmem:[%s222 + $0x8] sm:$0xf]
      %v239 = vld [vmem:[%s222 + $0xc] sm:$0xf]
      %v240 = vld [vmem:[%s222 + $0x10] sm:$0xf]
      %v241 = vld [vmem:[%s222 + $0x14] sm:$0xf]
      %v242 = vld [vmem:[%s222 + $0x18] sm:$0xf]
      %v243 = vld [vmem:[%s222 + $0x1c] sm:$0xf]
      %v244 = vld [vmem:[%s226] sm:$0xff]
      %246 = vset.pattern.permute.xlu0 0
      %247 = vperm.xlu0 %246, %v244
      %v248 = vpop.permute.xlu0 %247
      %v258 = vunpack.c.l.b16 %v236
      %v259 = vunpack.c.l.b16 %v237
      %v260 = vunpack.c.l.b16 %v238
      %v261 = vunpack.c.l.b16 %v239
      %v262 = vunpack.c.l.b16 %v240
      %v263 = vunpack.c.l.b16 %v241
      %v264 = vunpack.c.l.b16 %v242
      %v265 = vunpack.c.l.b16 %v243
      %v266 = vpack.c.b16 %v259, %v258
      %v267 = vpack.c.b16 %v261, %v260
      %v268 = vpack.c.b16 %v263, %v262
      %v269 = vpack.c.b16 %v265, %v264
      %vm274 = vcmask 523264
      %v276 = vsel %vm274, %v235, 0
      %278 = vmatprep.subr.bf16.mxu0 0
      %279 = vmatpush1.bf16.msra.mxu0 %v266
      %280 = vmatprep.subr.bf16.mxu0 0
      %281 = vmatpush1.bf16.msra.mxu0 %v267
      %282 = vmatprep.subr.bf16.mxu0 0
      %283 = vmatpush1.bf16.msra.mxu0 %v268
      %284 = vmatprep.subr.bf16.mxu0 0
      %285 = vmatpush1.bf16.msra.mxu0 %v269
      %286 = vmatprep.subr.bf16.mxu0 0
      %287 = vmatpush1.bf16.msra.mxu0 0
      %288 = vmatprep.subr.bf16.mxu0 0
      %289 = vmatpush1.bf16.msra.mxu0 0
      %290 = vmatprep.subr.bf16.mxu0 0
      %291 = vmatpush1.bf16.msra.mxu0 0
      %292 = vmatprep.subr.bf16.mxu0 0
      %293 = vmatpush1.bf16.msra.mxu0 0
      %294 = vmatprep.subr.bf16.mxu0 0
      %295 = vmatpush1.bf16.msra.mxu0 0
      %296 = vmatprep.subr.bf16.mxu0 0
      %297 = vmatpush1.bf16.msra.mxu0 0
      %298 = vmatprep.subr.bf16.mxu0 0
      %299 = vmatpush1.bf16.msra.mxu0 0
      %300 = vmatprep.subr.bf16.mxu0 0
      %301 = vmatpush1.bf16.msra.mxu0 0
      %302 = vmatprep.subr.bf16.mxu0 0
      %303 = vmatpush1.bf16.msra.mxu0 0
      %304 = vmatprep.subr.bf16.mxu0 0
      %305 = vmatpush1.bf16.msra.mxu0 0
      %306 = vmatprep.subr.bf16.mxu0 0
      %307 = vmatpush1.bf16.msra.mxu0 0
      %308 = vmatprep.subr.bf16.mxu0 0
      %309 = vmatpush1.bf16.msra.mxu0 0
      %310 = vmatprep.mubr.bf16.mxu0 0
      %311 = vmatmul.mubr.bf16.gmra.mrb[0].mxu0 %v276
      %v312 = vpop.f32.mrb[0].mxu0
      %v313 = vadd.f32 %v248, %v312
      %v314 = vpop.f32.mrb[0].mxu0
      %v315 = vpop.f32.mrb[0].mxu0
      %v316 = vpop.f32.mrb[0].mxu0
      %317 = vdwg.mxu0
      %vm318 = vcmp.ge.f32.partialorder %v313, 0.0
      %v319 = vmul.f32 %v313, 0.1
      %v320 = vsel %vm318, %v313, %v319
      %321 = vst [vmem:[%s233] sm:$0xff] %v320
      %p322 = scmp.lt.s32.totalorder %s18, 7
      %s323 = scalar_select %p322, %s18, 7
      %p324 = scmp.lt.s32.totalorder %s19, 0
      %s325 = scalar_select %p324, %s19, 0
      %s326 = sadd.s32 %s325, %s323
      %s327 = smul.addr %s326, 8
      %s328 = scalar_lea.vmem %s3, %s327
      // Predicated region
      $region33: #{unet_forward.15} parent=31 // pred_check
        %p329 = pneg %p126
      $region34: #{unet_forward.15} parent=31 // pred_check_branch
        %331 = sbr.rel (%p329) target = $region36
      $region35: #{unet_forward.15} parent=31 // pred_region
        _
      $region36: #{unet_forward.15} parent=31 // pred_fallthru
        _
    $region32: #{unet_forward.15} parent=5 // pred_fallthru
      _
    %p332 = scmp.le.s32.totalorder 2, %s9
    // Predicated region
    $region37: #{unet_forward.15} parent=5 // pred_check
      %p333 = pneg %p332
    $region38: #{unet_forward.15} parent=5 // pred_check_branch
      %335 = sbr.rel (%p333) target = $region40
    $region39: #{unet_forward.15} parent=5 // pred_region
      %s336 = ssub.s32 %s9, 2
      // Predicated region
      $region41: #{unet_forward.15} parent=39 // pred_check
        %p337 = pneg %p132
      $region42: #{unet_forward.15} parent=39 // pred_check_branch
        %339 = sbr.rel (%p337) target = $region44
      $region43: #{unet_forward.15} parent=39 // pred_region
        %p340 = scmp.lt.s32.totalorder %s20, 7
        %s341 = scalar_select %p340, %s20, 7
        %p342 = scmp.lt.s32.totalorder %s21, 0
        %s343 = scalar_select %p342, %s21, 0
        %s344 = sadd.s32 %s343, %s341
        %s345 = smul.addr %s344, 8
        %s346 = scalar_lea.vmem %s3, %s345
      $region44: #{unet_forward.15} parent=39 // pred_fallthru
        _
    $region40: #{unet_forward.15} parent=5 // pred_fallthru
      _
  $region6: #{unet_forward.15} parent=0 // loop_footer
    %s13 = sadd.s32 1, %s9
  $region7: #{unet_forward.15} parent=0 // loop_footer_branch
    %8 = sbr.rel target = $region3
  $region8: #{unet_forward.15} parent=0 // loop_exit
    _

// kernel: unet_forward.16
$region0: #{unet_forward.16}
  #allocation0 [shape = 'u32[]', space=smem, size = 0x4, offset = 0x4, fixed_abs, tag = 'smem constant byte address 0x4 - core index']
  #allocation1 [shape = 'u32[144,128]{1,0:T(1,128)}', space=vmem, size = 0x12000, scoped, tag = 'internal scratch']
  %s0 = inlined_call_operand.vmem [shape: bf16[8,8,64], index: 0, kind: input, shape index: {}]
  %s1 = inlined_call_operand.vmem [shape: bf16[8,64,1024], index: 1, kind: input, shape index: {}]
  %s2 = inlined_call_operand.vmem [shape: f32[8,8,1], index: 2, kind: input, shape index: {}]
  %s3 = inlined_call_operand.vmem [shape: f32[8,8,1024], index: 3, kind: output, shape index: {}]
  %s4 = sld [smem:[#allocation0]]
  $region45: #{unet_forward.16} parent=0
    _
  %s6 = ssub.s32 1, %s4
  %s7 = scalar_select 0, %s6, %s4
  loop: start=0, step=1, limit=10
  $region2: #{unet_forward.16} parent=0 // loop_pre_header
    _
  $region3: #{unet_forward.16} parent=0 // loop_header
    %s9 = sphi 0, %s13
    %p10 = scmp.ge.s32.totalorder %s9, 10
    %s16 = sphi 0, %s28
    %s17 = sphi 0, %s24
    %s18 = sphi 0, %s16
    %s19 = sphi 0, %s17
    %s20 = sphi 0, %s18
    %s21 = sphi 0, %s19
    %s31 = sphi 0, %s33
    %s34 = sphi 0, %s31
    %s35 = sphi 0, %s34
    %s51 = sphi 0, %s35
    %s59 = sphi 0, %s61
    %s62 = sphi 0, %s59
    %s63 = sphi 0, %s62
    %s79 = sphi 0, %s63
    %s85 = sphi 0, %s87
    %s88 = sphi 0, %s85
    %s89 = sphi 0, %s88
    %s105 = sphi 0, %s89
    %s113 = sphi 0, %s115
    %s116 = sphi 0, %s113
    %s117 = sphi 0, %s116
    %s133 = sphi 0, %s117
  $region4: #{unet_forward.16} parent=0 // loop_header_branch
    %12 = sbr.rel (%p10) target = $region8
  $region5: #{unet_forward.16} parent=0 // loop_body
    %s14 = ssub.s32 %s9, 1
    %s15 = ssub.s32 %s9, 2
    %s22 = sadd.s32 1, %s17
    %p23 = scmp.ge.s32.totalorder %s22, 1
    %s24 = scalar_select %p23, 0, %s22
    %s25 = sadd.s32 1, %s16
    %s26 = scalar_select %p23, %s25, %s16
    %p27 = scmp.ge.s32.totalorder %s26, 8
    %s28 = scalar_select %p27, 0, %s26
    %s29 = ssub.s32 %s16, %s28
    %p30 = scmp.eq.s32.totalorder %s29, 0
    %s32 = sadd.s32 %s31, 1
    %s33 = scalar_select %p30, %s31, %s32
    %p36 = pneg %p30
    %p37 = scmp.eq.s32.totalorder %s9, 7
    %p38 = por %p36, %p37
    %p39 = scmp.ne.s32.totalorder %s31, %s34
    %p40 = scmp.eq.s32.totalorder %s9, 0
    %p41 = por %p39, %p40
    %p42 = scmp.ne.s32.totalorder %s31, %s34
    %p43 = scmp.eq.s32.totalorder %s14, 7
    %p44 = por %p42, %p43
    %p45 = scmp.ne.s32.totalorder %s34, %s35
    %p46 = scmp.eq.s32.totalorder %s14, 0
    %p47 = por %p45, %p46
    %p48 = scmp.ne.s32.totalorder %s34, %s35
    %p49 = scmp.eq.s32.totalorder %s15, 7
    %p50 = por %p48, %p49
    %p52 = scmp.ne.s32.totalorder %s35, %s51
    %p53 = scmp.eq.s32.totalorder %s15, 0
    %p54 = por %p52, %p53
    %s55 = ssub.s32 %s16, %s28
    %s56 = ssub.s32 %s17, %s24
    %s57 = sor.u32 %s55, %s56
    %p58 = scmp.eq.s32.totalorder %s57, 0
    %s60 = sadd.s32 %s59, 1
    %s61 = scalar_select %p58, %s59, %s60
    %p64 = pneg %p58
    %p65 = scmp.eq.s32.totalorder %s9, 7
    %p66 = por %p64, %p65
    %p67 = scmp.ne.s32.totalorder %s59, %s62
    %p68 = scmp.eq.s32.totalorder %s9, 0
    %p69 = por %p67, %p68
    %p70 = scmp.ne.s32.totalorder %s59, %s62
    %p71 = scmp.eq.s32.totalorder %s14, 7
    %p72 = por %p70, %p71
    %p73 = scmp.ne.s32.totalorder %s62, %s63
    %p74 = scmp.eq.s32.totalorder %s14, 0
    %p75 = por %p73, %p74
    %p76 = scmp.ne.s32.totalorder %s62, %s63
    %p77 = scmp.eq.s32.totalorder %s15, 7
    %p78 = por %p76, %p77
    %p80 = scmp.ne.s32.totalorder %s63, %s79
    %p81 = scmp.eq.s32.totalorder %s15, 0
    %p82 = por %p80, %p81
    %s83 = ssub.s32 %s16, %s28
    %p84 = scmp.eq.s32.totalorder %s83, 0
    %s86 = sadd.s32 %s85, 1
    %s87 = scalar_select %p84, %s85, %s86
    %p90 = pneg %p84
    %p91 = scmp.eq.s32.totalorder %s9, 7
    %p92 = por %p90, %p91
    %p93 = scmp.ne.s32.totalorder %s85, %s88
    %p94 = scmp.eq.s32.totalorder %s9, 0
    %p95 = por %p93, %p94
    %p96 = scmp.ne.s32.totalorder %s85, %s88
    %p97 = scmp.eq.s32.totalorder %s14, 7
    %p98 = por %p96, %p97
    %p99 = scmp.ne.s32.totalorder %s88, %s89
    %p100 = scmp.eq.s32.totalorder %s14, 0
    %p101 = por %p99, %p100
    %p102 = scmp.ne.s32.totalorder %s88, %s89
    %p103 = scmp.eq.s32.totalorder %s15, 7
    %p104 = por %p102, %p103
    %p106 = scmp.ne.s32.totalorder %s89, %s105
    %p107 = scmp.eq.s32.totalorder %s15, 0
    %p108 = por %p106, %p107
    %s109 = ssub.s32 %s16, %s28
    %s110 = ssub.s32 %s17, %s24
    %s111 = sor.u32 %s109, %s110
    %p112 = scmp.eq.s32.totalorder %s111, 0
    %s114 = sadd.s32 %s113, 1
    %s115 = scalar_select %p112, %s113, %s114
    %p118 = pneg %p112
    %p119 = scmp.eq.s32.totalorder %s9, 7
    %p120 = por %p118, %p119
    %p121 = scmp.ne.s32.totalorder %s113, %s116
    %p122 = scmp.eq.s32.totalorder %s9, 0
    %p123 = por %p121, %p122
    %p124 = scmp.ne.s32.totalorder %s113, %s116
    %p125 = scmp.eq.s32.totalorder %s14, 7
    %p126 = por %p124, %p125
    %p127 = scmp.ne.s32.totalorder %s116, %s117
    %p128 = scmp.eq.s32.totalorder %s14, 0
    %p129 = por %p127, %p128
    %p130 = scmp.ne.s32.totalorder %s116, %s117
    %p131 = scmp.eq.s32.totalorder %s15, 7
    %p132 = por %p130, %p131
    %p134 = scmp.ne.s32.totalorder %s117, %s133
    %p135 = scmp.eq.s32.totalorder %s15, 0
    %p136 = por %p134, %p135
    %p137 = scmp.le.s32.totalorder 1, %s9
    %p138 = scmp.lt.s32.totalorder %s9, 9
    %p139 = pnand %p137, %p138
    %p140 = pneg %p139
    // Predicated region
    $region9: #{unet_forward.16} parent=5 // pred_check
      _
    $region10: #{unet_forward.16} parent=5 // pred_check_branch
      %142 = sbr.rel (%p139) target = $region12
    $region11: #{unet_forward.16} parent=5 // pred_region
      %s143 = ssub.s32 %s9, 1
    $region12: #{unet_forward.16} parent=5 // pred_fallthru
      _
    %p144 = scmp.lt.s32.totalorder %s9, 8
    // Predicated region
    $region13: #{unet_forward.16} parent=5 // pred_check
      %p145 = pneg %p144
    $region14: #{unet_forward.16} parent=5 // pred_check_branch
      %147 = sbr.rel (%p145) target = $region16
    $region15: #{unet_forward.16} parent=5 // pred_region
      // Predicated region
      $region17: #{unet_forward.16} parent=15 // pred_check
        %p148 = pneg %p41
      $region18: #{unet_forward.16} parent=15 // pred_check_branch
        %150 = sbr.rel (%p148) target = $region20
      $region19: #{unet_forward.16} parent=15 // pred_region
        %p151 = scmp.lt.s32.totalorder %s16, 7
        %s152 = scalar_select %p151, %s16, 7
        %s153 = smul.addr %s152, 4
        %s154 = scalar_lea.vmem %s0, %s153
      $region20: #{unet_forward.16} parent=15 // pred_fallthru
        _
      // Predicated region
      $region21: #{unet_forward.16} parent=15 // pred_check
        %p155 = pneg %p69
      $region22: #{unet_forward.16} parent=15 // pred_check_branch
        %157 = sbr.rel (%p155) target = $region24
      $region23: #{unet_forward.16} parent=15 // pred_region
        %s158 = smul.u32 8, %s17
        %p159 = scmp.lt.s32.totalorder %s16, 7
        %s160 = scalar_select %p159, %s16, 7
        %p161 = scmp.lt.s32.totalorder %s158, 7
        %s162 = scalar_select %p161, %s158, 7
        %s163 = smul.addr %s160, 64
        %s164 = sadd.s32 %s162, %s163
        %s165 = smul.addr %s164, 4
        %s166 = scalar_lea.vmem %s1, %s165
        %s167 = smul.u32 8, %s17
      $region24: #{unet_forward.16} parent=15 // pred_fallthru
        _
      // Predicated region
      $region25: #{unet_forward.16} parent=15 // pred_check
        %p168 = pneg %p95
      $region26: #{unet_forward.16} parent=15 // pred_check_branch
        %170 = sbr.rel (%p168) target = $region28
      $region27: #{unet_forward.16} parent=15 // pred_region
        %p171 = scmp.lt.s32.totalorder %s16, 7
        %s172 = scalar_select %p171, %s16, 7
        %s173 = smul.addr %s172, 8
        %s174 = scalar_lea.vmem %s2, %s173
      $region28: #{unet_forward.16} parent=15 // pred_fallthru
        _
    $region16: #{unet_forward.16} parent=5 // pred_fallthru
      _
    %p175 = scmp.le.s32.totalorder 1, %s9
    %p176 = scmp.lt.s32.totalorder %s9, 9
    %p177 = pnand %p175, %p176
    %p178 = pneg %p177
    // Predicated region
    $region29: #{unet_forward.16} parent=5 // pred_check
      _
    $region30: #{unet_forward.16} parent=5 // pred_check_branch
      %180 = sbr.rel (%p177) target = $region32
    $region31: #{unet_forward.16} parent=5 // pred_region
      %s181 = ssub.s32 %s9, 1
      %p182 = scmp.lt.s32.totalorder %s18, 7
      %s183 = scalar_select %p182, %s18, 7
      %s184 = smul.addr %s183, 4
      %s185 = scalar_lea.vmem %s0, %s184
      %p186 = pneg %p47
      %p187 = pneg %p44
      %s188 = smul.u32 8, %s19
      %p189 = scmp.lt.s32.totalorder %s18, 7
      %s190 = scalar_select %p189, %s18, 7
      %p191 = scmp.lt.s32.totalorder %s188, 7
      %s192 = scalar_select %p191, %s188, 7
      %s193 = smul.addr %s190, 64
      %s194 = sadd.s32 %s192, %s193
      %s195 = smul.addr %s194, 4
      %s196 = scalar_lea.vmem %s1, %s195
      %p197 = pneg %p75
      %p198 = pneg %p72
      %p199 = scmp.lt.s32.totalorder %s18, 7
      %s200 = scalar_select %p199, %s18, 7
      %s201 = smul.addr %s200, 8
      %s202 = scalar_lea.vmem %s2, %s201
      %p203 = pneg %p101
      %p204 = pneg %p98
      %p205 = pneg %p129
      %p206 = pneg %p126
      %s207 = smul.u32 8, %s19
      %p208 = scmp.lt.s32.totalorder %s18, 7
      %s209 = scalar_select %p208, %s18, 7
      %p210 = scmp.lt.s32.totalorder %s207, 7
      %s211 = scalar_select %p210, %s207, 7
      %s212 = smul.addr %s209, 8
      %s213 = sadd.s32 %s211, %s212
      %s214 = smul.addr %s213, 8
      %s215 = scalar_lea.vmem %s3, %s214
      %p216 = scmp.lt.s32.totalorder %s18, 7
      %s217 = scalar_select %p216, %s18, 7
      %s218 = smul.addr %s217, 4
      %s219 = scalar_lea.vmem %s0, %s218
      %s220 = smul.u32 8, %s19
      %p221 = scmp.lt.s32.totalorder %s18, 7
      %s222 = scalar_select %p221, %s18, 7
      %p223 = scmp.lt.s32.totalorder %s220, 7
      %s224 = scalar_select %p223, %s220, 7
      %s225 = smul.addr %s222, 64
      %s226 = sadd.s32 %s224, %s225
      %s227 = smul.addr %s226, 4
      %s228 = scalar_lea.vmem %s1, %s227
      %s229 = smul.u32 8, %s19
      %p230 = scmp.lt.s32.totalorder %s18, 7
      %s231 = scalar_select %p230, %s18, 7
      %s232 = smul.addr %s231, 8
      %s233 = scalar_lea.vmem %s2, %s232
      %s234 = smul.u32 8, %s19
      %p235 = scmp.lt.s32.totalorder %s18, 7
      %s236 = scalar_select %p235, %s18, 7
      %p237 = scmp.lt.s32.totalorder %s234, 7
      %s238 = scalar_select %p237, %s234, 7
      %s239 = smul.addr %s236, 8
      %s240 = sadd.s32 %s238, %s239
      %s241 = smul.addr %s240, 8
      %s242 = scalar_lea.vmem %s3, %s241
      %s243 = smul.u32 8, %s19
      %v245 = vld [vmem:[%s219] sm:$0xf]
      %v246 = vld [vmem:[%s228] sm:$0xff]
      %v247 = vld [vmem:[%s228 + $0x8] sm:$0xff]
      %v248 = vld [vmem:[%s228 + $0x10] sm:$0xff]
      %v249 = vld [vmem:[%s228 + $0x18] sm:$0xff]
      %v250 = vld [vmem:[%s228 + $0x20] sm:$0xff]
      %v251 = vld [vmem:[%s228 + $0x28] sm:$0xff]
      %v252 = vld [vmem:[%s228 + $0x30] sm:$0xff]
      %v253 = vld [vmem:[%s228 + $0x38] sm:$0xff]
      %v254 = vld [vmem:[%s228 + $0x40] sm:$0xff]
      %v255 = vld [vmem:[%s228 + $0x48] sm:$0xff]
      %v256 = vld [vmem:[%s228 + $0x50] sm:$0xff]
      %v257 = vld [vmem:[%s228 + $0x58] sm:$0xff]
      %v258 = vld [vmem:[%s228 + $0x60] sm:$0xff]
      %v259 = vld [vmem:[%s228 + $0x68] sm:$0xff]
      %v260 = vld [vmem:[%s228 + $0x70] sm:$0xff]
      %v261 = vld [vmem:[%s228 + $0x78] sm:$0xff]
      %v262 = vld [vmem:[%s228 + $0x80] sm:$0xff]
      %v263 = vld [vmem:[%s228 + $0x88] sm:$0xff]
      %v264 = vld [vmem:[%s228 + $0x90] sm:$0xff]
      %v265 = vld [vmem:[%s228 + $0x98] sm:$0xff]
      %v266 = vld [vmem:[%s228 + $0xa0] sm:$0xff]
      %v267 = vld [vmem:[%s228 + $0xa8] sm:$0xff]
      %v268 = vld [vmem:[%s228 + $0xb0] sm:$0xff]
      %v269 = vld [vmem:[%s228 + $0xb8] sm:$0xff]
      %v270 = vld [vmem:[%s228 + $0xc0] sm:$0xff]
      %v271 = vld [vmem:[%s228 + $0xc8] sm:$0xff]
      %v272 = vld [vmem:[%s228 + $0xd0] sm:$0xff]
      %v273 = vld [vmem:[%s228 + $0xd8] sm:$0xff]
      %v274 = vld [vmem:[%s228 + $0xe0] sm:$0xff]
      %v275 = vld [vmem:[%s228 + $0xe8] sm:$0xff]
      %v276 = vld [vmem:[%s228 + $0xf0] sm:$0xff]
      %v277 = vld [vmem:[%s228 + $0xf8] sm:$0xff]
      %v278 = vld [vmem:[%s233] sm:$0xff]
      %280 = vset.pattern.permute.xlu0 0
      %281 = vperm.xlu0 %280, %v278
      %v282 = vpop.permute.xlu0 %281
      %v316 = vunpack.c.l.b16 %v246
      %v317 = vunpack.c.h.b16 %v246
      %v318 = vunpack.c.l.b16 %v247
      %v319 = vunpack.c.h.b16 %v247
      %v320 = vunpack.c.l.b16 %v248
      %v321 = vunpack.c.h.b16 %v248
      %v322 = vunpack.c.l.b16 %v249
      %v323 = vunpack.c.h.b16 %v249
      %v324 = vunpack.c.l.b16 %v250
      %v325 = vunpack.c.h.b16 %v250
      %v326 = vunpack.c.l.b16 %v251
      %v327 = vunpack.c.h.b16 %v251
      %v328 = vunpack.c.l.b16 %v252
      %v329 = vunpack.c.h.b16 %v252
      %v330 = vunpack.c.l.b16 %v253
      %v331 = vunpack.c.h.b16 %v253
      %v332 = vunpack.c.l.b16 %v254
      %v333 = vunpack.c.h.b16 %v254
      %v334 = vunpack.c.l.b16 %v255
      %v335 = vunpack.c.h.b16 %v255
      %v336 = vunpack.c.l.b16 %v256
      %v337 = vunpack.c.h.b16 %v256
      %v338 = vunpack.c.l.b16 %v257
      %v339 = vunpack.c.h.b16 %v257
      %v340 = vunpack.c.l.b16 %v258
      %v341 = vunpack.c.h.b16 %v258
      %v342 = vunpack.c.l.b16 %v259
      %v343 = vunpack.c.h.b16 %v259
      %v344 = vunpack.c.l.b16 %v260
      %v345 = vunpack.c.h.b16 %v260
      %v346 = vunpack.c.l.b16 %v261
      %v347 = vunpack.c.h.b16 %v261
      %v348 = vunpack.c.l.b16 %v262
      %v349 = vunpack.c.h.b16 %v262
      %v350 = vunpack.c.l.b16 %v263
      %v351 = vunpack.c.h.b16 %v263
      %v352 = vunpack.c.l.b16 %v264
      %v353 = vunpack.c.h.b16 %v264
      %v354 = vunpack.c.l.b16 %v265
      %v355 = vunpack.c.h.b16 %v265
      %v356 = vunpack.c.l.b16 %v266
      %v357 = vunpack.c.h.b16 %v266
      %v358 = vunpack.c.l.b16 %v267
      %v359 = vunpack.c.h.b16 %v267
      %v360 = vunpack.c.l.b16 %v268
      %v361 = vunpack.c.h.b16 %v268
      %v362 = vunpack.c.l.b16 %v269
      %v363 = vunpack.c.h.b16 %v269
      %v364 = vunpack.c.l.b16 %v270
      %v365 = vunpack.c.h.b16 %v270
      %v366 = vunpack.c.l.b16 %v271
      %v367 = vunpack.c.h.b16 %v271
      %v368 = vunpack.c.l.b16 %v272
      %v369 = vunpack.c.h.b16 %v272
      %v370 = vunpack.c.l.b16 %v273
      %v371 = vunpack.c.h.b16 %v273
      %v372 = vunpack.c.l.b16 %v274
      %v373 = vunpack.c.h.b16 %v274
      %v374 = vunpack.c.l.b16 %v275
      %v375 = vunpack.c.h.b16 %v275
      %v376 = vunpack.c.l.b16 %v276
      %v377 = vunpack.c.h.b16 %v276
      %v378 = vunpack.c.l.b16 %v277
      %v379 = vunpack.c.h.b16 %v277
      %v380 = vpack.c.b16 %v324, %v316
      %v381 = vpack.c.b16 %v325, %v317
      %v382 = vpack.c.b16 %v326, %v318
      %v383 = vpack.c.b16 %v327, %v319
      %v384 = vpack.c.b16 %v328, %v320
      %v385 = vpack.c.b16 %v329, %v321
      %v386 = vpack.c.b16 %v330, %v322
      %v387 = vpack.c.b16 %v331, %v323
      %v388 = vpack.c.b16 %v340, %v332
      %v389 = vpack.c.b16 %v341, %v333
      %v390 = vpack.c.b16 %v342, %v334
      %v391 = vpack.c.b16 %v343, %v335
      %v392 = vpack.c.b16 %v344, %v336
      %v393 = vpack.c.b16 %v345, %v337
      %v394 = vpack.c.b16 %v346, %v338
      %v395 = vpack.c.b16 %v347, %v339
      %v396 = vpack.c.b16 %v356, %v348
      %v397 = vpack.c.b16 %v357, %v349
      %v398 = vpack.c.b16 %v358, %v350
      %v399 = vpack.c.b16 %v359, %v351
      %v400 = vpack.c.b16 %v360, %v352
      %v401 = vpack.c.b16 %v361, %v353
      %v402 = vpack.c.b16 %v362, %v354
      %v403 = vpack.c.b16 %v363, %v355
      %v404 = vpack.c.b16 %v372, %v364
      %v405 = vpack.c.b16 %v373, %v365
      %v406 = vpack.c.b16 %v374, %v366
      %v407 = vpack.c.b16 %v375, %v367
      %v408 = vpack.c.b16 %v376, %v368
      %v409 = vpack.c.b16 %v377, %v369
      %v410 = vpack.c.b16 %v378, %v370
      %v411 = vpack.c.b16 %v379, %v371
      %vm444 = vcmask 523264
      %v446 = vsel %vm444, %v245, 0
      %448 = vmatprep.subr.bf16.mxu0 %v381
      %449 = vmatpush1.bf16.msra.mxu0 %v380
      %450 = vmatprep.subr.bf16.mxu0 %v389
      %451 = vmatpush1.bf16.msra.mxu0 %v388
      %452 = vmatprep.subr.bf16.mxu0 %v397
      %453 = vmatpush1.bf16.msra.mxu0 %v396
      %454 = vmatprep.subr.bf16.mxu0 %v405
      %455 = vmatpush1.bf16.msra.mxu0 %v404
      %456 = vmatprep.subr.bf16.mxu0 0
      %457 = vmatpush1.bf16.msra.mxu0 0
      %458 = vmatprep.subr.bf16.mxu0 0
      %459 = vmatpush1.bf16.msra.mxu0 0
      %460 = vmatprep.subr.bf16.mxu0 0
      %461 = vmatpush1.bf16.msra.mxu0 0
      %462 = vmatprep.subr.bf16.mxu0 0
      %463 = vmatpush1.bf16.msra.mxu0 0
      %464 = vmatprep.subr.bf16.mxu0 0
      %465 = vmatpush1.bf16.msra.mxu0 0
      %466 = vmatprep.subr.bf16.mxu0 0
      %467 = vmatpush1.bf16.msra.mxu0 0
      %468 = vmatprep.subr.bf16.mxu0 0
      %469 = vmatpush1.bf16.msra.mxu0 0
      %470 = vmatprep.subr.bf16.mxu0 0
      %471 = vmatpush1.bf16.msra.mxu0 0
      %472 = vmatprep.subr.bf16.mxu0 0
      %473 = vmatpush1.bf16.msra.mxu0 0
      %474 = vmatprep.subr.bf16.mxu0 0
      %475 = vmatpush1.bf16.msra.mxu0 0
      %476 = vmatprep.subr.bf16.mxu0 0
      %477 = vmatpush1.bf16.msra.mxu0 0
      %478 = vmatprep.subr.bf16.mxu0 0
      %479 = vmatpush1.bf16.msra.mxu0 0
      %480 = vmatprep.mubr.bf16.mxu0 0
      %481 = vmatmul.mubr.bf16.gmra.mrb[0].mxu0 %v446
      %v482 = vpop.f32.mrb[0].mxu0
      %v483 = vadd.f32 %v282, %v482
      %v484 = vpop.f32.mrb[0].mxu0
      %v485 = vadd.f32 %v282, %v484
      %v486 = vpop.f32.mrb[0].mxu0
      %v487 = vpop.f32.mrb[0].mxu0
      %488 = vdwg.mxu0
      %489 = vmatprep.subr.bf16.mxu0 %v383
      %490 = vmatpush1.bf16.msra.mxu0 %v382
      %491 = vmatprep.subr.bf16.mxu0 %v391
      %492 = vmatpush1.bf16.msra.mxu0 %v390
      %493 = vmatprep.subr.bf16.mxu0 %v399
      %494 = vmatpush1.bf16.msra.mxu0 %v398
      %495 = vmatprep.subr.bf16.mxu0 %v407
      %496 = vmatpush1.bf16.msra.mxu0 %v406
      %497 = vmatprep.subr.bf16.mxu0 0
      %498 = vmatpush1.bf16.msra.mxu0 0
      %499 = vmatprep.subr.bf16.mxu0 0
      %500 = vmatpush1.bf16.msra.mxu0 0
      %501 = vmatprep.subr.bf16.mxu0 0
      %502 = vmatpush1.bf16.msra.mxu0 0
      %503 = vmatprep.subr.bf16.mxu0 0
      %504 = vmatpush1.bf16.msra.mxu0 0
      %505 = vmatprep.subr.bf16.mxu0 0
      %506 = vmatpush1.bf16.msra.mxu0 0
      %507 = vmatprep.subr.bf16.mxu0 0
      %508 = vmatpush1.bf16.msra.mxu0 0
      %509 = vmatprep.subr.bf16.mxu0 0
      %510 = vmatpush1.bf16.msra.mxu0 0
      %511 = vmatprep.subr.bf16.mxu0 0
      %512 = vmatpush1.bf16.msra.mxu0 0
      %513 = vmatprep.subr.bf16.mxu0 0
      %514 = vmatpush1.bf16.msra.mxu0 0
      %515 = vmatprep.subr.bf16.mxu0 0
      %516 = vmatpush1.bf16.msra.mxu0 0
      %517 = vmatprep.subr.bf16.mxu0 0
      %518 = vmatpush1.bf16.msra.mxu0 0
      %519 = vmatprep.subr.bf16.mxu0 0
      %520 = vmatpush1.bf16.msra.mxu0 0
      %521 = vmatprep.mubr.bf16.mxu0 0
      %522 = vmatmul.mubr.bf16.gmra.mrb[0].mxu0 %v446
      %v523 = vpop.f32.mrb[0].mxu0
      %v524 = vadd.f32 %v282, %v523
      %v525 = vpop.f32.mrb[0].mxu0
      %v526 = vadd.f32 %v282, %v525
      %v527 = vpop.f32.mrb[0].mxu0
      %v528 = vpop.f32.mrb[0].mxu0
      %529 = vdwg.mxu0
      %530 = vmatprep.subr.bf16.mxu0 %v385
      %531 = vmatpush1.bf16.msra.mxu0 %v384
      %532 = vmatprep.subr.bf16.mxu0 %v393
      %533 = vmatpush1.bf16.msra.mxu0 %v392
      %534 = vmatprep.subr.bf16.mxu0 %v401
      %535 = vmatpush1.bf16.msra.mxu0 %v400
      %536 = vmatprep.subr.bf16.mxu0 %v409
      %537 = vmatpush1.bf16.msra.mxu0 %v408
      %538 = vmatprep.subr.bf16.mxu0 0
      %539 = vmatpush1.bf16.msra.mxu0 0
      %540 = vmatprep.subr.bf16.mxu0 0
      %541 = vmatpush1.bf16.msra.mxu0 0
      %542 = vmatprep.subr.bf16.mxu0 0
      %543 = vmatpush1.bf16.msra.mxu0 0
      %544 = vmatprep.subr.bf16.mxu0 0
      %545 = vmatpush1.bf16.msra.mxu0 0
      %546 = vmatprep.subr.bf16.mxu0 0
      %547 = vmatpush1.bf16.msra.mxu0 0
      %548 = vmatprep.subr.bf16.mxu0 0
      %549 = vmatpush1.bf16.msra.mxu0 0
      %550 = vmatprep.subr.bf16.mxu0 0
      %551 = vmatpush1.bf16.msra.mxu0 0
      %552 = vmatprep.subr.bf16.mxu0 0
      %553 = vmatpush1.bf16.msra.mxu0 0
      %554 = vmatprep.subr.bf16.mxu0 0
      %555 = vmatpush1.bf16.msra.mxu0 0
      %556 = vmatprep.subr.bf16.mxu0 0
      %557 = vmatpush1.bf16.msra.mxu0 0
      %558 = vmatprep.subr.bf16.mxu0 0
      %559 = vmatpush1.bf16.msra.mxu0 0
      %560 = vmatprep.subr.bf16.mxu0 0
      %561 = vmatpush1.bf16.msra.mxu0 0
      %562 = vmatprep.mubr.bf16.mxu0 0
      %563 = vmatmul.mubr.bf16.gmra.mrb[0].mxu0 %v446
      %v564 = vpop.f32.mrb[0].mxu0
      %v565 = vadd.f32 %v282, %v564
      %v566 = vpop.f32.mrb[0].mxu0
      %v567 = vadd.f32 %v282, %v566
      %v568 = vpop.f32.mrb[0].mxu0
      %v569 = vpop.f32.mrb[0].mxu0
      %570 = vdwg.mxu0
      %571 = vmatprep.subr.bf16.mxu0 %v387
      %572 = vmatpush1.bf16.msra.mxu0 %v386
      %573 = vmatprep.subr.bf16.mxu0 %v395
      %574 = vmatpush1.bf16.msra.mxu0 %v394
      %575 = vmatprep.subr.bf16.mxu0 %v403
      %576 = vmatpush1.bf16.msra.mxu0 %v402
      %577 = vmatprep.subr.bf16.mxu0 %v411
      %578 = vmatpush1.bf16.msra.mxu0 %v410
      %579 = vmatprep.subr.bf16.mxu0 0
      %580 = vmatpush1.bf16.msra.mxu0 0
      %581 = vmatprep.subr.bf16.mxu0 0
      %582 = vmatpush1.bf16.msra.mxu0 0
      %583 = vmatprep.subr.bf16.mxu0 0
      %584 = vmatpush1.bf16.msra.mxu0 0
      %585 = vmatprep.subr.bf16.mxu0 0
      %586 = vmatpush1.bf16.msra.mxu0 0
      %587 = vmatprep.subr.bf16.mxu0 0
      %588 = vmatpush1.bf16.msra.mxu0 0
      %589 = vmatprep.subr.bf16.mxu0 0
      %590 = vmatpush1.bf16.msra.mxu0 0
      %591 = vmatprep.subr.bf16.mxu0 0
      %592 = vmatpush1.bf16.msra.mxu0 0
      %593 = vmatprep.subr.bf16.mxu0 0
      %594 = vmatpush1.bf16.msra.mxu0 0
      %595 = vmatprep.subr.bf16.mxu0 0
      %596 = vmatpush1.bf16.msra.mxu0 0
      %597 = vmatprep.subr.bf16.mxu0 0
      %598 = vmatpush1.bf16.msra.mxu0 0
      %599 = vmatprep.subr.bf16.mxu0 0
      %600 = vmatpush1.bf16.msra.mxu0 0
      %601 = vmatprep.subr.bf16.mxu0 0
      %602 = vmatpush1.bf16.msra.mxu0 0
      %603 = vmatprep.mubr.bf16.mxu0 0
      %604 = vmatmul.mubr.bf16.gmra.mrb[0].mxu0 %v446
      %v605 = vpop.f32.mrb[0].mxu0
      %v606 = vadd.f32 %v282, %v605
      %v607 = vpop.f32.mrb[0].mxu0
      %v608 = vadd.f32 %v282, %v607
      %v609 = vpop.f32.mrb[0].mxu0
      %v610 = vpop.f32.mrb[0].mxu0
      %611 = vdwg.mxu0
      %vm612 = vcmp.ge.f32.partialorder %v483, 0.0
      %vm613 = vcmp.ge.f32.partialorder %v485, 0.0
      %vm614 = vcmp.ge.f32.partialorder %v524, 0.0
      %vm615 = vcmp.ge.f32.partialorder %v526, 0.0
      %vm616 = vcmp.ge.f32.partialorder %v565, 0.0
      %vm617 = vcmp.ge.f32.partialorder %v567, 0.0
      %vm618 = vcmp.ge.f32.partialorder %v606, 0.0
      %vm619 = vcmp.ge.f32.partialorder %v608, 0.0
      %v620 = vmul.f32 %v483, 0.1
      %v621 = vmul.f32 %v485, 0.1
      %v622 = vmul.f32 %v524, 0.1
      %v623 = vmul.f32 %v526, 0.1
      %v624 = vmul.f32 %v565, 0.1
      %v625 = vmul.f32 %v567, 0.1
      %v626 = vmul.f32 %v606, 0.1
      %v627 = vmul.f32 %v608, 0.1
      %v628 = vsel %vm612, %v483, %v620
      %v629 = vsel %vm613, %v485, %v621
      %v630 = vsel %vm614, %v524, %v622
      %v631 = vsel %vm615, %v526, %v623
      %v632 = vsel %vm616, %v565, %v624
      %v633 = vsel %vm617, %v567, %v625
      %v634 = vsel %vm618, %v606, %v626
      %v635 = vsel %vm619, %v608, %v627
      %636 = vst [vmem:[%s242] sm:$0xff] %v628
      %637 = vst [vmem:[%s242 + $0x8] sm:$0xff] %v629
      %638 = vst [vmem:[%s242 + $0x10] sm:$0xff] %v630
      %639 = vst [vmem:[%s242 + $0x18] sm:$0xff] %v631
      %640 = vst [vmem:[%s242 + $0x20] sm:$0xff] %v632
      %641 = vst [vmem:[%s242 + $0x28] sm:$0xff] %v633
      %642 = vst [vmem:[%s242 + $0x30] sm:$0xff] %v634
      %643 = vst [vmem:[%s242 + $0x38] sm:$0xff] %v635
      %s644 = smul.u32 8, %s19
      %p645 = scmp.lt.s32.totalorder %s18, 7
      %s646 = scalar_select %p645, %s18, 7
      %p647 = scmp.lt.s32.totalorder %s644, 7
      %s648 = scalar_select %p647, %s644, 7
      %s649 = smul.addr %s646, 8
      %s650 = sadd.s32 %s648, %s649
      %s651 = smul.addr %s650, 8
      %s652 = scalar_lea.vmem %s3, %s651
      // Predicated region
      $region33: #{unet_forward.16} parent=31 // pred_check
        %p653 = pneg %p126
      $region34: #{unet_forward.16} parent=31 // pred_check_branch
        %655 = sbr.rel (%p653) target = $region36
      $region35: #{unet_forward.16} parent=31 // pred_region
        %s656 = smul.u32 8, %s19
      $region36: #{unet_forward.16} parent=31 // pred_fallthru
        _
    $region32: #{unet_forward.16} parent=5 // pred_fallthru
      _
    %p657 = scmp.le.s32.totalorder 2, %s9
    // Predicated region
    $region37: #{unet_forward.16} parent=5 // pred_check
      %p658 = pneg %p657
    $region38: #{unet_forward.16} parent=5 // pred_check_branch
      %660 = sbr.rel (%p658) target = $region40
    $region39: #{unet_forward.16} parent=5 // pred_region
      %s661 = ssub.s32 %s9, 2
      // Predicated region
      $region41: #{unet_forward.16} parent=39 // pred_check
        %p662 = pneg %p132
      $region42: #{unet_forward.16} parent=39 // pred_check_branch
        %664 = sbr.rel (%p662) target = $region44
      $region43: #{unet_forward.16} parent=39 // pred_region
        %s665 = smul.u32 8, %s21
        %p666 = scmp.lt.s32.totalorder %s20, 7
        %s667 = scalar_select %p666, %s20, 7
        %p668 = scmp.lt.s32.totalorder %s665, 7
        %s669 = scalar_select %p668, %s665, 7
        %s670 = smul.addr %s667, 8
        %s671 = sadd.s32 %s669, %s670
        %s672 = smul.addr %s671, 8
        %s673 = scalar_lea.vmem %s3, %s672
      $region44: #{unet_forward.16} parent=39 // pred_fallthru
        _
    $region40: #{unet_forward.16} parent=5 // pred_fallthru
      _
  $region6: #{unet_forward.16} parent=0 // loop_footer
    %s13 = sadd.s32 1, %s9
  $region7: #{unet_forward.16} parent=0 // loop_footer_branch
    %8 = sbr.rel target = $region3
  $region8: #{unet_forward.16} parent=0 // loop_exit
    _

// kernel: squeeze.11
$region0: #{squeeze.11}
  %s0 = inlined_call_operand.vmem [shape: f32[1,4,8192], index: 0, kind: input, shape index: {}]
  %s1 = inlined_call_operand.hbm [shape: f32[4,2,16,16,16], index: 1, kind: output, shape index: {}]
  $region1: #{squeeze.11} parent=0
    #allocation0 [shape = 'u8[1048576]{0}', space=vmem, size = 0x100000, scoped, tag = 'operand span for operand 1']
    #allocation1 [shape = 's32[1]{0}', space=sflag, size = 0x4, scoped, tag = 'scoped memory for squeeze.11']
    #allocation2 [shape = 'u8[262144]{0}', space=vmem, size = 0x40000, scoped, tag = 'scoped mem for input reshape']
    %2 = vsyncpa [#allocation1], 0
    %s4 = sshllo.u32 0, 4
    %s5 = smul.addr 4, 63
    %s6 = scalar_lea.vmem %s0, %s5
    %v7 = vld [vmem:[%s6] sm:%s4]
    %s8 = scalar_lea.vmem [#allocation2], 504
    %9 = vst [vmem:[%s8] sm:%s4] %v7
    %s10 = smul.addr 4, 62
    %s11 = scalar_lea.vmem %s0, %s10
    %v12 = vld [vmem:[%s11] sm:%s4]
    %s13 = scalar_lea.vmem [#allocation2], 496
    %14 = vst [vmem:[%s13] sm:%s4] %v12
    %s15 = smul.addr 4, 61
    %s16 = scalar_lea.vmem %s0, %s15
    %v17 = vld [vmem:[%s16] sm:%s4]
    %s18 = scalar_lea.vmem [#allocation2], 488
    %19 = vst [vmem:[%s18] sm:%s4] %v17
    %s20 = smul.addr 4, 60
    %s21 = scalar_lea.vmem %s0, %s20
    %v22 = vld [vmem:[%s21] sm:%s4]
    %s23 = scalar_lea.vmem [#allocation2], 480
    %24 = vst [vmem:[%s23] sm:%s4] %v22
    %s25 = smul.addr 4, 59
    %s26 = scalar_lea.vmem %s0, %s25
    %v27 = vld [vmem:[%s26] sm:%s4]
    %s28 = scalar_lea.vmem [#allocation2], 472
    %29 = vst [vmem:[%s28] sm:%s4] %v27
    %s30 = smul.addr 4, 58
    %s31 = scalar_lea.vmem %s0, %s30
    %v32 = vld [vmem:[%s31] sm:%s4]
    %s33 = scalar_lea.vmem [#allocation2], 464
    %34 = vst [vmem:[%s33] sm:%s4] %v32
    %s35 = smul.addr 4, 57
    %s36 = scalar_lea.vmem %s0, %s35
    %v37 = vld [vmem:[%s36] sm:%s4]
    %s38 = scalar_lea.vmem [#allocation2], 456
    %39 = vst [vmem:[%s38] sm:%s4] %v37
    %s40 = smul.addr 4, 56
    %s41 = scalar_lea.vmem %s0, %s40
    %v42 = vld [vmem:[%s41] sm:%s4]
    %s43 = scalar_lea.vmem [#allocation2], 448
    %44 = vst [vmem:[%s43] sm:%s4] %v42
    %s45 = smul.addr 4, 55
    %s46 = scalar_lea.vmem %s0, %s45
    %v47 = vld [vmem:[%s46] sm:%s4]
    %s48 = scalar_lea.vmem [#allocation2], 440
    %49 = vst [vmem:[%s48] sm:%s4] %v47
    %s50 = smul.addr 4, 54
    %s51 = scalar_lea.vmem %s0, %s50
    %v52 = vld [vmem:[%s51] sm:%s4]
    %s53 = scalar_lea.vmem [#allocation2], 432
    %54 = vst [vmem:[%s53] sm:%s4] %v52
    %s55 = smul.addr 4, 53
    %s56 = scalar_lea.vmem %s0, %s55
    %v57 = vld [vmem:[%s56] sm:%s4]
    %s58 = scalar_lea.vmem [#allocation2], 424
    %59 = vst [vmem:[%s58] sm:%s4] %v57
    %s60 = smul.addr 4, 52
    %s61 = scalar_lea.vmem %s0, %s60
    %v62 = vld [vmem:[%s61] sm:%s4]
    %s63 = scalar_lea.vmem [#allocation2], 416
    %64 = vst [vmem:[%s63] sm:%s4] %v62
    %s65 = smul.addr 4, 51
    %s66 = scalar_lea.vmem %s0, %s65
    %v67 = vld [vmem:[%s66] sm:%s4]
    %s68 = scalar_lea.vmem [#allocation2], 408
    %69 = vst [vmem:[%s68] sm:%s4] %v67
    %s70 = smul.addr 4, 50
    %s71 = scalar_lea.vmem %s0, %s70
    %v72 = vld [vmem:[%s71] sm:%s4]
    %s73 = scalar_lea.vmem [#allocation2], 400
    %74 = vst [vmem:[%s73] sm:%s4] %v72
    %s75 = smul.addr 4, 49
    %s76 = scalar_lea.vmem %s0, %s75
    %v77 = vld [vmem:[%s76] sm:%s4]
    %s78 = scalar_lea.vmem [#allocation2], 392
    %79 = vst [vmem:[%s78] sm:%s4] %v77
    %s80 = smul.addr 4, 48
    %s81 = scalar_lea.vmem %s0, %s80
    %v82 = vld [vmem:[%s81] sm:%s4]
    %s83 = scalar_lea.vmem [#allocation2], 384
    %84 = vst [vmem:[%s83] sm:%s4] %v82
    %s85 = smul.addr 4, 47
    %s86 = scalar_lea.vmem %s0, %s85
    %v87 = vld [vmem:[%s86] sm:%s4]
    %s88 = scalar_lea.vmem [#allocation2], 376
    %89 = vst [vmem:[%s88] sm:%s4] %v87
    %s90 = smul.addr 4, 46
    %s91 = scalar_lea.vmem %s0, %s90
    %v92 = vld [vmem:[%s91] sm:%s4]
    %s93 = scalar_lea.vmem [#allocation2], 368
    %94 = vst [vmem:[%s93] sm:%s4] %v92
    %s95 = smul.addr 4, 45
    %s96 = scalar_lea.vmem %s0, %s95
    %v97 = vld [vmem:[%s96] sm:%s4]
    %s98 = scalar_lea.vmem [#allocation2], 360
    %99 = vst [vmem:[%s98] sm:%s4] %v97
    %s100 = smul.addr 4, 44
    %s101 = scalar_lea.vmem %s0, %s100
    %v102 = vld [vmem:[%s101] sm:%s4]
    %s103 = scalar_lea.vmem [#allocation2], 352
    %104 = vst [vmem:[%s103] sm:%s4] %v102
    %s105 = smul.addr 4, 43
    %s106 = scalar_lea.vmem %s0, %s105
    %v107 = vld [vmem:[%s106] sm:%s4]
    %s108 = scalar_lea.vmem [#allocation2], 344
    %109 = vst [vmem:[%s108] sm:%s4] %v107
    %s110 = smul.addr 4, 42
    %s111 = scalar_lea.vmem %s0, %s110
    %v112 = vld [vmem:[%s111] sm:%s4]
    %s113 = scalar_lea.vmem [#allocation2], 336
    %114 = vst [vmem:[%s113] sm:%s4] %v112
    %s115 = smul.addr 4, 41
    %s116 = scalar_lea.vmem %s0, %s115
    %v117 = vld [vmem:[%s116] sm:%s4]
    %s118 = scalar_lea.vmem [#allocation2], 328
    %119 = vst [vmem:[%s118] sm:%s4] %v117
    %s120 = smul.addr 4, 40
    %s121 = scalar_lea.vmem %s0, %s120
    %v122 = vld [vmem:[%s121] sm:%s4]
    %s123 = scalar_lea.vmem [#allocation2], 320
    %124 = vst [vmem:[%s123] sm:%s4] %v122
    %s125 = smul.addr 4, 39
    %s126 = scalar_lea.vmem %s0, %s125
    %v127 = vld [vmem:[%s126] sm:%s4]
    %s128 = scalar_lea.vmem [#allocation2], 312
    %129 = vst [vmem:[%s128] sm:%s4] %v127
    %s130 = smul.addr 4, 38
    %s131 = scalar_lea.vmem %s0, %s130
    %v132 = vld [vmem:[%s131] sm:%s4]
    %s133 = scalar_lea.vmem [#allocation2], 304
    %134 = vst [vmem:[%s133] sm:%s4] %v132
    %s135 = smul.addr 4, 37
    %s136 = scalar_lea.vmem %s0, %s135
    %v137 = vld [vmem:[%s136] sm:%s4]
    %s138 = scalar_lea.vmem [#allocation2], 296
    %139 = vst [vmem:[%s138] sm:%s4] %v137
    %s140 = smul.addr 4, 36
    %s141 = scalar_lea.vmem %s0, %s140
    %v142 = vld [vmem:[%s141] sm:%s4]
    %s143 = scalar_lea.vmem [#allocation2], 288
    %144 = vst [vmem:[%s143] sm:%s4] %v142
    %s145 = smul.addr 4, 35
    %s146 = scalar_lea.vmem %s0, %s145
    %v147 = vld [vmem:[%s146] sm:%s4]
    %s148 = scalar_lea.vmem [#allocation2], 280
    %149 = vst [vmem:[%s148] sm:%s4] %v147
    %s150 = smul.addr 4, 34
    %s151 = scalar_lea.vmem %s0, %s150
    %v152 = vld [vmem:[%s151] sm:%s4]
    %s153 = scalar_lea.vmem [#allocation2], 272
    %154 = vst [vmem:[%s153] sm:%s4] %v152
    %s155 = smul.addr 4, 33
    %s156 = scalar_lea.vmem %s0, %s155
    %v157 = vld [vmem:[%s156] sm:%s4]
    %s158 = scalar_lea.vmem [#allocation2], 264
    %159 = vst [vmem:[%s158] sm:%s4] %v157
    %s160 = smul.addr 4, 32
    %s161 = scalar_lea.vmem %s0, %s160
    %v162 = vld [vmem:[%s161] sm:%s4]
    %s163 = scalar_lea.vmem [#allocation2], 256
    %164 = vst [vmem:[%s163] sm:%s4] %v162
    %s165 = smul.addr 4, 31
    %s166 = scalar_lea.vmem %s0, %s165
    %v167 = vld [vmem:[%s166] sm:%s4]
    %s168 = scalar_lea.vmem [#allocation2], 248
    %169 = vst [vmem:[%s168] sm:%s4] %v167
    %s170 = smul.addr 4, 30
    %s171 = scalar_lea.vmem %s0, %s170
    %v172 = vld [vmem:[%s171] sm:%s4]
    %s173 = scalar_lea.vmem [#allocation2], 240
    %174 = vst [vmem:[%s173] sm:%s4] %v172
    %s175 = smul.addr 4, 29
    %s176 = scalar_lea.vmem %s0, %s175
    %v177 = vld [vmem:[%s176] sm:%s4]
    %s178 = scalar_lea.vmem [#allocation2], 232
    %179 = vst [vmem:[%s178] sm:%s4] %v177
    %s180 = smul.addr 4, 28
    %s181 = scalar_lea.vmem %s0, %s180
    %v182 = vld [vmem:[%s181] sm:%s4]
    %s183 = scalar_lea.vmem [#allocation2], 224
    %184 = vst [vmem:[%s183] sm:%s4] %v182
    %s185 = smul.addr 4, 27
    %s186 = scalar_lea.vmem %s0, %s185
    %v187 = vld [vmem:[%s186] sm:%s4]
    %s188 = scalar_lea.vmem [#allocation2], 216
    %189 = vst [vmem:[%s188] sm:%s4] %v187
    %s190 = smul.addr 4, 26
    %s191 = scalar_lea.vmem %s0, %s190
    %v192 = vld [vmem:[%s191] sm:%s4]
    %s193 = scalar_lea.vmem [#allocation2], 208
    %194 = vst [vmem:[%s193] sm:%s4] %v192
    %s195 = smul.addr 4, 25
    %s196 = scalar_lea.vmem %s0, %s195
    %v197 = vld [vmem:[%s196] sm:%s4]
    %s198 = scalar_lea.vmem [#allocation2], 200
    %199 = vst [vmem:[%s198] sm:%s4] %v197
    %s200 = smul.addr 4, 24
    %s201 = scalar_lea.vmem %s0, %s200
    %v202 = vld [vmem:[%s201] sm:%s4]
    %s203 = scalar_lea.vmem [#allocation2], 192
    %204 = vst [vmem:[%s203] sm:%s4] %v202
    %s205 = smul.addr 4, 23
    %s206 = scalar_lea.vmem %s0, %s205
    %v207 = vld [vmem:[%s206] sm:%s4]
    %s208 = scalar_lea.vmem [#allocation2], 184
    %209 = vst [vmem:[%s208] sm:%s4] %v207
    %s210 = smul.addr 4, 22
    %s211 = scalar_lea.vmem %s0, %s210
    %v212 = vld [vmem:[%s211] sm:%s4]
    %s213 = scalar_lea.vmem [#allocation2], 176
    %214 = vst [vmem:[%s213] sm:%s4] %v212
    %s215 = smul.addr 4, 21
    %s216 = scalar_lea.vmem %s0, %s215
    %v217 = vld [vmem:[%s216] sm:%s4]
    %s218 = scalar_lea.vmem [#allocation2], 168
    %219 = vst [vmem:[%s218] sm:%s4] %v217
    %s220 = smul.addr 4, 20
    %s221 = scalar_lea.vmem %s0, %s220
    %v222 = vld [vmem:[%s221] sm:%s4]
    %s223 = scalar_lea.vmem [#allocation2], 160
    %224 = vst [vmem:[%s223] sm:%s4] %v222
    %s225 = smul.addr 4, 19
    %s226 = scalar_lea.vmem %s0, %s225
    %v227 = vld [vmem:[%s226] sm:%s4]
    %s228 = scalar_lea.vmem [#allocation2], 152
    %229 = vst [vmem:[%s228] sm:%s4] %v227
    %s230 = smul.addr 4, 18
    %s231 = scalar_lea.vmem %s0, %s230
    %v232 = vld [vmem:[%s231] sm:%s4]
    %s233 = scalar_lea.vmem [#allocation2], 144
    %234 = vst [vmem:[%s233] sm:%s4] %v232
    %s235 = smul.addr 4, 17
    %s236 = scalar_lea.vmem %s0, %s235
    %v237 = vld [vmem:[%s236] sm:%s4]
    %s238 = scalar_lea.vmem [#allocation2], 136
    %239 = vst [vmem:[%s238] sm:%s4] %v237
    %s240 = smul.addr 4, 16
    %s241 = scalar_lea.vmem %s0, %s240
    %v242 = vld [vmem:[%s241] sm:%s4]
    %s243 = scalar_lea.vmem [#allocation2], 128
    %244 = vst [vmem:[%s243] sm:%s4] %v242
    %s245 = smul.addr 4, 15
    %s246 = scalar_lea.vmem %s0, %s245
    %v247 = vld [vmem:[%s246] sm:%s4]
    %s248 = scalar_lea.vmem [#allocation2], 120
    %249 = vst [vmem:[%s248] sm:%s4] %v247
    %s250 = smul.addr 4, 14
    %s251 = scalar_lea.vmem %s0, %s250
    %v252 = vld [vmem:[%s251] sm:%s4]
    %s253 = scalar_lea.vmem [#allocation2], 112
    %254 = vst [vmem:[%s253] sm:%s4] %v252
    %s255 = smul.addr 4, 13
    %s256 = scalar_lea.vmem %s0, %s255
    %v257 = vld [vmem:[%s256] sm:%s4]
    %s258 = scalar_lea.vmem [#allocation2], 104
    %259 = vst [vmem:[%s258] sm:%s4] %v257
    %s260 = smul.addr 4, 12
    %s261 = scalar_lea.vmem %s0, %s260
    %v262 = vld [vmem:[%s261] sm:%s4]
    %s263 = scalar_lea.vmem [#allocation2], 96
    %264 = vst [vmem:[%s263] sm:%s4] %v262
    %s265 = smul.addr 4, 11
    %s266 = scalar_lea.vmem %s0, %s265
    %v267 = vld [vmem:[%s266] sm:%s4]
    %s268 = scalar_lea.vmem [#allocation2], 88
    %269 = vst [vmem:[%s268] sm:%s4] %v267
    %s270 = smul.addr 4, 10
    %s271 = scalar_lea.vmem %s0, %s270
    %v272 = vld [vmem:[%s271] sm:%s4]
    %s273 = scalar_lea.vmem [#allocation2], 80
    %274 = vst [vmem:[%s273] sm:%s4] %v272
    %s275 = smul.addr 4, 9
    %s276 = scalar_lea.vmem %s0, %s275
    %v277 = vld [vmem:[%s276] sm:%s4]
    %s278 = scalar_lea.vmem [#allocation2], 72
    %279 = vst [vmem:[%s278] sm:%s4] %v277
    %s280 = smul.addr 4, 8
    %s281 = scalar_lea.vmem %s0, %s280
    %v282 = vld [vmem:[%s281] sm:%s4]
    %s283 = scalar_lea.vmem [#allocation2], 64
    %284 = vst [vmem:[%s283] sm:%s4] %v282
    %s285 = smul.addr 4, 7
    %s286 = scalar_lea.vmem %s0, %s285
    %v287 = vld [vmem:[%s286] sm:%s4]
    %s288 = scalar_lea.vmem [#allocation2], 56
    %289 = vst [vmem:[%s288] sm:%s4] %v287
    %s290 = smul.addr 4, 6
    %s291 = scalar_lea.vmem %s0, %s290
    %v292 = vld [vmem:[%s291] sm:%s4]
    %s293 = scalar_lea.vmem [#allocation2], 48
    %294 = vst [vmem:[%s293] sm:%s4] %v292
    %s295 = smul.addr 4, 5
    %s296 = scalar_lea.vmem %s0, %s295
    %v297 = vld [vmem:[%s296] sm:%s4]
    %s298 = scalar_lea.vmem [#allocation2], 40
    %299 = vst [vmem:[%s298] sm:%s4] %v297
    %s300 = smul.addr 4, 4
    %s301 = scalar_lea.vmem %s0, %s300
    %v302 = vld [vmem:[%s301] sm:%s4]
    %s303 = scalar_lea.vmem [#allocation2], 32
    %304 = vst [vmem:[%s303] sm:%s4] %v302
    %s305 = smul.addr 4, 3
    %s306 = scalar_lea.vmem %s0, %s305
    %v307 = vld [vmem:[%s306] sm:%s4]
    %s308 = scalar_lea.vmem [#allocation2], 24
    %309 = vst [vmem:[%s308] sm:%s4] %v307
    %s310 = smul.addr 4, 2
    %s311 = scalar_lea.vmem %s0, %s310
    %v312 = vld [vmem:[%s311] sm:%s4]
    %s313 = scalar_lea.vmem [#allocation2], 16
    %314 = vst [vmem:[%s313] sm:%s4] %v312
    %s315 = scalar_lea.vmem %s0, 4
    %v316 = vld [vmem:[%s315] sm:%s4]
    %s317 = scalar_lea.vmem [#allocation2], 8
    %318 = vst [vmem:[%s317] sm:%s4] %v316
    %v319 = vld [vmem:[%s0] sm:%s4]
    %320 = vst [vmem:[#allocation2] sm:%s4] %v319
    %v321 = vld [vmem:[#allocation2] sm:$0xf]
    %vm322 = vcmask 130048
    %323 = vst.msk [vmem:[#allocation0] sm:$0x1] %vm322, %v321
    %s324 = scalar_lea.vmem [#allocation0], 511
    %325 = vst.msk [vmem:[%s324] sm:$0x2] %vm322, %v321
    %s326 = scalar_lea.vmem [#allocation0], 1022
    %327 = vst.msk [vmem:[%s326] sm:$0x4] %vm322, %v321
    %s328 = scalar_lea.vmem [#allocation0], 1533
    %329 = vst.msk [vmem:[%s328] sm:$0x8] %vm322, %v321
    %s330 = scalar_lea.vmem [#allocation2], 8
    %v331 = vld [vmem:[%s330] sm:$0xf]
    %vm332 = vcmask 130048
    %s333 = scalar_lea.vmem [#allocation0], 8
    %334 = vst.msk [vmem:[%s333] sm:$0x1] %vm332, %v331
    %s335 = scalar_lea.vmem [#allocation0], 519
    %336 = vst.msk [vmem:[%s335] sm:$0x2] %vm332, %v331
    %s337 = scalar_lea.vmem [#allocation0], 1030
    %338 = vst.msk [vmem:[%s337] sm:$0x4] %vm332, %v331
    %s339 = scalar_lea.vmem [#allocation0], 1541
    %340 = vst.msk [vmem:[%s339] sm:$0x8] %vm332, %v331
    %s341 = scalar_lea.vmem [#allocation2], 16
    %v342 = vld [vmem:[%s341] sm:$0xf]
    %vm343 = vcmask 130048
    %s344 = scalar_lea.vmem [#allocation0], 16
    %345 = vst.msk [vmem:[%s344] sm:$0x1] %vm343, %v342
    %s346 = scalar_lea.vmem [#allocation0], 527
    %347 = vst.msk [vmem:[%s346] sm:$0x2] %vm343, %v342
    %s348 = scalar_lea.vmem [#allocation0], 1038
    %349 = vst.msk [vmem:[%s348] sm:$0x4] %vm343, %v342
    %s350 = scalar_lea.vmem [#allocation0], 1549
    %351 = vst.msk [vmem:[%s350] sm:$0x8] %vm343, %v342
    %s352 = scalar_lea.vmem [#allocation2], 24
    %v353 = vld [vmem:[%s352] sm:$0xf]
    %vm354 = vcmask 130048
    %s355 = scalar_lea.vmem [#allocation0], 24
    %356 = vst.msk [vmem:[%s355] sm:$0x1] %vm354, %v353
    %s357 = scalar_lea.vmem [#allocation0], 535
    %358 = vst.msk [vmem:[%s357] sm:$0x2] %vm354, %v353
    %s359 = scalar_lea.vmem [#allocation0], 1046
    %360 = vst.msk [vmem:[%s359] sm:$0x4] %vm354, %v353
    %s361 = scalar_lea.vmem [#allocation0], 1557
    %362 = vst.msk [vmem:[%s361] sm:$0x8] %vm354, %v353
    %s363 = scalar_lea.vmem [#allocation2], 32
    %v364 = vld [vmem:[%s363] sm:$0xf]
    %vm365 = vcmask 130048
    %s366 = scalar_lea.vmem [#allocation0], 32
    %367 = vst.msk [vmem:[%s366] sm:$0x1] %vm365, %v364
    %s368 = scalar_lea.vmem [#allocation0], 543
    %369 = vst.msk [vmem:[%s368] sm:$0x2] %vm365, %v364
    %s370 = scalar_lea.vmem [#allocation0], 1054
    %371 = vst.msk [vmem:[%s370] sm:$0x4] %vm365, %v364
    %s372 = scalar_lea.vmem [#allocation0], 1565
    %373 = vst.msk [vmem:[%s372] sm:$0x8] %vm365, %v364
    %s374 = scalar_lea.vmem [#allocation2], 40
    %v375 = vld [vmem:[%s374] sm:$0xf]
    %vm376 = vcmask 130048
    %s377 = scalar_lea.vmem [#allocation0], 40
    %378 = vst.msk [vmem:[%s377] sm:$0x1] %vm376, %v375
    %s379 = scalar_lea.vmem [#allocation0], 551
    %380 = vst.msk [vmem:[%s379] sm:$0x2] %vm376, %v375
    %s381 = scalar_lea.vmem [#allocation0], 1062
    %382 = vst.msk [vmem:[%s381] sm:$0x4] %vm376, %v375
    %s383 = scalar_lea.vmem [#allocation0], 1573
    %384 = vst.msk [vmem:[%s383] sm:$0x8] %vm376, %v375
    %s385 = scalar_lea.vmem [#allocation2], 48
    %v386 = vld [vmem:[%s385] sm:$0xf]
    %vm387 = vcmask 130048
    %s388 = scalar_lea.vmem [#allocation0], 48
    %389 = vst.msk [vmem:[%s388] sm:$0x1] %vm387, %v386
    %s390 = scalar_lea.vmem [#allocation0], 559
    %391 = vst.msk [vmem:[%s390] sm:$0x2] %vm387, %v386
    %s392 = scalar_lea.vmem [#allocation0], 1070
    %393 = vst.msk [vmem:[%s392] sm:$0x4] %vm387, %v386
    %s394 = scalar_lea.vmem [#allocation0], 1581
    %395 = vst.msk [vmem:[%s394] sm:$0x8] %vm387, %v386
    %s396 = scalar_lea.vmem [#allocation2], 56
    %v397 = vld [vmem:[%s396] sm:$0xf]
    %vm398 = vcmask 130048
    %s399 = scalar_lea.vmem [#allocation0], 56
    %400 = vst.msk [vmem:[%s399] sm:$0x1] %vm398, %v397
    %s401 = scalar_lea.vmem [#allocation0], 567
    %402 = vst.msk [vmem:[%s401] sm:$0x2] %vm398, %v397
    %s403 = scalar_lea.vmem [#allocation0], 1078
    %404 = vst.msk [vmem:[%s403] sm:$0x4] %vm398, %v397
    %s405 = scalar_lea.vmem [#allocation0], 1589
    %406 = vst.msk [vmem:[%s405] sm:$0x8] %vm398, %v397
    %s407 = scalar_lea.vmem [#allocation2], 64
    %v408 = vld [vmem:[%s407] sm:$0xf]
    %vm409 = vcmask 130048
    %s410 = scalar_lea.vmem [#allocation0], 64
    %411 = vst.msk [vmem:[%s410] sm:$0x1] %vm409, %v408
    %s412 = scalar_lea.vmem [#allocation0], 575
    %413 = vst.msk [vmem:[%s412] sm:$0x2] %vm409, %v408
    %s414 = scalar_lea.vmem [#allocation0], 1086
    %415 = vst.msk [vmem:[%s414] sm:$0x4] %vm409, %v408
    %s416 = scalar_lea.vmem [#allocation0], 1597
    %417 = vst.msk [vmem:[%s416] sm:$0x8] %vm409, %v408
    %s418 = scalar_lea.vmem [#allocation2], 72
    %v419 = vld [vmem:[%s418] sm:$0xf]
    %vm420 = vcmask 130048
    %s421 = scalar_lea.vmem [#allocation0], 72
    %422 = vst.msk [vmem:[%s421] sm:$0x1] %vm420, %v419
    %s423 = scalar_lea.vmem [#allocation0], 583
    %424 = vst.msk [vmem:[%s423] sm:$0x2] %vm420, %v419
    %s425 = scalar_lea.vmem [#allocation0], 1094
    %426 = vst.msk [vmem:[%s425] sm:$0x4] %vm420, %v419
    %s427 = scalar_lea.vmem [#allocation0], 1605
    %428 = vst.msk [vmem:[%s427] sm:$0x8] %vm420, %v419
    %s429 = scalar_lea.vmem [#allocation2], 80
    %v430 = vld [vmem:[%s429] sm:$0xf]
    %vm431 = vcmask 130048
    %s432 = scalar_lea.vmem [#allocation0], 80
    %433 = vst.msk [vmem:[%s432] sm:$0x1] %vm431, %v430
    %s434 = scalar_lea.vmem [#allocation0], 591
    %435 = vst.msk [vmem:[%s434] sm:$0x2] %vm431, %v430
    %s436 = scalar_lea.vmem [#allocation0], 1102
    %437 = vst.msk [vmem:[%s436] sm:$0x4] %vm431, %v430
    %s438 = scalar_lea.vmem [#allocation0], 1613
    %439 = vst.msk [vmem:[%s438] sm:$0x8] %vm431, %v430
    %s440 = scalar_lea.vmem [#allocation2], 88
    %v441 = vld [vmem:[%s440] sm:$0xf]
    %vm442 = vcmask 130048
    %s443 = scalar_lea.vmem [#allocation0], 88
    %444 = vst.msk [vmem:[%s443] sm:$0x1] %vm442, %v441
    %s445 = scalar_lea.vmem [#allocation0], 599
    %446 = vst.msk [vmem:[%s445] sm:$0x2] %vm442, %v441
    %s447 = scalar_lea.vmem [#allocation0], 1110
    %448 = vst.msk [vmem:[%s447] sm:$0x4] %vm442, %v441
    %s449 = scalar_lea.vmem [#allocation0], 1621
    %450 = vst.msk [vmem:[%s449] sm:$0x8] %vm442, %v441
    %s451 = scalar_lea.vmem [#allocation2], 96
    %v452 = vld [vmem:[%s451] sm:$0xf]
    %vm453 = vcmask 130048
    %s454 = scalar_lea.vmem [#allocation0], 96
    %455 = vst.msk [vmem:[%s454] sm:$0x1] %vm453, %v452
    %s456 = scalar_lea.vmem [#allocation0], 607
    %457 = vst.msk [vmem:[%s456] sm:$0x2] %vm453, %v452
    %s458 = scalar_lea.vmem [#allocation0], 1118
    %459 = vst.msk [vmem:[%s458] sm:$0x4] %vm453, %v452
    %s460 = scalar_lea.vmem [#allocation0], 1629
    %461 = vst.msk [vmem:[%s460] sm:$0x8] %vm453, %v452
    %s462 = scalar_lea.vmem [#allocation2], 104
    %v463 = vld [vmem:[%s462] sm:$0xf]
    %vm464 = vcmask 130048
    %s465 = scalar_lea.vmem [#allocation0], 104
    %466 = vst.msk [vmem:[%s465] sm:$0x1] %vm464, %v463
    %s467 = scalar_lea.vmem [#allocation0], 615
    %468 = vst.msk [vmem:[%s467] sm:$0x2] %vm464, %v463
    %s469 = scalar_lea.vmem [#allocation0], 1126
    %470 = vst.msk [vmem:[%s469] sm:$0x4] %vm464, %v463
    %s471 = scalar_lea.vmem [#allocation0], 1637
    %472 = vst.msk [vmem:[%s471] sm:$0x8] %vm464, %v463
    %s473 = scalar_lea.vmem [#allocation2], 112
    %v474 = vld [vmem:[%s473] sm:$0xf]
    %vm475 = vcmask 130048
    %s476 = scalar_lea.vmem [#allocation0], 112
    %477 = vst.msk [vmem:[%s476] sm:$0x1] %vm475, %v474
    %s478 = scalar_lea.vmem [#allocation0], 623
    %479 = vst.msk [vmem:[%s478] sm:$0x2] %vm475, %v474
    %s480 = scalar_lea.vmem [#allocation0], 1134
    %481 = vst.msk [vmem:[%s480] sm:$0x4] %vm475, %v474
    %s482 = scalar_lea.vmem [#allocation0], 1645
    %483 = vst.msk [vmem:[%s482] sm:$0x8] %vm475, %v474
    %s484 = scalar_lea.vmem [#allocation2], 120
    %v485 = vld [vmem:[%s484] sm:$0xf]
    %vm486 = vcmask 130048
    %s487 = scalar_lea.vmem [#allocation0], 120
    %488 = vst.msk [vmem:[%s487] sm:$0x1] %vm486, %v485
    %s489 = scalar_lea.vmem [#allocation0], 631
    %490 = vst.msk [vmem:[%s489] sm:$0x2] %vm486, %v485
    %s491 = scalar_lea.vmem [#allocation0], 1142
    %492 = vst.msk [vmem:[%s491] sm:$0x4] %vm486, %v485
    %s493 = scalar_lea.vmem [#allocation0], 1653
    %494 = vst.msk [vmem:[%s493] sm:$0x8] %vm486, %v485
    %s495 = scalar_lea.vmem [#allocation2], 128
    %v496 = vld [vmem:[%s495] sm:$0xf]
    %vm497 = vcmask 130048
    %s498 = scalar_lea.vmem [#allocation0], 128
    %499 = vst.msk [vmem:[%s498] sm:$0x1] %vm497, %v496
    %s500 = scalar_lea.vmem [#allocation0], 639
    %501 = vst.msk [vmem:[%s500] sm:$0x2] %vm497, %v496
    %s502 = scalar_lea.vmem [#allocation0], 1150
    %503 = vst.msk [vmem:[%s502] sm:$0x4] %vm497, %v496
    %s504 = scalar_lea.vmem [#allocation0], 1661
    %505 = vst.msk [vmem:[%s504] sm:$0x8] %vm497, %v496
    %s506 = scalar_lea.vmem [#allocation2], 136
    %v507 = vld [vmem:[%s506] sm:$0xf]
    %vm508 = vcmask 130048
    %s509 = scalar_lea.vmem [#allocation0], 136
    %510 = vst.msk [vmem:[%s509] sm:$0x1] %vm508, %v507
    %s511 = scalar_lea.vmem [#allocation0], 647
    %512 = vst.msk [vmem:[%s511] sm:$0x2] %vm508, %v507
    %s513 = scalar_lea.vmem [#allocation0], 1158
    %514 = vst.msk [vmem:[%s513] sm:$0x4] %vm508, %v507
    %s515 = scalar_lea.vmem [#allocation0], 1669
    %516 = vst.msk [vmem:[%s515] sm:$0x8] %vm508, %v507
    %s517 = scalar_lea.vmem [#allocation2], 144
    %v518 = vld [vmem:[%s517] sm:$0xf]
    %vm519 = vcmask 130048
    %s520 = scalar_lea.vmem [#allocation0], 144
    %521 = vst.msk [vmem:[%s520] sm:$0x1] %vm519, %v518
    %s522 = scalar_lea.vmem [#allocation0], 655
    %523 = vst.msk [vmem:[%s522] sm:$0x2] %vm519, %v518
    %s524 = scalar_lea.vmem [#allocation0], 1166
    %525 = vst.msk [vmem:[%s524] sm:$0x4] %vm519, %v518
    %s526 = scalar_lea.vmem [#allocation0], 1677
    %527 = vst.msk [vmem:[%s526] sm:$0x8] %vm519, %v518
    %s528 = scalar_lea.vmem [#allocation2], 152
    %v529 = vld [vmem:[%s528] sm:$0xf]
    %vm530 = vcmask 130048
    %s531 = scalar_lea.vmem [#allocation0], 152
    %532 = vst.msk [vmem:[%s531] sm:$0x1] %vm530, %v529
    %s533 = scalar_lea.vmem [#allocation0], 663
    %534 = vst.msk [vmem:[%s533] sm:$0x2] %vm530, %v529
    %s535 = scalar_lea.vmem [#allocation0], 1174
    %536 = vst.msk [vmem:[%s535] sm:$0x4] %vm530, %v529
    %s537 = scalar_lea.vmem [#allocation0], 1685
    %538 = vst.msk [vmem:[%s537] sm:$0x8] %vm530, %v529
    %s539 = scalar_lea.vmem [#allocation2], 160
    %v540 = vld [vmem:[%s539] sm:$0xf]
    %vm541 = vcmask 130048
    %s542 = scalar_lea.vmem [#allocation0], 160
    %543 = vst.msk [vmem:[%s542] sm:$0x1] %vm541, %v540
    %s544 = scalar_lea.vmem [#allocation0], 671
    %545 = vst.msk [vmem:[%s544] sm:$0x2] %vm541, %v540
    %s546 = scalar_lea.vmem [#allocation0], 1182
    %547 = vst.msk [vmem:[%s546] sm:$0x4] %vm541, %v540
    %s548 = scalar_lea.vmem [#allocation0], 1693
    %549 = vst.msk [vmem:[%s548] sm:$0x8] %vm541, %v540
    %s550 = scalar_lea.vmem [#allocation2], 168
    %v551 = vld [vmem:[%s550] sm:$0xf]
    %vm552 = vcmask 130048
    %s553 = scalar_lea.vmem [#allocation0], 168
    %554 = vst.msk [vmem:[%s553] sm:$0x1] %vm552, %v551
    %s555 = scalar_lea.vmem [#allocation0], 679
    %556 = vst.msk [vmem:[%s555] sm:$0x2] %vm552, %v551
    %s557 = scalar_lea.vmem [#allocation0], 1190
    %558 = vst.msk [vmem:[%s557] sm:$0x4] %vm552, %v551
    %s559 = scalar_lea.vmem [#allocation0], 1701
    %560 = vst.msk [vmem:[%s559] sm:$0x8] %vm552, %v551
    %s561 = scalar_lea.vmem [#allocation2], 176
    %v562 = vld [vmem:[%s561] sm:$0xf]
    %vm563 = vcmask 130048
    %s564 = scalar_lea.vmem [#allocation0], 176
    %565 = vst.msk [vmem:[%s564] sm:$0x1] %vm563, %v562
    %s566 = scalar_lea.vmem [#allocation0], 687
    %567 = vst.msk [vmem:[%s566] sm:$0x2] %vm563, %v562
    %s568 = scalar_lea.vmem [#allocation0], 1198
    %569 = vst.msk [vmem:[%s568] sm:$0x4] %vm563, %v562
    %s570 = scalar_lea.vmem [#allocation0], 1709
    %571 = vst.msk [vmem:[%s570] sm:$0x8] %vm563, %v562
    %s572 = scalar_lea.vmem [#allocation2], 184
    %v573 = vld [vmem:[%s572] sm:$0xf]
    %vm574 = vcmask 130048
    %s575 = scalar_lea.vmem [#allocation0], 184
    %576 = vst.msk [vmem:[%s575] sm:$0x1] %vm574, %v573
    %s577 = scalar_lea.vmem [#allocation0], 695
    %578 = vst.msk [vmem:[%s577] sm:$0x2] %vm574, %v573
    %s579 = scalar_lea.vmem [#allocation0], 1206
    %580 = vst.msk [vmem:[%s579] sm:$0x4] %vm574, %v573
    %s581 = scalar_lea.vmem [#allocation0], 1717
    %582 = vst.msk [vmem:[%s581] sm:$0x8] %vm574, %v573
    %s583 = scalar_lea.vmem [#allocation2], 192
    %v584 = vld [vmem:[%s583] sm:$0xf]
    %vm585 = vcmask 130048
    %s586 = scalar_lea.vmem [#allocation0], 192
    %587 = vst.msk [vmem:[%s586] sm:$0x1] %vm585, %v584
    %s588 = scalar_lea.vmem [#allocation0], 703
    %589 = vst.msk [vmem:[%s588] sm:$0x2] %vm585, %v584
    %s590 = scalar_lea.vmem [#allocation0], 1214
    %591 = vst.msk [vmem:[%s590] sm:$0x4] %vm585, %v584
    %s592 = scalar_lea.vmem [#allocation0], 1725
    %593 = vst.msk [vmem:[%s592] sm:$0x8] %vm585, %v584
    %s594 = scalar_lea.vmem [#allocation2], 200
    %v595 = vld [vmem:[%s594] sm:$0xf]
    %vm596 = vcmask 130048
    %s597 = scalar_lea.vmem [#allocation0], 200
    %598 = vst.msk [vmem:[%s597] sm:$0x1] %vm596, %v595
    %s599 = scalar_lea.vmem [#allocation0], 711
    %600 = vst.msk [vmem:[%s599] sm:$0x2] %vm596, %v595
    %s601 = scalar_lea.vmem [#allocation0], 1222
    %602 = vst.msk [vmem:[%s601] sm:$0x4] %vm596, %v595
    %s603 = scalar_lea.vmem [#allocation0], 1733
    %604 = vst.msk [vmem:[%s603] sm:$0x8] %vm596, %v595
    %s605 = scalar_lea.vmem [#allocation2], 208
    %v606 = vld [vmem:[%s605] sm:$0xf]
    %vm607 = vcmask 130048
    %s608 = scalar_lea.vmem [#allocation0], 208
    %609 = vst.msk [vmem:[%s608] sm:$0x1] %vm607, %v606
    %s610 = scalar_lea.vmem [#allocation0], 719
    %611 = vst.msk [vmem:[%s610] sm:$0x2] %vm607, %v606
    %s612 = scalar_lea.vmem [#allocation0], 1230
    %613 = vst.msk [vmem:[%s612] sm:$0x4] %vm607, %v606
    %s614 = scalar_lea.vmem [#allocation0], 1741
    %615 = vst.msk [vmem:[%s614] sm:$0x8] %vm607, %v606
    %s616 = scalar_lea.vmem [#allocation2], 216
    %v617 = vld [vmem:[%s616] sm:$0xf]
    %vm618 = vcmask 130048
    %s619 = scalar_lea.vmem [#allocation0], 216
    %620 = vst.msk [vmem:[%s619] sm:$0x1] %vm618, %v617
    %s621 = scalar_lea.vmem [#allocation0], 727
    %622 = vst.msk [vmem:[%s621] sm:$0x2] %vm618, %v617
    %s623 = scalar_lea.vmem [#allocation0], 1238
    %624 = vst.msk [vmem:[%s623] sm:$0x4] %vm618, %v617
    %s625 = scalar_lea.vmem [#allocation0], 1749
    %626 = vst.msk [vmem:[%s625] sm:$0x8] %vm618, %v617
    %s627 = scalar_lea.vmem [#allocation2], 224
    %v628 = vld [vmem:[%s627] sm:$0xf]
    %vm629 = vcmask 130048
    %s630 = scalar_lea.vmem [#allocation0], 224
    %631 = vst.msk [vmem:[%s630] sm:$0x1] %vm629, %v628
    %s632 = scalar_lea.vmem [#allocation0], 735
    %633 = vst.msk [vmem:[%s632] sm:$0x2] %vm629, %v628
    %s634 = scalar_lea.vmem [#allocation0], 1246
    %635 = vst.msk [vmem:[%s634] sm:$0x4] %vm629, %v628
    %s636 = scalar_lea.vmem [#allocation0], 1757
    %637 = vst.msk [vmem:[%s636] sm:$0x8] %vm629, %v628
    %s638 = scalar_lea.vmem [#allocation2], 232
    %v639 = vld [vmem:[%s638] sm:$0xf]
    %vm640 = vcmask 130048
    %s641 = scalar_lea.vmem [#allocation0], 232
    %642 = vst.msk [vmem:[%s641] sm:$0x1] %vm640, %v639
    %s643 = scalar_lea.vmem [#allocation0], 743
    %644 = vst.msk [vmem:[%s643] sm:$0x2] %vm640, %v639
    %s645 = scalar_lea.vmem [#allocation0], 1254
    %646 = vst.msk [vmem:[%s645] sm:$0x4] %vm640, %v639
    %s647 = scalar_lea.vmem [#allocation0], 1765
    %648 = vst.msk [vmem:[%s647] sm:$0x8] %vm640, %v639
    %s649 = scalar_lea.vmem [#allocation2], 240
    %v650 = vld [vmem:[%s649] sm:$0xf]
    %vm651 = vcmask 130048
    %s652 = scalar_lea.vmem [#allocation0], 240
    %653 = vst.msk [vmem:[%s652] sm:$0x1] %vm651, %v650
    %s654 = scalar_lea.vmem [#allocation0], 751
    %655 = vst.msk [vmem:[%s654] sm:$0x2] %vm651, %v650
    %s656 = scalar_lea.vmem [#allocation0], 1262
    %657 = vst.msk [vmem:[%s656] sm:$0x4] %vm651, %v650
    %s658 = scalar_lea.vmem [#allocation0], 1773
    %659 = vst.msk [vmem:[%s658] sm:$0x8] %vm651, %v650
    %s660 = scalar_lea.vmem [#allocation2], 248
    %v661 = vld [vmem:[%s660] sm:$0xf]
    %vm662 = vcmask 130048
    %s663 = scalar_lea.vmem [#allocation0], 248
    %664 = vst.msk [vmem:[%s663] sm:$0x1] %vm662, %v661
    %s665 = scalar_lea.vmem [#allocation0], 759
    %666 = vst.msk [vmem:[%s665] sm:$0x2] %vm662, %v661
    %s667 = scalar_lea.vmem [#allocation0], 1270
    %668 = vst.msk [vmem:[%s667] sm:$0x4] %vm662, %v661
    %s669 = scalar_lea.vmem [#allocation0], 1781
    %670 = vst.msk [vmem:[%s669] sm:$0x8] %vm662, %v661
    %s671 = scalar_lea.vmem [#allocation2], 256
    %v672 = vld [vmem:[%s671] sm:$0xf]
    %vm673 = vcmask 130048
    %s674 = scalar_lea.vmem [#allocation0], 256
    %675 = vst.msk [vmem:[%s674] sm:$0x1] %vm673, %v672
    %s676 = scalar_lea.vmem [#allocation0], 767
    %677 = vst.msk [vmem:[%s676] sm:$0x2] %vm673, %v672
    %s678 = scalar_lea.vmem [#allocation0], 1278
    %679 = vst.msk [vmem:[%s678] sm:$0x4] %vm673, %v672
    %s680 = scalar_lea.vmem [#allocation0], 1789
    %681 = vst.msk [vmem:[%s680] sm:$0x8] %vm673, %v672
    %s682 = scalar_lea.vmem [#allocation2], 264
    %v683 = vld [vmem:[%s682] sm:$0xf]
    %vm684 = vcmask 130048
    %s685 = scalar_lea.vmem [#allocation0], 264
    %686 = vst.msk [vmem:[%s685] sm:$0x1] %vm684, %v683
    %s687 = scalar_lea.vmem [#allocation0], 775
    %688 = vst.msk [vmem:[%s687] sm:$0x2] %vm684, %v683
    %s689 = scalar_lea.vmem [#allocation0], 1286
    %690 = vst.msk [vmem:[%s689] sm:$0x4] %vm684, %v683
    %s691 = scalar_lea.vmem [#allocation0], 1797
    %692 = vst.msk [vmem:[%s691] sm:$0x8] %vm684, %v683
    %s693 = scalar_lea.vmem [#allocation2], 272
    %v694 = vld [vmem:[%s693] sm:$0xf]
    %vm695 = vcmask 130048
    %s696 = scalar_lea.vmem [#allocation0], 272
    %697 = vst.msk [vmem:[%s696] sm:$0x1] %vm695, %v694
    %s698 = scalar_lea.vmem [#allocation0], 783
    %699 = vst.msk [vmem:[%s698] sm:$0x2] %vm695, %v694
    %s700 = scalar_lea.vmem [#allocation0], 1294
    %701 = vst.msk [vmem:[%s700] sm:$0x4] %vm695, %v694
    %s702 = scalar_lea.vmem [#allocation0], 1805
    %703 = vst.msk [vmem:[%s702] sm:$0x8] %vm695, %v694
    %s704 = scalar_lea.vmem [#allocation2], 280
    %v705 = vld [vmem:[%s704] sm:$0xf]
    %vm706 = vcmask 130048
    %s707 = scalar_lea.vmem [#allocation0], 280
    %708 = vst.msk [vmem:[%s707] sm:$0x1] %vm706, %v705
    %s709 = scalar_lea.vmem [#allocation0], 791
    %710 = vst.msk [vmem:[%s709] sm:$0x2] %vm706, %v705
    %s711 = scalar_lea.vmem [#allocation0], 1302
    %712 = vst.msk [vmem:[%s711] sm:$0x4] %vm706, %v705
    %s713 = scalar_lea.vmem [#allocation0], 1813
    %714 = vst.msk [vmem:[%s713] sm:$0x8] %vm706, %v705
    %s715 = scalar_lea.vmem [#allocation2], 288
    %v716 = vld [vmem:[%s715] sm:$0xf]
    %vm717 = vcmask 130048
    %s718 = scalar_lea.vmem [#allocation0], 288
    %719 = vst.msk [vmem:[%s718] sm:$0x1] %vm717, %v716
    %s720 = scalar_lea.vmem [#allocation0], 799
    %721 = vst.msk [vmem:[%s720] sm:$0x2] %vm717, %v716
    %s722 = scalar_lea.vmem [#allocation0], 1310
    %723 = vst.msk [vmem:[%s722] sm:$0x4] %vm717, %v716
    %s724 = scalar_lea.vmem [#allocation0], 1821
    %725 = vst.msk [vmem:[%s724] sm:$0x8] %vm717, %v716
    %s726 = scalar_lea.vmem [#allocation2], 296
    %v727 = vld [vmem:[%s726] sm:$0xf]
    %vm728 = vcmask 130048
    %s729 = scalar_lea.vmem [#allocation0], 296
    %730 = vst.msk [vmem:[%s729] sm:$0x1] %vm728, %v727
    %s731 = scalar_lea.vmem [#allocation0], 807
    %732 = vst.msk [vmem:[%s731] sm:$0x2] %vm728, %v727
    %s733 = scalar_lea.vmem [#allocation0], 1318
    %734 = vst.msk [vmem:[%s733] sm:$0x4] %vm728, %v727
    %s735 = scalar_lea.vmem [#allocation0], 1829
    %736 = vst.msk [vmem:[%s735] sm:$0x8] %vm728, %v727
    %s737 = scalar_lea.vmem [#allocation2], 304
    %v738 = vld [vmem:[%s737] sm:$0xf]
    %vm739 = vcmask 130048
    %s740 = scalar_lea.vmem [#allocation0], 304
    %741 = vst.msk [vmem:[%s740] sm:$0x1] %vm739, %v738
    %s742 = scalar_lea.vmem [#allocation0], 815
    %743 = vst.msk [vmem:[%s742] sm:$0x2] %vm739, %v738
    %s744 = scalar_lea.vmem [#allocation0], 1326
    %745 = vst.msk [vmem:[%s744] sm:$0x4] %vm739, %v738
    %s746 = scalar_lea.vmem [#allocation0], 1837
    %747 = vst.msk [vmem:[%s746] sm:$0x8] %vm739, %v738
    %s748 = scalar_lea.vmem [#allocation2], 312
    %v749 = vld [vmem:[%s748] sm:$0xf]
    %vm750 = vcmask 130048
    %s751 = scalar_lea.vmem [#allocation0], 312
    %752 = vst.msk [vmem:[%s751] sm:$0x1] %vm750, %v749
    %s753 = scalar_lea.vmem [#allocation0], 823
    %754 = vst.msk [vmem:[%s753] sm:$0x2] %vm750, %v749
    %s755 = scalar_lea.vmem [#allocation0], 1334
    %756 = vst.msk [vmem:[%s755] sm:$0x4] %vm750, %v749
    %s757 = scalar_lea.vmem [#allocation0], 1845
    %758 = vst.msk [vmem:[%s757] sm:$0x8] %vm750, %v749
    %s759 = scalar_lea.vmem [#allocation2], 320
    %v760 = vld [vmem:[%s759] sm:$0xf]
    %vm761 = vcmask 130048
    %s762 = scalar_lea.vmem [#allocation0], 320
    %763 = vst.msk [vmem:[%s762] sm:$0x1] %vm761, %v760
    %s764 = scalar_lea.vmem [#allocation0], 831
    %765 = vst.msk [vmem:[%s764] sm:$0x2] %vm761, %v760
    %s766 = scalar_lea.vmem [#allocation0], 1342
    %767 = vst.msk [vmem:[%s766] sm:$0x4] %vm761, %v760
    %s768 = scalar_lea.vmem [#allocation0], 1853
    %769 = vst.msk [vmem:[%s768] sm:$0x8] %vm761, %v760
    %s770 = scalar_lea.vmem [#allocation2], 328
    %v771 = vld [vmem:[%s770] sm:$0xf]
    %vm772 = vcmask 130048
    %s773 = scalar_lea.vmem [#allocation0], 328
    %774 = vst.msk [vmem:[%s773] sm:$0x1] %vm772, %v771
    %s775 = scalar_lea.vmem [#allocation0], 839
    %776 = vst.msk [vmem:[%s775] sm:$0x2] %vm772, %v771
    %s777 = scalar_lea.vmem [#allocation0], 1350
    %778 = vst.msk [vmem:[%s777] sm:$0x4] %vm772, %v771
    %s779 = scalar_lea.vmem [#allocation0], 1861
    %780 = vst.msk [vmem:[%s779] sm:$0x8] %vm772, %v771
    %s781 = scalar_lea.vmem [#allocation2], 336
    %v782 = vld [vmem:[%s781] sm:$0xf]
    %vm783 = vcmask 130048
    %s784 = scalar_lea.vmem [#allocation0], 336
    %785 = vst.msk [vmem:[%s784] sm:$0x1] %vm783, %v782
    %s786 = scalar_lea.vmem [#allocation0], 847
    %787 = vst.msk [vmem:[%s786] sm:$0x2] %vm783, %v782
    %s788 = scalar_lea.vmem [#allocation0], 1358
    %789 = vst.msk [vmem:[%s788] sm:$0x4] %vm783, %v782
    %s790 = scalar_lea.vmem [#allocation0], 1869
    %791 = vst.msk [vmem:[%s790] sm:$0x8] %vm783, %v782
    %s792 = scalar_lea.vmem [#allocation2], 344
    %v793 = vld [vmem:[%s792] sm:$0xf]
    %vm794 = vcmask 130048
    %s795 = scalar_lea.vmem [#allocation0], 344
    %796 = vst.msk [vmem:[%s795] sm:$0x1] %vm794, %v793
    %s797 = scalar_lea.vmem [#allocation0], 855
    %798 = vst.msk [vmem:[%s797] sm:$0x2] %vm794, %v793
    %s799 = scalar_lea.vmem [#allocation0], 1366
    %800 = vst.msk [vmem:[%s799] sm:$0x4] %vm794, %v793
    %s801 = scalar_lea.vmem [#allocation0], 1877
    %802 = vst.msk [vmem:[%s801] sm:$0x8] %vm794, %v793
    %s803 = scalar_lea.vmem [#allocation2], 352
    %v804 = vld [vmem:[%s803] sm:$0xf]
    %vm805 = vcmask 130048
    %s806 = scalar_lea.vmem [#allocation0], 352
    %807 = vst.msk [vmem:[%s806] sm:$0x1] %vm805, %v804
    %s808 = scalar_lea.vmem [#allocation0], 863
    %809 = vst.msk [vmem:[%s808] sm:$0x2] %vm805, %v804
    %s810 = scalar_lea.vmem [#allocation0], 1374
    %811 = vst.msk [vmem:[%s810] sm:$0x4] %vm805, %v804
    %s812 = scalar_lea.vmem [#allocation0], 1885
    %813 = vst.msk [vmem:[%s812] sm:$0x8] %vm805, %v804
    %s814 = scalar_lea.vmem [#allocation2], 360
    %v815 = vld [vmem:[%s814] sm:$0xf]
    %vm816 = vcmask 130048
    %s817 = scalar_lea.vmem [#allocation0], 360
    %818 = vst.msk [vmem:[%s817] sm:$0x1] %vm816, %v815
    %s819 = scalar_lea.vmem [#allocation0], 871
    %820 = vst.msk [vmem:[%s819] sm:$0x2] %vm816, %v815
    %s821 = scalar_lea.vmem [#allocation0], 1382
    %822 = vst.msk [vmem:[%s821] sm:$0x4] %vm816, %v815
    %s823 = scalar_lea.vmem [#allocation0], 1893
    %824 = vst.msk [vmem:[%s823] sm:$0x8] %vm816, %v815
    %s825 = scalar_lea.vmem [#allocation2], 368
    %v826 = vld [vmem:[%s825] sm:$0xf]
    %vm827 = vcmask 130048
    %s828 = scalar_lea.vmem [#allocation0], 368
    %829 = vst.msk [vmem:[%s828] sm:$0x1] %vm827, %v826
    %s830 = scalar_lea.vmem [#allocation0], 879
    %831 = vst.msk [vmem:[%s830] sm:$0x2] %vm827, %v826
    %s832 = scalar_lea.vmem [#allocation0], 1390
    %833 = vst.msk [vmem:[%s832] sm:$0x4] %vm827, %v826
    %s834 = scalar_lea.vmem [#allocation0], 1901
    %835 = vst.msk [vmem:[%s834] sm:$0x8] %vm827, %v826
    %s836 = scalar_lea.vmem [#allocation2], 376
    %v837 = vld [vmem:[%s836] sm:$0xf]
    %vm838 = vcmask 130048
    %s839 = scalar_lea.vmem [#allocation0], 376
    %840 = vst.msk [vmem:[%s839] sm:$0x1] %vm838, %v837
    %s841 = scalar_lea.vmem [#allocation0], 887
    %842 = vst.msk [vmem:[%s841] sm:$0x2] %vm838, %v837
    %s843 = scalar_lea.vmem [#allocation0], 1398
    %844 = vst.msk [vmem:[%s843] sm:$0x4] %vm838, %v837
    %s845 = scalar_lea.vmem [#allocation0], 1909
    %846 = vst.msk [vmem:[%s845] sm:$0x8] %vm838, %v837
    %s847 = scalar_lea.vmem [#allocation2], 384
    %v848 = vld [vmem:[%s847] sm:$0xf]
    %vm849 = vcmask 130048
    %s850 = scalar_lea.vmem [#allocation0], 384
    %851 = vst.msk [vmem:[%s850] sm:$0x1] %vm849, %v848
    %s852 = scalar_lea.vmem [#allocation0], 895
    %853 = vst.msk [vmem:[%s852] sm:$0x2] %vm849, %v848
    %s854 = scalar_lea.vmem [#allocation0], 1406
    %855 = vst.msk [vmem:[%s854] sm:$0x4] %vm849, %v848
    %s856 = scalar_lea.vmem [#allocation0], 1917
    %857 = vst.msk [vmem:[%s856] sm:$0x8] %vm849, %v848
    %s858 = scalar_lea.vmem [#allocation2], 392
    %v859 = vld [vmem:[%s858] sm:$0xf]
    %vm860 = vcmask 130048
    %s861 = scalar_lea.vmem [#allocation0], 392
    %862 = vst.msk [vmem:[%s861] sm:$0x1] %vm860, %v859
    %s863 = scalar_lea.vmem [#allocation0], 903
    %864 = vst.msk [vmem:[%s863] sm:$0x2] %vm860, %v859
    %s865 = scalar_lea.vmem [#allocation0], 1414
    %866 = vst.msk [vmem:[%s865] sm:$0x4] %vm860, %v859
    %s867 = scalar_lea.vmem [#allocation0], 1925
    %868 = vst.msk [vmem:[%s867] sm:$0x8] %vm860, %v859
    %s869 = scalar_lea.vmem [#allocation2], 400
    %v870 = vld [vmem:[%s869] sm:$0xf]
    %vm871 = vcmask 130048
    %s872 = scalar_lea.vmem [#allocation0], 400
    %873 = vst.msk [vmem:[%s872] sm:$0x1] %vm871, %v870
    %s874 = scalar_lea.vmem [#allocation0], 911
    %875 = vst.msk [vmem:[%s874] sm:$0x2] %vm871, %v870
    %s876 = scalar_lea.vmem [#allocation0], 1422
    %877 = vst.msk [vmem:[%s876] sm:$0x4] %vm871, %v870
    %s878 = scalar_lea.vmem [#allocation0], 1933
    %879 = vst.msk [vmem:[%s878] sm:$0x8] %vm871, %v870
    %s880 = scalar_lea.vmem [#allocation2], 408
    %v881 = vld [vmem:[%s880] sm:$0xf]
    %vm882 = vcmask 130048
    %s883 = scalar_lea.vmem [#allocation0], 408
    %884 = vst.msk [vmem:[%s883] sm:$0x1] %vm882, %v881
    %s885 = scalar_lea.vmem [#allocation0], 919
    %886 = vst.msk [vmem:[%s885] sm:$0x2] %vm882, %v881
    %s887 = scalar_lea.vmem [#allocation0], 1430
    %888 = vst.msk [vmem:[%s887] sm:$0x4] %vm882, %v881
    %s889 = scalar_lea.vmem [#allocation0], 1941
    %890 = vst.msk [vmem:[%s889] sm:$0x8] %vm882, %v881
    %s891 = scalar_lea.vmem [#allocation2], 416
    %v892 = vld [vmem:[%s891] sm:$0xf]
    %vm893 = vcmask 130048
    %s894 = scalar_lea.vmem [#allocation0], 416
    %895 = vst.msk [vmem:[%s894] sm:$0x1] %vm893, %v892
    %s896 = scalar_lea.vmem [#allocation0], 927
    %897 = vst.msk [vmem:[%s896] sm:$0x2] %vm893, %v892
    %s898 = scalar_lea.vmem [#allocation0], 1438
    %899 = vst.msk [vmem:[%s898] sm:$0x4] %vm893, %v892
    %s900 = scalar_lea.vmem [#allocation0], 1949
    %901 = vst.msk [vmem:[%s900] sm:$0x8] %vm893, %v892
    %s902 = scalar_lea.vmem [#allocation2], 424
    %v903 = vld [vmem:[%s902] sm:$0xf]
    %vm904 = vcmask 130048
    %s905 = scalar_lea.vmem [#allocation0], 424
    %906 = vst.msk [vmem:[%s905] sm:$0x1] %vm904, %v903
    %s907 = scalar_lea.vmem [#allocation0], 935
    %908 = vst.msk [vmem:[%s907] sm:$0x2] %vm904, %v903
    %s909 = scalar_lea.vmem [#allocation0], 1446
    %910 = vst.msk [vmem:[%s909] sm:$0x4] %vm904, %v903
    %s911 = scalar_lea.vmem [#allocation0], 1957
    %912 = vst.msk [vmem:[%s911] sm:$0x8] %vm904, %v903
    %s913 = scalar_lea.vmem [#allocation2], 432
    %v914 = vld [vmem:[%s913] sm:$0xf]
    %vm915 = vcmask 130048
    %s916 = scalar_lea.vmem [#allocation0], 432
    %917 = vst.msk [vmem:[%s916] sm:$0x1] %vm915, %v914
    %s918 = scalar_lea.vmem [#allocation0], 943
    %919 = vst.msk [vmem:[%s918] sm:$0x2] %vm915, %v914
    %s920 = scalar_lea.vmem [#allocation0], 1454
    %921 = vst.msk [vmem:[%s920] sm:$0x4] %vm915, %v914
    %s922 = scalar_lea.vmem [#allocation0], 1965
    %923 = vst.msk [vmem:[%s922] sm:$0x8] %vm915, %v914
    %s924 = scalar_lea.vmem [#allocation2], 440
    %v925 = vld [vmem:[%s924] sm:$0xf]
    %vm926 = vcmask 130048
    %s927 = scalar_lea.vmem [#allocation0], 440
    %928 = vst.msk [vmem:[%s927] sm:$0x1] %vm926, %v925
    %s929 = scalar_lea.vmem [#allocation0], 951
    %930 = vst.msk [vmem:[%s929] sm:$0x2] %vm926, %v925
    %s931 = scalar_lea.vmem [#allocation0], 1462
    %932 = vst.msk [vmem:[%s931] sm:$0x4] %vm926, %v925
    %s933 = scalar_lea.vmem [#allocation0], 1973
    %934 = vst.msk [vmem:[%s933] sm:$0x8] %vm926, %v925
    %s935 = scalar_lea.vmem [#allocation2], 448
    %v936 = vld [vmem:[%s935] sm:$0xf]
    %vm937 = vcmask 130048
    %s938 = scalar_lea.vmem [#allocation0], 448
    %939 = vst.msk [vmem:[%s938] sm:$0x1] %vm937, %v936
    %s940 = scalar_lea.vmem [#allocation0], 959
    %941 = vst.msk [vmem:[%s940] sm:$0x2] %vm937, %v936
    %s942 = scalar_lea.vmem [#allocation0], 1470
    %943 = vst.msk [vmem:[%s942] sm:$0x4] %vm937, %v936
    %s944 = scalar_lea.vmem [#allocation0], 1981
    %945 = vst.msk [vmem:[%s944] sm:$0x8] %vm937, %v936
    %s946 = scalar_lea.vmem [#allocation2], 456
    %v947 = vld [vmem:[%s946] sm:$0xf]
    %vm948 = vcmask 130048
    %s949 = scalar_lea.vmem [#allocation0], 456
    %950 = vst.msk [vmem:[%s949] sm:$0x1] %vm948, %v947
    %s951 = scalar_lea.vmem [#allocation0], 967
    %952 = vst.msk [vmem:[%s951] sm:$0x2] %vm948, %v947
    %s953 = scalar_lea.vmem [#allocation0], 1478
    %954 = vst.msk [vmem:[%s953] sm:$0x4] %vm948, %v947
    %s955 = scalar_lea.vmem [#allocation0], 1989
    %956 = vst.msk [vmem:[%s955] sm:$0x8] %vm948, %v947
    %s957 = scalar_lea.vmem [#allocation2], 464
    %v958 = vld [vmem:[%s957] sm:$0xf]
    %vm959 = vcmask 130048
    %s960 = scalar_lea.vmem [#allocation0], 464
    %961 = vst.msk [vmem:[%s960] sm:$0x1] %vm959, %v958
    %s962 = scalar_lea.vmem [#allocation0], 975
    %963 = vst.msk [vmem:[%s962] sm:$0x2] %vm959, %v958
    %s964 = scalar_lea.vmem [#allocation0], 1486
    %965 = vst.msk [vmem:[%s964] sm:$0x4] %vm959, %v958
    %s966 = scalar_lea.vmem [#allocation0], 1997
    %967 = vst.msk [vmem:[%s966] sm:$0x8] %vm959, %v958
    %s968 = scalar_lea.vmem [#allocation2], 472
    %v969 = vld [vmem:[%s968] sm:$0xf]
    %vm970 = vcmask 130048
    %s971 = scalar_lea.vmem [#allocation0], 472
    %972 = vst.msk [vmem:[%s971] sm:$0x1] %vm970, %v969
    %s973 = scalar_lea.vmem [#allocation0], 983
    %974 = vst.msk [vmem:[%s973] sm:$0x2] %vm970, %v969
    %s975 = scalar_lea.vmem [#allocation0], 1494
    %976 = vst.msk [vmem:[%s975] sm:$0x4] %vm970, %v969
    %s977 = scalar_lea.vmem [#allocation0], 2005
    %978 = vst.msk [vmem:[%s977] sm:$0x8] %vm970, %v969
    %s979 = scalar_lea.vmem [#allocation2], 480
    %v980 = vld [vmem:[%s979] sm:$0xf]
    %vm981 = vcmask 130048
    %s982 = scalar_lea.vmem [#allocation0], 480
    %983 = vst.msk [vmem:[%s982] sm:$0x1] %vm981, %v980
    %s984 = scalar_lea.vmem [#allocation0], 991
    %985 = vst.msk [vmem:[%s984] sm:$0x2] %vm981, %v980
    %s986 = scalar_lea.vmem [#allocation0], 1502
    %987 = vst.msk [vmem:[%s986] sm:$0x4] %vm981, %v980
    %s988 = scalar_lea.vmem [#allocation0], 2013
    %989 = vst.msk [vmem:[%s988] sm:$0x8] %vm981, %v980
    %s990 = scalar_lea.vmem [#allocation2], 488
    %v991 = vld [vmem:[%s990] sm:$0xf]
    %vm992 = vcmask 130048
    %s993 = scalar_lea.vmem [#allocation0], 488
    %994 = vst.msk [vmem:[%s993] sm:$0x1] %vm992, %v991
    %s995 = scalar_lea.vmem [#allocation0], 999
    %996 = vst.msk [vmem:[%s995] sm:$0x2] %vm992, %v991
    %s997 = scalar_lea.vmem [#allocation0], 1510
    %998 = vst.msk [vmem:[%s997] sm:$0x4] %vm992, %v991
    %s999 = scalar_lea.vmem [#allocation0], 2021
    %1000 = vst.msk [vmem:[%s999] sm:$0x8] %vm992, %v991
    %s1001 = scalar_lea.vmem [#allocation2], 496
    %v1002 = vld [vmem:[%s1001] sm:$0xf]
    %vm1003 = vcmask 130048
    %s1004 = scalar_lea.vmem [#allocation0], 496
    %1005 = vst.msk [vmem:[%s1004] sm:$0x1] %vm1003, %v1002
    %s1006 = scalar_lea.vmem [#allocation0], 1007
    %1007 = vst.msk [vmem:[%s1006] sm:$0x2] %vm1003, %v1002
    %s1008 = scalar_lea.vmem [#allocation0], 1518
    %1009 = vst.msk [vmem:[%s1008] sm:$0x4] %vm1003, %v1002
    %s1010 = scalar_lea.vmem [#allocation0], 2029
    %1011 = vst.msk [vmem:[%s1010] sm:$0x8] %vm1003, %v1002
    %s1012 = scalar_lea.vmem [#allocation2], 504
    %v1013 = vld [vmem:[%s1012] sm:$0xf]
    %vm1014 = vcmask 130048
    %s1015 = scalar_lea.vmem [#allocation0], 504
    %1016 = vst.msk [vmem:[%s1015] sm:$0x1] %vm1014, %v1013
    %s1017 = scalar_lea.vmem [#allocation0], 1015
    %1018 = vst.msk [vmem:[%s1017] sm:$0x2] %vm1014, %v1013
    %s1019 = scalar_lea.vmem [#allocation0], 1526
    %1020 = vst.msk [vmem:[%s1019] sm:$0x4] %vm1014, %v1013
    %s1021 = scalar_lea.vmem [#allocation0], 2037
    %1022 = vst.msk [vmem:[%s1021] sm:$0x8] %vm1014, %v1013
    %v1023 = vld [vmem:[#allocation2] ss:$8 sm:$0xf]
    %s1024 = scalar_lea.vmem [#allocation2], 4294967265
    %v1025 = vld [vmem:[%s1024] ss:$8 sm:$0xf0]
    %vm1026 = vcmask 1047556
    %v1027 = vsel %vm1026, %v1025, %v1023
    %1028 = vrot.lane.b32.xlu0 %v1027, 112
    %v1029 = vpop.permute.xlu0 %1028
    %vm1030 = vcmask 130048
    %s1031 = scalar_lea.vmem [#allocation0], 1
    %1032 = vst.msk [vmem:[%s1031] ss:$8 sm:$0xf] %vm1030, %v1029
    %s1033 = scalar_lea.vmem [#allocation0], 481
    %1034 = vst.msk [vmem:[%s1033] ss:$8 sm:$0xf0] %vm1030, %v1029
    %s1035 = scalar_lea.vmem [#allocation2], 2
    %v1036 = vld [vmem:[%s1035] ss:$8 sm:$0xf]
    %s1037 = scalar_lea.vmem [#allocation2], 4294967267
    %v1038 = vld [vmem:[%s1037] ss:$8 sm:$0xf0]
    %vm1039 = vcmask 1047556
    %v1040 = vsel %vm1039, %v1038, %v1036
    %1041 = vrot.lane.b32.xlu0 %v1040, 112
    %v1042 = vpop.permute.xlu0 %1041
    %vm1043 = vcmask 130048
    %s1044 = scalar_lea.vmem [#allocation0], 1025
    %1045 = vst.msk [vmem:[%s1044] ss:$8 sm:$0xf] %vm1043, %v1042
    %s1046 = scalar_lea.vmem [#allocation0], 1505
    %1047 = vst.msk [vmem:[%s1046] ss:$8 sm:$0xf0] %vm1043, %v1042
    %s1048 = scalar_lea.vmem [#allocation2], 32
    %v1049 = vld [vmem:[%s1048] ss:$8 sm:$0xf]
    %s1050 = scalar_lea.vmem [#allocation2], 1
    %v1051 = vld [vmem:[%s1050] ss:$8 sm:$0xf0]
    %vm1052 = vcmask 1047556
    %v1053 = vsel %vm1052, %v1051, %v1049
    %1054 = vrot.lane.b32.xlu0 %v1053, 112
    %v1055 = vpop.permute.xlu0 %1054
    %vm1056 = vcmask 130048
    %s1057 = scalar_lea.vmem [#allocation0], 33
    %1058 = vst.msk [vmem:[%s1057] ss:$8 sm:$0xf] %vm1056, %v1055
    %s1059 = scalar_lea.vmem [#allocation0], 513
    %1060 = vst.msk [vmem:[%s1059] ss:$8 sm:$0xf0] %vm1056, %v1055
    %s1061 = scalar_lea.vmem [#allocation2], 34
    %v1062 = vld [vmem:[%s1061] ss:$8 sm:$0xf]
    %s1063 = scalar_lea.vmem [#allocation2], 3
    %v1064 = vld [vmem:[%s1063] ss:$8 sm:$0xf0]
    %vm1065 = vcmask 1047556
    %v1066 = vsel %vm1065, %v1064, %v1062
    %1067 = vrot.lane.b32.xlu0 %v1066, 112
    %v1068 = vpop.permute.xlu0 %1067
    %vm1069 = vcmask 130048
    %s1070 = scalar_lea.vmem [#allocation0], 1057
    %1071 = vst.msk [vmem:[%s1070] ss:$8 sm:$0xf] %vm1069, %v1068
    %s1072 = scalar_lea.vmem [#allocation0], 1537
    %1073 = vst.msk [vmem:[%s1072] ss:$8 sm:$0xf0] %vm1069, %v1068
    %s1074 = scalar_lea.vmem [#allocation2], 64
    %v1075 = vld [vmem:[%s1074] ss:$8 sm:$0xf]
    %s1076 = scalar_lea.vmem [#allocation2], 33
    %v1077 = vld [vmem:[%s1076] ss:$8 sm:$0xf0]
    %vm1078 = vcmask 1047556
    %v1079 = vsel %vm1078, %v1077, %v1075
    %1080 = vrot.lane.b32.xlu0 %v1079, 112
    %v1081 = vpop.permute.xlu0 %1080
    %vm1082 = vcmask 130048
    %s1083 = scalar_lea.vmem [#allocation0], 65
    %1084 = vst.msk [vmem:[%s1083] ss:$8 sm:$0xf] %vm1082, %v1081
    %s1085 = scalar_lea.vmem [#allocation0], 545
    %1086 = vst.msk [vmem:[%s1085] ss:$8 sm:$0xf0] %vm1082, %v1081
    %s1087 = scalar_lea.vmem [#allocation2], 66
    %v1088 = vld [vmem:[%s1087] ss:$8 sm:$0xf]
    %s1089 = scalar_lea.vmem [#allocation2], 35
    %v1090 = vld [vmem:[%s1089] ss:$8 sm:$0xf0]
    %vm1091 = vcmask 1047556
    %v1092 = vsel %vm1091, %v1090, %v1088
    %1093 = vrot.lane.b32.xlu0 %v1092, 112
    %v1094 = vpop.permute.xlu0 %1093
    %vm1095 = vcmask 130048
    %s1096 = scalar_lea.vmem [#allocation0], 1089
    %1097 = vst.msk [vmem:[%s1096] ss:$8 sm:$0xf] %vm1095, %v1094
    %s1098 = scalar_lea.vmem [#allocation0], 1569
    %1099 = vst.msk [vmem:[%s1098] ss:$8 sm:$0xf0] %vm1095, %v1094
    %s1100 = scalar_lea.vmem [#allocation2], 96
    %v1101 = vld [vmem:[%s1100] ss:$8 sm:$0xf]
    %s1102 = scalar_lea.vmem [#allocation2], 65
    %v1103 = vld [vmem:[%s1102] ss:$8 sm:$0xf0]
    %vm1104 = vcmask 1047556
    %v1105 = vsel %vm1104, %v1103, %v1101
    %1106 = vrot.lane.b32.xlu0 %v1105, 112
    %v1107 = vpop.permute.xlu0 %1106
    %vm1108 = vcmask 130048
    %s1109 = scalar_lea.vmem [#allocation0], 97
    %1110 = vst.msk [vmem:[%s1109] ss:$8 sm:$0xf] %vm1108, %v1107
    %s1111 = scalar_lea.vmem [#allocation0], 577
    %1112 = vst.msk [vmem:[%s1111] ss:$8 sm:$0xf0] %vm1108, %v1107
    %s1113 = scalar_lea.vmem [#allocation2], 98
    %v1114 = vld [vmem:[%s1113] ss:$8 sm:$0xf]
    %s1115 = scalar_lea.vmem [#allocation2], 67
    %v1116 = vld [vmem:[%s1115] ss:$8 sm:$0xf0]
    %vm1117 = vcmask 1047556
    %v1118 = vsel %vm1117, %v1116, %v1114
    %1119 = vrot.lane.b32.xlu0 %v1118, 112
    %v1120 = vpop.permute.xlu0 %1119
    %vm1121 = vcmask 130048
    %s1122 = scalar_lea.vmem [#allocation0], 1121
    %1123 = vst.msk [vmem:[%s1122] ss:$8 sm:$0xf] %vm1121, %v1120
    %s1124 = scalar_lea.vmem [#allocation0], 1601
    %1125 = vst.msk [vmem:[%s1124] ss:$8 sm:$0xf0] %vm1121, %v1120
    %s1126 = scalar_lea.vmem [#allocation2], 128
    %v1127 = vld [vmem:[%s1126] ss:$8 sm:$0xf]
    %s1128 = scalar_lea.vmem [#allocation2], 97
    %v1129 = vld [vmem:[%s1128] ss:$8 sm:$0xf0]
    %vm1130 = vcmask 1047556
    %v1131 = vsel %vm1130, %v1129, %v1127
    %1132 = vrot.lane.b32.xlu0 %v1131, 112
    %v1133 = vpop.permute.xlu0 %1132
    %vm1134 = vcmask 130048
    %s1135 = scalar_lea.vmem [#allocation0], 129
    %1136 = vst.msk [vmem:[%s1135] ss:$8 sm:$0xf] %vm1134, %v1133
    %s1137 = scalar_lea.vmem [#allocation0], 609
    %1138 = vst.msk [vmem:[%s1137] ss:$8 sm:$0xf0] %vm1134, %v1133
    %s1139 = scalar_lea.vmem [#allocation2], 130
    %v1140 = vld [vmem:[%s1139] ss:$8 sm:$0xf]
    %s1141 = scalar_lea.vmem [#allocation2], 99
    %v1142 = vld [vmem:[%s1141] ss:$8 sm:$0xf0]
    %vm1143 = vcmask 1047556
    %v1144 = vsel %vm1143, %v1142, %v1140
    %1145 = vrot.lane.b32.xlu0 %v1144, 112
    %v1146 = vpop.permute.xlu0 %1145
    %vm1147 = vcmask 130048
    %s1148 = scalar_lea.vmem [#allocation0], 1153
    %1149 = vst.msk [vmem:[%s1148] ss:$8 sm:$0xf] %vm1147, %v1146
    %s1150 = scalar_lea.vmem [#allocation0], 1633
    %1151 = vst.msk [vmem:[%s1150] ss:$8 sm:$0xf0] %vm1147, %v1146
    %s1152 = scalar_lea.vmem [#allocation2], 160
    %v1153 = vld [vmem:[%s1152] ss:$8 sm:$0xf]
    %s1154 = scalar_lea.vmem [#allocation2], 129
    %v1155 = vld [vmem:[%s1154] ss:$8 sm:$0xf0]
    %vm1156 = vcmask 1047556
    %v1157 = vsel %vm1156, %v1155, %v1153
    %1158 = vrot.lane.b32.xlu0 %v1157, 112
    %v1159 = vpop.permute.xlu0 %1158
    %vm1160 = vcmask 130048
    %s1161 = scalar_lea.vmem [#allocation0], 161
    %1162 = vst.msk [vmem:[%s1161] ss:$8 sm:$0xf] %vm1160, %v1159
    %s1163 = scalar_lea.vmem [#allocation0], 641
    %1164 = vst.msk [vmem:[%s1163] ss:$8 sm:$0xf0] %vm1160, %v1159
    %s1165 = scalar_lea.vmem [#allocation2], 162
    %v1166 = vld [vmem:[%s1165] ss:$8 sm:$0xf]
    %s1167 = scalar_lea.vmem [#allocation2], 131
    %v1168 = vld [vmem:[%s1167] ss:$8 sm:$0xf0]
    %vm1169 = vcmask 1047556
    %v1170 = vsel %vm1169, %v1168, %v1166
    %1171 = vrot.lane.b32.xlu0 %v1170, 112
    %v1172 = vpop.permute.xlu0 %1171
    %vm1173 = vcmask 130048
    %s1174 = scalar_lea.vmem [#allocation0], 1185
    %1175 = vst.msk [vmem:[%s1174] ss:$8 sm:$0xf] %vm1173, %v1172
    %s1176 = scalar_lea.vmem [#allocation0], 1665
    %1177 = vst.msk [vmem:[%s1176] ss:$8 sm:$0xf0] %vm1173, %v1172
    %s1178 = scalar_lea.vmem [#allocation2], 192
    %v1179 = vld [vmem:[%s1178] ss:$8 sm:$0xf]
    %s1180 = scalar_lea.vmem [#allocation2], 161
    %v1181 = vld [vmem:[%s1180] ss:$8 sm:$0xf0]
    %vm1182 = vcmask 1047556
    %v1183 = vsel %vm1182, %v1181, %v1179
    %1184 = vrot.lane.b32.xlu0 %v1183, 112
    %v1185 = vpop.permute.xlu0 %1184
    %vm1186 = vcmask 130048
    %s1187 = scalar_lea.vmem [#allocation0], 193
    %1188 = vst.msk [vmem:[%s1187] ss:$8 sm:$0xf] %vm1186, %v1185
    %s1189 = scalar_lea.vmem [#allocation0], 673
    %1190 = vst.msk [vmem:[%s1189] ss:$8 sm:$0xf0] %vm1186, %v1185
    %s1191 = scalar_lea.vmem [#allocation2], 194
    %v1192 = vld [vmem:[%s1191] ss:$8 sm:$0xf]
    %s1193 = scalar_lea.vmem [#allocation2], 163
    %v1194 = vld [vmem:[%s1193] ss:$8 sm:$0xf0]
    %vm1195 = vcmask 1047556
    %v1196 = vsel %vm1195, %v1194, %v1192
    %1197 = vrot.lane.b32.xlu0 %v1196, 112
    %v1198 = vpop.permute.xlu0 %1197
    %vm1199 = vcmask 130048
    %s1200 = scalar_lea.vmem [#allocation0], 1217
    %1201 = vst.msk [vmem:[%s1200] ss:$8 sm:$0xf] %vm1199, %v1198
    %s1202 = scalar_lea.vmem [#allocation0], 1697
    %1203 = vst.msk [vmem:[%s1202] ss:$8 sm:$0xf0] %vm1199, %v1198
    %s1204 = scalar_lea.vmem [#allocation2], 224
    %v1205 = vld [vmem:[%s1204] ss:$8 sm:$0xf]
    %s1206 = scalar_lea.vmem [#allocation2], 193
    %v1207 = vld [vmem:[%s1206] ss:$8 sm:$0xf0]
    %vm1208 = vcmask 1047556
    %v1209 = vsel %vm1208, %v1207, %v1205
    %1210 = vrot.lane.b32.xlu0 %v1209, 112
    %v1211 = vpop.permute.xlu0 %1210
    %vm1212 = vcmask 130048
    %s1213 = scalar_lea.vmem [#allocation0], 225
    %1214 = vst.msk [vmem:[%s1213] ss:$8 sm:$0xf] %vm1212, %v1211
    %s1215 = scalar_lea.vmem [#allocation0], 705
    %1216 = vst.msk [vmem:[%s1215] ss:$8 sm:$0xf0] %vm1212, %v1211
    %s1217 = scalar_lea.vmem [#allocation2], 226
    %v1218 = vld [vmem:[%s1217] ss:$8 sm:$0xf]
    %s1219 = scalar_lea.vmem [#allocation2], 195
    %v1220 = vld [vmem:[%s1219] ss:$8 sm:$0xf0]
    %vm1221 = vcmask 1047556
    %v1222 = vsel %vm1221, %v1220, %v1218
    %1223 = vrot.lane.b32.xlu0 %v1222, 112
    %v1224 = vpop.permute.xlu0 %1223
    %vm1225 = vcmask 130048
    %s1226 = scalar_lea.vmem [#allocation0], 1249
    %1227 = vst.msk [vmem:[%s1226] ss:$8 sm:$0xf] %vm1225, %v1224
    %s1228 = scalar_lea.vmem [#allocation0], 1729
    %1229 = vst.msk [vmem:[%s1228] ss:$8 sm:$0xf0] %vm1225, %v1224
    %s1230 = scalar_lea.vmem [#allocation2], 256
    %v1231 = vld [vmem:[%s1230] ss:$8 sm:$0xf]
    %s1232 = scalar_lea.vmem [#allocation2], 225
    %v1233 = vld [vmem:[%s1232] ss:$8 sm:$0xf0]
    %vm1234 = vcmask 1047556
    %v1235 = vsel %vm1234, %v1233, %v1231
    %1236 = vrot.lane.b32.xlu0 %v1235, 112
    %v1237 = vpop.permute.xlu0 %1236
    %vm1238 = vcmask 130048
    %s1239 = scalar_lea.vmem [#allocation0], 257
    %1240 = vst.msk [vmem:[%s1239] ss:$8 sm:$0xf] %vm1238, %v1237
    %s1241 = scalar_lea.vmem [#allocation0], 737
    %1242 = vst.msk [vmem:[%s1241] ss:$8 sm:$0xf0] %vm1238, %v1237
    %s1243 = scalar_lea.vmem [#allocation2], 258
    %v1244 = vld [vmem:[%s1243] ss:$8 sm:$0xf]
    %s1245 = scalar_lea.vmem [#allocation2], 227
    %v1246 = vld [vmem:[%s1245] ss:$8 sm:$0xf0]
    %vm1247 = vcmask 1047556
    %v1248 = vsel %vm1247, %v1246, %v1244
    %1249 = vrot.lane.b32.xlu0 %v1248, 112
    %v1250 = vpop.permute.xlu0 %1249
    %vm1251 = vcmask 130048
    %s1252 = scalar_lea.vmem [#allocation0], 1281
    %1253 = vst.msk [vmem:[%s1252] ss:$8 sm:$0xf] %vm1251, %v1250
    %s1254 = scalar_lea.vmem [#allocation0], 1761
    %1255 = vst.msk [vmem:[%s1254] ss:$8 sm:$0xf0] %vm1251, %v1250
    %s1256 = scalar_lea.vmem [#allocation2], 288
    %v1257 = vld [vmem:[%s1256] ss:$8 sm:$0xf]
    %s1258 = scalar_lea.vmem [#allocation2], 257
    %v1259 = vld [vmem:[%s1258] ss:$8 sm:$0xf0]
    %vm1260 = vcmask 1047556
    %v1261 = vsel %vm1260, %v1259, %v1257
    %1262 = vrot.lane.b32.xlu0 %v1261, 112
    %v1263 = vpop.permute.xlu0 %1262
    %vm1264 = vcmask 130048
    %s1265 = scalar_lea.vmem [#allocation0], 289
    %1266 = vst.msk [vmem:[%s1265] ss:$8 sm:$0xf] %vm1264, %v1263
    %s1267 = scalar_lea.vmem [#allocation0], 769
    %1268 = vst.msk [vmem:[%s1267] ss:$8 sm:$0xf0] %vm1264, %v1263
    %s1269 = scalar_lea.vmem [#allocation2], 290
    %v1270 = vld [vmem:[%s1269] ss:$8 sm:$0xf]
    %s1271 = scalar_lea.vmem [#allocation2], 259
    %v1272 = vld [vmem:[%s1271] ss:$8 sm:$0xf0]
    %vm1273 = vcmask 1047556
    %v1274 = vsel %vm1273, %v1272, %v1270
    %1275 = vrot.lane.b32.xlu0 %v1274, 112
    %v1276 = vpop.permute.xlu0 %1275
    %vm1277 = vcmask 130048
    %s1278 = scalar_lea.vmem [#allocation0], 1313
    %1279 = vst.msk [vmem:[%s1278] ss:$8 sm:$0xf] %vm1277, %v1276
    %s1280 = scalar_lea.vmem [#allocation0], 1793
    %1281 = vst.msk [vmem:[%s1280] ss:$8 sm:$0xf0] %vm1277, %v1276
    %s1282 = scalar_lea.vmem [#allocation2], 320
    %v1283 = vld [vmem:[%s1282] ss:$8 sm:$0xf]
    %s1284 = scalar_lea.vmem [#allocation2], 289
    %v1285 = vld [vmem:[%s1284] ss:$8 sm:$0xf0]
    %vm1286 = vcmask 1047556
    %v1287 = vsel %vm1286, %v1285, %v1283
    %1288 = vrot.lane.b32.xlu0 %v1287, 112
    %v1289 = vpop.permute.xlu0 %1288
    %vm1290 = vcmask 130048
    %s1291 = scalar_lea.vmem [#allocation0], 321
    %1292 = vst.msk [vmem:[%s1291] ss:$8 sm:$0xf] %vm1290, %v1289
    %s1293 = scalar_lea.vmem [#allocation0], 801
    %1294 = vst.msk [vmem:[%s1293] ss:$8 sm:$0xf0] %vm1290, %v1289
    %s1295 = scalar_lea.vmem [#allocation2], 322
    %v1296 = vld [vmem:[%s1295] ss:$8 sm:$0xf]
    %s1297 = scalar_lea.vmem [#allocation2], 291
    %v1298 = vld [vmem:[%s1297] ss:$8 sm:$0xf0]
    %vm1299 = vcmask 1047556
    %v1300 = vsel %vm1299, %v1298, %v1296
    %1301 = vrot.lane.b32.xlu0 %v1300, 112
    %v1302 = vpop.permute.xlu0 %1301
    %vm1303 = vcmask 130048
    %s1304 = scalar_lea.vmem [#allocation0], 1345
    %1305 = vst.msk [vmem:[%s1304] ss:$8 sm:$0xf] %vm1303, %v1302
    %s1306 = scalar_lea.vmem [#allocation0], 1825
    %1307 = vst.msk [vmem:[%s1306] ss:$8 sm:$0xf0] %vm1303, %v1302
    %s1308 = scalar_lea.vmem [#allocation2], 352
    %v1309 = vld [vmem:[%s1308] ss:$8 sm:$0xf]
    %s1310 = scalar_lea.vmem [#allocation2], 321
    %v1311 = vld [vmem:[%s1310] ss:$8 sm:$0xf0]
    %vm1312 = vcmask 1047556
    %v1313 = vsel %vm1312, %v1311, %v1309
    %1314 = vrot.lane.b32.xlu0 %v1313, 112
    %v1315 = vpop.permute.xlu0 %1314
    %vm1316 = vcmask 130048
    %s1317 = scalar_lea.vmem [#allocation0], 353
    %1318 = vst.msk [vmem:[%s1317] ss:$8 sm:$0xf] %vm1316, %v1315
    %s1319 = scalar_lea.vmem [#allocation0], 833
    %1320 = vst.msk [vmem:[%s1319] ss:$8 sm:$0xf0] %vm1316, %v1315
    %s1321 = scalar_lea.vmem [#allocation2], 354
    %v1322 = vld [vmem:[%s1321] ss:$8 sm:$0xf]
    %s1323 = scalar_lea.vmem [#allocation2], 323
    %v1324 = vld [vmem:[%s1323] ss:$8 sm:$0xf0]
    %vm1325 = vcmask 1047556
    %v1326 = vsel %vm1325, %v1324, %v1322
    %1327 = vrot.lane.b32.xlu0 %v1326, 112
    %v1328 = vpop.permute.xlu0 %1327
    %vm1329 = vcmask 130048
    %s1330 = scalar_lea.vmem [#allocation0], 1377
    %1331 = vst.msk [vmem:[%s1330] ss:$8 sm:$0xf] %vm1329, %v1328
    %s1332 = scalar_lea.vmem [#allocation0], 1857
    %1333 = vst.msk [vmem:[%s1332] ss:$8 sm:$0xf0] %vm1329, %v1328
    %s1334 = scalar_lea.vmem [#allocation2], 384
    %v1335 = vld [vmem:[%s1334] ss:$8 sm:$0xf]
    %s1336 = scalar_lea.vmem [#allocation2], 353
    %v1337 = vld [vmem:[%s1336] ss:$8 sm:$0xf0]
    %vm1338 = vcmask 1047556
    %v1339 = vsel %vm1338, %v1337, %v1335
    %1340 = vrot.lane.b32.xlu0 %v1339, 112
    %v1341 = vpop.permute.xlu0 %1340
    %vm1342 = vcmask 130048
    %s1343 = scalar_lea.vmem [#allocation0], 385
    %1344 = vst.msk [vmem:[%s1343] ss:$8 sm:$0xf] %vm1342, %v1341
    %s1345 = scalar_lea.vmem [#allocation0], 865
    %1346 = vst.msk [vmem:[%s1345] ss:$8 sm:$0xf0] %vm1342, %v1341
    %s1347 = scalar_lea.vmem [#allocation2], 386
    %v1348 = vld [vmem:[%s1347] ss:$8 sm:$0xf]
    %s1349 = scalar_lea.vmem [#allocation2], 355
    %v1350 = vld [vmem:[%s1349] ss:$8 sm:$0xf0]
    %vm1351 = vcmask 1047556
    %v1352 = vsel %vm1351, %v1350, %v1348
    %1353 = vrot.lane.b32.xlu0 %v1352, 112
    %v1354 = vpop.permute.xlu0 %1353
    %vm1355 = vcmask 130048
    %s1356 = scalar_lea.vmem [#allocation0], 1409
    %1357 = vst.msk [vmem:[%s1356] ss:$8 sm:$0xf] %vm1355, %v1354
    %s1358 = scalar_lea.vmem [#allocation0], 1889
    %1359 = vst.msk [vmem:[%s1358] ss:$8 sm:$0xf0] %vm1355, %v1354
    %s1360 = scalar_lea.vmem [#allocation2], 416
    %v1361 = vld [vmem:[%s1360] ss:$8 sm:$0xf]
    %s1362 = scalar_lea.vmem [#allocation2], 385
    %v1363 = vld [vmem:[%s1362] ss:$8 sm:$0xf0]
    %vm1364 = vcmask 1047556
    %v1365 = vsel %vm1364, %v1363, %v1361
    %1366 = vrot.lane.b32.xlu0 %v1365, 112
    %v1367 = vpop.permute.xlu0 %1366
    %vm1368 = vcmask 130048
    %s1369 = scalar_lea.vmem [#allocation0], 417
    %1370 = vst.msk [vmem:[%s1369] ss:$8 sm:$0xf] %vm1368, %v1367
    %s1371 = scalar_lea.vmem [#allocation0], 897
    %1372 = vst.msk [vmem:[%s1371] ss:$8 sm:$0xf0] %vm1368, %v1367
    %s1373 = scalar_lea.vmem [#allocation2], 418
    %v1374 = vld [vmem:[%s1373] ss:$8 sm:$0xf]
    %s1375 = scalar_lea.vmem [#allocation2], 387
    %v1376 = vld [vmem:[%s1375] ss:$8 sm:$0xf0]
    %vm1377 = vcmask 1047556
    %v1378 = vsel %vm1377, %v1376, %v1374
    %1379 = vrot.lane.b32.xlu0 %v1378, 112
    %v1380 = vpop.permute.xlu0 %1379
    %vm1381 = vcmask 130048
    %s1382 = scalar_lea.vmem [#allocation0], 1441
    %1383 = vst.msk [vmem:[%s1382] ss:$8 sm:$0xf] %vm1381, %v1380
    %s1384 = scalar_lea.vmem [#allocation0], 1921
    %1385 = vst.msk [vmem:[%s1384] ss:$8 sm:$0xf0] %vm1381, %v1380
    %s1386 = scalar_lea.vmem [#allocation2], 448
    %v1387 = vld [vmem:[%s1386] ss:$8 sm:$0xf]
    %s1388 = scalar_lea.vmem [#allocation2], 417
    %v1389 = vld [vmem:[%s1388] ss:$8 sm:$0xf0]
    %vm1390 = vcmask 1047556
    %v1391 = vsel %vm1390, %v1389, %v1387
    %1392 = vrot.lane.b32.xlu0 %v1391, 112
    %v1393 = vpop.permute.xlu0 %1392
    %vm1394 = vcmask 130048
    %s1395 = scalar_lea.vmem [#allocation0], 449
    %1396 = vst.msk [vmem:[%s1395] ss:$8 sm:$0xf] %vm1394, %v1393
    %s1397 = scalar_lea.vmem [#allocation0], 929
    %1398 = vst.msk [vmem:[%s1397] ss:$8 sm:$0xf0] %vm1394, %v1393
    %s1399 = scalar_lea.vmem [#allocation2], 450
    %v1400 = vld [vmem:[%s1399] ss:$8 sm:$0xf]
    %s1401 = scalar_lea.vmem [#allocation2], 419
    %v1402 = vld [vmem:[%s1401] ss:$8 sm:$0xf0]
    %vm1403 = vcmask 1047556
    %v1404 = vsel %vm1403, %v1402, %v1400
    %1405 = vrot.lane.b32.xlu0 %v1404, 112
    %v1406 = vpop.permute.xlu0 %1405
    %vm1407 = vcmask 130048
    %s1408 = scalar_lea.vmem [#allocation0], 1473
    %1409 = vst.msk [vmem:[%s1408] ss:$8 sm:$0xf] %vm1407, %v1406
    %s1410 = scalar_lea.vmem [#allocation0], 1953
    %1411 = vst.msk [vmem:[%s1410] ss:$8 sm:$0xf0] %vm1407, %v1406
    %s1412 = scalar_lea.vmem [#allocation2], 480
    %v1413 = vld [vmem:[%s1412] ss:$8 sm:$0xf]
    %s1414 = scalar_lea.vmem [#allocation2], 449
    %v1415 = vld [vmem:[%s1414] ss:$8 sm:$0xf0]
    %vm1416 = vcmask 1047556
    %v1417 = vsel %vm1416, %v1415, %v1413
    %1418 = vrot.lane.b32.xlu0 %v1417, 112
    %v1419 = vpop.permute.xlu0 %1418
    %vm1420 = vcmask 130048
    %s1421 = scalar_lea.vmem [#allocation0], 481
    %1422 = vst.msk [vmem:[%s1421] ss:$8 sm:$0xf] %vm1420, %v1419
    %s1423 = scalar_lea.vmem [#allocation0], 961
    %1424 = vst.msk [vmem:[%s1423] ss:$8 sm:$0xf0] %vm1420, %v1419
    %s1425 = scalar_lea.vmem [#allocation2], 482
    %v1426 = vld [vmem:[%s1425] ss:$8 sm:$0xf]
    %s1427 = scalar_lea.vmem [#allocation2], 451
    %v1428 = vld [vmem:[%s1427] ss:$8 sm:$0xf0]
    %vm1429 = vcmask 1047556
    %v1430 = vsel %vm1429, %v1428, %v1426
    %1431 = vrot.lane.b32.xlu0 %v1430, 112
    %v1432 = vpop.permute.xlu0 %1431
    %vm1433 = vcmask 130048
    %s1434 = scalar_lea.vmem [#allocation0], 1505
    %1435 = vst.msk [vmem:[%s1434] ss:$8 sm:$0xf] %vm1433, %v1432
    %s1436 = scalar_lea.vmem [#allocation0], 1985
    %1437 = vst.msk [vmem:[%s1436] ss:$8 sm:$0xf0] %vm1433, %v1432
    %v1438 = vld [vmem:[#allocation2] ss:$8 sm:$0xf]
    %s1439 = scalar_lea.vmem [#allocation2], 4294967265
    %v1440 = vld [vmem:[%s1439] ss:$8 sm:$0xf0]
    %vm1441 = vcmask 1047556
    %v1442 = vsel %vm1441, %v1440, %v1438
    %1443 = vrot.lane.b32.xlu0 %v1442, 96
    %v1444 = vpop.permute.xlu0 %1443
    %vm1445 = vcmask 130048
    %s1446 = scalar_lea.vmem [#allocation0], 2
    %1447 = vst.msk [vmem:[%s1446] ss:$8 sm:$0xf] %vm1445, %v1444
    %s1448 = scalar_lea.vmem [#allocation0], 482
    %1449 = vst.msk [vmem:[%s1448] ss:$8 sm:$0xf0] %vm1445, %v1444
    %s1450 = scalar_lea.vmem [#allocation2], 2
    %v1451 = vld [vmem:[%s1450] ss:$8 sm:$0xf]
    %s1452 = scalar_lea.vmem [#allocation2], 4294967267
    %v1453 = vld [vmem:[%s1452] ss:$8 sm:$0xf0]
    %vm1454 = vcmask 1047556
    %v1455 = vsel %vm1454, %v1453, %v1451
    %1456 = vrot.lane.b32.xlu0 %v1455, 96
    %v1457 = vpop.permute.xlu0 %1456
    %vm1458 = vcmask 130048
    %s1459 = scalar_lea.vmem [#allocation0], 1026
    %1460 = vst.msk [vmem:[%s1459] ss:$8 sm:$0xf] %vm1458, %v1457
    %s1461 = scalar_lea.vmem [#allocation0], 1506
    %1462 = vst.msk [vmem:[%s1461] ss:$8 sm:$0xf0] %vm1458, %v1457
    %s1463 = scalar_lea.vmem [#allocation2], 32
    %v1464 = vld [vmem:[%s1463] ss:$8 sm:$0xf]
    %s1465 = scalar_lea.vmem [#allocation2], 1
    %v1466 = vld [vmem:[%s1465] ss:$8 sm:$0xf0]
    %vm1467 = vcmask 1047556
    %v1468 = vsel %vm1467, %v1466, %v1464
    %1469 = vrot.lane.b32.xlu0 %v1468, 96
    %v1470 = vpop.permute.xlu0 %1469
    %vm1471 = vcmask 130048
    %s1472 = scalar_lea.vmem [#allocation0], 34
    %1473 = vst.msk [vmem:[%s1472] ss:$8 sm:$0xf] %vm1471, %v1470
    %s1474 = scalar_lea.vmem [#allocation0], 514
    %1475 = vst.msk [vmem:[%s1474] ss:$8 sm:$0xf0] %vm1471, %v1470
    %s1476 = scalar_lea.vmem [#allocation2], 34
    %v1477 = vld [vmem:[%s1476] ss:$8 sm:$0xf]
    %s1478 = scalar_lea.vmem [#allocation2], 3
    %v1479 = vld [vmem:[%s1478] ss:$8 sm:$0xf0]
    %vm1480 = vcmask 1047556
    %v1481 = vsel %vm1480, %v1479, %v1477
    %1482 = vrot.lane.b32.xlu0 %v1481, 96
    %v1483 = vpop.permute.xlu0 %1482
    %vm1484 = vcmask 130048
    %s1485 = scalar_lea.vmem [#allocation0], 1058
    %1486 = vst.msk [vmem:[%s1485] ss:$8 sm:$0xf] %vm1484, %v1483
    %s1487 = scalar_lea.vmem [#allocation0], 1538
    %1488 = vst.msk [vmem:[%s1487] ss:$8 sm:$0xf0] %vm1484, %v1483
    %s1489 = scalar_lea.vmem [#allocation2], 64
    %v1490 = vld [vmem:[%s1489] ss:$8 sm:$0xf]
    %s1491 = scalar_lea.vmem [#allocation2], 33
    %v1492 = vld [vmem:[%s1491] ss:$8 sm:$0xf0]
    %vm1493 = vcmask 1047556
    %v1494 = vsel %vm1493, %v1492, %v1490
    %1495 = vrot.lane.b32.xlu0 %v1494, 96
    %v1496 = vpop.permute.xlu0 %1495
    %vm1497 = vcmask 130048
    %s1498 = scalar_lea.vmem [#allocation0], 66
    %1499 = vst.msk [vmem:[%s1498] ss:$8 sm:$0xf] %vm1497, %v1496
    %s1500 = scalar_lea.vmem [#allocation0], 546
    %1501 = vst.msk [vmem:[%s1500] ss:$8 sm:$0xf0] %vm1497, %v1496
    %s1502 = scalar_lea.vmem [#allocation2], 66
    %v1503 = vld [vmem:[%s1502] ss:$8 sm:$0xf]
    %s1504 = scalar_lea.vmem [#allocation2], 35
    %v1505 = vld [vmem:[%s1504] ss:$8 sm:$0xf0]
    %vm1506 = vcmask 1047556
    %v1507 = vsel %vm1506, %v1505, %v1503
    %1508 = vrot.lane.b32.xlu0 %v1507, 96
    %v1509 = vpop.permute.xlu0 %1508
    %vm1510 = vcmask 130048
    %s1511 = scalar_lea.vmem [#allocation0], 1090
    %1512 = vst.msk [vmem:[%s1511] ss:$8 sm:$0xf] %vm1510, %v1509
    %s1513 = scalar_lea.vmem [#allocation0], 1570
    %1514 = vst.msk [vmem:[%s1513] ss:$8 sm:$0xf0] %vm1510, %v1509
    %s1515 = scalar_lea.vmem [#allocation2], 96
    %v1516 = vld [vmem:[%s1515] ss:$8 sm:$0xf]
    %s1517 = scalar_lea.vmem [#allocation2], 65
    %v1518 = vld [vmem:[%s1517] ss:$8 sm:$0xf0]
    %vm1519 = vcmask 1047556
    %v1520 = vsel %vm1519, %v1518, %v1516
    %1521 = vrot.lane.b32.xlu0 %v1520, 96
    %v1522 = vpop.permute.xlu0 %1521
    %vm1523 = vcmask 130048
    %s1524 = scalar_lea.vmem [#allocation0], 98
    %1525 = vst.msk [vmem:[%s1524] ss:$8 sm:$0xf] %vm1523, %v1522
    %s1526 = scalar_lea.vmem [#allocation0], 578
    %1527 = vst.msk [vmem:[%s1526] ss:$8 sm:$0xf0] %vm1523, %v1522
    %s1528 = scalar_lea.vmem [#allocation2], 98
    %v1529 = vld [vmem:[%s1528] ss:$8 sm:$0xf]
    %s1530 = scalar_lea.vmem [#allocation2], 67
    %v1531 = vld [vmem:[%s1530] ss:$8 sm:$0xf0]
    %vm1532 = vcmask 1047556
    %v1533 = vsel %vm1532, %v1531, %v1529
    %1534 = vrot.lane.b32.xlu0 %v1533, 96
    %v1535 = vpop.permute.xlu0 %1534
    %vm1536 = vcmask 130048
    %s1537 = scalar_lea.vmem [#allocation0], 1122
    %1538 = vst.msk [vmem:[%s1537] ss:$8 sm:$0xf] %vm1536, %v1535
    %s1539 = scalar_lea.vmem [#allocation0], 1602
    %1540 = vst.msk [vmem:[%s1539] ss:$8 sm:$0xf0] %vm1536, %v1535
    %s1541 = scalar_lea.vmem [#allocation2], 128
    %v1542 = vld [vmem:[%s1541] ss:$8 sm:$0xf]
    %s1543 = scalar_lea.vmem [#allocation2], 97
    %v1544 = vld [vmem:[%s1543] ss:$8 sm:$0xf0]
    %vm1545 = vcmask 1047556
    %v1546 = vsel %vm1545, %v1544, %v1542
    %1547 = vrot.lane.b32.xlu0 %v1546, 96
    %v1548 = vpop.permute.xlu0 %1547
    %vm1549 = vcmask 130048
    %s1550 = scalar_lea.vmem [#allocation0], 130
    %1551 = vst.msk [vmem:[%s1550] ss:$8 sm:$0xf] %vm1549, %v1548
    %s1552 = scalar_lea.vmem [#allocation0], 610
    %1553 = vst.msk [vmem:[%s1552] ss:$8 sm:$0xf0] %vm1549, %v1548
    %s1554 = scalar_lea.vmem [#allocation2], 130
    %v1555 = vld [vmem:[%s1554] ss:$8 sm:$0xf]
    %s1556 = scalar_lea.vmem [#allocation2], 99
    %v1557 = vld [vmem:[%s1556] ss:$8 sm:$0xf0]
    %vm1558 = vcmask 1047556
    %v1559 = vsel %vm1558, %v1557, %v1555
    %1560 = vrot.lane.b32.xlu0 %v1559, 96
    %v1561 = vpop.permute.xlu0 %1560
    %vm1562 = vcmask 130048
    %s1563 = scalar_lea.vmem [#allocation0], 1154
    %1564 = vst.msk [vmem:[%s1563] ss:$8 sm:$0xf] %vm1562, %v1561
    %s1565 = scalar_lea.vmem [#allocation0], 1634
    %1566 = vst.msk [vmem:[%s1565] ss:$8 sm:$0xf0] %vm1562, %v1561
    %s1567 = scalar_lea.vmem [#allocation2], 160
    %v1568 = vld [vmem:[%s1567] ss:$8 sm:$0xf]
    %s1569 = scalar_lea.vmem [#allocation2], 129
    %v1570 = vld [vmem:[%s1569] ss:$8 sm:$0xf0]
    %vm1571 = vcmask 1047556
    %v1572 = vsel %vm1571, %v1570, %v1568
    %1573 = vrot.lane.b32.xlu0 %v1572, 96
    %v1574 = vpop.permute.xlu0 %1573
    %vm1575 = vcmask 130048
    %s1576 = scalar_lea.vmem [#allocation0], 162
    %1577 = vst.msk [vmem:[%s1576] ss:$8 sm:$0xf] %vm1575, %v1574
    %s1578 = scalar_lea.vmem [#allocation0], 642
    %1579 = vst.msk [vmem:[%s1578] ss:$8 sm:$0xf0] %vm1575, %v1574
    %s1580 = scalar_lea.vmem [#allocation2], 162
    %v1581 = vld [vmem:[%s1580] ss:$8 sm:$0xf]
    %s1582 = scalar_lea.vmem [#allocation2], 131
    %v1583 = vld [vmem:[%s1582] ss:$8 sm:$0xf0]
    %vm1584 = vcmask 1047556
    %v1585 = vsel %vm1584, %v1583, %v1581
    %1586 = vrot.lane.b32.xlu0 %v1585, 96
    %v1587 = vpop.permute.xlu0 %1586
    %vm1588 = vcmask 130048
    %s1589 = scalar_lea.vmem [#allocation0], 1186
    %1590 = vst.msk [vmem:[%s1589] ss:$8 sm:$0xf] %vm1588, %v1587
    %s1591 = scalar_lea.vmem [#allocation0], 1666
    %1592 = vst.msk [vmem:[%s1591] ss:$8 sm:$0xf0] %vm1588, %v1587
    %s1593 = scalar_lea.vmem [#allocation2], 192
    %v1594 = vld [vmem:[%s1593] ss:$8 sm:$0xf]
    %s1595 = scalar_lea.vmem [#allocation2], 161
    %v1596 = vld [vmem:[%s1595] ss:$8 sm:$0xf0]
    %vm1597 = vcmask 1047556
    %v1598 = vsel %vm1597, %v1596, %v1594
    %1599 = vrot.lane.b32.xlu0 %v1598, 96
    %v1600 = vpop.permute.xlu0 %1599
    %vm1601 = vcmask 130048
    %s1602 = scalar_lea.vmem [#allocation0], 194
    %1603 = vst.msk [vmem:[%s1602] ss:$8 sm:$0xf] %vm1601, %v1600
    %s1604 = scalar_lea.vmem [#allocation0], 674
    %1605 = vst.msk [vmem:[%s1604] ss:$8 sm:$0xf0] %vm1601, %v1600
    %s1606 = scalar_lea.vmem [#allocation2], 194
    %v1607 = vld [vmem:[%s1606] ss:$8 sm:$0xf]
    %s1608 = scalar_lea.vmem [#allocation2], 163
    %v1609 = vld [vmem:[%s1608] ss:$8 sm:$0xf0]
    %vm1610 = vcmask 1047556
    %v1611 = vsel %vm1610, %v1609, %v1607
    %1612 = vrot.lane.b32.xlu0 %v1611, 96
    %v1613 = vpop.permute.xlu0 %1612
    %vm1614 = vcmask 130048
    %s1615 = scalar_lea.vmem [#allocation0], 1218
    %1616 = vst.msk [vmem:[%s1615] ss:$8 sm:$0xf] %vm1614, %v1613
    %s1617 = scalar_lea.vmem [#allocation0], 1698
    %1618 = vst.msk [vmem:[%s1617] ss:$8 sm:$0xf0] %vm1614, %v1613
    %s1619 = scalar_lea.vmem [#allocation2], 224
    %v1620 = vld [vmem:[%s1619] ss:$8 sm:$0xf]
    %s1621 = scalar_lea.vmem [#allocation2], 193
    %v1622 = vld [vmem:[%s1621] ss:$8 sm:$0xf0]
    %vm1623 = vcmask 1047556
    %v1624 = vsel %vm1623, %v1622, %v1620
    %1625 = vrot.lane.b32.xlu0 %v1624, 96
    %v1626 = vpop.permute.xlu0 %1625
    %vm1627 = vcmask 130048
    %s1628 = scalar_lea.vmem [#allocation0], 226
    %1629 = vst.msk [vmem:[%s1628] ss:$8 sm:$0xf] %vm1627, %v1626
    %s1630 = scalar_lea.vmem [#allocation0], 706
    %1631 = vst.msk [vmem:[%s1630] ss:$8 sm:$0xf0] %vm1627, %v1626
    %s1632 = scalar_lea.vmem [#allocation2], 226
    %v1633 = vld [vmem:[%s1632] ss:$8 sm:$0xf]
    %s1634 = scalar_lea.vmem [#allocation2], 195
    %v1635 = vld [vmem:[%s1634] ss:$8 sm:$0xf0]
    %vm1636 = vcmask 1047556
    %v1637 = vsel %vm1636, %v1635, %v1633
    %1638 = vrot.lane.b32.xlu0 %v1637, 96
    %v1639 = vpop.permute.xlu0 %1638
    %vm1640 = vcmask 130048
    %s1641 = scalar_lea.vmem [#allocation0], 1250
    %1642 = vst.msk [vmem:[%s1641] ss:$8 sm:$0xf] %vm1640, %v1639
    %s1643 = scalar_lea.vmem [#allocation0], 1730
    %1644 = vst.msk [vmem:[%s1643] ss:$8 sm:$0xf0] %vm1640, %v1639
    %s1645 = scalar_lea.vmem [#allocation2], 256
    %v1646 = vld [vmem:[%s1645] ss:$8 sm:$0xf]
    %s1647 = scalar_lea.vmem [#allocation2], 225
    %v1648 = vld [vmem:[%s1647] ss:$8 sm:$0xf0]
    %vm1649 = vcmask 1047556
    %v1650 = vsel %vm1649, %v1648, %v1646
    %1651 = vrot.lane.b32.xlu0 %v1650, 96
    %v1652 = vpop.permute.xlu0 %1651
    %vm1653 = vcmask 130048
    %s1654 = scalar_lea.vmem [#allocation0], 258
    %1655 = vst.msk [vmem:[%s1654] ss:$8 sm:$0xf] %vm1653, %v1652
    %s1656 = scalar_lea.vmem [#allocation0], 738
    %1657 = vst.msk [vmem:[%s1656] ss:$8 sm:$0xf0] %vm1653, %v1652
    %s1658 = scalar_lea.vmem [#allocation2], 258
    %v1659 = vld [vmem:[%s1658] ss:$8 sm:$0xf]
    %s1660 = scalar_lea.vmem [#allocation2], 227
    %v1661 = vld [vmem:[%s1660] ss:$8 sm:$0xf0]
    %vm1662 = vcmask 1047556
    %v1663 = vsel %vm1662, %v1661, %v1659
    %1664 = vrot.lane.b32.xlu0 %v1663, 96
    %v1665 = vpop.permute.xlu0 %1664
    %vm1666 = vcmask 130048
    %s1667 = scalar_lea.vmem [#allocation0], 1282
    %1668 = vst.msk [vmem:[%s1667] ss:$8 sm:$0xf] %vm1666, %v1665
    %s1669 = scalar_lea.vmem [#allocation0], 1762
    %1670 = vst.msk [vmem:[%s1669] ss:$8 sm:$0xf0] %vm1666, %v1665
    %s1671 = scalar_lea.vmem [#allocation2], 288
    %v1672 = vld [vmem:[%s1671] ss:$8 sm:$0xf]
    %s1673 = scalar_lea.vmem [#allocation2], 257
    %v1674 = vld [vmem:[%s1673] ss:$8 sm:$0xf0]
    %vm1675 = vcmask 1047556
    %v1676 = vsel %vm1675, %v1674, %v1672
    %1677 = vrot.lane.b32.xlu0 %v1676, 96
    %v1678 = vpop.permute.xlu0 %1677
    %vm1679 = vcmask 130048
    %s1680 = scalar_lea.vmem [#allocation0], 290
    %1681 = vst.msk [vmem:[%s1680] ss:$8 sm:$0xf] %vm1679, %v1678
    %s1682 = scalar_lea.vmem [#allocation0], 770
    %1683 = vst.msk [vmem:[%s1682] ss:$8 sm:$0xf0] %vm1679, %v1678
    %s1684 = scalar_lea.vmem [#allocation2], 290
    %v1685 = vld [vmem:[%s1684] ss:$8 sm:$0xf]
    %s1686 = scalar_lea.vmem [#allocation2], 259
    %v1687 = vld [vmem:[%s1686] ss:$8 sm:$0xf0]
    %vm1688 = vcmask 1047556
    %v1689 = vsel %vm1688, %v1687, %v1685
    %1690 = vrot.lane.b32.xlu0 %v1689, 96
    %v1691 = vpop.permute.xlu0 %1690
    %vm1692 = vcmask 130048
    %s1693 = scalar_lea.vmem [#allocation0], 1314
    %1694 = vst.msk [vmem:[%s1693] ss:$8 sm:$0xf] %vm1692, %v1691
    %s1695 = scalar_lea.vmem [#allocation0], 1794
    %1696 = vst.msk [vmem:[%s1695] ss:$8 sm:$0xf0] %vm1692, %v1691
    %s1697 = scalar_lea.vmem [#allocation2], 320
    %v1698 = vld [vmem:[%s1697] ss:$8 sm:$0xf]
    %s1699 = scalar_lea.vmem [#allocation2], 289
    %v1700 = vld [vmem:[%s1699] ss:$8 sm:$0xf0]
    %vm1701 = vcmask 1047556
    %v1702 = vsel %vm1701, %v1700, %v1698
    %1703 = vrot.lane.b32.xlu0 %v1702, 96
    %v1704 = vpop.permute.xlu0 %1703
    %vm1705 = vcmask 130048
    %s1706 = scalar_lea.vmem [#allocation0], 322
    %1707 = vst.msk [vmem:[%s1706] ss:$8 sm:$0xf] %vm1705, %v1704
    %s1708 = scalar_lea.vmem [#allocation0], 802
    %1709 = vst.msk [vmem:[%s1708] ss:$8 sm:$0xf0] %vm1705, %v1704
    %s1710 = scalar_lea.vmem [#allocation2], 322
    %v1711 = vld [vmem:[%s1710] ss:$8 sm:$0xf]
    %s1712 = scalar_lea.vmem [#allocation2], 291
    %v1713 = vld [vmem:[%s1712] ss:$8 sm:$0xf0]
    %vm1714 = vcmask 1047556
    %v1715 = vsel %vm1714, %v1713, %v1711
    %1716 = vrot.lane.b32.xlu0 %v1715, 96
    %v1717 = vpop.permute.xlu0 %1716
    %vm1718 = vcmask 130048
    %s1719 = scalar_lea.vmem [#allocation0], 1346
    %1720 = vst.msk [vmem:[%s1719] ss:$8 sm:$0xf] %vm1718, %v1717
    %s1721 = scalar_lea.vmem [#allocation0], 1826
    %1722 = vst.msk [vmem:[%s1721] ss:$8 sm:$0xf0] %vm1718, %v1717
    %s1723 = scalar_lea.vmem [#allocation2], 352
    %v1724 = vld [vmem:[%s1723] ss:$8 sm:$0xf]
    %s1725 = scalar_lea.vmem [#allocation2], 321
    %v1726 = vld [vmem:[%s1725] ss:$8 sm:$0xf0]
    %vm1727 = vcmask 1047556
    %v1728 = vsel %vm1727, %v1726, %v1724
    %1729 = vrot.lane.b32.xlu0 %v1728, 96
    %v1730 = vpop.permute.xlu0 %1729
    %vm1731 = vcmask 130048
    %s1732 = scalar_lea.vmem [#allocation0], 354
    %1733 = vst.msk [vmem:[%s1732] ss:$8 sm:$0xf] %vm1731, %v1730
    %s1734 = scalar_lea.vmem [#allocation0], 834
    %1735 = vst.msk [vmem:[%s1734] ss:$8 sm:$0xf0] %vm1731, %v1730
    %s1736 = scalar_lea.vmem [#allocation2], 354
    %v1737 = vld [vmem:[%s1736] ss:$8 sm:$0xf]
    %s1738 = scalar_lea.vmem [#allocation2], 323
    %v1739 = vld [vmem:[%s1738] ss:$8 sm:$0xf0]
    %vm1740 = vcmask 1047556
    %v1741 = vsel %vm1740, %v1739, %v1737
    %1742 = vrot.lane.b32.xlu0 %v1741, 96
    %v1743 = vpop.permute.xlu0 %1742
    %vm1744 = vcmask 130048
    %s1745 = scalar_lea.vmem [#allocation0], 1378
    %1746 = vst.msk [vmem:[%s1745] ss:$8 sm:$0xf] %vm1744, %v1743
    %s1747 = scalar_lea.vmem [#allocation0], 1858
    %1748 = vst.msk [vmem:[%s1747] ss:$8 sm:$0xf0] %vm1744, %v1743
    %s1749 = scalar_lea.vmem [#allocation2], 384
    %v1750 = vld [vmem:[%s1749] ss:$8 sm:$0xf]
    %s1751 = scalar_lea.vmem [#allocation2], 353
    %v1752 = vld [vmem:[%s1751] ss:$8 sm:$0xf0]
    %vm1753 = vcmask 1047556
    %v1754 = vsel %vm1753, %v1752, %v1750
    %1755 = vrot.lane.b32.xlu0 %v1754, 96
    %v1756 = vpop.permute.xlu0 %1755
    %vm1757 = vcmask 130048
    %s1758 = scalar_lea.vmem [#allocation0], 386
    %1759 = vst.msk [vmem:[%s1758] ss:$8 sm:$0xf] %vm1757, %v1756
    %s1760 = scalar_lea.vmem [#allocation0], 866
    %1761 = vst.msk [vmem:[%s1760] ss:$8 sm:$0xf0] %vm1757, %v1756
    %s1762 = scalar_lea.vmem [#allocation2], 386
    %v1763 = vld [vmem:[%s1762] ss:$8 sm:$0xf]
    %s1764 = scalar_lea.vmem [#allocation2], 355
    %v1765 = vld [vmem:[%s1764] ss:$8 sm:$0xf0]
    %vm1766 = vcmask 1047556
    %v1767 = vsel %vm1766, %v1765, %v1763
    %1768 = vrot.lane.b32.xlu0 %v1767, 96
    %v1769 = vpop.permute.xlu0 %1768
    %vm1770 = vcmask 130048
    %s1771 = scalar_lea.vmem [#allocation0], 1410
    %1772 = vst.msk [vmem:[%s1771] ss:$8 sm:$0xf] %vm1770, %v1769
    %s1773 = scalar_lea.vmem [#allocation0], 1890
    %1774 = vst.msk [vmem:[%s1773] ss:$8 sm:$0xf0] %vm1770, %v1769
    %s1775 = scalar_lea.vmem [#allocation2], 416
    %v1776 = vld [vmem:[%s1775] ss:$8 sm:$0xf]
    %s1777 = scalar_lea.vmem [#allocation2], 385
    %v1778 = vld [vmem:[%s1777] ss:$8 sm:$0xf0]
    %vm1779 = vcmask 1047556
    %v1780 = vsel %vm1779, %v1778, %v1776
    %1781 = vrot.lane.b32.xlu0 %v1780, 96
    %v1782 = vpop.permute.xlu0 %1781
    %vm1783 = vcmask 130048
    %s1784 = scalar_lea.vmem [#allocation0], 418
    %1785 = vst.msk [vmem:[%s1784] ss:$8 sm:$0xf] %vm1783, %v1782
    %s1786 = scalar_lea.vmem [#allocation0], 898
    %1787 = vst.msk [vmem:[%s1786] ss:$8 sm:$0xf0] %vm1783, %v1782
    %s1788 = scalar_lea.vmem [#allocation2], 418
    %v1789 = vld [vmem:[%s1788] ss:$8 sm:$0xf]
    %s1790 = scalar_lea.vmem [#allocation2], 387
    %v1791 = vld [vmem:[%s1790] ss:$8 sm:$0xf0]
    %vm1792 = vcmask 1047556
    %v1793 = vsel %vm1792, %v1791, %v1789
    %1794 = vrot.lane.b32.xlu0 %v1793, 96
    %v1795 = vpop.permute.xlu0 %1794
    %vm1796 = vcmask 130048
    %s1797 = scalar_lea.vmem [#allocation0], 1442
    %1798 = vst.msk [vmem:[%s1797] ss:$8 sm:$0xf] %vm1796, %v1795
    %s1799 = scalar_lea.vmem [#allocation0], 1922
    %1800 = vst.msk [vmem:[%s1799] ss:$8 sm:$0xf0] %vm1796, %v1795
    %s1801 = scalar_lea.vmem [#allocation2], 448
    %v1802 = vld [vmem:[%s1801] ss:$8 sm:$0xf]
    %s1803 = scalar_lea.vmem [#allocation2], 417
    %v1804 = vld [vmem:[%s1803] ss:$8 sm:$0xf0]
    %vm1805 = vcmask 1047556
    %v1806 = vsel %vm1805, %v1804, %v1802
    %1807 = vrot.lane.b32.xlu0 %v1806, 96
    %v1808 = vpop.permute.xlu0 %1807
    %vm1809 = vcmask 130048
    %s1810 = scalar_lea.vmem [#allocation0], 450
    %1811 = vst.msk [vmem:[%s1810] ss:$8 sm:$0xf] %vm1809, %v1808
    %s1812 = scalar_lea.vmem [#allocation0], 930
    %1813 = vst.msk [vmem:[%s1812] ss:$8 sm:$0xf0] %vm1809, %v1808
    %s1814 = scalar_lea.vmem [#allocation2], 450
    %v1815 = vld [vmem:[%s1814] ss:$8 sm:$0xf]
    %s1816 = scalar_lea.vmem [#allocation2], 419
    %v1817 = vld [vmem:[%s1816] ss:$8 sm:$0xf0]
    %vm1818 = vcmask 1047556
    %v1819 = vsel %vm1818, %v1817, %v1815
    %1820 = vrot.lane.b32.xlu0 %v1819, 96
    %v1821 = vpop.permute.xlu0 %1820
    %vm1822 = vcmask 130048
    %s1823 = scalar_lea.vmem [#allocation0], 1474
    %1824 = vst.msk [vmem:[%s1823] ss:$8 sm:$0xf] %vm1822, %v1821
    %s1825 = scalar_lea.vmem [#allocation0], 1954
    %1826 = vst.msk [vmem:[%s1825] ss:$8 sm:$0xf0] %vm1822, %v1821
    %s1827 = scalar_lea.vmem [#allocation2], 480
    %v1828 = vld [vmem:[%s1827] ss:$8 sm:$0xf]
    %s1829 = scalar_lea.vmem [#allocation2], 449
    %v1830 = vld [vmem:[%s1829] ss:$8 sm:$0xf0]
    %vm1831 = vcmask 1047556
    %v1832 = vsel %vm1831, %v1830, %v1828
    %1833 = vrot.lane.b32.xlu0 %v1832, 96
    %v1834 = vpop.permute.xlu0 %1833
    %vm1835 = vcmask 130048
    %s1836 = scalar_lea.vmem [#allocation0], 482
    %1837 = vst.msk [vmem:[%s1836] ss:$8 sm:$0xf] %vm1835, %v1834
    %s1838 = scalar_lea.vmem [#allocation0], 962
    %1839 = vst.msk [vmem:[%s1838] ss:$8 sm:$0xf0] %vm1835, %v1834
    %s1840 = scalar_lea.vmem [#allocation2], 482
    %v1841 = vld [vmem:[%s1840] ss:$8 sm:$0xf]
    %s1842 = scalar_lea.vmem [#allocation2], 451
    %v1843 = vld [vmem:[%s1842] ss:$8 sm:$0xf0]
    %vm1844 = vcmask 1047556
    %v1845 = vsel %vm1844, %v1843, %v1841
    %1846 = vrot.lane.b32.xlu0 %v1845, 96
    %v1847 = vpop.permute.xlu0 %1846
    %vm1848 = vcmask 130048
    %s1849 = scalar_lea.vmem [#allocation0], 1506
    %1850 = vst.msk [vmem:[%s1849] ss:$8 sm:$0xf] %vm1848, %v1847
    %s1851 = scalar_lea.vmem [#allocation0], 1986
    %1852 = vst.msk [vmem:[%s1851] ss:$8 sm:$0xf0] %vm1848, %v1847
    %v1853 = vld [vmem:[#allocation2] ss:$8 sm:$0xf]
    %s1854 = scalar_lea.vmem [#allocation2], 4294967265
    %v1855 = vld [vmem:[%s1854] ss:$8 sm:$0xf0]
    %vm1856 = vcmask 1047556
    %v1857 = vsel %vm1856, %v1855, %v1853
    %1858 = vrot.lane.b32.xlu0 %v1857, 80
    %v1859 = vpop.permute.xlu0 %1858
    %vm1860 = vcmask 130048
    %s1861 = scalar_lea.vmem [#allocation0], 3
    %1862 = vst.msk [vmem:[%s1861] ss:$8 sm:$0xf] %vm1860, %v1859
    %s1863 = scalar_lea.vmem [#allocation0], 483
    %1864 = vst.msk [vmem:[%s1863] ss:$8 sm:$0xf0] %vm1860, %v1859
    %s1865 = scalar_lea.vmem [#allocation2], 2
    %v1866 = vld [vmem:[%s1865] ss:$8 sm:$0xf]
    %s1867 = scalar_lea.vmem [#allocation2], 4294967267
    %v1868 = vld [vmem:[%s1867] ss:$8 sm:$0xf0]
    %vm1869 = vcmask 1047556
    %v1870 = vsel %vm1869, %v1868, %v1866
    %1871 = vrot.lane.b32.xlu0 %v1870, 80
    %v1872 = vpop.permute.xlu0 %1871
    %vm1873 = vcmask 130048
    %s1874 = scalar_lea.vmem [#allocation0], 1027
    %1875 = vst.msk [vmem:[%s1874] ss:$8 sm:$0xf] %vm1873, %v1872
    %s1876 = scalar_lea.vmem [#allocation0], 1507
    %1877 = vst.msk [vmem:[%s1876] ss:$8 sm:$0xf0] %vm1873, %v1872
    %s1878 = scalar_lea.vmem [#allocation2], 32
    %v1879 = vld [vmem:[%s1878] ss:$8 sm:$0xf]
    %s1880 = scalar_lea.vmem [#allocation2], 1
    %v1881 = vld [vmem:[%s1880] ss:$8 sm:$0xf0]
    %vm1882 = vcmask 1047556
    %v1883 = vsel %vm1882, %v1881, %v1879
    %1884 = vrot.lane.b32.xlu0 %v1883, 80
    %v1885 = vpop.permute.xlu0 %1884
    %vm1886 = vcmask 130048
    %s1887 = scalar_lea.vmem [#allocation0], 35
    %1888 = vst.msk [vmem:[%s1887] ss:$8 sm:$0xf] %vm1886, %v1885
    %s1889 = scalar_lea.vmem [#allocation0], 515
    %1890 = vst.msk [vmem:[%s1889] ss:$8 sm:$0xf0] %vm1886, %v1885
    %s1891 = scalar_lea.vmem [#allocation2], 34
    %v1892 = vld [vmem:[%s1891] ss:$8 sm:$0xf]
    %s1893 = scalar_lea.vmem [#allocation2], 3
    %v1894 = vld [vmem:[%s1893] ss:$8 sm:$0xf0]
    %vm1895 = vcmask 1047556
    %v1896 = vsel %vm1895, %v1894, %v1892
    %1897 = vrot.lane.b32.xlu0 %v1896, 80
    %v1898 = vpop.permute.xlu0 %1897
    %vm1899 = vcmask 130048
    %s1900 = scalar_lea.vmem [#allocation0], 1059
    %1901 = vst.msk [vmem:[%s1900] ss:$8 sm:$0xf] %vm1899, %v1898
    %s1902 = scalar_lea.vmem [#allocation0], 1539
    %1903 = vst.msk [vmem:[%s1902] ss:$8 sm:$0xf0] %vm1899, %v1898
    %s1904 = scalar_lea.vmem [#allocation2], 64
    %v1905 = vld [vmem:[%s1904] ss:$8 sm:$0xf]
    %s1906 = scalar_lea.vmem [#allocation2], 33
    %v1907 = vld [vmem:[%s1906] ss:$8 sm:$0xf0]
    %vm1908 = vcmask 1047556
    %v1909 = vsel %vm1908, %v1907, %v1905
    %1910 = vrot.lane.b32.xlu0 %v1909, 80
    %v1911 = vpop.permute.xlu0 %1910
    %vm1912 = vcmask 130048
    %s1913 = scalar_lea.vmem [#allocation0], 67
    %1914 = vst.msk [vmem:[%s1913] ss:$8 sm:$0xf] %vm1912, %v1911
    %s1915 = scalar_lea.vmem [#allocation0], 547
    %1916 = vst.msk [vmem:[%s1915] ss:$8 sm:$0xf0] %vm1912, %v1911
    %s1917 = scalar_lea.vmem [#allocation2], 66
    %v1918 = vld [vmem:[%s1917] ss:$8 sm:$0xf]
    %s1919 = scalar_lea.vmem [#allocation2], 35
    %v1920 = vld [vmem:[%s1919] ss:$8 sm:$0xf0]
    %vm1921 = vcmask 1047556
    %v1922 = vsel %vm1921, %v1920, %v1918
    %1923 = vrot.lane.b32.xlu0 %v1922, 80
    %v1924 = vpop.permute.xlu0 %1923
    %vm1925 = vcmask 130048
    %s1926 = scalar_lea.vmem [#allocation0], 1091
    %1927 = vst.msk [vmem:[%s1926] ss:$8 sm:$0xf] %vm1925, %v1924
    %s1928 = scalar_lea.vmem [#allocation0], 1571
    %1929 = vst.msk [vmem:[%s1928] ss:$8 sm:$0xf0] %vm1925, %v1924
    %s1930 = scalar_lea.vmem [#allocation2], 96
    %v1931 = vld [vmem:[%s1930] ss:$8 sm:$0xf]
    %s1932 = scalar_lea.vmem [#allocation2], 65
    %v1933 = vld [vmem:[%s1932] ss:$8 sm:$0xf0]
    %vm1934 = vcmask 1047556
    %v1935 = vsel %vm1934, %v1933, %v1931
    %1936 = vrot.lane.b32.xlu0 %v1935, 80
    %v1937 = vpop.permute.xlu0 %1936
    %vm1938 = vcmask 130048
    %s1939 = scalar_lea.vmem [#allocation0], 99
    %1940 = vst.msk [vmem:[%s1939] ss:$8 sm:$0xf] %vm1938, %v1937
    %s1941 = scalar_lea.vmem [#allocation0], 579
    %1942 = vst.msk [vmem:[%s1941] ss:$8 sm:$0xf0] %vm1938, %v1937
    %s1943 = scalar_lea.vmem [#allocation2], 98
    %v1944 = vld [vmem:[%s1943] ss:$8 sm:$0xf]
    %s1945 = scalar_lea.vmem [#allocation2], 67
    %v1946 = vld [vmem:[%s1945] ss:$8 sm:$0xf0]
    %vm1947 = vcmask 1047556
    %v1948 = vsel %vm1947, %v1946, %v1944
    %1949 = vrot.lane.b32.xlu0 %v1948, 80
    %v1950 = vpop.permute.xlu0 %1949
    %vm1951 = vcmask 130048
    %s1952 = scalar_lea.vmem [#allocation0], 1123
    %1953 = vst.msk [vmem:[%s1952] ss:$8 sm:$0xf] %vm1951, %v1950
    %s1954 = scalar_lea.vmem [#allocation0], 1603
    %1955 = vst.msk [vmem:[%s1954] ss:$8 sm:$0xf0] %vm1951, %v1950
    %s1956 = scalar_lea.vmem [#allocation2], 128
    %v1957 = vld [vmem:[%s1956] ss:$8 sm:$0xf]
    %s1958 = scalar_lea.vmem [#allocation2], 97
    %v1959 = vld [vmem:[%s1958] ss:$8 sm:$0xf0]
    %vm1960 = vcmask 1047556
    %v1961 = vsel %vm1960, %v1959, %v1957
    %1962 = vrot.lane.b32.xlu0 %v1961, 80
    %v1963 = vpop.permute.xlu0 %1962
    %vm1964 = vcmask 130048
    %s1965 = scalar_lea.vmem [#allocation0], 131
    %1966 = vst.msk [vmem:[%s1965] ss:$8 sm:$0xf] %vm1964, %v1963
    %s1967 = scalar_lea.vmem [#allocation0], 611
    %1968 = vst.msk [vmem:[%s1967] ss:$8 sm:$0xf0] %vm1964, %v1963
    %s1969 = scalar_lea.vmem [#allocation2], 130
    %v1970 = vld [vmem:[%s1969] ss:$8 sm:$0xf]
    %s1971 = scalar_lea.vmem [#allocation2], 99
    %v1972 = vld [vmem:[%s1971] ss:$8 sm:$0xf0]
    %vm1973 = vcmask 1047556
    %v1974 = vsel %vm1973, %v1972, %v1970
    %1975 = vrot.lane.b32.xlu0 %v1974, 80
    %v1976 = vpop.permute.xlu0 %1975
    %vm1977 = vcmask 130048
    %s1978 = scalar_lea.vmem [#allocation0], 1155
    %1979 = vst.msk [vmem:[%s1978] ss:$8 sm:$0xf] %vm1977, %v1976
    %s1980 = scalar_lea.vmem [#allocation0], 1635
    %1981 = vst.msk [vmem:[%s1980] ss:$8 sm:$0xf0] %vm1977, %v1976
    %s1982 = scalar_lea.vmem [#allocation2], 160
    %v1983 = vld [vmem:[%s1982] ss:$8 sm:$0xf]
    %s1984 = scalar_lea.vmem [#allocation2], 129
    %v1985 = vld [vmem:[%s1984] ss:$8 sm:$0xf0]
    %vm1986 = vcmask 1047556
    %v1987 = vsel %vm1986, %v1985, %v1983
    %1988 = vrot.lane.b32.xlu0 %v1987, 80
    %v1989 = vpop.permute.xlu0 %1988
    %vm1990 = vcmask 130048
    %s1991 = scalar_lea.vmem [#allocation0], 163
    %1992 = vst.msk [vmem:[%s1991] ss:$8 sm:$0xf] %vm1990, %v1989
    %s1993 = scalar_lea.vmem [#allocation0], 643
    %1994 = vst.msk [vmem:[%s1993] ss:$8 sm:$0xf0] %vm1990, %v1989
    %s1995 = scalar_lea.vmem [#allocation2], 162
    %v1996 = vld [vmem:[%s1995] ss:$8 sm:$0xf]
    %s1997 = scalar_lea.vmem [#allocation2], 131
    %v1998 = vld [vmem:[%s1997] ss:$8 sm:$0xf0]
    %vm1999 = vcmask 1047556
    %v2000 = vsel %vm1999, %v1998, %v1996
    %2001 = vrot.lane.b32.xlu0 %v2000, 80
    %v2002 = vpop.permute.xlu0 %2001
    %vm2003 = vcmask 130048
    %s2004 = scalar_lea.vmem [#allocation0], 1187
    %2005 = vst.msk [vmem:[%s2004] ss:$8 sm:$0xf] %vm2003, %v2002
    %s2006 = scalar_lea.vmem [#allocation0], 1667
    %2007 = vst.msk [vmem:[%s2006] ss:$8 sm:$0xf0] %vm2003, %v2002
    %s2008 = scalar_lea.vmem [#allocation2], 192
    %v2009 = vld [vmem:[%s2008] ss:$8 sm:$0xf]
    %s2010 = scalar_lea.vmem [#allocation2], 161
    %v2011 = vld [vmem:[%s2010] ss:$8 sm:$0xf0]
    %vm2012 = vcmask 1047556
    %v2013 = vsel %vm2012, %v2011, %v2009
    %2014 = vrot.lane.b32.xlu0 %v2013, 80
    %v2015 = vpop.permute.xlu0 %2014
    %vm2016 = vcmask 130048
    %s2017 = scalar_lea.vmem [#allocation0], 195
    %2018 = vst.msk [vmem:[%s2017] ss:$8 sm:$0xf] %vm2016, %v2015
    %s2019 = scalar_lea.vmem [#allocation0], 675
    %2020 = vst.msk [vmem:[%s2019] ss:$8 sm:$0xf0] %vm2016, %v2015
    %s2021 = scalar_lea.vmem [#allocation2], 194
    %v2022 = vld [vmem:[%s2021] ss:$8 sm:$0xf]
    %s2023 = scalar_lea.vmem [#allocation2], 163
    %v2024 = vld [vmem:[%s2023] ss:$8 sm:$0xf0]
    %vm2025 = vcmask 1047556
    %v2026 = vsel %vm2025, %v2024, %v2022
    %2027 = vrot.lane.b32.xlu0 %v2026, 80
    %v2028 = vpop.permute.xlu0 %2027
    %vm2029 = vcmask 130048
    %s2030 = scalar_lea.vmem [#allocation0], 1219
    %2031 = vst.msk [vmem:[%s2030] ss:$8 sm:$0xf] %vm2029, %v2028
    %s2032 = scalar_lea.vmem [#allocation0], 1699
    %2033 = vst.msk [vmem:[%s2032] ss:$8 sm:$0xf0] %vm2029, %v2028
    %s2034 = scalar_lea.vmem [#allocation2], 224
    %v2035 = vld [vmem:[%s2034] ss:$8 sm:$0xf]
    %s2036 = scalar_lea.vmem [#allocation2], 193
    %v2037 = vld [vmem:[%s2036] ss:$8 sm:$0xf0]
    %vm2038 = vcmask 1047556
    %v2039 = vsel %vm2038, %v2037, %v2035
    %2040 = vrot.lane.b32.xlu0 %v2039, 80
    %v2041 = vpop.permute.xlu0 %2040
    %vm2042 = vcmask 130048
    %s2043 = scalar_lea.vmem [#allocation0], 227
    %2044 = vst.msk [vmem:[%s2043] ss:$8 sm:$0xf] %vm2042, %v2041
    %s2045 = scalar_lea.vmem [#allocation0], 707
    %2046 = vst.msk [vmem:[%s2045] ss:$8 sm:$0xf0] %vm2042, %v2041
    %s2047 = scalar_lea.vmem [#allocation2], 226
    %v2048 = vld [vmem:[%s2047] ss:$8 sm:$0xf]
    %s2049 = scalar_lea.vmem [#allocation2], 195
    %v2050 = vld [vmem:[%s2049] ss:$8 sm:$0xf0]
    %vm2051 = vcmask 1047556
    %v2052 = vsel %vm2051, %v2050, %v2048
    %2053 = vrot.lane.b32.xlu0 %v2052, 80
    %v2054 = vpop.permute.xlu0 %2053
    %vm2055 = vcmask 130048
    %s2056 = scalar_lea.vmem [#allocation0], 1251
    %2057 = vst.msk [vmem:[%s2056] ss:$8 sm:$0xf] %vm2055, %v2054
    %s2058 = scalar_lea.vmem [#allocation0], 1731
    %2059 = vst.msk [vmem:[%s2058] ss:$8 sm:$0xf0] %vm2055, %v2054
    %s2060 = scalar_lea.vmem [#allocation2], 256
    %v2061 = vld [vmem:[%s2060] ss:$8 sm:$0xf]
    %s2062 = scalar_lea.vmem [#allocation2], 225
    %v2063 = vld [vmem:[%s2062] ss:$8 sm:$0xf0]
    %vm2064 = vcmask 1047556
    %v2065 = vsel %vm2064, %v2063, %v2061
    %2066 = vrot.lane.b32.xlu0 %v2065, 80
    %v2067 = vpop.permute.xlu0 %2066
    %vm2068 = vcmask 130048
    %s2069 = scalar_lea.vmem [#allocation0], 259
    %2070 = vst.msk [vmem:[%s2069] ss:$8 sm:$0xf] %vm2068, %v2067
    %s2071 = scalar_lea.vmem [#allocation0], 739
    %2072 = vst.msk [vmem:[%s2071] ss:$8 sm:$0xf0] %vm2068, %v2067
    %s2073 = scalar_lea.vmem [#allocation2], 258
    %v2074 = vld [vmem:[%s2073] ss:$8 sm:$0xf]
    %s2075 = scalar_lea.vmem [#allocation2], 227
    %v2076 = vld [vmem:[%s2075] ss:$8 sm:$0xf0]
    %vm2077 = vcmask 1047556
    %v2078 = vsel %vm2077, %v2076, %v2074
    %2079 = vrot.lane.b32.xlu0 %v2078, 80
    %v2080 = vpop.permute.xlu0 %2079
    %vm2081 = vcmask 130048
    %s2082 = scalar_lea.vmem [#allocation0], 1283
    %2083 = vst.msk [vmem:[%s2082] ss:$8 sm:$0xf] %vm2081, %v2080
    %s2084 = scalar_lea.vmem [#allocation0], 1763
    %2085 = vst.msk [vmem:[%s2084] ss:$8 sm:$0xf0] %vm2081, %v2080
    %s2086 = scalar_lea.vmem [#allocation2], 288
    %v2087 = vld [vmem:[%s2086] ss:$8 sm:$0xf]
    %s2088 = scalar_lea.vmem [#allocation2], 257
    %v2089 = vld [vmem:[%s2088] ss:$8 sm:$0xf0]
    %vm2090 = vcmask 1047556
    %v2091 = vsel %vm2090, %v2089, %v2087
    %2092 = vrot.lane.b32.xlu0 %v2091, 80
    %v2093 = vpop.permute.xlu0 %2092
    %vm2094 = vcmask 130048
    %s2095 = scalar_lea.vmem [#allocation0], 291
    %2096 = vst.msk [vmem:[%s2095] ss:$8 sm:$0xf] %vm2094, %v2093
    %s2097 = scalar_lea.vmem [#allocation0], 771
    %2098 = vst.msk [vmem:[%s2097] ss:$8 sm:$0xf0] %vm2094, %v2093
    %s2099 = scalar_lea.vmem [#allocation2], 290
    %v2100 = vld [vmem:[%s2099] ss:$8 sm:$0xf]
    %s2101 = scalar_lea.vmem [#allocation2], 259
    %v2102 = vld [vmem:[%s2101] ss:$8 sm:$0xf0]
    %vm2103 = vcmask 1047556
    %v2104 = vsel %vm2103, %v2102, %v2100
    %2105 = vrot.lane.b32.xlu0 %v2104, 80
    %v2106 = vpop.permute.xlu0 %2105
    %vm2107 = vcmask 130048
    %s2108 = scalar_lea.vmem [#allocation0], 1315
    %2109 = vst.msk [vmem:[%s2108] ss:$8 sm:$0xf] %vm2107, %v2106
    %s2110 = scalar_lea.vmem [#allocation0], 1795
    %2111 = vst.msk [vmem:[%s2110] ss:$8 sm:$0xf0] %vm2107, %v2106
    %s2112 = scalar_lea.vmem [#allocation2], 320
    %v2113 = vld [vmem:[%s2112] ss:$8 sm:$0xf]
    %s2114 = scalar_lea.vmem [#allocation2], 289
    %v2115 = vld [vmem:[%s2114] ss:$8 sm:$0xf0]
    %vm2116 = vcmask 1047556
    %v2117 = vsel %vm2116, %v2115, %v2113
    %2118 = vrot.lane.b32.xlu0 %v2117, 80
    %v2119 = vpop.permute.xlu0 %2118
    %vm2120 = vcmask 130048
    %s2121 = scalar_lea.vmem [#allocation0], 323
    %2122 = vst.msk [vmem:[%s2121] ss:$8 sm:$0xf] %vm2120, %v2119
    %s2123 = scalar_lea.vmem [#allocation0], 803
    %2124 = vst.msk [vmem:[%s2123] ss:$8 sm:$0xf0] %vm2120, %v2119
    %s2125 = scalar_lea.vmem [#allocation2], 322
    %v2126 = vld [vmem:[%s2125] ss:$8 sm:$0xf]
    %s2127 = scalar_lea.vmem [#allocation2], 291
    %v2128 = vld [vmem:[%s2127] ss:$8 sm:$0xf0]
    %vm2129 = vcmask 1047556
    %v2130 = vsel %vm2129, %v2128, %v2126
    %2131 = vrot.lane.b32.xlu0 %v2130, 80
    %v2132 = vpop.permute.xlu0 %2131
    %vm2133 = vcmask 130048
    %s2134 = scalar_lea.vmem [#allocation0], 1347
    %2135 = vst.msk [vmem:[%s2134] ss:$8 sm:$0xf] %vm2133, %v2132
    %s2136 = scalar_lea.vmem [#allocation0], 1827
    %2137 = vst.msk [vmem:[%s2136] ss:$8 sm:$0xf0] %vm2133, %v2132
    %s2138 = scalar_lea.vmem [#allocation2], 352
    %v2139 = vld [vmem:[%s2138] ss:$8 sm:$0xf]
    %s2140 = scalar_lea.vmem [#allocation2], 321
    %v2141 = vld [vmem:[%s2140] ss:$8 sm:$0xf0]
    %vm2142 = vcmask 1047556
    %v2143 = vsel %vm2142, %v2141, %v2139
    %2144 = vrot.lane.b32.xlu0 %v2143, 80
    %v2145 = vpop.permute.xlu0 %2144
    %vm2146 = vcmask 130048
    %s2147 = scalar_lea.vmem [#allocation0], 355
    %2148 = vst.msk [vmem:[%s2147] ss:$8 sm:$0xf] %vm2146, %v2145
    %s2149 = scalar_lea.vmem [#allocation0], 835
    %2150 = vst.msk [vmem:[%s2149] ss:$8 sm:$0xf0] %vm2146, %v2145
    %s2151 = scalar_lea.vmem [#allocation2], 354
    %v2152 = vld [vmem:[%s2151] ss:$8 sm:$0xf]
    %s2153 = scalar_lea.vmem [#allocation2], 323
    %v2154 = vld [vmem:[%s2153] ss:$8 sm:$0xf0]
    %vm2155 = vcmask 1047556
    %v2156 = vsel %vm2155, %v2154, %v2152
    %2157 = vrot.lane.b32.xlu0 %v2156, 80
    %v2158 = vpop.permute.xlu0 %2157
    %vm2159 = vcmask 130048
    %s2160 = scalar_lea.vmem [#allocation0], 1379
    %2161 = vst.msk [vmem:[%s2160] ss:$8 sm:$0xf] %vm2159, %v2158
    %s2162 = scalar_lea.vmem [#allocation0], 1859
    %2163 = vst.msk [vmem:[%s2162] ss:$8 sm:$0xf0] %vm2159, %v2158
    %s2164 = scalar_lea.vmem [#allocation2], 384
    %v2165 = vld [vmem:[%s2164] ss:$8 sm:$0xf]
    %s2166 = scalar_lea.vmem [#allocation2], 353
    %v2167 = vld [vmem:[%s2166] ss:$8 sm:$0xf0]
    %vm2168 = vcmask 1047556
    %v2169 = vsel %vm2168, %v2167, %v2165
    %2170 = vrot.lane.b32.xlu0 %v2169, 80
    %v2171 = vpop.permute.xlu0 %2170
    %vm2172 = vcmask 130048
    %s2173 = scalar_lea.vmem [#allocation0], 387
    %2174 = vst.msk [vmem:[%s2173] ss:$8 sm:$0xf] %vm2172, %v2171
    %s2175 = scalar_lea.vmem [#allocation0], 867
    %2176 = vst.msk [vmem:[%s2175] ss:$8 sm:$0xf0] %vm2172, %v2171
    %s2177 = scalar_lea.vmem [#allocation2], 386
    %v2178 = vld [vmem:[%s2177] ss:$8 sm:$0xf]
    %s2179 = scalar_lea.vmem [#allocation2], 355
    %v2180 = vld [vmem:[%s2179] ss:$8 sm:$0xf0]
    %vm2181 = vcmask 1047556
    %v2182 = vsel %vm2181, %v2180, %v2178
    %2183 = vrot.lane.b32.xlu0 %v2182, 80
    %v2184 = vpop.permute.xlu0 %2183
    %vm2185 = vcmask 130048
    %s2186 = scalar_lea.vmem [#allocation0], 1411
    %2187 = vst.msk [vmem:[%s2186] ss:$8 sm:$0xf] %vm2185, %v2184
    %s2188 = scalar_lea.vmem [#allocation0], 1891
    %2189 = vst.msk [vmem:[%s2188] ss:$8 sm:$0xf0] %vm2185, %v2184
    %s2190 = scalar_lea.vmem [#allocation2], 416
    %v2191 = vld [vmem:[%s2190] ss:$8 sm:$0xf]
    %s2192 = scalar_lea.vmem [#allocation2], 385
    %v2193 = vld [vmem:[%s2192] ss:$8 sm:$0xf0]
    %vm2194 = vcmask 1047556
    %v2195 = vsel %vm2194, %v2193, %v2191
    %2196 = vrot.lane.b32.xlu0 %v2195, 80
    %v2197 = vpop.permute.xlu0 %2196
    %vm2198 = vcmask 130048
    %s2199 = scalar_lea.vmem [#allocation0], 419
    %2200 = vst.msk [vmem:[%s2199] ss:$8 sm:$0xf] %vm2198, %v2197
    %s2201 = scalar_lea.vmem [#allocation0], 899
    %2202 = vst.msk [vmem:[%s2201] ss:$8 sm:$0xf0] %vm2198, %v2197
    %s2203 = scalar_lea.vmem [#allocation2], 418
    %v2204 = vld [vmem:[%s2203] ss:$8 sm:$0xf]
    %s2205 = scalar_lea.vmem [#allocation2], 387
    %v2206 = vld [vmem:[%s2205] ss:$8 sm:$0xf0]
    %vm2207 = vcmask 1047556
    %v2208 = vsel %vm2207, %v2206, %v2204
    %2209 = vrot.lane.b32.xlu0 %v2208, 80
    %v2210 = vpop.permute.xlu0 %2209
    %vm2211 = vcmask 130048
    %s2212 = scalar_lea.vmem [#allocation0], 1443
    %2213 = vst.msk [vmem:[%s2212] ss:$8 sm:$0xf] %vm2211, %v2210
    %s2214 = scalar_lea.vmem [#allocation0], 1923
    %2215 = vst.msk [vmem:[%s2214] ss:$8 sm:$0xf0] %vm2211, %v2210
    %s2216 = scalar_lea.vmem [#allocation2], 448
    %v2217 = vld [vmem:[%s2216] ss:$8 sm:$0xf]
    %s2218 = scalar_lea.vmem [#allocation2], 417
    %v2219 = vld [vmem:[%s2218] ss:$8 sm:$0xf0]
    %vm2220 = vcmask 1047556
    %v2221 = vsel %vm2220, %v2219, %v2217
    %2222 = vrot.lane.b32.xlu0 %v2221, 80
    %v2223 = vpop.permute.xlu0 %2222
    %vm2224 = vcmask 130048
    %s2225 = scalar_lea.vmem [#allocation0], 451
    %2226 = vst.msk [vmem:[%s2225] ss:$8 sm:$0xf] %vm2224, %v2223
    %s2227 = scalar_lea.vmem [#allocation0], 931
    %2228 = vst.msk [vmem:[%s2227] ss:$8 sm:$0xf0] %vm2224, %v2223
    %s2229 = scalar_lea.vmem [#allocation2], 450
    %v2230 = vld [vmem:[%s2229] ss:$8 sm:$0xf]
    %s2231 = scalar_lea.vmem [#allocation2], 419
    %v2232 = vld [vmem:[%s2231] ss:$8 sm:$0xf0]
    %vm2233 = vcmask 1047556
    %v2234 = vsel %vm2233, %v2232, %v2230
    %2235 = vrot.lane.b32.xlu0 %v2234, 80
    %v2236 = vpop.permute.xlu0 %2235
    %vm2237 = vcmask 130048
    %s2238 = scalar_lea.vmem [#allocation0], 1475
    %2239 = vst.msk [vmem:[%s2238] ss:$8 sm:$0xf] %vm2237, %v2236
    %s2240 = scalar_lea.vmem [#allocation0], 1955
    %2241 = vst.msk [vmem:[%s2240] ss:$8 sm:$0xf0] %vm2237, %v2236
    %s2242 = scalar_lea.vmem [#allocation2], 480
    %v2243 = vld [vmem:[%s2242] ss:$8 sm:$0xf]
    %s2244 = scalar_lea.vmem [#allocation2], 449
    %v2245 = vld [vmem:[%s2244] ss:$8 sm:$0xf0]
    %vm2246 = vcmask 1047556
    %v2247 = vsel %vm2246, %v2245, %v2243
    %2248 = vrot.lane.b32.xlu0 %v2247, 80
    %v2249 = vpop.permute.xlu0 %2248
    %vm2250 = vcmask 130048
    %s2251 = scalar_lea.vmem [#allocation0], 483
    %2252 = vst.msk [vmem:[%s2251] ss:$8 sm:$0xf] %vm2250, %v2249
    %s2253 = scalar_lea.vmem [#allocation0], 963
    %2254 = vst.msk [vmem:[%s2253] ss:$8 sm:$0xf0] %vm2250, %v2249
    %s2255 = scalar_lea.vmem [#allocation2], 482
    %v2256 = vld [vmem:[%s2255] ss:$8 sm:$0xf]
    %s2257 = scalar_lea.vmem [#allocation2], 451
    %v2258 = vld [vmem:[%s2257] ss:$8 sm:$0xf0]
    %vm2259 = vcmask 1047556
    %v2260 = vsel %vm2259, %v2258, %v2256
    %2261 = vrot.lane.b32.xlu0 %v2260, 80
    %v2262 = vpop.permute.xlu0 %2261
    %vm2263 = vcmask 130048
    %s2264 = scalar_lea.vmem [#allocation0], 1507
    %2265 = vst.msk [vmem:[%s2264] ss:$8 sm:$0xf] %vm2263, %v2262
    %s2266 = scalar_lea.vmem [#allocation0], 1987
    %2267 = vst.msk [vmem:[%s2266] ss:$8 sm:$0xf0] %vm2263, %v2262
    %v2268 = vld [vmem:[#allocation2] ss:$8 sm:$0xf]
    %s2269 = scalar_lea.vmem [#allocation2], 4294967265
    %v2270 = vld [vmem:[%s2269] ss:$8 sm:$0xf0]
    %vm2271 = vcmask 1047556
    %v2272 = vsel %vm2271, %v2270, %v2268
    %2273 = vrot.lane.b32.xlu0 %v2272, 64
    %v2274 = vpop.permute.xlu0 %2273
    %vm2275 = vcmask 130048
    %s2276 = scalar_lea.vmem [#allocation0], 4
    %2277 = vst.msk [vmem:[%s2276] ss:$8 sm:$0xf] %vm2275, %v2274
    %s2278 = scalar_lea.vmem [#allocation0], 484
    %2279 = vst.msk [vmem:[%s2278] ss:$8 sm:$0xf0] %vm2275, %v2274
    %s2280 = scalar_lea.vmem [#allocation2], 2
    %v2281 = vld [vmem:[%s2280] ss:$8 sm:$0xf]
    %s2282 = scalar_lea.vmem [#allocation2], 4294967267
    %v2283 = vld [vmem:[%s2282] ss:$8 sm:$0xf0]
    %vm2284 = vcmask 1047556
    %v2285 = vsel %vm2284, %v2283, %v2281
    %2286 = vrot.lane.b32.xlu0 %v2285, 64
    %v2287 = vpop.permute.xlu0 %2286
    %vm2288 = vcmask 130048
    %s2289 = scalar_lea.vmem [#allocation0], 1028
    %2290 = vst.msk [vmem:[%s2289] ss:$8 sm:$0xf] %vm2288, %v2287
    %s2291 = scalar_lea.vmem [#allocation0], 1508
    %2292 = vst.msk [vmem:[%s2291] ss:$8 sm:$0xf0] %vm2288, %v2287
    %s2293 = scalar_lea.vmem [#allocation2], 32
    %v2294 = vld [vmem:[%s2293] ss:$8 sm:$0xf]
    %s2295 = scalar_lea.vmem [#allocation2], 1
    %v2296 = vld [vmem:[%s2295] ss:$8 sm:$0xf0]
    %vm2297 = vcmask 1047556
    %v2298 = vsel %vm2297, %v2296, %v2294
    %2299 = vrot.lane.b32.xlu0 %v2298, 64
    %v2300 = vpop.permute.xlu0 %2299
    %vm2301 = vcmask 130048
    %s2302 = scalar_lea.vmem [#allocation0], 36
    %2303 = vst.msk [vmem:[%s2302] ss:$8 sm:$0xf] %vm2301, %v2300
    %s2304 = scalar_lea.vmem [#allocation0], 516
    %2305 = vst.msk [vmem:[%s2304] ss:$8 sm:$0xf0] %vm2301, %v2300
    %s2306 = scalar_lea.vmem [#allocation2], 34
    %v2307 = vld [vmem:[%s2306] ss:$8 sm:$0xf]
    %s2308 = scalar_lea.vmem [#allocation2], 3
    %v2309 = vld [vmem:[%s2308] ss:$8 sm:$0xf0]
    %vm2310 = vcmask 1047556
    %v2311 = vsel %vm2310, %v2309, %v2307
    %2312 = vrot.lane.b32.xlu0 %v2311, 64
    %v2313 = vpop.permute.xlu0 %2312
    %vm2314 = vcmask 130048
    %s2315 = scalar_lea.vmem [#allocation0], 1060
    %2316 = vst.msk [vmem:[%s2315] ss:$8 sm:$0xf] %vm2314, %v2313
    %s2317 = scalar_lea.vmem [#allocation0], 1540
    %2318 = vst.msk [vmem:[%s2317] ss:$8 sm:$0xf0] %vm2314, %v2313
    %s2319 = scalar_lea.vmem [#allocation2], 64
    %v2320 = vld [vmem:[%s2319] ss:$8 sm:$0xf]
    %s2321 = scalar_lea.vmem [#allocation2], 33
    %v2322 = vld [vmem:[%s2321] ss:$8 sm:$0xf0]
    %vm2323 = vcmask 1047556
    %v2324 = vsel %vm2323, %v2322, %v2320
    %2325 = vrot.lane.b32.xlu0 %v2324, 64
    %v2326 = vpop.permute.xlu0 %2325
    %vm2327 = vcmask 130048
    %s2328 = scalar_lea.vmem [#allocation0], 68
    %2329 = vst.msk [vmem:[%s2328] ss:$8 sm:$0xf] %vm2327, %v2326
    %s2330 = scalar_lea.vmem [#allocation0], 548
    %2331 = vst.msk [vmem:[%s2330] ss:$8 sm:$0xf0] %vm2327, %v2326
    %s2332 = scalar_lea.vmem [#allocation2], 66
    %v2333 = vld [vmem:[%s2332] ss:$8 sm:$0xf]
    %s2334 = scalar_lea.vmem [#allocation2], 35
    %v2335 = vld [vmem:[%s2334] ss:$8 sm:$0xf0]
    %vm2336 = vcmask 1047556
    %v2337 = vsel %vm2336, %v2335, %v2333
    %2338 = vrot.lane.b32.xlu0 %v2337, 64
    %v2339 = vpop.permute.xlu0 %2338
    %vm2340 = vcmask 130048
    %s2341 = scalar_lea.vmem [#allocation0], 1092
    %2342 = vst.msk [vmem:[%s2341] ss:$8 sm:$0xf] %vm2340, %v2339
    %s2343 = scalar_lea.vmem [#allocation0], 1572
    %2344 = vst.msk [vmem:[%s2343] ss:$8 sm:$0xf0] %vm2340, %v2339
    %s2345 = scalar_lea.vmem [#allocation2], 96
    %v2346 = vld [vmem:[%s2345] ss:$8 sm:$0xf]
    %s2347 = scalar_lea.vmem [#allocation2], 65
    %v2348 = vld [vmem:[%s2347] ss:$8 sm:$0xf0]
    %vm2349 = vcmask 1047556
    %v2350 = vsel %vm2349, %v2348, %v2346
    %2351 = vrot.lane.b32.xlu0 %v2350, 64
    %v2352 = vpop.permute.xlu0 %2351
    %vm2353 = vcmask 130048
    %s2354 = scalar_lea.vmem [#allocation0], 100
    %2355 = vst.msk [vmem:[%s2354] ss:$8 sm:$0xf] %vm2353, %v2352
    %s2356 = scalar_lea.vmem [#allocation0], 580
    %2357 = vst.msk [vmem:[%s2356] ss:$8 sm:$0xf0] %vm2353, %v2352
    %s2358 = scalar_lea.vmem [#allocation2], 98
    %v2359 = vld [vmem:[%s2358] ss:$8 sm:$0xf]
    %s2360 = scalar_lea.vmem [#allocation2], 67
    %v2361 = vld [vmem:[%s2360] ss:$8 sm:$0xf0]
    %vm2362 = vcmask 1047556
    %v2363 = vsel %vm2362, %v2361, %v2359
    %2364 = vrot.lane.b32.xlu0 %v2363, 64
    %v2365 = vpop.permute.xlu0 %2364
    %vm2366 = vcmask 130048
    %s2367 = scalar_lea.vmem [#allocation0], 1124
    %2368 = vst.msk [vmem:[%s2367] ss:$8 sm:$0xf] %vm2366, %v2365
    %s2369 = scalar_lea.vmem [#allocation0], 1604
    %2370 = vst.msk [vmem:[%s2369] ss:$8 sm:$0xf0] %vm2366, %v2365
    %s2371 = scalar_lea.vmem [#allocation2], 128
    %v2372 = vld [vmem:[%s2371] ss:$8 sm:$0xf]
    %s2373 = scalar_lea.vmem [#allocation2], 97
    %v2374 = vld [vmem:[%s2373] ss:$8 sm:$0xf0]
    %vm2375 = vcmask 1047556
    %v2376 = vsel %vm2375, %v2374, %v2372
    %2377 = vrot.lane.b32.xlu0 %v2376, 64
    %v2378 = vpop.permute.xlu0 %2377
    %vm2379 = vcmask 130048
    %s2380 = scalar_lea.vmem [#allocation0], 132
    %2381 = vst.msk [vmem:[%s2380] ss:$8 sm:$0xf] %vm2379, %v2378
    %s2382 = scalar_lea.vmem [#allocation0], 612
    %2383 = vst.msk [vmem:[%s2382] ss:$8 sm:$0xf0] %vm2379, %v2378
    %s2384 = scalar_lea.vmem [#allocation2], 130
    %v2385 = vld [vmem:[%s2384] ss:$8 sm:$0xf]
    %s2386 = scalar_lea.vmem [#allocation2], 99
    %v2387 = vld [vmem:[%s2386] ss:$8 sm:$0xf0]
    %vm2388 = vcmask 1047556
    %v2389 = vsel %vm2388, %v2387, %v2385
    %2390 = vrot.lane.b32.xlu0 %v2389, 64
    %v2391 = vpop.permute.xlu0 %2390
    %vm2392 = vcmask 130048
    %s2393 = scalar_lea.vmem [#allocation0], 1156
    %2394 = vst.msk [vmem:[%s2393] ss:$8 sm:$0xf] %vm2392, %v2391
    %s2395 = scalar_lea.vmem [#allocation0], 1636
    %2396 = vst.msk [vmem:[%s2395] ss:$8 sm:$0xf0] %vm2392, %v2391
    %s2397 = scalar_lea.vmem [#allocation2], 160
    %v2398 = vld [vmem:[%s2397] ss:$8 sm:$0xf]
    %s2399 = scalar_lea.vmem [#allocation2], 129
    %v2400 = vld [vmem:[%s2399] ss:$8 sm:$0xf0]
    %vm2401 = vcmask 1047556
    %v2402 = vsel %vm2401, %v2400, %v2398
    %2403 = vrot.lane.b32.xlu0 %v2402, 64
    %v2404 = vpop.permute.xlu0 %2403
    %vm2405 = vcmask 130048
    %s2406 = scalar_lea.vmem [#allocation0], 164
    %2407 = vst.msk [vmem:[%s2406] ss:$8 sm:$0xf] %vm2405, %v2404
    %s2408 = scalar_lea.vmem [#allocation0], 644
    %2409 = vst.msk [vmem:[%s2408] ss:$8 sm:$0xf0] %vm2405, %v2404
    %s2410 = scalar_lea.vmem [#allocation2], 162
    %v2411 = vld [vmem:[%s2410] ss:$8 sm:$0xf]
    %s2412 = scalar_lea.vmem [#allocation2], 131
    %v2413 = vld [vmem:[%s2412] ss:$8 sm:$0xf0]
    %vm2414 = vcmask 1047556
    %v2415 = vsel %vm2414, %v2413, %v2411
    %2416 = vrot.lane.b32.xlu0 %v2415, 64
    %v2417 = vpop.permute.xlu0 %2416
    %vm2418 = vcmask 130048
    %s2419 = scalar_lea.vmem [#allocation0], 1188
    %2420 = vst.msk [vmem:[%s2419] ss:$8 sm:$0xf] %vm2418, %v2417
    %s2421 = scalar_lea.vmem [#allocation0], 1668
    %2422 = vst.msk [vmem:[%s2421] ss:$8 sm:$0xf0] %vm2418, %v2417
    %s2423 = scalar_lea.vmem [#allocation2], 192
    %v2424 = vld [vmem:[%s2423] ss:$8 sm:$0xf]
    %s2425 = scalar_lea.vmem [#allocation2], 161
    %v2426 = vld [vmem:[%s2425] ss:$8 sm:$0xf0]
    %vm2427 = vcmask 1047556
    %v2428 = vsel %vm2427, %v2426, %v2424
    %2429 = vrot.lane.b32.xlu0 %v2428, 64
    %v2430 = vpop.permute.xlu0 %2429
    %vm2431 = vcmask 130048
    %s2432 = scalar_lea.vmem [#allocation0], 196
    %2433 = vst.msk [vmem:[%s2432] ss:$8 sm:$0xf] %vm2431, %v2430
    %s2434 = scalar_lea.vmem [#allocation0], 676
    %2435 = vst.msk [vmem:[%s2434] ss:$8 sm:$0xf0] %vm2431, %v2430
    %s2436 = scalar_lea.vmem [#allocation2], 194
    %v2437 = vld [vmem:[%s2436] ss:$8 sm:$0xf]
    %s2438 = scalar_lea.vmem [#allocation2], 163
    %v2439 = vld [vmem:[%s2438] ss:$8 sm:$0xf0]
    %vm2440 = vcmask 1047556
    %v2441 = vsel %vm2440, %v2439, %v2437
    %2442 = vrot.lane.b32.xlu0 %v2441, 64
    %v2443 = vpop.permute.xlu0 %2442
    %vm2444 = vcmask 130048
    %s2445 = scalar_lea.vmem [#allocation0], 1220
    %2446 = vst.msk [vmem:[%s2445] ss:$8 sm:$0xf] %vm2444, %v2443
    %s2447 = scalar_lea.vmem [#allocation0], 1700
    %2448 = vst.msk [vmem:[%s2447] ss:$8 sm:$0xf0] %vm2444, %v2443
    %s2449 = scalar_lea.vmem [#allocation2], 224
    %v2450 = vld [vmem:[%s2449] ss:$8 sm:$0xf]
    %s2451 = scalar_lea.vmem [#allocation2], 193
    %v2452 = vld [vmem:[%s2451] ss:$8 sm:$0xf0]
    %vm2453 = vcmask 1047556
    %v2454 = vsel %vm2453, %v2452, %v2450
    %2455 = vrot.lane.b32.xlu0 %v2454, 64
    %v2456 = vpop.permute.xlu0 %2455
    %vm2457 = vcmask 130048
    %s2458 = scalar_lea.vmem [#allocation0], 228
    %2459 = vst.msk [vmem:[%s2458] ss:$8 sm:$0xf] %vm2457, %v2456
    %s2460 = scalar_lea.vmem [#allocation0], 708
    %2461 = vst.msk [vmem:[%s2460] ss:$8 sm:$0xf0] %vm2457, %v2456
    %s2462 = scalar_lea.vmem [#allocation2], 226
    %v2463 = vld [vmem:[%s2462] ss:$8 sm:$0xf]
    %s2464 = scalar_lea.vmem [#allocation2], 195
    %v2465 = vld [vmem:[%s2464] ss:$8 sm:$0xf0]
    %vm2466 = vcmask 1047556
    %v2467 = vsel %vm2466, %v2465, %v2463
    %2468 = vrot.lane.b32.xlu0 %v2467, 64
    %v2469 = vpop.permute.xlu0 %2468
    %vm2470 = vcmask 130048
    %s2471 = scalar_lea.vmem [#allocation0], 1252
    %2472 = vst.msk [vmem:[%s2471] ss:$8 sm:$0xf] %vm2470, %v2469
    %s2473 = scalar_lea.vmem [#allocation0], 1732
    %2474 = vst.msk [vmem:[%s2473] ss:$8 sm:$0xf0] %vm2470, %v2469
    %s2475 = scalar_lea.vmem [#allocation2], 256
    %v2476 = vld [vmem:[%s2475] ss:$8 sm:$0xf]
    %s2477 = scalar_lea.vmem [#allocation2], 225
    %v2478 = vld [vmem:[%s2477] ss:$8 sm:$0xf0]
    %vm2479 = vcmask 1047556
    %v2480 = vsel %vm2479, %v2478, %v2476
    %2481 = vrot.lane.b32.xlu0 %v2480, 64
    %v2482 = vpop.permute.xlu0 %2481
    %vm2483 = vcmask 130048
    %s2484 = scalar_lea.vmem [#allocation0], 260
    %2485 = vst.msk [vmem:[%s2484] ss:$8 sm:$0xf] %vm2483, %v2482
    %s2486 = scalar_lea.vmem [#allocation0], 740
    %2487 = vst.msk [vmem:[%s2486] ss:$8 sm:$0xf0] %vm2483, %v2482
    %s2488 = scalar_lea.vmem [#allocation2], 258
    %v2489 = vld [vmem:[%s2488] ss:$8 sm:$0xf]
    %s2490 = scalar_lea.vmem [#allocation2], 227
    %v2491 = vld [vmem:[%s2490] ss:$8 sm:$0xf0]
    %vm2492 = vcmask 1047556
    %v2493 = vsel %vm2492, %v2491, %v2489
    %2494 = vrot.lane.b32.xlu0 %v2493, 64
    %v2495 = vpop.permute.xlu0 %2494
    %vm2496 = vcmask 130048
    %s2497 = scalar_lea.vmem [#allocation0], 1284
    %2498 = vst.msk [vmem:[%s2497] ss:$8 sm:$0xf] %vm2496, %v2495
    %s2499 = scalar_lea.vmem [#allocation0], 1764
    %2500 = vst.msk [vmem:[%s2499] ss:$8 sm:$0xf0] %vm2496, %v2495
    %s2501 = scalar_lea.vmem [#allocation2], 288
    %v2502 = vld [vmem:[%s2501] ss:$8 sm:$0xf]
    %s2503 = scalar_lea.vmem [#allocation2], 257
    %v2504 = vld [vmem:[%s2503] ss:$8 sm:$0xf0]
    %vm2505 = vcmask 1047556
    %v2506 = vsel %vm2505, %v2504, %v2502
    %2507 = vrot.lane.b32.xlu0 %v2506, 64
    %v2508 = vpop.permute.xlu0 %2507
    %vm2509 = vcmask 130048
    %s2510 = scalar_lea.vmem [#allocation0], 292
    %2511 = vst.msk [vmem:[%s2510] ss:$8 sm:$0xf] %vm2509, %v2508
    %s2512 = scalar_lea.vmem [#allocation0], 772
    %2513 = vst.msk [vmem:[%s2512] ss:$8 sm:$0xf0] %vm2509, %v2508
    %s2514 = scalar_lea.vmem [#allocation2], 290
    %v2515 = vld [vmem:[%s2514] ss:$8 sm:$0xf]
    %s2516 = scalar_lea.vmem [#allocation2], 259
    %v2517 = vld [vmem:[%s2516] ss:$8 sm:$0xf0]
    %vm2518 = vcmask 1047556
    %v2519 = vsel %vm2518, %v2517, %v2515
    %2520 = vrot.lane.b32.xlu0 %v2519, 64
    %v2521 = vpop.permute.xlu0 %2520
    %vm2522 = vcmask 130048
    %s2523 = scalar_lea.vmem [#allocation0], 1316
    %2524 = vst.msk [vmem:[%s2523] ss:$8 sm:$0xf] %vm2522, %v2521
    %s2525 = scalar_lea.vmem [#allocation0], 1796
    %2526 = vst.msk [vmem:[%s2525] ss:$8 sm:$0xf0] %vm2522, %v2521
    %s2527 = scalar_lea.vmem [#allocation2], 320
    %v2528 = vld [vmem:[%s2527] ss:$8 sm:$0xf]
    %s2529 = scalar_lea.vmem [#allocation2], 289
    %v2530 = vld [vmem:[%s2529] ss:$8 sm:$0xf0]
    %vm2531 = vcmask 1047556
    %v2532 = vsel %vm2531, %v2530, %v2528
    %2533 = vrot.lane.b32.xlu0 %v2532, 64
    %v2534 = vpop.permute.xlu0 %2533
    %vm2535 = vcmask 130048
    %s2536 = scalar_lea.vmem [#allocation0], 324
    %2537 = vst.msk [vmem:[%s2536] ss:$8 sm:$0xf] %vm2535, %v2534
    %s2538 = scalar_lea.vmem [#allocation0], 804
    %2539 = vst.msk [vmem:[%s2538] ss:$8 sm:$0xf0] %vm2535, %v2534
    %s2540 = scalar_lea.vmem [#allocation2], 322
    %v2541 = vld [vmem:[%s2540] ss:$8 sm:$0xf]
    %s2542 = scalar_lea.vmem [#allocation2], 291
    %v2543 = vld [vmem:[%s2542] ss:$8 sm:$0xf0]
    %vm2544 = vcmask 1047556
    %v2545 = vsel %vm2544, %v2543, %v2541
    %2546 = vrot.lane.b32.xlu0 %v2545, 64
    %v2547 = vpop.permute.xlu0 %2546
    %vm2548 = vcmask 130048
    %s2549 = scalar_lea.vmem [#allocation0], 1348
    %2550 = vst.msk [vmem:[%s2549] ss:$8 sm:$0xf] %vm2548, %v2547
    %s2551 = scalar_lea.vmem [#allocation0], 1828
    %2552 = vst.msk [vmem:[%s2551] ss:$8 sm:$0xf0] %vm2548, %v2547
    %s2553 = scalar_lea.vmem [#allocation2], 352
    %v2554 = vld [vmem:[%s2553] ss:$8 sm:$0xf]
    %s2555 = scalar_lea.vmem [#allocation2], 321
    %v2556 = vld [vmem:[%s2555] ss:$8 sm:$0xf0]
    %vm2557 = vcmask 1047556
    %v2558 = vsel %vm2557, %v2556, %v2554
    %2559 = vrot.lane.b32.xlu0 %v2558, 64
    %v2560 = vpop.permute.xlu0 %2559
    %vm2561 = vcmask 130048
    %s2562 = scalar_lea.vmem [#allocation0], 356
    %2563 = vst.msk [vmem:[%s2562] ss:$8 sm:$0xf] %vm2561, %v2560
    %s2564 = scalar_lea.vmem [#allocation0], 836
    %2565 = vst.msk [vmem:[%s2564] ss:$8 sm:$0xf0] %vm2561, %v2560
    %s2566 = scalar_lea.vmem [#allocation2], 354
    %v2567 = vld [vmem:[%s2566] ss:$8 sm:$0xf]
    %s2568 = scalar_lea.vmem [#allocation2], 323
    %v2569 = vld [vmem:[%s2568] ss:$8 sm:$0xf0]
    %vm2570 = vcmask 1047556
    %v2571 = vsel %vm2570, %v2569, %v2567
    %2572 = vrot.lane.b32.xlu0 %v2571, 64
    %v2573 = vpop.permute.xlu0 %2572
    %vm2574 = vcmask 130048
    %s2575 = scalar_lea.vmem [#allocation0], 1380
    %2576 = vst.msk [vmem:[%s2575] ss:$8 sm:$0xf] %vm2574, %v2573
    %s2577 = scalar_lea.vmem [#allocation0], 1860
    %2578 = vst.msk [vmem:[%s2577] ss:$8 sm:$0xf0] %vm2574, %v2573
    %s2579 = scalar_lea.vmem [#allocation2], 384
    %v2580 = vld [vmem:[%s2579] ss:$8 sm:$0xf]
    %s2581 = scalar_lea.vmem [#allocation2], 353
    %v2582 = vld [vmem:[%s2581] ss:$8 sm:$0xf0]
    %vm2583 = vcmask 1047556
    %v2584 = vsel %vm2583, %v2582, %v2580
    %2585 = vrot.lane.b32.xlu0 %v2584, 64
    %v2586 = vpop.permute.xlu0 %2585
    %vm2587 = vcmask 130048
    %s2588 = scalar_lea.vmem [#allocation0], 388
    %2589 = vst.msk [vmem:[%s2588] ss:$8 sm:$0xf] %vm2587, %v2586
    %s2590 = scalar_lea.vmem [#allocation0], 868
    %2591 = vst.msk [vmem:[%s2590] ss:$8 sm:$0xf0] %vm2587, %v2586
    %s2592 = scalar_lea.vmem [#allocation2], 386
    %v2593 = vld [vmem:[%s2592] ss:$8 sm:$0xf]
    %s2594 = scalar_lea.vmem [#allocation2], 355
    %v2595 = vld [vmem:[%s2594] ss:$8 sm:$0xf0]
    %vm2596 = vcmask 1047556
    %v2597 = vsel %vm2596, %v2595, %v2593
    %2598 = vrot.lane.b32.xlu0 %v2597, 64
    %v2599 = vpop.permute.xlu0 %2598
    %vm2600 = vcmask 130048
    %s2601 = scalar_lea.vmem [#allocation0], 1412
    %2602 = vst.msk [vmem:[%s2601] ss:$8 sm:$0xf] %vm2600, %v2599
    %s2603 = scalar_lea.vmem [#allocation0], 1892
    %2604 = vst.msk [vmem:[%s2603] ss:$8 sm:$0xf0] %vm2600, %v2599
    %s2605 = scalar_lea.vmem [#allocation2], 416
    %v2606 = vld [vmem:[%s2605] ss:$8 sm:$0xf]
    %s2607 = scalar_lea.vmem [#allocation2], 385
    %v2608 = vld [vmem:[%s2607] ss:$8 sm:$0xf0]
    %vm2609 = vcmask 1047556
    %v2610 = vsel %vm2609, %v2608, %v2606
    %2611 = vrot.lane.b32.xlu0 %v2610, 64
    %v2612 = vpop.permute.xlu0 %2611
    %vm2613 = vcmask 130048
    %s2614 = scalar_lea.vmem [#allocation0], 420
    %2615 = vst.msk [vmem:[%s2614] ss:$8 sm:$0xf] %vm2613, %v2612
    %s2616 = scalar_lea.vmem [#allocation0], 900
    %2617 = vst.msk [vmem:[%s2616] ss:$8 sm:$0xf0] %vm2613, %v2612
    %s2618 = scalar_lea.vmem [#allocation2], 418
    %v2619 = vld [vmem:[%s2618] ss:$8 sm:$0xf]
    %s2620 = scalar_lea.vmem [#allocation2], 387
    %v2621 = vld [vmem:[%s2620] ss:$8 sm:$0xf0]
    %vm2622 = vcmask 1047556
    %v2623 = vsel %vm2622, %v2621, %v2619
    %2624 = vrot.lane.b32.xlu0 %v2623, 64
    %v2625 = vpop.permute.xlu0 %2624
    %vm2626 = vcmask 130048
    %s2627 = scalar_lea.vmem [#allocation0], 1444
    %2628 = vst.msk [vmem:[%s2627] ss:$8 sm:$0xf] %vm2626, %v2625
    %s2629 = scalar_lea.vmem [#allocation0], 1924
    %2630 = vst.msk [vmem:[%s2629] ss:$8 sm:$0xf0] %vm2626, %v2625
    %s2631 = scalar_lea.vmem [#allocation2], 448
    %v2632 = vld [vmem:[%s2631] ss:$8 sm:$0xf]
    %s2633 = scalar_lea.vmem [#allocation2], 417
    %v2634 = vld [vmem:[%s2633] ss:$8 sm:$0xf0]
    %vm2635 = vcmask 1047556
    %v2636 = vsel %vm2635, %v2634, %v2632
    %2637 = vrot.lane.b32.xlu0 %v2636, 64
    %v2638 = vpop.permute.xlu0 %2637
    %vm2639 = vcmask 130048
    %s2640 = scalar_lea.vmem [#allocation0], 452
    %2641 = vst.msk [vmem:[%s2640] ss:$8 sm:$0xf] %vm2639, %v2638
    %s2642 = scalar_lea.vmem [#allocation0], 932
    %2643 = vst.msk [vmem:[%s2642] ss:$8 sm:$0xf0] %vm2639, %v2638
    %s2644 = scalar_lea.vmem [#allocation2], 450
    %v2645 = vld [vmem:[%s2644] ss:$8 sm:$0xf]
    %s2646 = scalar_lea.vmem [#allocation2], 419
    %v2647 = vld [vmem:[%s2646] ss:$8 sm:$0xf0]
    %vm2648 = vcmask 1047556
    %v2649 = vsel %vm2648, %v2647, %v2645
    %2650 = vrot.lane.b32.xlu0 %v2649, 64
    %v2651 = vpop.permute.xlu0 %2650
    %vm2652 = vcmask 130048
    %s2653 = scalar_lea.vmem [#allocation0], 1476
    %2654 = vst.msk [vmem:[%s2653] ss:$8 sm:$0xf] %vm2652, %v2651
    %s2655 = scalar_lea.vmem [#allocation0], 1956
    %2656 = vst.msk [vmem:[%s2655] ss:$8 sm:$0xf0] %vm2652, %v2651
    %s2657 = scalar_lea.vmem [#allocation2], 480
    %v2658 = vld [vmem:[%s2657] ss:$8 sm:$0xf]
    %s2659 = scalar_lea.vmem [#allocation2], 449
    %v2660 = vld [vmem:[%s2659] ss:$8 sm:$0xf0]
    %vm2661 = vcmask 1047556
    %v2662 = vsel %vm2661, %v2660, %v2658
    %2663 = vrot.lane.b32.xlu0 %v2662, 64
    %v2664 = vpop.permute.xlu0 %2663
    %vm2665 = vcmask 130048
    %s2666 = scalar_lea.vmem [#allocation0], 484
    %2667 = vst.msk [vmem:[%s2666] ss:$8 sm:$0xf] %vm2665, %v2664
    %s2668 = scalar_lea.vmem [#allocation0], 964
    %2669 = vst.msk [vmem:[%s2668] ss:$8 sm:$0xf0] %vm2665, %v2664
    %s2670 = scalar_lea.vmem [#allocation2], 482
    %v2671 = vld [vmem:[%s2670] ss:$8 sm:$0xf]
    %s2672 = scalar_lea.vmem [#allocation2], 451
    %v2673 = vld [vmem:[%s2672] ss:$8 sm:$0xf0]
    %vm2674 = vcmask 1047556
    %v2675 = vsel %vm2674, %v2673, %v2671
    %2676 = vrot.lane.b32.xlu0 %v2675, 64
    %v2677 = vpop.permute.xlu0 %2676
    %vm2678 = vcmask 130048
    %s2679 = scalar_lea.vmem [#allocation0], 1508
    %2680 = vst.msk [vmem:[%s2679] ss:$8 sm:$0xf] %vm2678, %v2677
    %s2681 = scalar_lea.vmem [#allocation0], 1988
    %2682 = vst.msk [vmem:[%s2681] ss:$8 sm:$0xf0] %vm2678, %v2677
    %v2683 = vld [vmem:[#allocation2] ss:$8 sm:$0xf]
    %s2684 = scalar_lea.vmem [#allocation2], 4294967265
    %v2685 = vld [vmem:[%s2684] ss:$8 sm:$0xf0]
    %vm2686 = vcmask 1047556
    %v2687 = vsel %vm2686, %v2685, %v2683
    %2688 = vrot.lane.b32.xlu0 %v2687, 48
    %v2689 = vpop.permute.xlu0 %2688
    %vm2690 = vcmask 130048
    %s2691 = scalar_lea.vmem [#allocation0], 5
    %2692 = vst.msk [vmem:[%s2691] ss:$8 sm:$0xf] %vm2690, %v2689
    %s2693 = scalar_lea.vmem [#allocation0], 485
    %2694 = vst.msk [vmem:[%s2693] ss:$8 sm:$0xf0] %vm2690, %v2689
    %s2695 = scalar_lea.vmem [#allocation2], 2
    %v2696 = vld [vmem:[%s2695] ss:$8 sm:$0xf]
    %s2697 = scalar_lea.vmem [#allocation2], 4294967267
    %v2698 = vld [vmem:[%s2697] ss:$8 sm:$0xf0]
    %vm2699 = vcmask 1047556
    %v2700 = vsel %vm2699, %v2698, %v2696
    %2701 = vrot.lane.b32.xlu0 %v2700, 48
    %v2702 = vpop.permute.xlu0 %2701
    %vm2703 = vcmask 130048
    %s2704 = scalar_lea.vmem [#allocation0], 1029
    %2705 = vst.msk [vmem:[%s2704] ss:$8 sm:$0xf] %vm2703, %v2702
    %s2706 = scalar_lea.vmem [#allocation0], 1509
    %2707 = vst.msk [vmem:[%s2706] ss:$8 sm:$0xf0] %vm2703, %v2702
    %s2708 = scalar_lea.vmem [#allocation2], 32
    %v2709 = vld [vmem:[%s2708] ss:$8 sm:$0xf]
    %s2710 = scalar_lea.vmem [#allocation2], 1
    %v2711 = vld [vmem:[%s2710] ss:$8 sm:$0xf0]
    %vm2712 = vcmask 1047556
    %v2713 = vsel %vm2712, %v2711, %v2709
    %2714 = vrot.lane.b32.xlu0 %v2713, 48
    %v2715 = vpop.permute.xlu0 %2714
    %vm2716 = vcmask 130048
    %s2717 = scalar_lea.vmem [#allocation0], 37
    %2718 = vst.msk [vmem:[%s2717] ss:$8 sm:$0xf] %vm2716, %v2715
    %s2719 = scalar_lea.vmem [#allocation0], 517
    %2720 = vst.msk [vmem:[%s2719] ss:$8 sm:$0xf0] %vm2716, %v2715
    %s2721 = scalar_lea.vmem [#allocation2], 34
    %v2722 = vld [vmem:[%s2721] ss:$8 sm:$0xf]
    %s2723 = scalar_lea.vmem [#allocation2], 3
    %v2724 = vld [vmem:[%s2723] ss:$8 sm:$0xf0]
    %vm2725 = vcmask 1047556
    %v2726 = vsel %vm2725, %v2724, %v2722
    %2727 = vrot.lane.b32.xlu0 %v2726, 48
    %v2728 = vpop.permute.xlu0 %2727
    %vm2729 = vcmask 130048
    %s2730 = scalar_lea.vmem [#allocation0], 1061
    %2731 = vst.msk [vmem:[%s2730] ss:$8 sm:$0xf] %vm2729, %v2728
    %s2732 = scalar_lea.vmem [#allocation0], 1541
    %2733 = vst.msk [vmem:[%s2732] ss:$8 sm:$0xf0] %vm2729, %v2728
    %s2734 = scalar_lea.vmem [#allocation2], 64
    %v2735 = vld [vmem:[%s2734] ss:$8 sm:$0xf]
    %s2736 = scalar_lea.vmem [#allocation2], 33
    %v2737 = vld [vmem:[%s2736] ss:$8 sm:$0xf0]
    %vm2738 = vcmask 1047556
    %v2739 = vsel %vm2738, %v2737, %v2735
    %2740 = vrot.lane.b32.xlu0 %v2739, 48
    %v2741 = vpop.permute.xlu0 %2740
    %vm2742 = vcmask 130048
    %s2743 = scalar_lea.vmem [#allocation0], 69
    %2744 = vst.msk [vmem:[%s2743] ss:$8 sm:$0xf] %vm2742, %v2741
    %s2745 = scalar_lea.vmem [#allocation0], 549
    %2746 = vst.msk [vmem:[%s2745] ss:$8 sm:$0xf0] %vm2742, %v2741
    %s2747 = scalar_lea.vmem [#allocation2], 66
    %v2748 = vld [vmem:[%s2747] ss:$8 sm:$0xf]
    %s2749 = scalar_lea.vmem [#allocation2], 35
    %v2750 = vld [vmem:[%s2749] ss:$8 sm:$0xf0]
    %vm2751 = vcmask 1047556
    %v2752 = vsel %vm2751, %v2750, %v2748
    %2753 = vrot.lane.b32.xlu0 %v2752, 48
    %v2754 = vpop.permute.xlu0 %2753
    %vm2755 = vcmask 130048
    %s2756 = scalar_lea.vmem [#allocation0], 1093
    %2757 = vst.msk [vmem:[%s2756] ss:$8 sm:$0xf] %vm2755, %v2754
    %s2758 = scalar_lea.vmem [#allocation0], 1573
    %2759 = vst.msk [vmem:[%s2758] ss:$8 sm:$0xf0] %vm2755, %v2754
    %s2760 = scalar_lea.vmem [#allocation2], 96
    %v2761 = vld [vmem:[%s2760] ss:$8 sm:$0xf]
    %s2762 = scalar_lea.vmem [#allocation2], 65
    %v2763 = vld [vmem:[%s2762] ss:$8 sm:$0xf0]
    %vm2764 = vcmask 1047556
    %v2765 = vsel %vm2764, %v2763, %v2761
    %2766 = vrot.lane.b32.xlu0 %v2765, 48
    %v2767 = vpop.permute.xlu0 %2766
    %vm2768 = vcmask 130048
    %s2769 = scalar_lea.vmem [#allocation0], 101
    %2770 = vst.msk [vmem:[%s2769] ss:$8 sm:$0xf] %vm2768, %v2767
    %s2771 = scalar_lea.vmem [#allocation0], 581
    %2772 = vst.msk [vmem:[%s2771] ss:$8 sm:$0xf0] %vm2768, %v2767
    %s2773 = scalar_lea.vmem [#allocation2], 98
    %v2774 = vld [vmem:[%s2773] ss:$8 sm:$0xf]
    %s2775 = scalar_lea.vmem [#allocation2], 67
    %v2776 = vld [vmem:[%s2775] ss:$8 sm:$0xf0]
    %vm2777 = vcmask 1047556
    %v2778 = vsel %vm2777, %v2776, %v2774
    %2779 = vrot.lane.b32.xlu0 %v2778, 48
    %v2780 = vpop.permute.xlu0 %2779
    %vm2781 = vcmask 130048
    %s2782 = scalar_lea.vmem [#allocation0], 1125
    %2783 = vst.msk [vmem:[%s2782] ss:$8 sm:$0xf] %vm2781, %v2780
    %s2784 = scalar_lea.vmem [#allocation0], 1605
    %2785 = vst.msk [vmem:[%s2784] ss:$8 sm:$0xf0] %vm2781, %v2780
    %s2786 = scalar_lea.vmem [#allocation2], 128
    %v2787 = vld [vmem:[%s2786] ss:$8 sm:$0xf]
    %s2788 = scalar_lea.vmem [#allocation2], 97
    %v2789 = vld [vmem:[%s2788] ss:$8 sm:$0xf0]
    %vm2790 = vcmask 1047556
    %v2791 = vsel %vm2790, %v2789, %v2787
    %2792 = vrot.lane.b32.xlu0 %v2791, 48
    %v2793 = vpop.permute.xlu0 %2792
    %vm2794 = vcmask 130048
    %s2795 = scalar_lea.vmem [#allocation0], 133
    %2796 = vst.msk [vmem:[%s2795] ss:$8 sm:$0xf] %vm2794, %v2793
    %s2797 = scalar_lea.vmem [#allocation0], 613
    %2798 = vst.msk [vmem:[%s2797] ss:$8 sm:$0xf0] %vm2794, %v2793
    %s2799 = scalar_lea.vmem [#allocation2], 130
    %v2800 = vld [vmem:[%s2799] ss:$8 sm:$0xf]
    %s2801 = scalar_lea.vmem [#allocation2], 99
    %v2802 = vld [vmem:[%s2801] ss:$8 sm:$0xf0]
    %vm2803 = vcmask 1047556
    %v2804 = vsel %vm2803, %v2802, %v2800
    %2805 = vrot.lane.b32.xlu0 %v2804, 48
    %v2806 = vpop.permute.xlu0 %2805
    %vm2807 = vcmask 130048
    %s2808 = scalar_lea.vmem [#allocation0], 1157
    %2809 = vst.msk [vmem:[%s2808] ss:$8 sm:$0xf] %vm2807, %v2806
    %s2810 = scalar_lea.vmem [#allocation0], 1637
    %2811 = vst.msk [vmem:[%s2810] ss:$8 sm:$0xf0] %vm2807, %v2806
    %s2812 = scalar_lea.vmem [#allocation2], 160
    %v2813 = vld [vmem:[%s2812] ss:$8 sm:$0xf]
    %s2814 = scalar_lea.vmem [#allocation2], 129
    %v2815 = vld [vmem:[%s2814] ss:$8 sm:$0xf0]
    %vm2816 = vcmask 1047556
    %v2817 = vsel %vm2816, %v2815, %v2813
    %2818 = vrot.lane.b32.xlu0 %v2817, 48
    %v2819 = vpop.permute.xlu0 %2818
    %vm2820 = vcmask 130048
    %s2821 = scalar_lea.vmem [#allocation0], 165
    %2822 = vst.msk [vmem:[%s2821] ss:$8 sm:$0xf] %vm2820, %v2819
    %s2823 = scalar_lea.vmem [#allocation0], 645
    %2824 = vst.msk [vmem:[%s2823] ss:$8 sm:$0xf0] %vm2820, %v2819
    %s2825 = scalar_lea.vmem [#allocation2], 162
    %v2826 = vld [vmem:[%s2825] ss:$8 sm:$0xf]
    %s2827 = scalar_lea.vmem [#allocation2], 131
    %v2828 = vld [vmem:[%s2827] ss:$8 sm:$0xf0]
    %vm2829 = vcmask 1047556
    %v2830 = vsel %vm2829, %v2828, %v2826
    %2831 = vrot.lane.b32.xlu0 %v2830, 48
    %v2832 = vpop.permute.xlu0 %2831
    %vm2833 = vcmask 130048
    %s2834 = scalar_lea.vmem [#allocation0], 1189
    %2835 = vst.msk [vmem:[%s2834] ss:$8 sm:$0xf] %vm2833, %v2832
    %s2836 = scalar_lea.vmem [#allocation0], 1669
    %2837 = vst.msk [vmem:[%s2836] ss:$8 sm:$0xf0] %vm2833, %v2832
    %s2838 = scalar_lea.vmem [#allocation2], 192
    %v2839 = vld [vmem:[%s2838] ss:$8 sm:$0xf]
    %s2840 = scalar_lea.vmem [#allocation2], 161
    %v2841 = vld [vmem:[%s2840] ss:$8 sm:$0xf0]
    %vm2842 = vcmask 1047556
    %v2843 = vsel %vm2842, %v2841, %v2839
    %2844 = vrot.lane.b32.xlu0 %v2843, 48
    %v2845 = vpop.permute.xlu0 %2844
    %vm2846 = vcmask 130048
    %s2847 = scalar_lea.vmem [#allocation0], 197
    %2848 = vst.msk [vmem:[%s2847] ss:$8 sm:$0xf] %vm2846, %v2845
    %s2849 = scalar_lea.vmem [#allocation0], 677
    %2850 = vst.msk [vmem:[%s2849] ss:$8 sm:$0xf0] %vm2846, %v2845
    %s2851 = scalar_lea.vmem [#allocation2], 194
    %v2852 = vld [vmem:[%s2851] ss:$8 sm:$0xf]
    %s2853 = scalar_lea.vmem [#allocation2], 163
    %v2854 = vld [vmem:[%s2853] ss:$8 sm:$0xf0]
    %vm2855 = vcmask 1047556
    %v2856 = vsel %vm2855, %v2854, %v2852
    %2857 = vrot.lane.b32.xlu0 %v2856, 48
    %v2858 = vpop.permute.xlu0 %2857
    %vm2859 = vcmask 130048
    %s2860 = scalar_lea.vmem [#allocation0], 1221
    %2861 = vst.msk [vmem:[%s2860] ss:$8 sm:$0xf] %vm2859, %v2858
    %s2862 = scalar_lea.vmem [#allocation0], 1701
    %2863 = vst.msk [vmem:[%s2862] ss:$8 sm:$0xf0] %vm2859, %v2858
    %s2864 = scalar_lea.vmem [#allocation2], 224
    %v2865 = vld [vmem:[%s2864] ss:$8 sm:$0xf]
    %s2866 = scalar_lea.vmem [#allocation2], 193
    %v2867 = vld [vmem:[%s2866] ss:$8 sm:$0xf0]
    %vm2868 = vcmask 1047556
    %v2869 = vsel %vm2868, %v2867, %v2865
    %2870 = vrot.lane.b32.xlu0 %v2869, 48
    %v2871 = vpop.permute.xlu0 %2870
    %vm2872 = vcmask 130048
    %s2873 = scalar_lea.vmem [#allocation0], 229
    %2874 = vst.msk [vmem:[%s2873] ss:$8 sm:$0xf] %vm2872, %v2871
    %s2875 = scalar_lea.vmem [#allocation0], 709
    %2876 = vst.msk [vmem:[%s2875] ss:$8 sm:$0xf0] %vm2872, %v2871
    %s2877 = scalar_lea.vmem [#allocation2], 226
    %v2878 = vld [vmem:[%s2877] ss:$8 sm:$0xf]
    %s2879 = scalar_lea.vmem [#allocation2], 195
    %v2880 = vld [vmem:[%s2879] ss:$8 sm:$0xf0]
    %vm2881 = vcmask 1047556
    %v2882 = vsel %vm2881, %v2880, %v2878
    %2883 = vrot.lane.b32.xlu0 %v2882, 48
    %v2884 = vpop.permute.xlu0 %2883
    %vm2885 = vcmask 130048
    %s2886 = scalar_lea.vmem [#allocation0], 1253
    %2887 = vst.msk [vmem:[%s2886] ss:$8 sm:$0xf] %vm2885, %v2884
    %s2888 = scalar_lea.vmem [#allocation0], 1733
    %2889 = vst.msk [vmem:[%s2888] ss:$8 sm:$0xf0] %vm2885, %v2884
    %s2890 = scalar_lea.vmem [#allocation2], 256
    %v2891 = vld [vmem:[%s2890] ss:$8 sm:$0xf]
    %s2892 = scalar_lea.vmem [#allocation2], 225
    %v2893 = vld [vmem:[%s2892] ss:$8 sm:$0xf0]
    %vm2894 = vcmask 1047556
    %v2895 = vsel %vm2894, %v2893, %v2891
    %2896 = vrot.lane.b32.xlu0 %v2895, 48
    %v2897 = vpop.permute.xlu0 %2896
    %vm2898 = vcmask 130048
    %s2899 = scalar_lea.vmem [#allocation0], 261
    %2900 = vst.msk [vmem:[%s2899] ss:$8 sm:$0xf] %vm2898, %v2897
    %s2901 = scalar_lea.vmem [#allocation0], 741
    %2902 = vst.msk [vmem:[%s2901] ss:$8 sm:$0xf0] %vm2898, %v2897
    %s2903 = scalar_lea.vmem [#allocation2], 258
    %v2904 = vld [vmem:[%s2903] ss:$8 sm:$0xf]
    %s2905 = scalar_lea.vmem [#allocation2], 227
    %v2906 = vld [vmem:[%s2905] ss:$8 sm:$0xf0]
    %vm2907 = vcmask 1047556
    %v2908 = vsel %vm2907, %v2906, %v2904
    %2909 = vrot.lane.b32.xlu0 %v2908, 48
    %v2910 = vpop.permute.xlu0 %2909
    %vm2911 = vcmask 130048
    %s2912 = scalar_lea.vmem [#allocation0], 1285
    %2913 = vst.msk [vmem:[%s2912] ss:$8 sm:$0xf] %vm2911, %v2910
    %s2914 = scalar_lea.vmem [#allocation0], 1765
    %2915 = vst.msk [vmem:[%s2914] ss:$8 sm:$0xf0] %vm2911, %v2910
    %s2916 = scalar_lea.vmem [#allocation2], 288
    %v2917 = vld [vmem:[%s2916] ss:$8 sm:$0xf]
    %s2918 = scalar_lea.vmem [#allocation2], 257
    %v2919 = vld [vmem:[%s2918] ss:$8 sm:$0xf0]
    %vm2920 = vcmask 1047556
    %v2921 = vsel %vm2920, %v2919, %v2917
    %2922 = vrot.lane.b32.xlu0 %v2921, 48
    %v2923 = vpop.permute.xlu0 %2922
    %vm2924 = vcmask 130048
    %s2925 = scalar_lea.vmem [#allocation0], 293
    %2926 = vst.msk [vmem:[%s2925] ss:$8 sm:$0xf] %vm2924, %v2923
    %s2927 = scalar_lea.vmem [#allocation0], 773
    %2928 = vst.msk [vmem:[%s2927] ss:$8 sm:$0xf0] %vm2924, %v2923
    %s2929 = scalar_lea.vmem [#allocation2], 290
    %v2930 = vld [vmem:[%s2929] ss:$8 sm:$0xf]
    %s2931 = scalar_lea.vmem [#allocation2], 259
    %v2932 = vld [vmem:[%s2931] ss:$8 sm:$0xf0]
    %vm2933 = vcmask 1047556
    %v2934 = vsel %vm2933, %v2932, %v2930
    %2935 = vrot.lane.b32.xlu0 %v2934, 48
    %v2936 = vpop.permute.xlu0 %2935
    %vm2937 = vcmask 130048
    %s2938 = scalar_lea.vmem [#allocation0], 1317
    %2939 = vst.msk [vmem:[%s2938] ss:$8 sm:$0xf] %vm2937, %v2936
    %s2940 = scalar_lea.vmem [#allocation0], 1797
    %2941 = vst.msk [vmem:[%s2940] ss:$8 sm:$0xf0] %vm2937, %v2936
    %s2942 = scalar_lea.vmem [#allocation2], 320
    %v2943 = vld [vmem:[%s2942] ss:$8 sm:$0xf]
    %s2944 = scalar_lea.vmem [#allocation2], 289
    %v2945 = vld [vmem:[%s2944] ss:$8 sm:$0xf0]
    %vm2946 = vcmask 1047556
    %v2947 = vsel %vm2946, %v2945, %v2943
    %2948 = vrot.lane.b32.xlu0 %v2947, 48
    %v2949 = vpop.permute.xlu0 %2948
    %vm2950 = vcmask 130048
    %s2951 = scalar_lea.vmem [#allocation0], 325
    %2952 = vst.msk [vmem:[%s2951] ss:$8 sm:$0xf] %vm2950, %v2949
    %s2953 = scalar_lea.vmem [#allocation0], 805
    %2954 = vst.msk [vmem:[%s2953] ss:$8 sm:$0xf0] %vm2950, %v2949
    %s2955 = scalar_lea.vmem [#allocation2], 322
    %v2956 = vld [vmem:[%s2955] ss:$8 sm:$0xf]
    %s2957 = scalar_lea.vmem [#allocation2], 291
    %v2958 = vld [vmem:[%s2957] ss:$8 sm:$0xf0]
    %vm2959 = vcmask 1047556
    %v2960 = vsel %vm2959, %v2958, %v2956
    %2961 = vrot.lane.b32.xlu0 %v2960, 48
    %v2962 = vpop.permute.xlu0 %2961
    %vm2963 = vcmask 130048
    %s2964 = scalar_lea.vmem [#allocation0], 1349
    %2965 = vst.msk [vmem:[%s2964] ss:$8 sm:$0xf] %vm2963, %v2962
    %s2966 = scalar_lea.vmem [#allocation0], 1829
    %2967 = vst.msk [vmem:[%s2966] ss:$8 sm:$0xf0] %vm2963, %v2962
    %s2968 = scalar_lea.vmem [#allocation2], 352
    %v2969 = vld [vmem:[%s2968] ss:$8 sm:$0xf]
    %s2970 = scalar_lea.vmem [#allocation2], 321
    %v2971 = vld [vmem:[%s2970] ss:$8 sm:$0xf0]
    %vm2972 = vcmask 1047556
    %v2973 = vsel %vm2972, %v2971, %v2969
    %2974 = vrot.lane.b32.xlu0 %v2973, 48
    %v2975 = vpop.permute.xlu0 %2974
    %vm2976 = vcmask 130048
    %s2977 = scalar_lea.vmem [#allocation0], 357
    %2978 = vst.msk [vmem:[%s2977] ss:$8 sm:$0xf] %vm2976, %v2975
    %s2979 = scalar_lea.vmem [#allocation0], 837
    %2980 = vst.msk [vmem:[%s2979] ss:$8 sm:$0xf0] %vm2976, %v2975
    %s2981 = scalar_lea.vmem [#allocation2], 354
    %v2982 = vld [vmem:[%s2981] ss:$8 sm:$0xf]
    %s2983 = scalar_lea.vmem [#allocation2], 323
    %v2984 = vld [vmem:[%s2983] ss:$8 sm:$0xf0]
    %vm2985 = vcmask 1047556
    %v2986 = vsel %vm2985, %v2984, %v2982
    %2987 = vrot.lane.b32.xlu0 %v2986, 48
    %v2988 = vpop.permute.xlu0 %2987
    %vm2989 = vcmask 130048
    %s2990 = scalar_lea.vmem [#allocation0], 1381
    %2991 = vst.msk [vmem:[%s2990] ss:$8 sm:$0xf] %vm2989, %v2988
    %s2992 = scalar_lea.vmem [#allocation0], 1861
    %2993 = vst.msk [vmem:[%s2992] ss:$8 sm:$0xf0] %vm2989, %v2988
    %s2994 = scalar_lea.vmem [#allocation2], 384
    %v2995 = vld [vmem:[%s2994] ss:$8 sm:$0xf]
    %s2996 = scalar_lea.vmem [#allocation2], 353
    %v2997 = vld [vmem:[%s2996] ss:$8 sm:$0xf0]
    %vm2998 = vcmask 1047556
    %v2999 = vsel %vm2998, %v2997, %v2995
    %3000 = vrot.lane.b32.xlu0 %v2999, 48
    %v3001 = vpop.permute.xlu0 %3000
    %vm3002 = vcmask 130048
    %s3003 = scalar_lea.vmem [#allocation0], 389
    %3004 = vst.msk [vmem:[%s3003] ss:$8 sm:$0xf] %vm3002, %v3001
    %s3005 = scalar_lea.vmem [#allocation0], 869
    %3006 = vst.msk [vmem:[%s3005] ss:$8 sm:$0xf0] %vm3002, %v3001
    %s3007 = scalar_lea.vmem [#allocation2], 386
    %v3008 = vld [vmem:[%s3007] ss:$8 sm:$0xf]
    %s3009 = scalar_lea.vmem [#allocation2], 355
    %v3010 = vld [vmem:[%s3009] ss:$8 sm:$0xf0]
    %vm3011 = vcmask 1047556
    %v3012 = vsel %vm3011, %v3010, %v3008
    %3013 = vrot.lane.b32.xlu0 %v3012, 48
    %v3014 = vpop.permute.xlu0 %3013
    %vm3015 = vcmask 130048
    %s3016 = scalar_lea.vmem [#allocation0], 1413
    %3017 = vst.msk [vmem:[%s3016] ss:$8 sm:$0xf] %vm3015, %v3014
    %s3018 = scalar_lea.vmem [#allocation0], 1893
    %3019 = vst.msk [vmem:[%s3018] ss:$8 sm:$0xf0] %vm3015, %v3014
    %s3020 = scalar_lea.vmem [#allocation2], 416
    %v3021 = vld [vmem:[%s3020] ss:$8 sm:$0xf]
    %s3022 = scalar_lea.vmem [#allocation2], 385
    %v3023 = vld [vmem:[%s3022] ss:$8 sm:$0xf0]
    %vm3024 = vcmask 1047556
    %v3025 = vsel %vm3024, %v3023, %v3021
    %3026 = vrot.lane.b32.xlu0 %v3025, 48
    %v3027 = vpop.permute.xlu0 %3026
    %vm3028 = vcmask 130048
    %s3029 = scalar_lea.vmem [#allocation0], 421
    %3030 = vst.msk [vmem:[%s3029] ss:$8 sm:$0xf] %vm3028, %v3027
    %s3031 = scalar_lea.vmem [#allocation0], 901
    %3032 = vst.msk [vmem:[%s3031] ss:$8 sm:$0xf0] %vm3028, %v3027
    %s3033 = scalar_lea.vmem [#allocation2], 418
    %v3034 = vld [vmem:[%s3033] ss:$8 sm:$0xf]
    %s3035 = scalar_lea.vmem [#allocation2], 387
    %v3036 = vld [vmem:[%s3035] ss:$8 sm:$0xf0]
    %vm3037 = vcmask 1047556
    %v3038 = vsel %vm3037, %v3036, %v3034
    %3039 = vrot.lane.b32.xlu0 %v3038, 48
    %v3040 = vpop.permute.xlu0 %3039
    %vm3041 = vcmask 130048
    %s3042 = scalar_lea.vmem [#allocation0], 1445
    %3043 = vst.msk [vmem:[%s3042] ss:$8 sm:$0xf] %vm3041, %v3040
    %s3044 = scalar_lea.vmem [#allocation0], 1925
    %3045 = vst.msk [vmem:[%s3044] ss:$8 sm:$0xf0] %vm3041, %v3040
    %s3046 = scalar_lea.vmem [#allocation2], 448
    %v3047 = vld [vmem:[%s3046] ss:$8 sm:$0xf]
    %s3048 = scalar_lea.vmem [#allocation2], 417
    %v3049 = vld [vmem:[%s3048] ss:$8 sm:$0xf0]
    %vm3050 = vcmask 1047556
    %v3051 = vsel %vm3050, %v3049, %v3047
    %3052 = vrot.lane.b32.xlu0 %v3051, 48
    %v3053 = vpop.permute.xlu0 %3052
    %vm3054 = vcmask 130048
    %s3055 = scalar_lea.vmem [#allocation0], 453
    %3056 = vst.msk [vmem:[%s3055] ss:$8 sm:$0xf] %vm3054, %v3053
    %s3057 = scalar_lea.vmem [#allocation0], 933
    %3058 = vst.msk [vmem:[%s3057] ss:$8 sm:$0xf0] %vm3054, %v3053
    %s3059 = scalar_lea.vmem [#allocation2], 450
    %v3060 = vld [vmem:[%s3059] ss:$8 sm:$0xf]
    %s3061 = scalar_lea.vmem [#allocation2], 419
    %v3062 = vld [vmem:[%s3061] ss:$8 sm:$0xf0]
    %vm3063 = vcmask 1047556
    %v3064 = vsel %vm3063, %v3062, %v3060
    %3065 = vrot.lane.b32.xlu0 %v3064, 48
    %v3066 = vpop.permute.xlu0 %3065
    %vm3067 = vcmask 130048
    %s3068 = scalar_lea.vmem [#allocation0], 1477
    %3069 = vst.msk [vmem:[%s3068] ss:$8 sm:$0xf] %vm3067, %v3066
    %s3070 = scalar_lea.vmem [#allocation0], 1957
    %3071 = vst.msk [vmem:[%s3070] ss:$8 sm:$0xf0] %vm3067, %v3066
    %s3072 = scalar_lea.vmem [#allocation2], 480
    %v3073 = vld [vmem:[%s3072] ss:$8 sm:$0xf]
    %s3074 = scalar_lea.vmem [#allocation2], 449
    %v3075 = vld [vmem:[%s3074] ss:$8 sm:$0xf0]
    %vm3076 = vcmask 1047556
    %v3077 = vsel %vm3076, %v3075, %v3073
    %3078 = vrot.lane.b32.xlu0 %v3077, 48
    %v3079 = vpop.permute.xlu0 %3078
    %vm3080 = vcmask 130048
    %s3081 = scalar_lea.vmem [#allocation0], 485
    %3082 = vst.msk [vmem:[%s3081] ss:$8 sm:$0xf] %vm3080, %v3079
    %s3083 = scalar_lea.vmem [#allocation0], 965
    %3084 = vst.msk [vmem:[%s3083] ss:$8 sm:$0xf0] %vm3080, %v3079
    %s3085 = scalar_lea.vmem [#allocation2], 482
    %v3086 = vld [vmem:[%s3085] ss:$8 sm:$0xf]
    %s3087 = scalar_lea.vmem [#allocation2], 451
    %v3088 = vld [vmem:[%s3087] ss:$8 sm:$0xf0]
    %vm3089 = vcmask 1047556
    %v3090 = vsel %vm3089, %v3088, %v3086
    %3091 = vrot.lane.b32.xlu0 %v3090, 48
    %v3092 = vpop.permute.xlu0 %3091
    %vm3093 = vcmask 130048
    %s3094 = scalar_lea.vmem [#allocation0], 1509
    %3095 = vst.msk [vmem:[%s3094] ss:$8 sm:$0xf] %vm3093, %v3092
    %s3096 = scalar_lea.vmem [#allocation0], 1989
    %3097 = vst.msk [vmem:[%s3096] ss:$8 sm:$0xf0] %vm3093, %v3092
    %v3098 = vld [vmem:[#allocation2] ss:$8 sm:$0xf]
    %s3099 = scalar_lea.vmem [#allocation2], 4294967265
    %v3100 = vld [vmem:[%s3099] ss:$8 sm:$0xf0]
    %vm3101 = vcmask 1047556
    %v3102 = vsel %vm3101, %v3100, %v3098
    %3103 = vrot.lane.b32.xlu0 %v3102, 32
    %v3104 = vpop.permute.xlu0 %3103
    %vm3105 = vcmask 130048
    %s3106 = scalar_lea.vmem [#allocation0], 6
    %3107 = vst.msk [vmem:[%s3106] ss:$8 sm:$0xf] %vm3105, %v3104
    %s3108 = scalar_lea.vmem [#allocation0], 486
    %3109 = vst.msk [vmem:[%s3108] ss:$8 sm:$0xf0] %vm3105, %v3104
    %s3110 = scalar_lea.vmem [#allocation2], 2
    %v3111 = vld [vmem:[%s3110] ss:$8 sm:$0xf]
    %s3112 = scalar_lea.vmem [#allocation2], 4294967267
    %v3113 = vld [vmem:[%s3112] ss:$8 sm:$0xf0]
    %vm3114 = vcmask 1047556
    %v3115 = vsel %vm3114, %v3113, %v3111
    %3116 = vrot.lane.b32.xlu0 %v3115, 32
    %v3117 = vpop.permute.xlu0 %3116
    %vm3118 = vcmask 130048
    %s3119 = scalar_lea.vmem [#allocation0], 1030
    %3120 = vst.msk [vmem:[%s3119] ss:$8 sm:$0xf] %vm3118, %v3117
    %s3121 = scalar_lea.vmem [#allocation0], 1510
    %3122 = vst.msk [vmem:[%s3121] ss:$8 sm:$0xf0] %vm3118, %v3117
    %s3123 = scalar_lea.vmem [#allocation2], 32
    %v3124 = vld [vmem:[%s3123] ss:$8 sm:$0xf]
    %s3125 = scalar_lea.vmem [#allocation2], 1
    %v3126 = vld [vmem:[%s3125] ss:$8 sm:$0xf0]
    %vm3127 = vcmask 1047556
    %v3128 = vsel %vm3127, %v3126, %v3124
    %3129 = vrot.lane.b32.xlu0 %v3128, 32
    %v3130 = vpop.permute.xlu0 %3129
    %vm3131 = vcmask 130048
    %s3132 = scalar_lea.vmem [#allocation0], 38
    %3133 = vst.msk [vmem:[%s3132] ss:$8 sm:$0xf] %vm3131, %v3130
    %s3134 = scalar_lea.vmem [#allocation0], 518
    %3135 = vst.msk [vmem:[%s3134] ss:$8 sm:$0xf0] %vm3131, %v3130
    %s3136 = scalar_lea.vmem [#allocation2], 34
    %v3137 = vld [vmem:[%s3136] ss:$8 sm:$0xf]
    %s3138 = scalar_lea.vmem [#allocation2], 3
    %v3139 = vld [vmem:[%s3138] ss:$8 sm:$0xf0]
    %vm3140 = vcmask 1047556
    %v3141 = vsel %vm3140, %v3139, %v3137
    %3142 = vrot.lane.b32.xlu0 %v3141, 32
    %v3143 = vpop.permute.xlu0 %3142
    %vm3144 = vcmask 130048
    %s3145 = scalar_lea.vmem [#allocation0], 1062
    %3146 = vst.msk [vmem:[%s3145] ss:$8 sm:$0xf] %vm3144, %v3143
    %s3147 = scalar_lea.vmem [#allocation0], 1542
    %3148 = vst.msk [vmem:[%s3147] ss:$8 sm:$0xf0] %vm3144, %v3143
    %s3149 = scalar_lea.vmem [#allocation2], 64
    %v3150 = vld [vmem:[%s3149] ss:$8 sm:$0xf]
    %s3151 = scalar_lea.vmem [#allocation2], 33
    %v3152 = vld [vmem:[%s3151] ss:$8 sm:$0xf0]
    %vm3153 = vcmask 1047556
    %v3154 = vsel %vm3153, %v3152, %v3150
    %3155 = vrot.lane.b32.xlu0 %v3154, 32
    %v3156 = vpop.permute.xlu0 %3155
    %vm3157 = vcmask 130048
    %s3158 = scalar_lea.vmem [#allocation0], 70
    %3159 = vst.msk [vmem:[%s3158] ss:$8 sm:$0xf] %vm3157, %v3156
    %s3160 = scalar_lea.vmem [#allocation0], 550
    %3161 = vst.msk [vmem:[%s3160] ss:$8 sm:$0xf0] %vm3157, %v3156
    %s3162 = scalar_lea.vmem [#allocation2], 66
    %v3163 = vld [vmem:[%s3162] ss:$8 sm:$0xf]
    %s3164 = scalar_lea.vmem [#allocation2], 35
    %v3165 = vld [vmem:[%s3164] ss:$8 sm:$0xf0]
    %vm3166 = vcmask 1047556
    %v3167 = vsel %vm3166, %v3165, %v3163
    %3168 = vrot.lane.b32.xlu0 %v3167, 32
    %v3169 = vpop.permute.xlu0 %3168
    %vm3170 = vcmask 130048
    %s3171 = scalar_lea.vmem [#allocation0], 1094
    %3172 = vst.msk [vmem:[%s3171] ss:$8 sm:$0xf] %vm3170, %v3169
    %s3173 = scalar_lea.vmem [#allocation0], 1574
    %3174 = vst.msk [vmem:[%s3173] ss:$8 sm:$0xf0] %vm3170, %v3169
    %s3175 = scalar_lea.vmem [#allocation2], 96
    %v3176 = vld [vmem:[%s3175] ss:$8 sm:$0xf]
    %s3177 = scalar_lea.vmem [#allocation2], 65
    %v3178 = vld [vmem:[%s3177] ss:$8 sm:$0xf0]
    %vm3179 = vcmask 1047556
    %v3180 = vsel %vm3179, %v3178, %v3176
    %3181 = vrot.lane.b32.xlu0 %v3180, 32
    %v3182 = vpop.permute.xlu0 %3181
    %vm3183 = vcmask 130048
    %s3184 = scalar_lea.vmem [#allocation0], 102
    %3185 = vst.msk [vmem:[%s3184] ss:$8 sm:$0xf] %vm3183, %v3182
    %s3186 = scalar_lea.vmem [#allocation0], 582
    %3187 = vst.msk [vmem:[%s3186] ss:$8 sm:$0xf0] %vm3183, %v3182
    %s3188 = scalar_lea.vmem [#allocation2], 98
    %v3189 = vld [vmem:[%s3188] ss:$8 sm:$0xf]
    %s3190 = scalar_lea.vmem [#allocation2], 67
    %v3191 = vld [vmem:[%s3190] ss:$8 sm:$0xf0]
    %vm3192 = vcmask 1047556
    %v3193 = vsel %vm3192, %v3191, %v3189
    %3194 = vrot.lane.b32.xlu0 %v3193, 32
    %v3195 = vpop.permute.xlu0 %3194
    %vm3196 = vcmask 130048
    %s3197 = scalar_lea.vmem [#allocation0], 1126
    %3198 = vst.msk [vmem:[%s3197] ss:$8 sm:$0xf] %vm3196, %v3195
    %s3199 = scalar_lea.vmem [#allocation0], 1606
    %3200 = vst.msk [vmem:[%s3199] ss:$8 sm:$0xf0] %vm3196, %v3195
    %s3201 = scalar_lea.vmem [#allocation2], 128
    %v3202 = vld [vmem:[%s3201] ss:$8 sm:$0xf]
    %s3203 = scalar_lea.vmem [#allocation2], 97
    %v3204 = vld [vmem:[%s3203] ss:$8 sm:$0xf0]
    %vm3205 = vcmask 1047556
    %v3206 = vsel %vm3205, %v3204, %v3202
    %3207 = vrot.lane.b32.xlu0 %v3206, 32
    %v3208 = vpop.permute.xlu0 %3207
    %vm3209 = vcmask 130048
    %s3210 = scalar_lea.vmem [#allocation0], 134
    %3211 = vst.msk [vmem:[%s3210] ss:$8 sm:$0xf] %vm3209, %v3208
    %s3212 = scalar_lea.vmem [#allocation0], 614
    %3213 = vst.msk [vmem:[%s3212] ss:$8 sm:$0xf0] %vm3209, %v3208
    %s3214 = scalar_lea.vmem [#allocation2], 130
    %v3215 = vld [vmem:[%s3214] ss:$8 sm:$0xf]
    %s3216 = scalar_lea.vmem [#allocation2], 99
    %v3217 = vld [vmem:[%s3216] ss:$8 sm:$0xf0]
    %vm3218 = vcmask 1047556
    %v3219 = vsel %vm3218, %v3217, %v3215
    %3220 = vrot.lane.b32.xlu0 %v3219, 32
    %v3221 = vpop.permute.xlu0 %3220
    %vm3222 = vcmask 130048
    %s3223 = scalar_lea.vmem [#allocation0], 1158
    %3224 = vst.msk [vmem:[%s3223] ss:$8 sm:$0xf] %vm3222, %v3221
    %s3225 = scalar_lea.vmem [#allocation0], 1638
    %3226 = vst.msk [vmem:[%s3225] ss:$8 sm:$0xf0] %vm3222, %v3221
    %s3227 = scalar_lea.vmem [#allocation2], 160
    %v3228 = vld [vmem:[%s3227] ss:$8 sm:$0xf]
    %s3229 = scalar_lea.vmem [#allocation2], 129
    %v3230 = vld [vmem:[%s3229] ss:$8 sm:$0xf0]
    %vm3231 = vcmask 1047556
    %v3232 = vsel %vm3231, %v3230, %v3228
    %3233 = vrot.lane.b32.xlu0 %v3232, 32
    %v3234 = vpop.permute.xlu0 %3233
    %vm3235 = vcmask 130048
    %s3236 = scalar_lea.vmem [#allocation0], 166
    %3237 = vst.msk [vmem:[%s3236] ss:$8 sm:$0xf] %vm3235, %v3234
    %s3238 = scalar_lea.vmem [#allocation0], 646
    %3239 = vst.msk [vmem:[%s3238] ss:$8 sm:$0xf0] %vm3235, %v3234
    %s3240 = scalar_lea.vmem [#allocation2], 162
    %v3241 = vld [vmem:[%s3240] ss:$8 sm:$0xf]
    %s3242 = scalar_lea.vmem [#allocation2], 131
    %v3243 = vld [vmem:[%s3242] ss:$8 sm:$0xf0]
    %vm3244 = vcmask 1047556
    %v3245 = vsel %vm3244, %v3243, %v3241
    %3246 = vrot.lane.b32.xlu0 %v3245, 32
    %v3247 = vpop.permute.xlu0 %3246
    %vm3248 = vcmask 130048
    %s3249 = scalar_lea.vmem [#allocation0], 1190
    %3250 = vst.msk [vmem:[%s3249] ss:$8 sm:$0xf] %vm3248, %v3247
    %s3251 = scalar_lea.vmem [#allocation0], 1670
    %3252 = vst.msk [vmem:[%s3251] ss:$8 sm:$0xf0] %vm3248, %v3247
    %s3253 = scalar_lea.vmem [#allocation2], 192
    %v3254 = vld [vmem:[%s3253] ss:$8 sm:$0xf]
    %s3255 = scalar_lea.vmem [#allocation2], 161
    %v3256 = vld [vmem:[%s3255] ss:$8 sm:$0xf0]
    %vm3257 = vcmask 1047556
    %v3258 = vsel %vm3257, %v3256, %v3254
    %3259 = vrot.lane.b32.xlu0 %v3258, 32
    %v3260 = vpop.permute.xlu0 %3259
    %vm3261 = vcmask 130048
    %s3262 = scalar_lea.vmem [#allocation0], 198
    %3263 = vst.msk [vmem:[%s3262] ss:$8 sm:$0xf] %vm3261, %v3260
    %s3264 = scalar_lea.vmem [#allocation0], 678
    %3265 = vst.msk [vmem:[%s3264] ss:$8 sm:$0xf0] %vm3261, %v3260
    %s3266 = scalar_lea.vmem [#allocation2], 194
    %v3267 = vld [vmem:[%s3266] ss:$8 sm:$0xf]
    %s3268 = scalar_lea.vmem [#allocation2], 163
    %v3269 = vld [vmem:[%s3268] ss:$8 sm:$0xf0]
    %vm3270 = vcmask 1047556
    %v3271 = vsel %vm3270, %v3269, %v3267
    %3272 = vrot.lane.b32.xlu0 %v3271, 32
    %v3273 = vpop.permute.xlu0 %3272
    %vm3274 = vcmask 130048
    %s3275 = scalar_lea.vmem [#allocation0], 1222
    %3276 = vst.msk [vmem:[%s3275] ss:$8 sm:$0xf] %vm3274, %v3273
    %s3277 = scalar_lea.vmem [#allocation0], 1702
    %3278 = vst.msk [vmem:[%s3277] ss:$8 sm:$0xf0] %vm3274, %v3273
    %s3279 = scalar_lea.vmem [#allocation2], 224
    %v3280 = vld [vmem:[%s3279] ss:$8 sm:$0xf]
    %s3281 = scalar_lea.vmem [#allocation2], 193
    %v3282 = vld [vmem:[%s3281] ss:$8 sm:$0xf0]
    %vm3283 = vcmask 1047556
    %v3284 = vsel %vm3283, %v3282, %v3280
    %3285 = vrot.lane.b32.xlu0 %v3284, 32
    %v3286 = vpop.permute.xlu0 %3285
    %vm3287 = vcmask 130048
    %s3288 = scalar_lea.vmem [#allocation0], 230
    %3289 = vst.msk [vmem:[%s3288] ss:$8 sm:$0xf] %vm3287, %v3286
    %s3290 = scalar_lea.vmem [#allocation0], 710
    %3291 = vst.msk [vmem:[%s3290] ss:$8 sm:$0xf0] %vm3287, %v3286
    %s3292 = scalar_lea.vmem [#allocation2], 226
    %v3293 = vld [vmem:[%s3292] ss:$8 sm:$0xf]
    %s3294 = scalar_lea.vmem [#allocation2], 195
    %v3295 = vld [vmem:[%s3294] ss:$8 sm:$0xf0]
    %vm3296 = vcmask 1047556
    %v3297 = vsel %vm3296, %v3295, %v3293
    %3298 = vrot.lane.b32.xlu0 %v3297, 32
    %v3299 = vpop.permute.xlu0 %3298
    %vm3300 = vcmask 130048
    %s3301 = scalar_lea.vmem [#allocation0], 1254
    %3302 = vst.msk [vmem:[%s3301] ss:$8 sm:$0xf] %vm3300, %v3299
    %s3303 = scalar_lea.vmem [#allocation0], 1734
    %3304 = vst.msk [vmem:[%s3303] ss:$8 sm:$0xf0] %vm3300, %v3299
    %s3305 = scalar_lea.vmem [#allocation2], 256
    %v3306 = vld [vmem:[%s3305] ss:$8 sm:$0xf]
    %s3307 = scalar_lea.vmem [#allocation2], 225
    %v3308 = vld [vmem:[%s3307] ss:$8 sm:$0xf0]
    %vm3309 = vcmask 1047556
    %v3310 = vsel %vm3309, %v3308, %v3306
    %3311 = vrot.lane.b32.xlu0 %v3310, 32
    %v3312 = vpop.permute.xlu0 %3311
    %vm3313 = vcmask 130048
    %s3314 = scalar_lea.vmem [#allocation0], 262
    %3315 = vst.msk [vmem:[%s3314] ss:$8 sm:$0xf] %vm3313, %v3312
    %s3316 = scalar_lea.vmem [#allocation0], 742
    %3317 = vst.msk [vmem:[%s3316] ss:$8 sm:$0xf0] %vm3313, %v3312
    %s3318 = scalar_lea.vmem [#allocation2], 258
    %v3319 = vld [vmem:[%s3318] ss:$8 sm:$0xf]
    %s3320 = scalar_lea.vmem [#allocation2], 227
    %v3321 = vld [vmem:[%s3320] ss:$8 sm:$0xf0]
    %vm3322 = vcmask 1047556
    %v3323 = vsel %vm3322, %v3321, %v3319
    %3324 = vrot.lane.b32.xlu0 %v3323, 32
    %v3325 = vpop.permute.xlu0 %3324
    %vm3326 = vcmask 130048
    %s3327 = scalar_lea.vmem [#allocation0], 1286
    %3328 = vst.msk [vmem:[%s3327] ss:$8 sm:$0xf] %vm3326, %v3325
    %s3329 = scalar_lea.vmem [#allocation0], 1766
    %3330 = vst.msk [vmem:[%s3329] ss:$8 sm:$0xf0] %vm3326, %v3325
    %s3331 = scalar_lea.vmem [#allocation2], 288
    %v3332 = vld [vmem:[%s3331] ss:$8 sm:$0xf]
    %s3333 = scalar_lea.vmem [#allocation2], 257
    %v3334 = vld [vmem:[%s3333] ss:$8 sm:$0xf0]
    %vm3335 = vcmask 1047556
    %v3336 = vsel %vm3335, %v3334, %v3332
    %3337 = vrot.lane.b32.xlu0 %v3336, 32
    %v3338 = vpop.permute.xlu0 %3337
    %vm3339 = vcmask 130048
    %s3340 = scalar_lea.vmem [#allocation0], 294
    %3341 = vst.msk [vmem:[%s3340] ss:$8 sm:$0xf] %vm3339, %v3338
    %s3342 = scalar_lea.vmem [#allocation0], 774
    %3343 = vst.msk [vmem:[%s3342] ss:$8 sm:$0xf0] %vm3339, %v3338
    %s3344 = scalar_lea.vmem [#allocation2], 290
    %v3345 = vld [vmem:[%s3344] ss:$8 sm:$0xf]
    %s3346 = scalar_lea.vmem [#allocation2], 259
    %v3347 = vld [vmem:[%s3346] ss:$8 sm:$0xf0]
    %vm3348 = vcmask 1047556
    %v3349 = vsel %vm3348, %v3347, %v3345
    %3350 = vrot.lane.b32.xlu0 %v3349, 32
    %v3351 = vpop.permute.xlu0 %3350
    %vm3352 = vcmask 130048
    %s3353 = scalar_lea.vmem [#allocation0], 1318
    %3354 = vst.msk [vmem:[%s3353] ss:$8 sm:$0xf] %vm3352, %v3351
    %s3355 = scalar_lea.vmem [#allocation0], 1798
    %3356 = vst.msk [vmem:[%s3355] ss:$8 sm:$0xf0] %vm3352, %v3351
    %s3357 = scalar_lea.vmem [#allocation2], 320
    %v3358 = vld [vmem:[%s3357] ss:$8 sm:$0xf]
    %s3359 = scalar_lea.vmem [#allocation2], 289
    %v3360 = vld [vmem:[%s3359] ss:$8 sm:$0xf0]
    %vm3361 = vcmask 1047556
    %v3362 = vsel %vm3361, %v3360, %v3358
    %3363 = vrot.lane.b32.xlu0 %v3362, 32
    %v3364 = vpop.permute.xlu0 %3363
    %vm3365 = vcmask 130048
    %s3366 = scalar_lea.vmem [#allocation0], 326
    %3367 = vst.msk [vmem:[%s3366] ss:$8 sm:$0xf] %vm3365, %v3364
    %s3368 = scalar_lea.vmem [#allocation0], 806
    %3369 = vst.msk [vmem:[%s3368] ss:$8 sm:$0xf0] %vm3365, %v3364
    %s3370 = scalar_lea.vmem [#allocation2], 322
    %v3371 = vld [vmem:[%s3370] ss:$8 sm:$0xf]
    %s3372 = scalar_lea.vmem [#allocation2], 291
    %v3373 = vld [vmem:[%s3372] ss:$8 sm:$0xf0]
    %vm3374 = vcmask 1047556
    %v3375 = vsel %vm3374, %v3373, %v3371
    %3376 = vrot.lane.b32.xlu0 %v3375, 32
    %v3377 = vpop.permute.xlu0 %3376
    %vm3378 = vcmask 130048
    %s3379 = scalar_lea.vmem [#allocation0], 1350
    %3380 = vst.msk [vmem:[%s3379] ss:$8 sm:$0xf] %vm3378, %v3377
    %s3381 = scalar_lea.vmem [#allocation0], 1830
    %3382 = vst.msk [vmem:[%s3381] ss:$8 sm:$0xf0] %vm3378, %v3377
    %s3383 = scalar_lea.vmem [#allocation2], 352
    %v3384 = vld [vmem:[%s3383] ss:$8 sm:$0xf]
    %s3385 = scalar_lea.vmem [#allocation2], 321
    %v3386 = vld [vmem:[%s3385] ss:$8 sm:$0xf0]
    %vm3387 = vcmask 1047556
    %v3388 = vsel %vm3387, %v3386, %v3384
    %3389 = vrot.lane.b32.xlu0 %v3388, 32
    %v3390 = vpop.permute.xlu0 %3389
    %vm3391 = vcmask 130048
    %s3392 = scalar_lea.vmem [#allocation0], 358
    %3393 = vst.msk [vmem:[%s3392] ss:$8 sm:$0xf] %vm3391, %v3390
    %s3394 = scalar_lea.vmem [#allocation0], 838
    %3395 = vst.msk [vmem:[%s3394] ss:$8 sm:$0xf0] %vm3391, %v3390
    %s3396 = scalar_lea.vmem [#allocation2], 354
    %v3397 = vld [vmem:[%s3396] ss:$8 sm:$0xf]
    %s3398 = scalar_lea.vmem [#allocation2], 323
    %v3399 = vld [vmem:[%s3398] ss:$8 sm:$0xf0]
    %vm3400 = vcmask 1047556
    %v3401 = vsel %vm3400, %v3399, %v3397
    %3402 = vrot.lane.b32.xlu0 %v3401, 32
    %v3403 = vpop.permute.xlu0 %3402
    %vm3404 = vcmask 130048
    %s3405 = scalar_lea.vmem [#allocation0], 1382
    %3406 = vst.msk [vmem:[%s3405] ss:$8 sm:$0xf] %vm3404, %v3403
    %s3407 = scalar_lea.vmem [#allocation0], 1862
    %3408 = vst.msk [vmem:[%s3407] ss:$8 sm:$0xf0] %vm3404, %v3403
    %s3409 = scalar_lea.vmem [#allocation2], 384
    %v3410 = vld [vmem:[%s3409] ss:$8 sm:$0xf]
    %s3411 = scalar_lea.vmem [#allocation2], 353
    %v3412 = vld [vmem:[%s3411] ss:$8 sm:$0xf0]
    %vm3413 = vcmask 1047556
    %v3414 = vsel %vm3413, %v3412, %v3410
    %3415 = vrot.lane.b32.xlu0 %v3414, 32
    %v3416 = vpop.permute.xlu0 %3415
    %vm3417 = vcmask 130048
    %s3418 = scalar_lea.vmem [#allocation0], 390
    %3419 = vst.msk [vmem:[%s3418] ss:$8 sm:$0xf] %vm3417, %v3416
    %s3420 = scalar_lea.vmem [#allocation0], 870
    %3421 = vst.msk [vmem:[%s3420] ss:$8 sm:$0xf0] %vm3417, %v3416
    %s3422 = scalar_lea.vmem [#allocation2], 386
    %v3423 = vld [vmem:[%s3422] ss:$8 sm:$0xf]
    %s3424 = scalar_lea.vmem [#allocation2], 355
    %v3425 = vld [vmem:[%s3424] ss:$8 sm:$0xf0]
    %vm3426 = vcmask 1047556
    %v3427 = vsel %vm3426, %v3425, %v3423
    %3428 = vrot.lane.b32.xlu0 %v3427, 32
    %v3429 = vpop.permute.xlu0 %3428
    %vm3430 = vcmask 130048
    %s3431 = scalar_lea.vmem [#allocation0], 1414
    %3432 = vst.msk [vmem:[%s3431] ss:$8 sm:$0xf] %vm3430, %v3429
    %s3433 = scalar_lea.vmem [#allocation0], 1894
    %3434 = vst.msk [vmem:[%s3433] ss:$8 sm:$0xf0] %vm3430, %v3429
    %s3435 = scalar_lea.vmem [#allocation2], 416
    %v3436 = vld [vmem:[%s3435] ss:$8 sm:$0xf]
    %s3437 = scalar_lea.vmem [#allocation2], 385
    %v3438 = vld [vmem:[%s3437] ss:$8 sm:$0xf0]
    %vm3439 = vcmask 1047556
    %v3440 = vsel %vm3439, %v3438, %v3436
    %3441 = vrot.lane.b32.xlu0 %v3440, 32
    %v3442 = vpop.permute.xlu0 %3441
    %vm3443 = vcmask 130048
    %s3444 = scalar_lea.vmem [#allocation0], 422
    %3445 = vst.msk [vmem:[%s3444] ss:$8 sm:$0xf] %vm3443, %v3442
    %s3446 = scalar_lea.vmem [#allocation0], 902
    %3447 = vst.msk [vmem:[%s3446] ss:$8 sm:$0xf0] %vm3443, %v3442
    %s3448 = scalar_lea.vmem [#allocation2], 418
    %v3449 = vld [vmem:[%s3448] ss:$8 sm:$0xf]
    %s3450 = scalar_lea.vmem [#allocation2], 387
    %v3451 = vld [vmem:[%s3450] ss:$8 sm:$0xf0]
    %vm3452 = vcmask 1047556
    %v3453 = vsel %vm3452, %v3451, %v3449
    %3454 = vrot.lane.b32.xlu0 %v3453, 32
    %v3455 = vpop.permute.xlu0 %3454
    %vm3456 = vcmask 130048
    %s3457 = scalar_lea.vmem [#allocation0], 1446
    %3458 = vst.msk [vmem:[%s3457] ss:$8 sm:$0xf] %vm3456, %v3455
    %s3459 = scalar_lea.vmem [#allocation0], 1926
    %3460 = vst.msk [vmem:[%s3459] ss:$8 sm:$0xf0] %vm3456, %v3455
    %s3461 = scalar_lea.vmem [#allocation2], 448
    %v3462 = vld [vmem:[%s3461] ss:$8 sm:$0xf]
    %s3463 = scalar_lea.vmem [#allocation2], 417
    %v3464 = vld [vmem:[%s3463] ss:$8 sm:$0xf0]
    %vm3465 = vcmask 1047556
    %v3466 = vsel %vm3465, %v3464, %v3462
    %3467 = vrot.lane.b32.xlu0 %v3466, 32
    %v3468 = vpop.permute.xlu0 %3467
    %vm3469 = vcmask 130048
    %s3470 = scalar_lea.vmem [#allocation0], 454
    %3471 = vst.msk [vmem:[%s3470] ss:$8 sm:$0xf] %vm3469, %v3468
    %s3472 = scalar_lea.vmem [#allocation0], 934
    %3473 = vst.msk [vmem:[%s3472] ss:$8 sm:$0xf0] %vm3469, %v3468
    %s3474 = scalar_lea.vmem [#allocation2], 450
    %v3475 = vld [vmem:[%s3474] ss:$8 sm:$0xf]
    %s3476 = scalar_lea.vmem [#allocation2], 419
    %v3477 = vld [vmem:[%s3476] ss:$8 sm:$0xf0]
    %vm3478 = vcmask 1047556
    %v3479 = vsel %vm3478, %v3477, %v3475
    %3480 = vrot.lane.b32.xlu0 %v3479, 32
    %v3481 = vpop.permute.xlu0 %3480
    %vm3482 = vcmask 130048
    %s3483 = scalar_lea.vmem [#allocation0], 1478
    %3484 = vst.msk [vmem:[%s3483] ss:$8 sm:$0xf] %vm3482, %v3481
    %s3485 = scalar_lea.vmem [#allocation0], 1958
    %3486 = vst.msk [vmem:[%s3485] ss:$8 sm:$0xf0] %vm3482, %v3481
    %s3487 = scalar_lea.vmem [#allocation2], 480
    %v3488 = vld [vmem:[%s3487] ss:$8 sm:$0xf]
    %s3489 = scalar_lea.vmem [#allocation2], 449
    %v3490 = vld [vmem:[%s3489] ss:$8 sm:$0xf0]
    %vm3491 = vcmask 1047556
    %v3492 = vsel %vm3491, %v3490, %v3488
    %3493 = vrot.lane.b32.xlu0 %v3492, 32
    %v3494 = vpop.permute.xlu0 %3493
    %vm3495 = vcmask 130048
    %s3496 = scalar_lea.vmem [#allocation0], 486
    %3497 = vst.msk [vmem:[%s3496] ss:$8 sm:$0xf] %vm3495, %v3494
    %s3498 = scalar_lea.vmem [#allocation0], 966
    %3499 = vst.msk [vmem:[%s3498] ss:$8 sm:$0xf0] %vm3495, %v3494
    %s3500 = scalar_lea.vmem [#allocation2], 482
    %v3501 = vld [vmem:[%s3500] ss:$8 sm:$0xf]
    %s3502 = scalar_lea.vmem [#allocation2], 451
    %v3503 = vld [vmem:[%s3502] ss:$8 sm:$0xf0]
    %vm3504 = vcmask 1047556
    %v3505 = vsel %vm3504, %v3503, %v3501
    %3506 = vrot.lane.b32.xlu0 %v3505, 32
    %v3507 = vpop.permute.xlu0 %3506
    %vm3508 = vcmask 130048
    %s3509 = scalar_lea.vmem [#allocation0], 1510
    %3510 = vst.msk [vmem:[%s3509] ss:$8 sm:$0xf] %vm3508, %v3507
    %s3511 = scalar_lea.vmem [#allocation0], 1990
    %3512 = vst.msk [vmem:[%s3511] ss:$8 sm:$0xf0] %vm3508, %v3507
    %v3513 = vld [vmem:[#allocation2] ss:$8 sm:$0xf]
    %s3514 = scalar_lea.vmem [#allocation2], 4294967265
    %v3515 = vld [vmem:[%s3514] ss:$8 sm:$0xf0]
    %vm3516 = vcmask 1047556
    %v3517 = vsel %vm3516, %v3515, %v3513
    %3518 = vrot.lane.b32.xlu0 %v3517, 16
    %v3519 = vpop.permute.xlu0 %3518
    %vm3520 = vcmask 130048
    %s3521 = scalar_lea.vmem [#allocation0], 7
    %3522 = vst.msk [vmem:[%s3521] ss:$8 sm:$0xf] %vm3520, %v3519
    %s3523 = scalar_lea.vmem [#allocation0], 487
    %3524 = vst.msk [vmem:[%s3523] ss:$8 sm:$0xf0] %vm3520, %v3519
    %s3525 = scalar_lea.vmem [#allocation2], 2
    %v3526 = vld [vmem:[%s3525] ss:$8 sm:$0xf]
    %s3527 = scalar_lea.vmem [#allocation2], 4294967267
    %v3528 = vld [vmem:[%s3527] ss:$8 sm:$0xf0]
    %vm3529 = vcmask 1047556
    %v3530 = vsel %vm3529, %v3528, %v3526
    %3531 = vrot.lane.b32.xlu0 %v3530, 16
    %v3532 = vpop.permute.xlu0 %3531
    %vm3533 = vcmask 130048
    %s3534 = scalar_lea.vmem [#allocation0], 1031
    %3535 = vst.msk [vmem:[%s3534] ss:$8 sm:$0xf] %vm3533, %v3532
    %s3536 = scalar_lea.vmem [#allocation0], 1511
    %3537 = vst.msk [vmem:[%s3536] ss:$8 sm:$0xf0] %vm3533, %v3532
    %s3538 = scalar_lea.vmem [#allocation2], 32
    %v3539 = vld [vmem:[%s3538] ss:$8 sm:$0xf]
    %s3540 = scalar_lea.vmem [#allocation2], 1
    %v3541 = vld [vmem:[%s3540] ss:$8 sm:$0xf0]
    %vm3542 = vcmask 1047556
    %v3543 = vsel %vm3542, %v3541, %v3539
    %3544 = vrot.lane.b32.xlu0 %v3543, 16
    %v3545 = vpop.permute.xlu0 %3544
    %vm3546 = vcmask 130048
    %s3547 = scalar_lea.vmem [#allocation0], 39
    %3548 = vst.msk [vmem:[%s3547] ss:$8 sm:$0xf] %vm3546, %v3545
    %s3549 = scalar_lea.vmem [#allocation0], 519
    %3550 = vst.msk [vmem:[%s3549] ss:$8 sm:$0xf0] %vm3546, %v3545
    %s3551 = scalar_lea.vmem [#allocation2], 34
    %v3552 = vld [vmem:[%s3551] ss:$8 sm:$0xf]
    %s3553 = scalar_lea.vmem [#allocation2], 3
    %v3554 = vld [vmem:[%s3553] ss:$8 sm:$0xf0]
    %vm3555 = vcmask 1047556
    %v3556 = vsel %vm3555, %v3554, %v3552
    %3557 = vrot.lane.b32.xlu0 %v3556, 16
    %v3558 = vpop.permute.xlu0 %3557
    %vm3559 = vcmask 130048
    %s3560 = scalar_lea.vmem [#allocation0], 1063
    %3561 = vst.msk [vmem:[%s3560] ss:$8 sm:$0xf] %vm3559, %v3558
    %s3562 = scalar_lea.vmem [#allocation0], 1543
    %3563 = vst.msk [vmem:[%s3562] ss:$8 sm:$0xf0] %vm3559, %v3558
    %s3564 = scalar_lea.vmem [#allocation2], 64
    %v3565 = vld [vmem:[%s3564] ss:$8 sm:$0xf]
    %s3566 = scalar_lea.vmem [#allocation2], 33
    %v3567 = vld [vmem:[%s3566] ss:$8 sm:$0xf0]
    %vm3568 = vcmask 1047556
    %v3569 = vsel %vm3568, %v3567, %v3565
    %3570 = vrot.lane.b32.xlu0 %v3569, 16
    %v3571 = vpop.permute.xlu0 %3570
    %vm3572 = vcmask 130048
    %s3573 = scalar_lea.vmem [#allocation0], 71
    %3574 = vst.msk [vmem:[%s3573] ss:$8 sm:$0xf] %vm3572, %v3571
    %s3575 = scalar_lea.vmem [#allocation0], 551
    %3576 = vst.msk [vmem:[%s3575] ss:$8 sm:$0xf0] %vm3572, %v3571
    %s3577 = scalar_lea.vmem [#allocation2], 66
    %v3578 = vld [vmem:[%s3577] ss:$8 sm:$0xf]
    %s3579 = scalar_lea.vmem [#allocation2], 35
    %v3580 = vld [vmem:[%s3579] ss:$8 sm:$0xf0]
    %vm3581 = vcmask 1047556
    %v3582 = vsel %vm3581, %v3580, %v3578
    %3583 = vrot.lane.b32.xlu0 %v3582, 16
    %v3584 = vpop.permute.xlu0 %3583
    %vm3585 = vcmask 130048
    %s3586 = scalar_lea.vmem [#allocation0], 1095
    %3587 = vst.msk [vmem:[%s3586] ss:$8 sm:$0xf] %vm3585, %v3584
    %s3588 = scalar_lea.vmem [#allocation0], 1575
    %3589 = vst.msk [vmem:[%s3588] ss:$8 sm:$0xf0] %vm3585, %v3584
    %s3590 = scalar_lea.vmem [#allocation2], 96
    %v3591 = vld [vmem:[%s3590] ss:$8 sm:$0xf]
    %s3592 = scalar_lea.vmem [#allocation2], 65
    %v3593 = vld [vmem:[%s3592] ss:$8 sm:$0xf0]
    %vm3594 = vcmask 1047556
    %v3595 = vsel %vm3594, %v3593, %v3591
    %3596 = vrot.lane.b32.xlu0 %v3595, 16
    %v3597 = vpop.permute.xlu0 %3596
    %vm3598 = vcmask 130048
    %s3599 = scalar_lea.vmem [#allocation0], 103
    %3600 = vst.msk [vmem:[%s3599] ss:$8 sm:$0xf] %vm3598, %v3597
    %s3601 = scalar_lea.vmem [#allocation0], 583
    %3602 = vst.msk [vmem:[%s3601] ss:$8 sm:$0xf0] %vm3598, %v3597
    %s3603 = scalar_lea.vmem [#allocation2], 98
    %v3604 = vld [vmem:[%s3603] ss:$8 sm:$0xf]
    %s3605 = scalar_lea.vmem [#allocation2], 67
    %v3606 = vld [vmem:[%s3605] ss:$8 sm:$0xf0]
    %vm3607 = vcmask 1047556
    %v3608 = vsel %vm3607, %v3606, %v3604
    %3609 = vrot.lane.b32.xlu0 %v3608, 16
    %v3610 = vpop.permute.xlu0 %3609
    %vm3611 = vcmask 130048
    %s3612 = scalar_lea.vmem [#allocation0], 1127
    %3613 = vst.msk [vmem:[%s3612] ss:$8 sm:$0xf] %vm3611, %v3610
    %s3614 = scalar_lea.vmem [#allocation0], 1607
    %3615 = vst.msk [vmem:[%s3614] ss:$8 sm:$0xf0] %vm3611, %v3610
    %s3616 = scalar_lea.vmem [#allocation2], 128
    %v3617 = vld [vmem:[%s3616] ss:$8 sm:$0xf]
    %s3618 = scalar_lea.vmem [#allocation2], 97
    %v3619 = vld [vmem:[%s3618] ss:$8 sm:$0xf0]
    %vm3620 = vcmask 1047556
    %v3621 = vsel %vm3620, %v3619, %v3617
    %3622 = vrot.lane.b32.xlu0 %v3621, 16
    %v3623 = vpop.permute.xlu0 %3622
    %vm3624 = vcmask 130048
    %s3625 = scalar_lea.vmem [#allocation0], 135
    %3626 = vst.msk [vmem:[%s3625] ss:$8 sm:$0xf] %vm3624, %v3623
    %s3627 = scalar_lea.vmem [#allocation0], 615
    %3628 = vst.msk [vmem:[%s3627] ss:$8 sm:$0xf0] %vm3624, %v3623
    %s3629 = scalar_lea.vmem [#allocation2], 130
    %v3630 = vld [vmem:[%s3629] ss:$8 sm:$0xf]
    %s3631 = scalar_lea.vmem [#allocation2], 99
    %v3632 = vld [vmem:[%s3631] ss:$8 sm:$0xf0]
    %vm3633 = vcmask 1047556
    %v3634 = vsel %vm3633, %v3632, %v3630
    %3635 = vrot.lane.b32.xlu0 %v3634, 16
    %v3636 = vpop.permute.xlu0 %3635
    %vm3637 = vcmask 130048
    %s3638 = scalar_lea.vmem [#allocation0], 1159
    %3639 = vst.msk [vmem:[%s3638] ss:$8 sm:$0xf] %vm3637, %v3636
    %s3640 = scalar_lea.vmem [#allocation0], 1639
    %3641 = vst.msk [vmem:[%s3640] ss:$8 sm:$0xf0] %vm3637, %v3636
    %s3642 = scalar_lea.vmem [#allocation2], 160
    %v3643 = vld [vmem:[%s3642] ss:$8 sm:$0xf]
    %s3644 = scalar_lea.vmem [#allocation2], 129
    %v3645 = vld [vmem:[%s3644] ss:$8 sm:$0xf0]
    %vm3646 = vcmask 1047556
    %v3647 = vsel %vm3646, %v3645, %v3643
    %3648 = vrot.lane.b32.xlu0 %v3647, 16
    %v3649 = vpop.permute.xlu0 %3648
    %vm3650 = vcmask 130048
    %s3651 = scalar_lea.vmem [#allocation0], 167
    %3652 = vst.msk [vmem:[%s3651] ss:$8 sm:$0xf] %vm3650, %v3649
    %s3653 = scalar_lea.vmem [#allocation0], 647
    %3654 = vst.msk [vmem:[%s3653] ss:$8 sm:$0xf0] %vm3650, %v3649
    %s3655 = scalar_lea.vmem [#allocation2], 162
    %v3656 = vld [vmem:[%s3655] ss:$8 sm:$0xf]
    %s3657 = scalar_lea.vmem [#allocation2], 131
    %v3658 = vld [vmem:[%s3657] ss:$8 sm:$0xf0]
    %vm3659 = vcmask 1047556
    %v3660 = vsel %vm3659, %v3658, %v3656
    %3661 = vrot.lane.b32.xlu0 %v3660, 16
    %v3662 = vpop.permute.xlu0 %3661
    %vm3663 = vcmask 130048
    %s3664 = scalar_lea.vmem [#allocation0], 1191
    %3665 = vst.msk [vmem:[%s3664] ss:$8 sm:$0xf] %vm3663, %v3662
    %s3666 = scalar_lea.vmem [#allocation0], 1671
    %3667 = vst.msk [vmem:[%s3666] ss:$8 sm:$0xf0] %vm3663, %v3662
    %s3668 = scalar_lea.vmem [#allocation2], 192
    %v3669 = vld [vmem:[%s3668] ss:$8 sm:$0xf]
    %s3670 = scalar_lea.vmem [#allocation2], 161
    %v3671 = vld [vmem:[%s3670] ss:$8 sm:$0xf0]
    %vm3672 = vcmask 1047556
    %v3673 = vsel %vm3672, %v3671, %v3669
    %3674 = vrot.lane.b32.xlu0 %v3673, 16
    %v3675 = vpop.permute.xlu0 %3674
    %vm3676 = vcmask 130048
    %s3677 = scalar_lea.vmem [#allocation0], 199
    %3678 = vst.msk [vmem:[%s3677] ss:$8 sm:$0xf] %vm3676, %v3675
    %s3679 = scalar_lea.vmem [#allocation0], 679
    %3680 = vst.msk [vmem:[%s3679] ss:$8 sm:$0xf0] %vm3676, %v3675
    %s3681 = scalar_lea.vmem [#allocation2], 194
    %v3682 = vld [vmem:[%s3681] ss:$8 sm:$0xf]
    %s3683 = scalar_lea.vmem [#allocation2], 163
    %v3684 = vld [vmem:[%s3683] ss:$8 sm:$0xf0]
    %vm3685 = vcmask 1047556
    %v3686 = vsel %vm3685, %v3684, %v3682
    %3687 = vrot.lane.b32.xlu0 %v3686, 16
    %v3688 = vpop.permute.xlu0 %3687
    %vm3689 = vcmask 130048
    %s3690 = scalar_lea.vmem [#allocation0], 1223
    %3691 = vst.msk [vmem:[%s3690] ss:$8 sm:$0xf] %vm3689, %v3688
    %s3692 = scalar_lea.vmem [#allocation0], 1703
    %3693 = vst.msk [vmem:[%s3692] ss:$8 sm:$0xf0] %vm3689, %v3688
    %s3694 = scalar_lea.vmem [#allocation2], 224
    %v3695 = vld [vmem:[%s3694] ss:$8 sm:$0xf]
    %s3696 = scalar_lea.vmem [#allocation2], 193
    %v3697 = vld [vmem:[%s3696] ss:$8 sm:$0xf0]
    %vm3698 = vcmask 1047556
    %v3699 = vsel %vm3698, %v3697, %v3695
    %3700 = vrot.lane.b32.xlu0 %v3699, 16
    %v3701 = vpop.permute.xlu0 %3700
    %vm3702 = vcmask 130048
    %s3703 = scalar_lea.vmem [#allocation0], 231
    %3704 = vst.msk [vmem:[%s3703] ss:$8 sm:$0xf] %vm3702, %v3701
    %s3705 = scalar_lea.vmem [#allocation0], 711
    %3706 = vst.msk [vmem:[%s3705] ss:$8 sm:$0xf0] %vm3702, %v3701
    %s3707 = scalar_lea.vmem [#allocation2], 226
    %v3708 = vld [vmem:[%s3707] ss:$8 sm:$0xf]
    %s3709 = scalar_lea.vmem [#allocation2], 195
    %v3710 = vld [vmem:[%s3709] ss:$8 sm:$0xf0]
    %vm3711 = vcmask 1047556
    %v3712 = vsel %vm3711, %v3710, %v3708
    %3713 = vrot.lane.b32.xlu0 %v3712, 16
    %v3714 = vpop.permute.xlu0 %3713
    %vm3715 = vcmask 130048
    %s3716 = scalar_lea.vmem [#allocation0], 1255
    %3717 = vst.msk [vmem:[%s3716] ss:$8 sm:$0xf] %vm3715, %v3714
    %s3718 = scalar_lea.vmem [#allocation0], 1735
    %3719 = vst.msk [vmem:[%s3718] ss:$8 sm:$0xf0] %vm3715, %v3714
    %s3720 = scalar_lea.vmem [#allocation2], 256
    %v3721 = vld [vmem:[%s3720] ss:$8 sm:$0xf]
    %s3722 = scalar_lea.vmem [#allocation2], 225
    %v3723 = vld [vmem:[%s3722] ss:$8 sm:$0xf0]
    %vm3724 = vcmask 1047556
    %v3725 = vsel %vm3724, %v3723, %v3721
    %3726 = vrot.lane.b32.xlu0 %v3725, 16
    %v3727 = vpop.permute.xlu0 %3726
    %vm3728 = vcmask 130048
    %s3729 = scalar_lea.vmem [#allocation0], 263
    %3730 = vst.msk [vmem:[%s3729] ss:$8 sm:$0xf] %vm3728, %v3727
    %s3731 = scalar_lea.vmem [#allocation0], 743
    %3732 = vst.msk [vmem:[%s3731] ss:$8 sm:$0xf0] %vm3728, %v3727
    %s3733 = scalar_lea.vmem [#allocation2], 258
    %v3734 = vld [vmem:[%s3733] ss:$8 sm:$0xf]
    %s3735 = scalar_lea.vmem [#allocation2], 227
    %v3736 = vld [vmem:[%s3735] ss:$8 sm:$0xf0]
    %vm3737 = vcmask 1047556
    %v3738 = vsel %vm3737, %v3736, %v3734
    %3739 = vrot.lane.b32.xlu0 %v3738, 16
    %v3740 = vpop.permute.xlu0 %3739
    %vm3741 = vcmask 130048
    %s3742 = scalar_lea.vmem [#allocation0], 1287
    %3743 = vst.msk [vmem:[%s3742] ss:$8 sm:$0xf] %vm3741, %v3740
    %s3744 = scalar_lea.vmem [#allocation0], 1767
    %3745 = vst.msk [vmem:[%s3744] ss:$8 sm:$0xf0] %vm3741, %v3740
    %s3746 = scalar_lea.vmem [#allocation2], 288
    %v3747 = vld [vmem:[%s3746] ss:$8 sm:$0xf]
    %s3748 = scalar_lea.vmem [#allocation2], 257
    %v3749 = vld [vmem:[%s3748] ss:$8 sm:$0xf0]
    %vm3750 = vcmask 1047556
    %v3751 = vsel %vm3750, %v3749, %v3747
    %3752 = vrot.lane.b32.xlu0 %v3751, 16
    %v3753 = vpop.permute.xlu0 %3752
    %vm3754 = vcmask 130048
    %s3755 = scalar_lea.vmem [#allocation0], 295
    %3756 = vst.msk [vmem:[%s3755] ss:$8 sm:$0xf] %vm3754, %v3753
    %s3757 = scalar_lea.vmem [#allocation0], 775
    %3758 = vst.msk [vmem:[%s3757] ss:$8 sm:$0xf0] %vm3754, %v3753
    %s3759 = scalar_lea.vmem [#allocation2], 290
    %v3760 = vld [vmem:[%s3759] ss:$8 sm:$0xf]
    %s3761 = scalar_lea.vmem [#allocation2], 259
    %v3762 = vld [vmem:[%s3761] ss:$8 sm:$0xf0]
    %vm3763 = vcmask 1047556
    %v3764 = vsel %vm3763, %v3762, %v3760
    %3765 = vrot.lane.b32.xlu0 %v3764, 16
    %v3766 = vpop.permute.xlu0 %3765
    %vm3767 = vcmask 130048
    %s3768 = scalar_lea.vmem [#allocation0], 1319
    %3769 = vst.msk [vmem:[%s3768] ss:$8 sm:$0xf] %vm3767, %v3766
    %s3770 = scalar_lea.vmem [#allocation0], 1799
    %3771 = vst.msk [vmem:[%s3770] ss:$8 sm:$0xf0] %vm3767, %v3766
    %s3772 = scalar_lea.vmem [#allocation2], 320
    %v3773 = vld [vmem:[%s3772] ss:$8 sm:$0xf]
    %s3774 = scalar_lea.vmem [#allocation2], 289
    %v3775 = vld [vmem:[%s3774] ss:$8 sm:$0xf0]
    %vm3776 = vcmask 1047556
    %v3777 = vsel %vm3776, %v3775, %v3773
    %3778 = vrot.lane.b32.xlu0 %v3777, 16
    %v3779 = vpop.permute.xlu0 %3778
    %vm3780 = vcmask 130048
    %s3781 = scalar_lea.vmem [#allocation0], 327
    %3782 = vst.msk [vmem:[%s3781] ss:$8 sm:$0xf] %vm3780, %v3779
    %s3783 = scalar_lea.vmem [#allocation0], 807
    %3784 = vst.msk [vmem:[%s3783] ss:$8 sm:$0xf0] %vm3780, %v3779
    %s3785 = scalar_lea.vmem [#allocation2], 322
    %v3786 = vld [vmem:[%s3785] ss:$8 sm:$0xf]
    %s3787 = scalar_lea.vmem [#allocation2], 291
    %v3788 = vld [vmem:[%s3787] ss:$8 sm:$0xf0]
    %vm3789 = vcmask 1047556
    %v3790 = vsel %vm3789, %v3788, %v3786
    %3791 = vrot.lane.b32.xlu0 %v3790, 16
    %v3792 = vpop.permute.xlu0 %3791
    %vm3793 = vcmask 130048
    %s3794 = scalar_lea.vmem [#allocation0], 1351
    %3795 = vst.msk [vmem:[%s3794] ss:$8 sm:$0xf] %vm3793, %v3792
    %s3796 = scalar_lea.vmem [#allocation0], 1831
    %3797 = vst.msk [vmem:[%s3796] ss:$8 sm:$0xf0] %vm3793, %v3792
    %s3798 = scalar_lea.vmem [#allocation2], 352
    %v3799 = vld [vmem:[%s3798] ss:$8 sm:$0xf]
    %s3800 = scalar_lea.vmem [#allocation2], 321
    %v3801 = vld [vmem:[%s3800] ss:$8 sm:$0xf0]
    %vm3802 = vcmask 1047556
    %v3803 = vsel %vm3802, %v3801, %v3799
    %3804 = vrot.lane.b32.xlu0 %v3803, 16
    %v3805 = vpop.permute.xlu0 %3804
    %vm3806 = vcmask 130048
    %s3807 = scalar_lea.vmem [#allocation0], 359
    %3808 = vst.msk [vmem:[%s3807] ss:$8 sm:$0xf] %vm3806, %v3805
    %s3809 = scalar_lea.vmem [#allocation0], 839
    %3810 = vst.msk [vmem:[%s3809] ss:$8 sm:$0xf0] %vm3806, %v3805
    %s3811 = scalar_lea.vmem [#allocation2], 354
    %v3812 = vld [vmem:[%s3811] ss:$8 sm:$0xf]
    %s3813 = scalar_lea.vmem [#allocation2], 323
    %v3814 = vld [vmem:[%s3813] ss:$8 sm:$0xf0]
    %vm3815 = vcmask 1047556
    %v3816 = vsel %vm3815, %v3814, %v3812
    %3817 = vrot.lane.b32.xlu0 %v3816, 16
    %v3818 = vpop.permute.xlu0 %3817
    %vm3819 = vcmask 130048
    %s3820 = scalar_lea.vmem [#allocation0], 1383
    %3821 = vst.msk [vmem:[%s3820] ss:$8 sm:$0xf] %vm3819, %v3818
    %s3822 = scalar_lea.vmem [#allocation0], 1863
    %3823 = vst.msk [vmem:[%s3822] ss:$8 sm:$0xf0] %vm3819, %v3818
    %s3824 = scalar_lea.vmem [#allocation2], 384
    %v3825 = vld [vmem:[%s3824] ss:$8 sm:$0xf]
    %s3826 = scalar_lea.vmem [#allocation2], 353
    %v3827 = vld [vmem:[%s3826] ss:$8 sm:$0xf0]
    %vm3828 = vcmask 1047556
    %v3829 = vsel %vm3828, %v3827, %v3825
    %3830 = vrot.lane.b32.xlu0 %v3829, 16
    %v3831 = vpop.permute.xlu0 %3830
    %vm3832 = vcmask 130048
    %s3833 = scalar_lea.vmem [#allocation0], 391
    %3834 = vst.msk [vmem:[%s3833] ss:$8 sm:$0xf] %vm3832, %v3831
    %s3835 = scalar_lea.vmem [#allocation0], 871
    %3836 = vst.msk [vmem:[%s3835] ss:$8 sm:$0xf0] %vm3832, %v3831
    %s3837 = scalar_lea.vmem [#allocation2], 386
    %v3838 = vld [vmem:[%s3837] ss:$8 sm:$0xf]
    %s3839 = scalar_lea.vmem [#allocation2], 355
    %v3840 = vld [vmem:[%s3839] ss:$8 sm:$0xf0]
    %vm3841 = vcmask 1047556
    %v3842 = vsel %vm3841, %v3840, %v3838
    %3843 = vrot.lane.b32.xlu0 %v3842, 16
    %v3844 = vpop.permute.xlu0 %3843
    %vm3845 = vcmask 130048
    %s3846 = scalar_lea.vmem [#allocation0], 1415
    %3847 = vst.msk [vmem:[%s3846] ss:$8 sm:$0xf] %vm3845, %v3844
    %s3848 = scalar_lea.vmem [#allocation0], 1895
    %3849 = vst.msk [vmem:[%s3848] ss:$8 sm:$0xf0] %vm3845, %v3844
    %s3850 = scalar_lea.vmem [#allocation2], 416
    %v3851 = vld [vmem:[%s3850] ss:$8 sm:$0xf]
    %s3852 = scalar_lea.vmem [#allocation2], 385
    %v3853 = vld [vmem:[%s3852] ss:$8 sm:$0xf0]
    %vm3854 = vcmask 1047556
    %v3855 = vsel %vm3854, %v3853, %v3851
    %3856 = vrot.lane.b32.xlu0 %v3855, 16
    %v3857 = vpop.permute.xlu0 %3856
    %vm3858 = vcmask 130048
    %s3859 = scalar_lea.vmem [#allocation0], 423
    %3860 = vst.msk [vmem:[%s3859] ss:$8 sm:$0xf] %vm3858, %v3857
    %s3861 = scalar_lea.vmem [#allocation0], 903
    %3862 = vst.msk [vmem:[%s3861] ss:$8 sm:$0xf0] %vm3858, %v3857
    %s3863 = scalar_lea.vmem [#allocation2], 418
    %v3864 = vld [vmem:[%s3863] ss:$8 sm:$0xf]
    %s3865 = scalar_lea.vmem [#allocation2], 387
    %v3866 = vld [vmem:[%s3865] ss:$8 sm:$0xf0]
    %vm3867 = vcmask 1047556
    %v3868 = vsel %vm3867, %v3866, %v3864
    %3869 = vrot.lane.b32.xlu0 %v3868, 16
    %v3870 = vpop.permute.xlu0 %3869
    %vm3871 = vcmask 130048
    %s3872 = scalar_lea.vmem [#allocation0], 1447
    %3873 = vst.msk [vmem:[%s3872] ss:$8 sm:$0xf] %vm3871, %v3870
    %s3874 = scalar_lea.vmem [#allocation0], 1927
    %3875 = vst.msk [vmem:[%s3874] ss:$8 sm:$0xf0] %vm3871, %v3870
    %s3876 = scalar_lea.vmem [#allocation2], 448
    %v3877 = vld [vmem:[%s3876] ss:$8 sm:$0xf]
    %s3878 = scalar_lea.vmem [#allocation2], 417
    %v3879 = vld [vmem:[%s3878] ss:$8 sm:$0xf0]
    %vm3880 = vcmask 1047556
    %v3881 = vsel %vm3880, %v3879, %v3877
    %3882 = vrot.lane.b32.xlu0 %v3881, 16
    %v3883 = vpop.permute.xlu0 %3882
    %vm3884 = vcmask 130048
    %s3885 = scalar_lea.vmem [#allocation0], 455
    %3886 = vst.msk [vmem:[%s3885] ss:$8 sm:$0xf] %vm3884, %v3883
    %s3887 = scalar_lea.vmem [#allocation0], 935
    %3888 = vst.msk [vmem:[%s3887] ss:$8 sm:$0xf0] %vm3884, %v3883
    %s3889 = scalar_lea.vmem [#allocation2], 450
    %v3890 = vld [vmem:[%s3889] ss:$8 sm:$0xf]
    %s3891 = scalar_lea.vmem [#allocation2], 419
    %v3892 = vld [vmem:[%s3891] ss:$8 sm:$0xf0]
    %vm3893 = vcmask 1047556
    %v3894 = vsel %vm3893, %v3892, %v3890
    %3895 = vrot.lane.b32.xlu0 %v3894, 16
    %v3896 = vpop.permute.xlu0 %3895
    %vm3897 = vcmask 130048
    %s3898 = scalar_lea.vmem [#allocation0], 1479
    %3899 = vst.msk [vmem:[%s3898] ss:$8 sm:$0xf] %vm3897, %v3896
    %s3900 = scalar_lea.vmem [#allocation0], 1959
    %3901 = vst.msk [vmem:[%s3900] ss:$8 sm:$0xf0] %vm3897, %v3896
    %s3902 = scalar_lea.vmem [#allocation2], 480
    %v3903 = vld [vmem:[%s3902] ss:$8 sm:$0xf]
    %s3904 = scalar_lea.vmem [#allocation2], 449
    %v3905 = vld [vmem:[%s3904] ss:$8 sm:$0xf0]
    %vm3906 = vcmask 1047556
    %v3907 = vsel %vm3906, %v3905, %v3903
    %3908 = vrot.lane.b32.xlu0 %v3907, 16
    %v3909 = vpop.permute.xlu0 %3908
    %vm3910 = vcmask 130048
    %s3911 = scalar_lea.vmem [#allocation0], 487
    %3912 = vst.msk [vmem:[%s3911] ss:$8 sm:$0xf] %vm3910, %v3909
    %s3913 = scalar_lea.vmem [#allocation0], 967
    %3914 = vst.msk [vmem:[%s3913] ss:$8 sm:$0xf0] %vm3910, %v3909
    %s3915 = scalar_lea.vmem [#allocation2], 482
    %v3916 = vld [vmem:[%s3915] ss:$8 sm:$0xf]
    %s3917 = scalar_lea.vmem [#allocation2], 451
    %v3918 = vld [vmem:[%s3917] ss:$8 sm:$0xf0]
    %vm3919 = vcmask 1047556
    %v3920 = vsel %vm3919, %v3918, %v3916
    %3921 = vrot.lane.b32.xlu0 %v3920, 16
    %v3922 = vpop.permute.xlu0 %3921
    %vm3923 = vcmask 130048
    %s3924 = scalar_lea.vmem [#allocation0], 1511
    %3925 = vst.msk [vmem:[%s3924] ss:$8 sm:$0xf] %vm3923, %v3922
    %s3926 = scalar_lea.vmem [#allocation0], 1991
    %3927 = vst.msk [vmem:[%s3926] ss:$8 sm:$0xf0] %vm3923, %v3922
    %s3929 = ssub.s32 32768, 32768
    %3930 = vsyncadd [#allocation1], %s3929
    %s3932 = sshll.u32 [#allocation0], 4
    %s3933 = int_to_ptr.vmem [resolvable:$true] %s3932
    %3935 = dma.vmem_to_hbm [thread:$0]  %s3933, 32768, %s1, [#allocation1]
    %3936 = dma.done [#allocation1], 32768
    %3937 = vsyncpa [#allocation1], 1

// kernel: unet_forward.17
$region0: #{unet_forward.17}
  #allocation0 [shape = 'u32[]', space=smem, size = 0x4, offset = 0x4, fixed_abs, tag = 'smem constant byte address 0x4 - core index']
  #allocation1 [shape = 'u32[144,128]{1,0:T(1,128)}', space=vmem, size = 0x12000, scoped, tag = 'internal scratch']
  %s0 = inlined_call_operand.vmem [shape: bf16[1,8,224], index: 0, kind: input, shape index: {}]
  %s1 = inlined_call_operand.vmem [shape: bf16[1,224,8192], index: 1, kind: input, shape index: {}]
  %s2 = inlined_call_operand.vmem [shape: f32[1,8,1], index: 2, kind: input, shape index: {}]
  %s3 = inlined_call_operand.vmem [shape: f32[1,8,8192], index: 3, kind: output, shape index: {}]
  %s4 = sld [smem:[#allocation0]]
  $region68: #{unet_forward.17} parent=0
    _
  %s6 = ssub.s32 1, %s4
  %s7 = scalar_select 0, %s6, %s4
  $region1: #{unet_forward.17} parent=0
    #allocation2 [shape = 'u8[917504]{0}', space=vmem, size = 0xe0000, scoped, tag = 'input window, operand 1']
    loop: start=0, step=1, limit=10
    $region2: #{unet_forward.17} parent=1 // loop_pre_header
      _
    $region3: #{unet_forward.17} parent=1 // loop_header
      %s9 = sphi 0, %s13
      %p10 = scmp.ge.s32.totalorder %s9, 10
      %s16 = sphi 0, %s28
      %s17 = sphi 0, %s24
      %s18 = sphi 0, %s16
      %s19 = sphi 0, %s17
      %s20 = sphi 0, %s18
      %s21 = sphi 0, %s19
      %s31 = sphi 0, %s33
      %s34 = sphi 0, %s31
      %s35 = sphi 0, %s34
      %s51 = sphi 0, %s35
      %s59 = sphi 0, %s61
      %s62 = sphi 0, %s59
      %s63 = sphi 0, %s62
      %s79 = sphi 0, %s63
      %s85 = sphi 0, %s87
      %s88 = sphi 0, %s85
      %s89 = sphi 0, %s88
      %s105 = sphi 0, %s89
      %s113 = sphi 0, %s115
      %s116 = sphi 0, %s113
      %s117 = sphi 0, %s116
      %s133 = sphi 0, %s117
    $region4: #{unet_forward.17} parent=1 // loop_header_branch
      %12 = sbr.rel (%p10) target = $region8
    $region5: #{unet_forward.17} parent=1 // loop_body
      %s14 = ssub.s32 %s9, 1
      %s15 = ssub.s32 %s9, 2
      %s22 = sadd.s32 1, %s17
      %p23 = scmp.ge.s32.totalorder %s22, 8
      %s24 = scalar_select %p23, 0, %s22
      %s25 = sadd.s32 1, %s16
      %s26 = scalar_select %p23, %s25, %s16
      %p27 = scmp.ge.s32.totalorder %s26, 1
      %s28 = scalar_select %p27, 0, %s26
      %s29 = ssub.s32 %s16, %s28
      %p30 = scmp.eq.s32.totalorder %s29, 0
      %s32 = sadd.s32 %s31, 1
      %s33 = scalar_select %p30, %s31, %s32
      %p36 = pneg %p30
      %p37 = scmp.eq.s32.totalorder %s9, 7
      %p38 = por %p36, %p37
      %p39 = scmp.ne.s32.totalorder %s31, %s34
      %p40 = scmp.eq.s32.totalorder %s9, 0
      %p41 = por %p39, %p40
      %p42 = scmp.ne.s32.totalorder %s31, %s34
      %p43 = scmp.eq.s32.totalorder %s14, 7
      %p44 = por %p42, %p43
      %p45 = scmp.ne.s32.totalorder %s34, %s35
      %p46 = scmp.eq.s32.totalorder %s14, 0
      %p47 = por %p45, %p46
      %p48 = scmp.ne.s32.totalorder %s34, %s35
      %p49 = scmp.eq.s32.totalorder %s15, 7
      %p50 = por %p48, %p49
      %p52 = scmp.ne.s32.totalorder %s35, %s51
      %p53 = scmp.eq.s32.totalorder %s15, 0
      %p54 = por %p52, %p53
      %s55 = ssub.s32 %s16, %s28
      %s56 = ssub.s32 %s17, %s24
      %s57 = sor.u32 %s55, %s56
      %p58 = scmp.eq.s32.totalorder %s57, 0
      %s60 = sadd.s32 %s59, 1
      %s61 = scalar_select %p58, %s59, %s60
      %p64 = pneg %p58
      %p65 = scmp.eq.s32.totalorder %s9, 7
      %p66 = por %p64, %p65
      %p67 = scmp.ne.s32.totalorder %s59, %s62
      %p68 = scmp.eq.s32.totalorder %s9, 0
      %p69 = por %p67, %p68
      %p70 = scmp.ne.s32.totalorder %s59, %s62
      %p71 = scmp.eq.s32.totalorder %s14, 7
      %p72 = por %p70, %p71
      %p73 = scmp.ne.s32.totalorder %s62, %s63
      %p74 = scmp.eq.s32.totalorder %s14, 0
      %p75 = por %p73, %p74
      %p76 = scmp.ne.s32.totalorder %s62, %s63
      %p77 = scmp.eq.s32.totalorder %s15, 7
      %p78 = por %p76, %p77
      %p80 = scmp.ne.s32.totalorder %s63, %s79
      %p81 = scmp.eq.s32.totalorder %s15, 0
      %p82 = por %p80, %p81
      %s83 = ssub.s32 %s16, %s28
      %p84 = scmp.eq.s32.totalorder %s83, 0
      %s86 = sadd.s32 %s85, 1
      %s87 = scalar_select %p84, %s85, %s86
      %p90 = pneg %p84
      %p91 = scmp.eq.s32.totalorder %s9, 7
      %p92 = por %p90, %p91
      %p93 = scmp.ne.s32.totalorder %s85, %s88
      %p94 = scmp.eq.s32.totalorder %s9, 0
      %p95 = por %p93, %p94
      %p96 = scmp.ne.s32.totalorder %s85, %s88
      %p97 = scmp.eq.s32.totalorder %s14, 7
      %p98 = por %p96, %p97
      %p99 = scmp.ne.s32.totalorder %s88, %s89
      %p100 = scmp.eq.s32.totalorder %s14, 0
      %p101 = por %p99, %p100
      %p102 = scmp.ne.s32.totalorder %s88, %s89
      %p103 = scmp.eq.s32.totalorder %s15, 7
      %p104 = por %p102, %p103
      %p106 = scmp.ne.s32.totalorder %s89, %s105
      %p107 = scmp.eq.s32.totalorder %s15, 0
      %p108 = por %p106, %p107
      %s109 = ssub.s32 %s16, %s28
      %s110 = ssub.s32 %s17, %s24
      %s111 = sor.u32 %s109, %s110
      %p112 = scmp.eq.s32.totalorder %s111, 0
      %s114 = sadd.s32 %s113, 1
      %s115 = scalar_select %p112, %s113, %s114
      %p118 = pneg %p112
      %p119 = scmp.eq.s32.totalorder %s9, 7
      %p120 = por %p118, %p119
      %p121 = scmp.ne.s32.totalorder %s113, %s116
      %p122 = scmp.eq.s32.totalorder %s9, 0
      %p123 = por %p121, %p122
      %p124 = scmp.ne.s32.totalorder %s113, %s116
      %p125 = scmp.eq.s32.totalorder %s14, 7
      %p126 = por %p124, %p125
      %p127 = scmp.ne.s32.totalorder %s116, %s117
      %p128 = scmp.eq.s32.totalorder %s14, 0
      %p129 = por %p127, %p128
      %p130 = scmp.ne.s32.totalorder %s116, %s117
      %p131 = scmp.eq.s32.totalorder %s15, 7
      %p132 = por %p130, %p131
      %p134 = scmp.ne.s32.totalorder %s117, %s133
      %p135 = scmp.eq.s32.totalorder %s15, 0
      %p136 = por %p134, %p135
      %p137 = scmp.le.s32.totalorder 1, %s9
      %p138 = scmp.lt.s32.totalorder %s9, 9
      %p139 = pnand %p137, %p138
      %p140 = pneg %p139
      // Predicated region
      $region9: #{unet_forward.17} parent=5 // pred_check
        _
      $region10: #{unet_forward.17} parent=5 // pred_check_branch
        %142 = sbr.rel (%p139) target = $region12
      $region11: #{unet_forward.17} parent=5 // pred_region
        %s143 = ssub.s32 %s9, 1
        // Predicated region
        $region13: #{unet_forward.17} parent=11 // pred_check
          %p144 = pneg %p47
        $region14: #{unet_forward.17} parent=11 // pred_check_branch
          %146 = sbr.rel (%p144) target = $region16
        $region15: #{unet_forward.17} parent=11 // pred_region
          %p147 = scmp.lt.s32.totalorder %s18, 0
          %s148 = scalar_select %p147, %s18, 0
          %s149 = smul.addr %s148, 2
          %s150 = smul.addr %s149, 4
          %s151 = scalar_lea.vmem %s0, %s150
        $region16: #{unet_forward.17} parent=11 // pred_fallthru
          _
        // Predicated region
        $region17: #{unet_forward.17} parent=11 // pred_check
          %p152 = pneg %p101
        $region18: #{unet_forward.17} parent=11 // pred_check_branch
          %154 = sbr.rel (%p152) target = $region20
        $region19: #{unet_forward.17} parent=11 // pred_region
          %p155 = scmp.lt.s32.totalorder %s18, 0
          %s156 = scalar_select %p155, %s18, 0
          %s157 = smul.addr %s156, 8
          %s158 = scalar_lea.vmem %s2, %s157
        $region20: #{unet_forward.17} parent=11 // pred_fallthru
          _
      $region12: #{unet_forward.17} parent=5 // pred_fallthru
        _
      %p159 = scmp.lt.s32.totalorder %s9, 8
      // Predicated region
      $region21: #{unet_forward.17} parent=5 // pred_check
        %p160 = pneg %p159
      $region22: #{unet_forward.17} parent=5 // pred_check_branch
        %162 = sbr.rel (%p160) target = $region24
      $region23: #{unet_forward.17} parent=5 // pred_region
        // Predicated region
        $region25: #{unet_forward.17} parent=23 // pred_check
          %p163 = pneg %p69
        $region26: #{unet_forward.17} parent=23 // pred_check_branch
          %165 = sbr.rel (%p163) target = $region28
        $region27: #{unet_forward.17} parent=23 // pred_region
          %s166 = sand.u32 %s59, 1
          %s167 = sand.u32 %s59, 1
          %s168 = smul.addr %s167, 896
          %s169 = scalar_lea.vmem [#allocation2], %s168
          %s170 = smul.u32 8, %s17
          %s171 = smul.addr %s16, 1792
          %s172 = sadd.s32 %s170, %s171
          %s173 = smul.addr %s172, 4
          %s174 = scalar_lea.vmem %s1, %s173
          // Predicated region
          $region29: #{unet_forward.17} parent=27 // pred_check
            _
          $region30: #{unet_forward.17} parent=27 // pred_check_branch
            %176 = sbr.rel (0) target = $region32
          $region31: #{unet_forward.17} parent=27 // pred_region
            // Predicated region
            $region33: #{unet_forward.17} parent=31 // pred_check
              _
            $region34: #{unet_forward.17} parent=31 // pred_check_branch
              %178 = sbr.rel (0) target = $region36
            $region35: #{unet_forward.17} parent=31 // pred_region
              loop: start=0, step=1, limit=1
              $region37: #{unet_forward.17} parent=35 // loop_pre_header
                _
              $region38: #{unet_forward.17} parent=35 // loop_header
                %s180 = sphi 0, %s184
                %p181 = scmp.ge.s32.totalorder %s180, 1
                %s185 = sphi %s174, %s174
                %s186 = sphi %s169, %s169
              $region39: #{unet_forward.17} parent=35 // loop_header_branch
                %183 = sbr.rel (%p181) target = $region43
              $region40: #{unet_forward.17} parent=35 // loop_body
                %v187 = vld [vmem:[%s185] sm:$0xff]
                %188 = vst [vmem:[%s186] sm:$0xff] %v187
                %v189 = vld [vmem:[%s185 + $0x8] sm:$0xff]
                %190 = vst [vmem:[%s186 + $0x8] sm:$0xff] %v189
                %v191 = vld [vmem:[%s185 + $0x10] sm:$0xff]
                %192 = vst [vmem:[%s186 + $0x10] sm:$0xff] %v191
                %v193 = vld [vmem:[%s185 + $0x18] sm:$0xff]
                %194 = vst [vmem:[%s186 + $0x18] sm:$0xff] %v193
                %v195 = vld [vmem:[%s185 + $0x100] sm:$0xff]
                %196 = vst [vmem:[%s186 + $0x20] sm:$0xff] %v195
                %v197 = vld [vmem:[%s185 + $0x108] sm:$0xff]
                %198 = vst [vmem:[%s186 + $0x28] sm:$0xff] %v197
                %v199 = vld [vmem:[%s185 + $0x110] sm:$0xff]
                %200 = vst [vmem:[%s186 + $0x30] sm:$0xff] %v199
                %v201 = vld [vmem:[%s185 + $0x118] sm:$0xff]
                %202 = vst [vmem:[%s186 + $0x38] sm:$0xff] %v201
                %v203 = vld [vmem:[%s185 + $0x200] sm:$0xff]
                %204 = vst [vmem:[%s186 + $0x40] sm:$0xff] %v203
                %v205 = vld [vmem:[%s185 + $0x208] sm:$0xff]
                %206 = vst [vmem:[%s186 + $0x48] sm:$0xff] %v205
                %v207 = vld [vmem:[%s185 + $0x210] sm:$0xff]
                %208 = vst [vmem:[%s186 + $0x50] sm:$0xff] %v207
                %v209 = vld [vmem:[%s185 + $0x218] sm:$0xff]
                %210 = vst [vmem:[%s186 + $0x58] sm:$0xff] %v209
                %v211 = vld [vmem:[%s185 + $0x300] sm:$0xff]
                %212 = vst [vmem:[%s186 + $0x60] sm:$0xff] %v211
                %v213 = vld [vmem:[%s185 + $0x308] sm:$0xff]
                %214 = vst [vmem:[%s186 + $0x68] sm:$0xff] %v213
                %v215 = vld [vmem:[%s185 + $0x310] sm:$0xff]
                %216 = vst [vmem:[%s186 + $0x70] sm:$0xff] %v215
                %v217 = vld [vmem:[%s185 + $0x318] sm:$0xff]
                %218 = vst [vmem:[%s186 + $0x78] sm:$0xff] %v217
                %v219 = vld [vmem:[%s185 + $0x400] sm:$0xff]
                %220 = vst [vmem:[%s186 + $0x80] sm:$0xff] %v219
                %v221 = vld [vmem:[%s185 + $0x408] sm:$0xff]
                %222 = vst [vmem:[%s186 + $0x88] sm:$0xff] %v221
                %v223 = vld [vmem:[%s185 + $0x410] sm:$0xff]
                %224 = vst [vmem:[%s186 + $0x90] sm:$0xff] %v223
                %v225 = vld [vmem:[%s185 + $0x418] sm:$0xff]
                %226 = vst [vmem:[%s186 + $0x98] sm:$0xff] %v225
                %v227 = vld [vmem:[%s185 + $0x500] sm:$0xff]
                %228 = vst [vmem:[%s186 + $0xa0] sm:$0xff] %v227
                %v229 = vld [vmem:[%s185 + $0x508] sm:$0xff]
                %230 = vst [vmem:[%s186 + $0xa8] sm:$0xff] %v229
                %v231 = vld [vmem:[%s185 + $0x510] sm:$0xff]
                %232 = vst [vmem:[%s186 + $0xb0] sm:$0xff] %v231
                %v233 = vld [vmem:[%s185 + $0x518] sm:$0xff]
                %234 = vst [vmem:[%s186 + $0xb8] sm:$0xff] %v233
                %v235 = vld [vmem:[%s185 + $0x600] sm:$0xff]
                %236 = vst [vmem:[%s186 + $0xc0] sm:$0xff] %v235
                %v237 = vld [vmem:[%s185 + $0x608] sm:$0xff]
                %238 = vst [vmem:[%s186 + $0xc8] sm:$0xff] %v237
                %v239 = vld [vmem:[%s185 + $0x610] sm:$0xff]
                %240 = vst [vmem:[%s186 + $0xd0] sm:$0xff] %v239
                %v241 = vld [vmem:[%s185 + $0x618] sm:$0xff]
                %242 = vst [vmem:[%s186 + $0xd8] sm:$0xff] %v241
                %v243 = vld [vmem:[%s185 + $0x700] sm:$0xff]
                %244 = vst [vmem:[%s186 + $0xe0] sm:$0xff] %v243
                %v245 = vld [vmem:[%s185 + $0x708] sm:$0xff]
                %246 = vst [vmem:[%s186 + $0xe8] sm:$0xff] %v245
                %v247 = vld [vmem:[%s185 + $0x710] sm:$0xff]
                %248 = vst [vmem:[%s186 + $0xf0] sm:$0xff] %v247
                %v249 = vld [vmem:[%s185 + $0x718] sm:$0xff]
                %250 = vst [vmem:[%s186 + $0xf8] sm:$0xff] %v249
                %v251 = vld [vmem:[%s185 + $0x800] sm:$0xff]
                %252 = vst [vmem:[%s186 + $0x100] sm:$0xff] %v251
                %v253 = vld [vmem:[%s185 + $0x808] sm:$0xff]
                %254 = vst [vmem:[%s186 + $0x108] sm:$0xff] %v253
                %v255 = vld [vmem:[%s185 + $0x810] sm:$0xff]
                %256 = vst [vmem:[%s186 + $0x110] sm:$0xff] %v255
                %v257 = vld [vmem:[%s185 + $0x818] sm:$0xff]
                %258 = vst [vmem:[%s186 + $0x118] sm:$0xff] %v257
                %v259 = vld [vmem:[%s185 + $0x900] sm:$0xff]
                %260 = vst [vmem:[%s186 + $0x120] sm:$0xff] %v259
                %v261 = vld [vmem:[%s185 + $0x908] sm:$0xff]
                %262 = vst [vmem:[%s186 + $0x128] sm:$0xff] %v261
                %v263 = vld [vmem:[%s185 + $0x910] sm:$0xff]
                %264 = vst [vmem:[%s186 + $0x130] sm:$0xff] %v263
                %v265 = vld [vmem:[%s185 + $0x918] sm:$0xff]
                %266 = vst [vmem:[%s186 + $0x138] sm:$0xff] %v265
                %v267 = vld [vmem:[%s185 + $0xa00] sm:$0xff]
                %268 = vst [vmem:[%s186 + $0x140] sm:$0xff] %v267
                %v269 = vld [vmem:[%s185 + $0xa08] sm:$0xff]
                %270 = vst [vmem:[%s186 + $0x148] sm:$0xff] %v269
                %v271 = vld [vmem:[%s185 + $0xa10] sm:$0xff]
                %272 = vst [vmem:[%s186 + $0x150] sm:$0xff] %v271
                %v273 = vld [vmem:[%s185 + $0xa18] sm:$0xff]
                %274 = vst [vmem:[%s186 + $0x158] sm:$0xff] %v273
                %v275 = vld [vmem:[%s185 + $0xb00] sm:$0xff]
                %276 = vst [vmem:[%s186 + $0x160] sm:$0xff] %v275
                %v277 = vld [vmem:[%s185 + $0xb08] sm:$0xff]
                %278 = vst [vmem:[%s186 + $0x168] sm:$0xff] %v277
                %v279 = vld [vmem:[%s185 + $0xb10] sm:$0xff]
                %280 = vst [vmem:[%s186 + $0x170] sm:$0xff] %v279
                %v281 = vld [vmem:[%s185 + $0xb18] sm:$0xff]
                %282 = vst [vmem:[%s186 + $0x178] sm:$0xff] %v281
                %v283 = vld [vmem:[%s185 + $0xc00] sm:$0xff]
                %284 = vst [vmem:[%s186 + $0x180] sm:$0xff] %v283
                %v285 = vld [vmem:[%s185 + $0xc08] sm:$0xff]
                %286 = vst [vmem:[%s186 + $0x188] sm:$0xff] %v285
                %v287 = vld [vmem:[%s185 + $0xc10] sm:$0xff]
                %288 = vst [vmem:[%s186 + $0x190] sm:$0xff] %v287
                %v289 = vld [vmem:[%s185 + $0xc18] sm:$0xff]
                %290 = vst [vmem:[%s186 + $0x198] sm:$0xff] %v289
                %v291 = vld [vmem:[%s185 + $0xd00] sm:$0xff]
                %292 = vst [vmem:[%s186 + $0x1a0] sm:$0xff] %v291
                %v293 = vld [vmem:[%s185 + $0xd08] sm:$0xff]
                %294 = vst [vmem:[%s186 + $0x1a8] sm:$0xff] %v293
                %v295 = vld [vmem:[%s185 + $0xd10] sm:$0xff]
                %296 = vst [vmem:[%s186 + $0x1b0] sm:$0xff] %v295
                %v297 = vld [vmem:[%s185 + $0xd18] sm:$0xff]
                %298 = vst [vmem:[%s186 + $0x1b8] sm:$0xff] %v297
                %v299 = vld [vmem:[%s185 + $0xe00] sm:$0xff]
                %300 = vst [vmem:[%s186 + $0x1c0] sm:$0xff] %v299
                %v301 = vld [vmem:[%s185 + $0xe08] sm:$0xff]
                %302 = vst [vmem:[%s186 + $0x1c8] sm:$0xff] %v301
                %v303 = vld [vmem:[%s185 + $0xe10] sm:$0xff]
                %304 = vst [vmem:[%s186 + $0x1d0] sm:$0xff] %v303
                %v305 = vld [vmem:[%s185 + $0xe18] sm:$0xff]
                %306 = vst [vmem:[%s186 + $0x1d8] sm:$0xff] %v305
                %v307 = vld [vmem:[%s185 + $0xf00] sm:$0xff]
                %308 = vst [vmem:[%s186 + $0x1e0] sm:$0xff] %v307
                %v309 = vld [vmem:[%s185 + $0xf08] sm:$0xff]
                %310 = vst [vmem:[%s186 + $0x1e8] sm:$0xff] %v309
                %v311 = vld [vmem:[%s185 + $0xf10] sm:$0xff]
                %312 = vst [vmem:[%s186 + $0x1f0] sm:$0xff] %v311
                %v313 = vld [vmem:[%s185 + $0xf18] sm:$0xff]
                %314 = vst [vmem:[%s186 + $0x1f8] sm:$0xff] %v313
                %v315 = vld [vmem:[%s185 + $0x1000] sm:$0xff]
                %316 = vst [vmem:[%s186 + $0x200] sm:$0xff] %v315
                %v317 = vld [vmem:[%s185 + $0x1008] sm:$0xff]
                %318 = vst [vmem:[%s186 + $0x208] sm:$0xff] %v317
                %v319 = vld [vmem:[%s185 + $0x1010] sm:$0xff]
                %320 = vst [vmem:[%s186 + $0x210] sm:$0xff] %v319
                %v321 = vld [vmem:[%s185 + $0x1018] sm:$0xff]
                %322 = vst [vmem:[%s186 + $0x218] sm:$0xff] %v321
                %v323 = vld [vmem:[%s185 + $0x1100] sm:$0xff]
                %324 = vst [vmem:[%s186 + $0x220] sm:$0xff] %v323
                %v325 = vld [vmem:[%s185 + $0x1108] sm:$0xff]
                %326 = vst [vmem:[%s186 + $0x228] sm:$0xff] %v325
                %v327 = vld [vmem:[%s185 + $0x1110] sm:$0xff]
                %328 = vst [vmem:[%s186 + $0x230] sm:$0xff] %v327
                %v329 = vld [vmem:[%s185 + $0x1118] sm:$0xff]
                %330 = vst [vmem:[%s186 + $0x238] sm:$0xff] %v329
                %v331 = vld [vmem:[%s185 + $0x1200] sm:$0xff]
                %332 = vst [vmem:[%s186 + $0x240] sm:$0xff] %v331
                %v333 = vld [vmem:[%s185 + $0x1208] sm:$0xff]
                %334 = vst [vmem:[%s186 + $0x248] sm:$0xff] %v333
                %v335 = vld [vmem:[%s185 + $0x1210] sm:$0xff]
                %336 = vst [vmem:[%s186 + $0x250] sm:$0xff] %v335
                %v337 = vld [vmem:[%s185 + $0x1218] sm:$0xff]
                %338 = vst [vmem:[%s186 + $0x258] sm:$0xff] %v337
                %v339 = vld [vmem:[%s185 + $0x1300] sm:$0xff]
                %340 = vst [vmem:[%s186 + $0x260] sm:$0xff] %v339
                %v341 = vld [vmem:[%s185 + $0x1308] sm:$0xff]
                %342 = vst [vmem:[%s186 + $0x268] sm:$0xff] %v341
                %v343 = vld [vmem:[%s185 + $0x1310] sm:$0xff]
                %344 = vst [vmem:[%s186 + $0x270] sm:$0xff] %v343
                %v345 = vld [vmem:[%s185 + $0x1318] sm:$0xff]
                %346 = vst [vmem:[%s186 + $0x278] sm:$0xff] %v345
                %v347 = vld [vmem:[%s185 + $0x1400] sm:$0xff]
                %348 = vst [vmem:[%s186 + $0x280] sm:$0xff] %v347
                %v349 = vld [vmem:[%s185 + $0x1408] sm:$0xff]
                %350 = vst [vmem:[%s186 + $0x288] sm:$0xff] %v349
                %v351 = vld [vmem:[%s185 + $0x1410] sm:$0xff]
                %352 = vst [vmem:[%s186 + $0x290] sm:$0xff] %v351
                %v353 = vld [vmem:[%s185 + $0x1418] sm:$0xff]
                %354 = vst [vmem:[%s186 + $0x298] sm:$0xff] %v353
                %v355 = vld [vmem:[%s185 + $0x1500] sm:$0xff]
                %356 = vst [vmem:[%s186 + $0x2a0] sm:$0xff] %v355
                %v357 = vld [vmem:[%s185 + $0x1508] sm:$0xff]
                %358 = vst [vmem:[%s186 + $0x2a8] sm:$0xff] %v357
                %v359 = vld [vmem:[%s185 + $0x1510] sm:$0xff]
                %360 = vst [vmem:[%s186 + $0x2b0] sm:$0xff] %v359
                %v361 = vld [vmem:[%s185 + $0x1518] sm:$0xff]
                %362 = vst [vmem:[%s186 + $0x2b8] sm:$0xff] %v361
                %v363 = vld [vmem:[%s185 + $0x1600] sm:$0xff]
                %364 = vst [vmem:[%s186 + $0x2c0] sm:$0xff] %v363
                %v365 = vld [vmem:[%s185 + $0x1608] sm:$0xff]
                %366 = vst [vmem:[%s186 + $0x2c8] sm:$0xff] %v365
                %v367 = vld [vmem:[%s185 + $0x1610] sm:$0xff]
                %368 = vst [vmem:[%s186 + $0x2d0] sm:$0xff] %v367
                %v369 = vld [vmem:[%s185 + $0x1618] sm:$0xff]
                %370 = vst [vmem:[%s186 + $0x2d8] sm:$0xff] %v369
                %v371 = vld [vmem:[%s185 + $0x1700] sm:$0xff]
                %372 = vst [vmem:[%s186 + $0x2e0] sm:$0xff] %v371
                %v373 = vld [vmem:[%s185 + $0x1708] sm:$0xff]
                %374 = vst [vmem:[%s186 + $0x2e8] sm:$0xff] %v373
                %v375 = vld [vmem:[%s185 + $0x1710] sm:$0xff]
                %376 = vst [vmem:[%s186 + $0x2f0] sm:$0xff] %v375
                %v377 = vld [vmem:[%s185 + $0x1718] sm:$0xff]
                %378 = vst [vmem:[%s186 + $0x2f8] sm:$0xff] %v377
                %v379 = vld [vmem:[%s185 + $0x1800] sm:$0xff]
                %380 = vst [vmem:[%s186 + $0x300] sm:$0xff] %v379
                %v381 = vld [vmem:[%s185 + $0x1808] sm:$0xff]
                %382 = vst [vmem:[%s186 + $0x308] sm:$0xff] %v381
                %v383 = vld [vmem:[%s185 + $0x1810] sm:$0xff]
                %384 = vst [vmem:[%s186 + $0x310] sm:$0xff] %v383
                %v385 = vld [vmem:[%s185 + $0x1818] sm:$0xff]
                %386 = vst [vmem:[%s186 + $0x318] sm:$0xff] %v385
                %v387 = vld [vmem:[%s185 + $0x1900] sm:$0xff]
                %388 = vst [vmem:[%s186 + $0x320] sm:$0xff] %v387
                %v389 = vld [vmem:[%s185 + $0x1908] sm:$0xff]
                %390 = vst [vmem:[%s186 + $0x328] sm:$0xff] %v389
                %v391 = vld [vmem:[%s185 + $0x1910] sm:$0xff]
                %392 = vst [vmem:[%s186 + $0x330] sm:$0xff] %v391
                %v393 = vld [vmem:[%s185 + $0x1918] sm:$0xff]
                %394 = vst [vmem:[%s186 + $0x338] sm:$0xff] %v393
                %v395 = vld [vmem:[%s185 + $0x1a00] sm:$0xff]
                %396 = vst [vmem:[%s186 + $0x340] sm:$0xff] %v395
                %v397 = vld [vmem:[%s185 + $0x1a08] sm:$0xff]
                %398 = vst [vmem:[%s186 + $0x348] sm:$0xff] %v397
                %v399 = vld [vmem:[%s185 + $0x1a10] sm:$0xff]
                %400 = vst [vmem:[%s186 + $0x350] sm:$0xff] %v399
                %v401 = vld [vmem:[%s185 + $0x1a18] sm:$0xff]
                %402 = vst [vmem:[%s186 + $0x358] sm:$0xff] %v401
                %v403 = vld [vmem:[%s185 + $0x1b00] sm:$0xff]
                %404 = vst [vmem:[%s186 + $0x360] sm:$0xff] %v403
                %v405 = vld [vmem:[%s185 + $0x1b08] sm:$0xff]
                %406 = vst [vmem:[%s186 + $0x368] sm:$0xff] %v405
                %v407 = vld [vmem:[%s185 + $0x1b10] sm:$0xff]
                %408 = vst [vmem:[%s186 + $0x370] sm:$0xff] %v407
                %v409 = vld [vmem:[%s185 + $0x1b18] sm:$0xff]
                %410 = vst [vmem:[%s186 + $0x378] sm:$0xff] %v409
              $region41: #{unet_forward.17} parent=35 // loop_footer
                %s184 = sadd.s32 1, %s180
              $region42: #{unet_forward.17} parent=35 // loop_footer_branch
                %179 = sbr.rel target = $region38
              $region43: #{unet_forward.17} parent=35 // loop_exit
                _
            $region36: #{unet_forward.17} parent=31 // pred_fallthru
              _
            // Predicated region
            $region44: #{unet_forward.17} parent=31 // pred_check
              _
            $region45: #{unet_forward.17} parent=31 // pred_check_branch
              %412 = sbr.rel target = $region47
            $region46: #{unet_forward.17} parent=31 // pred_region
              _
            $region47: #{unet_forward.17} parent=31 // pred_fallthru
              _
          $region32: #{unet_forward.17} parent=27 // pred_fallthru
            _
          %413 = vnop
        $region28: #{unet_forward.17} parent=23 // pred_fallthru
          _
      $region24: #{unet_forward.17} parent=5 // pred_fallthru
        _
      %p414 = scmp.le.s32.totalorder 1, %s9
      %p415 = scmp.lt.s32.totalorder %s9, 9
      %p416 = pnand %p414, %p415
      %p417 = pneg %p416
      // Predicated region
      $region48: #{unet_forward.17} parent=5 // pred_check
        _
      $region49: #{unet_forward.17} parent=5 // pred_check_branch
        %419 = sbr.rel (%p416) target = $region51
      $region50: #{unet_forward.17} parent=5 // pred_region
        %s420 = ssub.s32 %s9, 1
        %s421 = sand.u32 %s62, 1
        %s422 = sand.u32 %s62, 1
        %s423 = smul.addr %s422, 896
        %s424 = scalar_lea.vmem [#allocation2], %s423
        // Predicated region
        $region52: #{unet_forward.17} parent=50 // pred_check
          %p425 = pneg %p75
        $region53: #{unet_forward.17} parent=50 // pred_check_branch
          %427 = sbr.rel (%p425) target = $region55
        $region54: #{unet_forward.17} parent=50 // pred_region
          _
        $region55: #{unet_forward.17} parent=50 // pred_fallthru
          _
        %p428 = scmp.lt.s32.totalorder %s18, 0
        %s429 = scalar_select %p428, %s18, 0
        %s430 = smul.addr %s429, 2
        %s431 = smul.addr %s430, 4
        %s432 = scalar_lea.vmem %s0, %s431
        %p433 = pneg %p47
        %p434 = pneg %p44
        %s435 = sand.u32 %s62, 1
        %s436 = sand.u32 %s62, 1
        %s437 = smul.addr %s436, 896
        %s438 = scalar_lea.vmem [#allocation2], %s437
        %p439 = pneg %p75
        %p440 = pneg %p72
        %p441 = scmp.lt.s32.totalorder %s18, 0
        %s442 = scalar_select %p441, %s18, 0
        %s443 = smul.addr %s442, 8
        %s444 = scalar_lea.vmem %s2, %s443
        %p445 = pneg %p101
        %p446 = pneg %p98
        %p447 = pneg %p129
        %p448 = pneg %p126
        %s449 = smul.u32 8, %s19
        %p450 = scmp.lt.s32.totalorder %s18, 0
        %s451 = scalar_select %p450, %s18, 0
        %p452 = scmp.lt.s32.totalorder %s449, 63
        %s453 = scalar_select %p452, %s449, 63
        %s454 = smul.addr %s451, 64
        %s455 = sadd.s32 %s453, %s454
        %s456 = smul.addr %s455, 8
        %s457 = scalar_lea.vmem %s3, %s456
        %p458 = scmp.lt.s32.totalorder %s18, 0
        %s459 = scalar_select %p458, %s18, 0
        %s460 = smul.addr %s459, 2
        %s461 = smul.addr %s460, 4
        %s462 = scalar_lea.vmem %s0, %s461
        %s463 = smul.u32 8, %s19
        %p464 = scmp.lt.s32.totalorder %s18, 0
        %s465 = scalar_select %p464, %s18, 0
        %s466 = smul.addr %s465, 8
        %s467 = scalar_lea.vmem %s2, %s466
        %s468 = smul.u32 8, %s19
        %p469 = scmp.lt.s32.totalorder %s18, 0
        %s470 = scalar_select %p469, %s18, 0
        %p471 = scmp.lt.s32.totalorder %s468, 63
        %s472 = scalar_select %p471, %s468, 63
        %s473 = smul.addr %s470, 64
        %s474 = sadd.s32 %s472, %s473
        %s475 = smul.addr %s474, 8
        %s476 = scalar_lea.vmem %s3, %s475
        %s477 = smul.u32 8, %s19
        %v479 = vld [vmem:[%s462] sm:$0xff]
        %v480 = vld [vmem:[%s424] sm:$0xff]
        %v481 = vld [vmem:[%s424 + $0x8] sm:$0xff]
        %v482 = vld [vmem:[%s424 + $0x10] sm:$0xff]
        %v483 = vld [vmem:[%s424 + $0x18] sm:$0xff]
        %v484 = vld [vmem:[%s424 + $0x20] sm:$0xff]
        %v485 = vld [vmem:[%s424 + $0x28] sm:$0xff]
        %v486 = vld [vmem:[%s424 + $0x30] sm:$0xff]
        %v487 = vld [vmem:[%s424 + $0x38] sm:$0xff]
        %v488 = vld [vmem:[%s424 + $0x40] sm:$0xff]
        %v489 = vld [vmem:[%s424 + $0x48] sm:$0xff]
        %v490 = vld [vmem:[%s424 + $0x50] sm:$0xff]
        %v491 = vld [vmem:[%s424 + $0x58] sm:$0xff]
        %v492 = vld [vmem:[%s424 + $0x60] sm:$0xff]
        %v493 = vld [vmem:[%s424 + $0x68] sm:$0xff]
        %v494 = vld [vmem:[%s424 + $0x70] sm:$0xff]
        %v495 = vld [vmem:[%s424 + $0x78] sm:$0xff]
        %v496 = vld [vmem:[%s424 + $0x80] sm:$0xff]
        %v497 = vld [vmem:[%s424 + $0x88] sm:$0xff]
        %v498 = vld [vmem:[%s424 + $0x90] sm:$0xff]
        %v499 = vld [vmem:[%s424 + $0x98] sm:$0xff]
        %v500 = vld [vmem:[%s424 + $0xa0] sm:$0xff]
        %v501 = vld [vmem:[%s424 + $0xa8] sm:$0xff]
        %v502 = vld [vmem:[%s424 + $0xb0] sm:$0xff]
        %v503 = vld [vmem:[%s424 + $0xb8] sm:$0xff]
        %v504 = vld [vmem:[%s424 + $0xc0] sm:$0xff]
        %v505 = vld [vmem:[%s424 + $0xc8] sm:$0xff]
        %v506 = vld [vmem:[%s424 + $0xd0] sm:$0xff]
        %v507 = vld [vmem:[%s424 + $0xd8] sm:$0xff]
        %v508 = vld [vmem:[%s424 + $0xe0] sm:$0xff]
        %v509 = vld [vmem:[%s424 + $0xe8] sm:$0xff]
        %v510 = vld [vmem:[%s424 + $0xf0] sm:$0xff]
        %v511 = vld [vmem:[%s424 + $0xf8] sm:$0xff]
        %v512 = vld [vmem:[%s424 + $0x100] sm:$0xff]
        %v513 = vld [vmem:[%s424 + $0x108] sm:$0xff]
        %v514 = vld [vmem:[%s424 + $0x110] sm:$0xff]
        %v515 = vld [vmem:[%s424 + $0x118] sm:$0xff]
        %v516 = vld [vmem:[%s424 + $0x120] sm:$0xff]
        %v517 = vld [vmem:[%s424 + $0x128] sm:$0xff]
        %v518 = vld [vmem:[%s424 + $0x130] sm:$0xff]
        %v519 = vld [vmem:[%s424 + $0x138] sm:$0xff]
        %v520 = vld [vmem:[%s424 + $0x140] sm:$0xff]
        %v521 = vld [vmem:[%s424 + $0x148] sm:$0xff]
        %v522 = vld [vmem:[%s424 + $0x150] sm:$0xff]
        %v523 = vld [vmem:[%s424 + $0x158] sm:$0xff]
        %v524 = vld [vmem:[%s424 + $0x160] sm:$0xff]
        %v525 = vld [vmem:[%s424 + $0x168] sm:$0xff]
        %v526 = vld [vmem:[%s424 + $0x170] sm:$0xff]
        %v527 = vld [vmem:[%s424 + $0x178] sm:$0xff]
        %v528 = vld [vmem:[%s424 + $0x180] sm:$0xff]
        %v529 = vld [vmem:[%s424 + $0x188] sm:$0xff]
        %v530 = vld [vmem:[%s424 + $0x190] sm:$0xff]
        %v531 = vld [vmem:[%s424 + $0x198] sm:$0xff]
        %v532 = vld [vmem:[%s424 + $0x1a0] sm:$0xff]
        %v533 = vld [vmem:[%s424 + $0x1a8] sm:$0xff]
        %v534 = vld [vmem:[%s424 + $0x1b0] sm:$0xff]
        %v535 = vld [vmem:[%s424 + $0x1b8] sm:$0xff]
        %v536 = vld [vmem:[%s424 + $0x1c0] sm:$0xff]
        %v537 = vld [vmem:[%s424 + $0x1c8] sm:$0xff]
        %v538 = vld [vmem:[%s424 + $0x1d0] sm:$0xff]
        %v539 = vld [vmem:[%s424 + $0x1d8] sm:$0xff]
        %v540 = vld [vmem:[%s424 + $0x1e0] sm:$0xff]
        %v541 = vld [vmem:[%s424 + $0x1e8] sm:$0xff]
        %v542 = vld [vmem:[%s424 + $0x1f0] sm:$0xff]
        %v543 = vld [vmem:[%s424 + $0x1f8] sm:$0xff]
        %v544 = vld [vmem:[%s424 + $0x200] sm:$0xff]
        %v545 = vld [vmem:[%s424 + $0x208] sm:$0xff]
        %v546 = vld [vmem:[%s424 + $0x210] sm:$0xff]
        %v547 = vld [vmem:[%s424 + $0x218] sm:$0xff]
        %v548 = vld [vmem:[%s424 + $0x220] sm:$0xff]
        %v549 = vld [vmem:[%s424 + $0x228] sm:$0xff]
        %v550 = vld [vmem:[%s424 + $0x230] sm:$0xff]
        %v551 = vld [vmem:[%s424 + $0x238] sm:$0xff]
        %v552 = vld [vmem:[%s424 + $0x240] sm:$0xff]
        %v553 = vld [vmem:[%s424 + $0x248] sm:$0xff]
        %v554 = vld [vmem:[%s424 + $0x250] sm:$0xff]
        %v555 = vld [vmem:[%s424 + $0x258] sm:$0xff]
        %v556 = vld [vmem:[%s424 + $0x260] sm:$0xff]
        %v557 = vld [vmem:[%s424 + $0x268] sm:$0xff]
        %v558 = vld [vmem:[%s424 + $0x270] sm:$0xff]
        %v559 = vld [vmem:[%s424 + $0x278] sm:$0xff]
        %v560 = vld [vmem:[%s424 + $0x280] sm:$0xff]
        %v561 = vld [vmem:[%s424 + $0x288] sm:$0xff]
        %v562 = vld [vmem:[%s424 + $0x290] sm:$0xff]
        %v563 = vld [vmem:[%s424 + $0x298] sm:$0xff]
        %v564 = vld [vmem:[%s424 + $0x2a0] sm:$0xff]
        %v565 = vld [vmem:[%s424 + $0x2a8] sm:$0xff]
        %v566 = vld [vmem:[%s424 + $0x2b0] sm:$0xff]
        %v567 = vld [vmem:[%s424 + $0x2b8] sm:$0xff]
        %v568 = vld [vmem:[%s424 + $0x2c0] sm:$0xff]
        %v569 = vld [vmem:[%s424 + $0x2c8] sm:$0xff]
        %v570 = vld [vmem:[%s424 + $0x2d0] sm:$0xff]
        %v571 = vld [vmem:[%s424 + $0x2d8] sm:$0xff]
        %v572 = vld [vmem:[%s424 + $0x2e0] sm:$0xff]
        %v573 = vld [vmem:[%s424 + $0x2e8] sm:$0xff]
        %v574 = vld [vmem:[%s424 + $0x2f0] sm:$0xff]
        %v575 = vld [vmem:[%s424 + $0x2f8] sm:$0xff]
        %v576 = vld [vmem:[%s424 + $0x300] sm:$0xff]
        %v577 = vld [vmem:[%s424 + $0x308] sm:$0xff]
        %v578 = vld [vmem:[%s424 + $0x310] sm:$0xff]
        %v579 = vld [vmem:[%s424 + $0x318] sm:$0xff]
        %v580 = vld [vmem:[%s424 + $0x320] sm:$0xff]
        %v581 = vld [vmem:[%s424 + $0x328] sm:$0xff]
        %v582 = vld [vmem:[%s424 + $0x330] sm:$0xff]
        %v583 = vld [vmem:[%s424 + $0x338] sm:$0xff]
        %v584 = vld [vmem:[%s424 + $0x340] sm:$0xff]
        %v585 = vld [vmem:[%s424 + $0x348] sm:$0xff]
        %v586 = vld [vmem:[%s424 + $0x350] sm:$0xff]
        %v587 = vld [vmem:[%s424 + $0x358] sm:$0xff]
        %v588 = vld [vmem:[%s424 + $0x360] sm:$0xff]
        %v589 = vld [vmem:[%s424 + $0x368] sm:$0xff]
        %v590 = vld [vmem:[%s424 + $0x370] sm:$0xff]
        %v591 = vld [vmem:[%s424 + $0x378] sm:$0xff]
        %v592 = vld [vmem:[%s467] sm:$0xff]
        %594 = vset.pattern.permute.xlu0 0
        %595 = vperm.xlu0 %594, %v592
        %v596 = vpop.permute.xlu0 %595
        %v599 = vunpack.c.l.b16 %v479
        %v600 = vunpack.c.h.b16 %v479
        %v601 = vpack.c.b16 %v599, %v599
        %v602 = vpack.c.b16 %v600, %v600
        %v716 = vunpack.c.l.b16 %v480
        %v717 = vunpack.c.h.b16 %v480
        %v718 = vunpack.c.l.b16 %v481
        %v719 = vunpack.c.h.b16 %v481
        %v720 = vunpack.c.l.b16 %v482
        %v721 = vunpack.c.h.b16 %v482
        %v722 = vunpack.c.l.b16 %v483
        %v723 = vunpack.c.h.b16 %v483
        %v724 = vunpack.c.l.b16 %v484
        %v725 = vunpack.c.h.b16 %v484
        %v726 = vunpack.c.l.b16 %v485
        %v727 = vunpack.c.h.b16 %v485
        %v728 = vunpack.c.l.b16 %v486
        %v729 = vunpack.c.h.b16 %v486
        %v730 = vunpack.c.l.b16 %v487
        %v731 = vunpack.c.h.b16 %v487
        %v732 = vunpack.c.l.b16 %v488
        %v733 = vunpack.c.h.b16 %v488
        %v734 = vunpack.c.l.b16 %v489
        %v735 = vunpack.c.h.b16 %v489
        %v736 = vunpack.c.l.b16 %v490
        %v737 = vunpack.c.h.b16 %v490
        %v738 = vunpack.c.l.b16 %v491
        %v739 = vunpack.c.h.b16 %v491
        %v740 = vunpack.c.l.b16 %v492
        %v741 = vunpack.c.h.b16 %v492
        %v742 = vunpack.c.l.b16 %v493
        %v743 = vunpack.c.h.b16 %v493
        %v744 = vunpack.c.l.b16 %v494
        %v745 = vunpack.c.h.b16 %v494
        %v746 = vunpack.c.l.b16 %v495
        %v747 = vunpack.c.h.b16 %v495
        %v748 = vunpack.c.l.b16 %v496
        %v749 = vunpack.c.h.b16 %v496
        %v750 = vunpack.c.l.b16 %v497
        %v751 = vunpack.c.h.b16 %v497
        %v752 = vunpack.c.l.b16 %v498
        %v753 = vunpack.c.h.b16 %v498
        %v754 = vunpack.c.l.b16 %v499
        %v755 = vunpack.c.h.b16 %v499
        %v756 = vunpack.c.l.b16 %v500
        %v757 = vunpack.c.h.b16 %v500
        %v758 = vunpack.c.l.b16 %v501
        %v759 = vunpack.c.h.b16 %v501
        %v760 = vunpack.c.l.b16 %v502
        %v761 = vunpack.c.h.b16 %v502
        %v762 = vunpack.c.l.b16 %v503
        %v763 = vunpack.c.h.b16 %v503
        %v764 = vunpack.c.l.b16 %v504
        %v765 = vunpack.c.h.b16 %v504
        %v766 = vunpack.c.l.b16 %v505
        %v767 = vunpack.c.h.b16 %v505
        %v768 = vunpack.c.l.b16 %v506
        %v769 = vunpack.c.h.b16 %v506
        %v770 = vunpack.c.l.b16 %v507
        %v771 = vunpack.c.h.b16 %v507
        %v772 = vunpack.c.l.b16 %v508
        %v773 = vunpack.c.h.b16 %v508
        %v774 = vunpack.c.l.b16 %v509
        %v775 = vunpack.c.h.b16 %v509
        %v776 = vunpack.c.l.b16 %v510
        %v777 = vunpack.c.h.b16 %v510
        %v778 = vunpack.c.l.b16 %v511
        %v779 = vunpack.c.h.b16 %v511
        %v780 = vunpack.c.l.b16 %v512
        %v781 = vunpack.c.h.b16 %v512
        %v782 = vunpack.c.l.b16 %v513
        %v783 = vunpack.c.h.b16 %v513
        %v784 = vunpack.c.l.b16 %v514
        %v785 = vunpack.c.h.b16 %v514
        %v786 = vunpack.c.l.b16 %v515
        %v787 = vunpack.c.h.b16 %v515
        %v788 = vunpack.c.l.b16 %v516
        %v789 = vunpack.c.h.b16 %v516
        %v790 = vunpack.c.l.b16 %v517
        %v791 = vunpack.c.h.b16 %v517
        %v792 = vunpack.c.l.b16 %v518
        %v793 = vunpack.c.h.b16 %v518
        %v794 = vunpack.c.l.b16 %v519
        %v795 = vunpack.c.h.b16 %v519
        %v796 = vunpack.c.l.b16 %v520
        %v797 = vunpack.c.h.b16 %v520
        %v798 = vunpack.c.l.b16 %v521
        %v799 = vunpack.c.h.b16 %v521
        %v800 = vunpack.c.l.b16 %v522
        %v801 = vunpack.c.h.b16 %v522
        %v802 = vunpack.c.l.b16 %v523
        %v803 = vunpack.c.h.b16 %v523
        %v804 = vunpack.c.l.b16 %v524
        %v805 = vunpack.c.h.b16 %v524
        %v806 = vunpack.c.l.b16 %v525
        %v807 = vunpack.c.h.b16 %v525
        %v808 = vunpack.c.l.b16 %v526
        %v809 = vunpack.c.h.b16 %v526
        %v810 = vunpack.c.l.b16 %v527
        %v811 = vunpack.c.h.b16 %v527
        %v812 = vunpack.c.l.b16 %v528
        %v813 = vunpack.c.h.b16 %v528
        %v814 = vunpack.c.l.b16 %v529
        %v815 = vunpack.c.h.b16 %v529
        %v816 = vunpack.c.l.b16 %v530
        %v817 = vunpack.c.h.b16 %v530
        %v818 = vunpack.c.l.b16 %v531
        %v819 = vunpack.c.h.b16 %v531
        %v820 = vunpack.c.l.b16 %v532
        %v821 = vunpack.c.h.b16 %v532
        %v822 = vunpack.c.l.b16 %v533
        %v823 = vunpack.c.h.b16 %v533
        %v824 = vunpack.c.l.b16 %v534
        %v825 = vunpack.c.h.b16 %v534
        %v826 = vunpack.c.l.b16 %v535
        %v827 = vunpack.c.h.b16 %v535
        %v828 = vunpack.c.l.b16 %v536
        %v829 = vunpack.c.h.b16 %v536
        %v830 = vunpack.c.l.b16 %v537
        %v831 = vunpack.c.h.b16 %v537
        %v832 = vunpack.c.l.b16 %v538
        %v833 = vunpack.c.h.b16 %v538
        %v834 = vunpack.c.l.b16 %v539
        %v835 = vunpack.c.h.b16 %v539
        %v836 = vunpack.c.l.b16 %v540
        %v837 = vunpack.c.h.b16 %v540
        %v838 = vunpack.c.l.b16 %v541
        %v839 = vunpack.c.h.b16 %v541
        %v840 = vunpack.c.l.b16 %v542
        %v841 = vunpack.c.h.b16 %v542
        %v842 = vunpack.c.l.b16 %v543
        %v843 = vunpack.c.h.b16 %v543
        %v844 = vunpack.c.l.b16 %v544
        %v845 = vunpack.c.h.b16 %v544
        %v846 = vunpack.c.l.b16 %v545
        %v847 = vunpack.c.h.b16 %v545
        %v848 = vunpack.c.l.b16 %v546
        %v849 = vunpack.c.h.b16 %v546
        %v850 = vunpack.c.l.b16 %v547
        %v851 = vunpack.c.h.b16 %v547
        %v852 = vunpack.c.l.b16 %v548
        %v853 = vunpack.c.h.b16 %v548
        %v854 = vunpack.c.l.b16 %v549
        %v855 = vunpack.c.h.b16 %v549
        %v856 = vunpack.c.l.b16 %v550
        %v857 = vunpack.c.h.b16 %v550
        %v858 = vunpack.c.l.b16 %v551
        %v859 = vunpack.c.h.b16 %v551
        %v860 = vunpack.c.l.b16 %v552
        %v861 = vunpack.c.h.b16 %v552
        %v862 = vunpack.c.l.b16 %v553
        %v863 = vunpack.c.h.b16 %v553
        %v864 = vunpack.c.l.b16 %v554
        %v865 = vunpack.c.h.b16 %v554
        %v866 = vunpack.c.l.b16 %v555
        %v867 = vunpack.c.h.b16 %v555
        %v868 = vunpack.c.l.b16 %v556
        %v869 = vunpack.c.h.b16 %v556
        %v870 = vunpack.c.l.b16 %v557
        %v871 = vunpack.c.h.b16 %v557
        %v872 = vunpack.c.l.b16 %v558
        %v873 = vunpack.c.h.b16 %v558
        %v874 = vunpack.c.l.b16 %v559
        %v875 = vunpack.c.h.b16 %v559
        %v876 = vunpack.c.l.b16 %v560
        %v877 = vunpack.c.h.b16 %v560
        %v878 = vunpack.c.l.b16 %v561
        %v879 = vunpack.c.h.b16 %v561
        %v880 = vunpack.c.l.b16 %v562
        %v881 = vunpack.c.h.b16 %v562
        %v882 = vunpack.c.l.b16 %v563
        %v883 = vunpack.c.h.b16 %v563
        %v884 = vunpack.c.l.b16 %v564
        %v885 = vunpack.c.h.b16 %v564
        %v886 = vunpack.c.l.b16 %v565
        %v887 = vunpack.c.h.b16 %v565
        %v888 = vunpack.c.l.b16 %v566
        %v889 = vunpack.c.h.b16 %v566
        %v890 = vunpack.c.l.b16 %v567
        %v891 = vunpack.c.h.b16 %v567
        %v892 = vunpack.c.l.b16 %v568
        %v893 = vunpack.c.h.b16 %v568
        %v894 = vunpack.c.l.b16 %v569
        %v895 = vunpack.c.h.b16 %v569
        %v896 = vunpack.c.l.b16 %v570
        %v897 = vunpack.c.h.b16 %v570
        %v898 = vunpack.c.l.b16 %v571
        %v899 = vunpack.c.h.b16 %v571
        %v900 = vunpack.c.l.b16 %v572
        %v901 = vunpack.c.h.b16 %v572
        %v902 = vunpack.c.l.b16 %v573
        %v903 = vunpack.c.h.b16 %v573
        %v904 = vunpack.c.l.b16 %v574
        %v905 = vunpack.c.h.b16 %v574
        %v906 = vunpack.c.l.b16 %v575
        %v907 = vunpack.c.h.b16 %v575
        %v908 = vunpack.c.l.b16 %v576
        %v909 = vunpack.c.h.b16 %v576
        %v910 = vunpack.c.l.b16 %v577
        %v911 = vunpack.c.h.b16 %v577
        %v912 = vunpack.c.l.b16 %v578
        %v913 = vunpack.c.h.b16 %v578
        %v914 = vunpack.c.l.b16 %v579
        %v915 = vunpack.c.h.b16 %v579
        %v916 = vunpack.c.l.b16 %v580
        %v917 = vunpack.c.h.b16 %v580
        %v918 = vunpack.c.l.b16 %v581
        %v919 = vunpack.c.h.b16 %v581
        %v920 = vunpack.c.l.b16 %v582
        %v921 = vunpack.c.h.b16 %v582
        %v922 = vunpack.c.l.b16 %v583
        %v923 = vunpack.c.h.b16 %v583
        %v924 = vunpack.c.l.b16 %v584
        %v925 = vunpack.c.h.b16 %v584
        %v926 = vunpack.c.l.b16 %v585
        %v927 = vunpack.c.h.b16 %v585
        %v928 = vunpack.c.l.b16 %v586
        %v929 = vunpack.c.h.b16 %v586
        %v930 = vunpack.c.l.b16 %v587
        %v931 = vunpack.c.h.b16 %v587
        %v932 = vunpack.c.l.b16 %v588
        %v933 = vunpack.c.h.b16 %v588
        %v934 = vunpack.c.l.b16 %v589
        %v935 = vunpack.c.h.b16 %v589
        %v936 = vunpack.c.l.b16 %v590
        %v937 = vunpack.c.h.b16 %v590
        %v938 = vunpack.c.l.b16 %v591
        %v939 = vunpack.c.h.b16 %v591
        %v940 = vpack.c.b16 %v724, %v716
        %v941 = vpack.c.b16 %v725, %v717
        %v942 = vpack.c.b16 %v726, %v718
        %v943 = vpack.c.b16 %v727, %v719
        %v944 = vpack.c.b16 %v728, %v720
        %v945 = vpack.c.b16 %v729, %v721
        %v946 = vpack.c.b16 %v730, %v722
        %v947 = vpack.c.b16 %v731, %v723
        %v948 = vpack.c.b16 %v740, %v732
        %v949 = vpack.c.b16 %v741, %v733
        %v950 = vpack.c.b16 %v742, %v734
        %v951 = vpack.c.b16 %v743, %v735
        %v952 = vpack.c.b16 %v744, %v736
        %v953 = vpack.c.b16 %v745, %v737
        %v954 = vpack.c.b16 %v746, %v738
        %v955 = vpack.c.b16 %v747, %v739
        %v956 = vpack.c.b16 %v756, %v748
        %v957 = vpack.c.b16 %v757, %v749
        %v958 = vpack.c.b16 %v758, %v750
        %v959 = vpack.c.b16 %v759, %v751
        %v960 = vpack.c.b16 %v760, %v752
        %v961 = vpack.c.b16 %v761, %v753
        %v962 = vpack.c.b16 %v762, %v754
        %v963 = vpack.c.b16 %v763, %v755
        %v964 = vpack.c.b16 %v772, %v764
        %v965 = vpack.c.b16 %v773, %v765
        %v966 = vpack.c.b16 %v774, %v766
        %v967 = vpack.c.b16 %v775, %v767
        %v968 = vpack.c.b16 %v776, %v768
        %v969 = vpack.c.b16 %v777, %v769
        %v970 = vpack.c.b16 %v778, %v770
        %v971 = vpack.c.b16 %v779, %v771
        %v972 = vpack.c.b16 %v788, %v780
        %v973 = vpack.c.b16 %v789, %v781
        %v974 = vpack.c.b16 %v790, %v782
        %v975 = vpack.c.b16 %v791, %v783
        %v976 = vpack.c.b16 %v792, %v784
        %v977 = vpack.c.b16 %v793, %v785
        %v978 = vpack.c.b16 %v794, %v786
        %v979 = vpack.c.b16 %v795, %v787
        %v980 = vpack.c.b16 %v804, %v796
        %v981 = vpack.c.b16 %v805, %v797
        %v982 = vpack.c.b16 %v806, %v798
        %v983 = vpack.c.b16 %v807, %v799
        %v984 = vpack.c.b16 %v808, %v800
        %v985 = vpack.c.b16 %v809, %v801
        %v986 = vpack.c.b16 %v810, %v802
        %v987 = vpack.c.b16 %v811, %v803
        %v988 = vpack.c.b16 %v820, %v812
        %v989 = vpack.c.b16 %v821, %v813
        %v990 = vpack.c.b16 %v822, %v814
        %v991 = vpack.c.b16 %v823, %v815
        %v992 = vpack.c.b16 %v824, %v816
        %v993 = vpack.c.b16 %v825, %v817
        %v994 = vpack.c.b16 %v826, %v818
        %v995 = vpack.c.b16 %v827, %v819
        %v996 = vpack.c.b16 %v836, %v828
        %v997 = vpack.c.b16 %v837, %v829
        %v998 = vpack.c.b16 %v838, %v830
        %v999 = vpack.c.b16 %v839, %v831
        %v1000 = vpack.c.b16 %v840, %v832
        %v1001 = vpack.c.b16 %v841, %v833
        %v1002 = vpack.c.b16 %v842, %v834
        %v1003 = vpack.c.b16 %v843, %v835
        %v1004 = vpack.c.b16 %v852, %v844
        %v1005 = vpack.c.b16 %v853, %v845
        %v1006 = vpack.c.b16 %v854, %v846
        %v1007 = vpack.c.b16 %v855, %v847
        %v1008 = vpack.c.b16 %v856, %v848
        %v1009 = vpack.c.b16 %v857, %v849
        %v1010 = vpack.c.b16 %v858, %v850
        %v1011 = vpack.c.b16 %v859, %v851
        %v1012 = vpack.c.b16 %v868, %v860
        %v1013 = vpack.c.b16 %v869, %v861
        %v1014 = vpack.c.b16 %v870, %v862
        %v1015 = vpack.c.b16 %v871, %v863
        %v1016 = vpack.c.b16 %v872, %v864
        %v1017 = vpack.c.b16 %v873, %v865
        %v1018 = vpack.c.b16 %v874, %v866
        %v1019 = vpack.c.b16 %v875, %v867
        %v1020 = vpack.c.b16 %v884, %v876
        %v1021 = vpack.c.b16 %v885, %v877
        %v1022 = vpack.c.b16 %v886, %v878
        %v1023 = vpack.c.b16 %v887, %v879
        %v1024 = vpack.c.b16 %v888, %v880
        %v1025 = vpack.c.b16 %v889, %v881
        %v1026 = vpack.c.b16 %v890, %v882
        %v1027 = vpack.c.b16 %v891, %v883
        %v1028 = vpack.c.b16 %v900, %v892
        %v1029 = vpack.c.b16 %v901, %v893
        %v1030 = vpack.c.b16 %v902, %v894
        %v1031 = vpack.c.b16 %v903, %v895
        %v1032 = vpack.c.b16 %v904, %v896
        %v1033 = vpack.c.b16 %v905, %v897
        %v1034 = vpack.c.b16 %v906, %v898
        %v1035 = vpack.c.b16 %v907, %v899
        %v1036 = vpack.c.b16 %v916, %v908
        %v1037 = vpack.c.b16 %v917, %v909
        %v1038 = vpack.c.b16 %v918, %v910
        %v1039 = vpack.c.b16 %v919, %v911
        %v1040 = vpack.c.b16 %v920, %v912
        %v1041 = vpack.c.b16 %v921, %v913
        %v1042 = vpack.c.b16 %v922, %v914
        %v1043 = vpack.c.b16 %v923, %v915
        %v1044 = vpack.c.b16 %v932, %v924
        %v1045 = vpack.c.b16 %v933, %v925
        %v1046 = vpack.c.b16 %v934, %v926
        %v1047 = vpack.c.b16 %v935, %v927
        %v1048 = vpack.c.b16 %v936, %v928
        %v1049 = vpack.c.b16 %v937, %v929
        %v1050 = vpack.c.b16 %v938, %v930
        %v1051 = vpack.c.b16 %v939, %v931
        %vm1164 = vcmask 785408
        %v1166 = vsel %vm1164, %v602, 0
        %1168 = vmatprep.subr.bf16.mxu0 %v941
        %1169 = vmatpush1.bf16.msra.mxu0 %v940
        %1170 = vmatprep.subr.bf16.mxu0 %v949
        %1171 = vmatpush1.bf16.msra.mxu0 %v948
        %1172 = vmatprep.subr.bf16.mxu0 %v957
        %1173 = vmatpush1.bf16.msra.mxu0 %v956
        %1174 = vmatprep.subr.bf16.mxu0 %v965
        %1175 = vmatpush1.bf16.msra.mxu0 %v964
        %1176 = vmatprep.subr.bf16.mxu0 %v973
        %1177 = vmatpush1.bf16.msra.mxu0 %v972
        %1178 = vmatprep.subr.bf16.mxu0 %v981
        %1179 = vmatpush1.bf16.msra.mxu0 %v980
        %1180 = vmatprep.subr.bf16.mxu0 %v989
        %1181 = vmatpush1.bf16.msra.mxu0 %v988
        %1182 = vmatprep.subr.bf16.mxu0 %v997
        %1183 = vmatpush1.bf16.msra.mxu0 %v996
        %1184 = vmatprep.subr.bf16.mxu0 %v1005
        %1185 = vmatpush1.bf16.msra.mxu0 %v1004
        %1186 = vmatprep.subr.bf16.mxu0 %v1013
        %1187 = vmatpush1.bf16.msra.mxu0 %v1012
        %1188 = vmatprep.subr.bf16.mxu0 %v1021
        %1189 = vmatpush1.bf16.msra.mxu0 %v1020
        %1190 = vmatprep.subr.bf16.mxu0 %v1029
        %1191 = vmatpush1.bf16.msra.mxu0 %v1028
        %1192 = vmatprep.subr.bf16.mxu0 %v1037
        %1193 = vmatpush1.bf16.msra.mxu0 %v1036
        %1194 = vmatprep.subr.bf16.mxu0 %v1045
        %1195 = vmatpush1.bf16.msra.mxu0 %v1044
        %1196 = vmatprep.subr.bf16.mxu0 0
        %1197 = vmatpush1.bf16.msra.mxu0 0
        %1198 = vmatprep.subr.bf16.mxu0 0
        %1199 = vmatpush1.bf16.msra.mxu0 0
        %1200 = vmatprep.mubr.bf16.mxu0 %v1166
        %1201 = vmatmul.mubr.bf16.gmra.mrb[0].mxu0 %v601
        %v1202 = vpop.f32.mrb[0].mxu0
        %v1203 = vadd.f32 %v596, %v1202
        %v1204 = vpop.f32.mrb[0].mxu0
        %v1205 = vadd.f32 %v596, %v1204
        %v1206 = vpop.f32.mrb[0].mxu0
        %v1207 = vpop.f32.mrb[0].mxu0
        %1208 = vdwg.mxu0
        %1209 = vmatprep.subr.bf16.mxu0 %v943
        %1210 = vmatpush1.bf16.msra.mxu0 %v942
        %1211 = vmatprep.subr.bf16.mxu0 %v951
        %1212 = vmatpush1.bf16.msra.mxu0 %v950
        %1213 = vmatprep.subr.bf16.mxu0 %v959
        %1214 = vmatpush1.bf16.msra.mxu0 %v958
        %1215 = vmatprep.subr.bf16.mxu0 %v967
        %1216 = vmatpush1.bf16.msra.mxu0 %v966
        %1217 = vmatprep.subr.bf16.mxu0 %v975
        %1218 = vmatpush1.bf16.msra.mxu0 %v974
        %1219 = vmatprep.subr.bf16.mxu0 %v983
        %1220 = vmatpush1.bf16.msra.mxu0 %v982
        %1221 = vmatprep.subr.bf16.mxu0 %v991
        %1222 = vmatpush1.bf16.msra.mxu0 %v990
        %1223 = vmatprep.subr.bf16.mxu0 %v999
        %1224 = vmatpush1.bf16.msra.mxu0 %v998
        %1225 = vmatprep.subr.bf16.mxu0 %v1007
        %1226 = vmatpush1.bf16.msra.mxu0 %v1006
        %1227 = vmatprep.subr.bf16.mxu0 %v1015
        %1228 = vmatpush1.bf16.msra.mxu0 %v1014
        %1229 = vmatprep.subr.bf16.mxu0 %v1023
        %1230 = vmatpush1.bf16.msra.mxu0 %v1022
        %1231 = vmatprep.subr.bf16.mxu0 %v1031
        %1232 = vmatpush1.bf16.msra.mxu0 %v1030
        %1233 = vmatprep.subr.bf16.mxu0 %v1039
        %1234 = vmatpush1.bf16.msra.mxu0 %v1038
        %1235 = vmatprep.subr.bf16.mxu0 %v1047
        %1236 = vmatpush1.bf16.msra.mxu0 %v1046
        %1237 = vmatprep.subr.bf16.mxu0 0
        %1238 = vmatpush1.bf16.msra.mxu0 0
        %1239 = vmatprep.subr.bf16.mxu0 0
        %1240 = vmatpush1.bf16.msra.mxu0 0
        %1241 = vmatprep.mubr.bf16.mxu0 %v1166
        %1242 = vmatmul.mubr.bf16.gmra.mrb[0].mxu0 %v601
        %v1243 = vpop.f32.mrb[0].mxu0
        %v1244 = vadd.f32 %v596, %v1243
        %v1245 = vpop.f32.mrb[0].mxu0
        %v1246 = vadd.f32 %v596, %v1245
        %v1247 = vpop.f32.mrb[0].mxu0
        %v1248 = vpop.f32.mrb[0].mxu0
        %1249 = vdwg.mxu0
        %1250 = vmatprep.subr.bf16.mxu0 %v945
        %1251 = vmatpush1.bf16.msra.mxu0 %v944
        %1252 = vmatprep.subr.bf16.mxu0 %v953
        %1253 = vmatpush1.bf16.msra.mxu0 %v952
        %1254 = vmatprep.subr.bf16.mxu0 %v961
        %1255 = vmatpush1.bf16.msra.mxu0 %v960
        %1256 = vmatprep.subr.bf16.mxu0 %v969
        %1257 = vmatpush1.bf16.msra.mxu0 %v968
        %1258 = vmatprep.subr.bf16.mxu0 %v977
        %1259 = vmatpush1.bf16.msra.mxu0 %v976
        %1260 = vmatprep.subr.bf16.mxu0 %v985
        %1261 = vmatpush1.bf16.msra.mxu0 %v984
        %1262 = vmatprep.subr.bf16.mxu0 %v993
        %1263 = vmatpush1.bf16.msra.mxu0 %v992
        %1264 = vmatprep.subr.bf16.mxu0 %v1001
        %1265 = vmatpush1.bf16.msra.mxu0 %v1000
        %1266 = vmatprep.subr.bf16.mxu0 %v1009
        %1267 = vmatpush1.bf16.msra.mxu0 %v1008
        %1268 = vmatprep.subr.bf16.mxu0 %v1017
        %1269 = vmatpush1.bf16.msra.mxu0 %v1016
        %1270 = vmatprep.subr.bf16.mxu0 %v1025
        %1271 = vmatpush1.bf16.msra.mxu0 %v1024
        %1272 = vmatprep.subr.bf16.mxu0 %v1033
        %1273 = vmatpush1.bf16.msra.mxu0 %v1032
        %1274 = vmatprep.subr.bf16.mxu0 %v1041
        %1275 = vmatpush1.bf16.msra.mxu0 %v1040
        %1276 = vmatprep.subr.bf16.mxu0 %v1049
        %1277 = vmatpush1.bf16.msra.mxu0 %v1048
        %1278 = vmatprep.subr.bf16.mxu0 0
        %1279 = vmatpush1.bf16.msra.mxu0 0
        %1280 = vmatprep.subr.bf16.mxu0 0
        %1281 = vmatpush1.bf16.msra.mxu0 0
        %1282 = vmatprep.mubr.bf16.mxu0 %v1166
        %1283 = vmatmul.mubr.bf16.gmra.mrb[0].mxu0 %v601
        %v1284 = vpop.f32.mrb[0].mxu0
        %v1285 = vadd.f32 %v596, %v1284
        %v1286 = vpop.f32.mrb[0].mxu0
        %v1287 = vadd.f32 %v596, %v1286
        %v1288 = vpop.f32.mrb[0].mxu0
        %v1289 = vpop.f32.mrb[0].mxu0
        %1290 = vdwg.mxu0
        %1291 = vmatprep.subr.bf16.mxu0 %v947
        %1292 = vmatpush1.bf16.msra.mxu0 %v946
        %1293 = vmatprep.subr.bf16.mxu0 %v955
        %1294 = vmatpush1.bf16.msra.mxu0 %v954
        %1295 = vmatprep.subr.bf16.mxu0 %v963
        %1296 = vmatpush1.bf16.msra.mxu0 %v962
        %1297 = vmatprep.subr.bf16.mxu0 %v971
        %1298 = vmatpush1.bf16.msra.mxu0 %v970
        %1299 = vmatprep.subr.bf16.mxu0 %v979
        %1300 = vmatpush1.bf16.msra.mxu0 %v978
        %1301 = vmatprep.subr.bf16.mxu0 %v987
        %1302 = vmatpush1.bf16.msra.mxu0 %v986
        %1303 = vmatprep.subr.bf16.mxu0 %v995
        %1304 = vmatpush1.bf16.msra.mxu0 %v994
        %1305 = vmatprep.subr.bf16.mxu0 %v1003
        %1306 = vmatpush1.bf16.msra.mxu0 %v1002
        %1307 = vmatprep.subr.bf16.mxu0 %v1011
        %1308 = vmatpush1.bf16.msra.mxu0 %v1010
        %1309 = vmatprep.subr.bf16.mxu0 %v1019
        %1310 = vmatpush1.bf16.msra.mxu0 %v1018
        %1311 = vmatprep.subr.bf16.mxu0 %v1027
        %1312 = vmatpush1.bf16.msra.mxu0 %v1026
        %1313 = vmatprep.subr.bf16.mxu0 %v1035
        %1314 = vmatpush1.bf16.msra.mxu0 %v1034
        %1315 = vmatprep.subr.bf16.mxu0 %v1043
        %1316 = vmatpush1.bf16.msra.mxu0 %v1042
        %1317 = vmatprep.subr.bf16.mxu0 %v1051
        %1318 = vmatpush1.bf16.msra.mxu0 %v1050
        %1319 = vmatprep.subr.bf16.mxu0 0
        %1320 = vmatpush1.bf16.msra.mxu0 0
        %1321 = vmatprep.subr.bf16.mxu0 0
        %1322 = vmatpush1.bf16.msra.mxu0 0
        %1323 = vmatprep.mubr.bf16.mxu0 %v1166
        %1324 = vmatmul.mubr.bf16.gmra.mrb[0].mxu0 %v601
        %v1325 = vpop.f32.mrb[0].mxu0
        %v1326 = vadd.f32 %v596, %v1325
        %v1327 = vpop.f32.mrb[0].mxu0
        %v1328 = vadd.f32 %v596, %v1327
        %v1329 = vpop.f32.mrb[0].mxu0
        %v1330 = vpop.f32.mrb[0].mxu0
        %1331 = vdwg.mxu0
        %1332 = vst [vmem:[%s476] sm:$0xff] %v1203
        %1333 = vst [vmem:[%s476 + $0x8] sm:$0xff] %v1205
        %1334 = vst [vmem:[%s476 + $0x10] sm:$0xff] %v1244
        %1335 = vst [vmem:[%s476 + $0x18] sm:$0xff] %v1246
        %1336 = vst [vmem:[%s476 + $0x20] sm:$0xff] %v1285
        %1337 = vst [vmem:[%s476 + $0x28] sm:$0xff] %v1287
        %1338 = vst [vmem:[%s476 + $0x30] sm:$0xff] %v1326
        %1339 = vst [vmem:[%s476 + $0x38] sm:$0xff] %v1328
        %s1340 = smul.u32 8, %s19
        %p1341 = scmp.lt.s32.totalorder %s18, 0
        %s1342 = scalar_select %p1341, %s18, 0
        %p1343 = scmp.lt.s32.totalorder %s1340, 63
        %s1344 = scalar_select %p1343, %s1340, 63
        %s1345 = smul.addr %s1342, 64
        %s1346 = sadd.s32 %s1344, %s1345
        %s1347 = smul.addr %s1346, 8
        %s1348 = scalar_lea.vmem %s3, %s1347
        // Predicated region
        $region56: #{unet_forward.17} parent=50 // pred_check
          %p1349 = pneg %p126
        $region57: #{unet_forward.17} parent=50 // pred_check_branch
          %1351 = sbr.rel (%p1349) target = $region59
        $region58: #{unet_forward.17} parent=50 // pred_region
          %s1352 = smul.u32 8, %s19
        $region59: #{unet_forward.17} parent=50 // pred_fallthru
          _
      $region51: #{unet_forward.17} parent=5 // pred_fallthru
        _
      %p1353 = scmp.le.s32.totalorder 2, %s9
      // Predicated region
      $region60: #{unet_forward.17} parent=5 // pred_check
        %p1354 = pneg %p1353
      $region61: #{unet_forward.17} parent=5 // pred_check_branch
        %1356 = sbr.rel (%p1354) target = $region63
      $region62: #{unet_forward.17} parent=5 // pred_region
        %s1357 = ssub.s32 %s9, 2
        // Predicated region
        $region64: #{unet_forward.17} parent=62 // pred_check
          %p1358 = pneg %p132
        $region65: #{unet_forward.17} parent=62 // pred_check_branch
          %1360 = sbr.rel (%p1358) target = $region67
        $region66: #{unet_forward.17} parent=62 // pred_region
          %s1361 = smul.u32 8, %s21
          %p1362 = scmp.lt.s32.totalorder %s20, 0
          %s1363 = scalar_select %p1362, %s20, 0
          %p1364 = scmp.lt.s32.totalorder %s1361, 63
          %s1365 = scalar_select %p1364, %s1361, 63
          %s1366 = smul.addr %s1363, 64
          %s1367 = sadd.s32 %s1365, %s1366
          %s1368 = smul.addr %s1367, 8
          %s1369 = scalar_lea.vmem %s3, %s1368
        $region67: #{unet_forward.17} parent=62 // pred_fallthru
          _
      $region63: #{unet_forward.17} parent=5 // pred_fallthru
        _
    $region6: #{unet_forward.17} parent=1 // loop_footer
      %s13 = sadd.s32 1, %s9
    $region7: #{unet_forward.17} parent=1 // loop_footer_branch
      %8 = sbr.rel target = $region3
    $region8: #{unet_forward.17} parent=1 // loop_exit
      _

</llo_original>
